<compile_context>
chip_gen: v7x
topology: tpu7x:2x2x1
jax: 0.10.0
libtpu: 0.0.40
codegen_flags: <defaults>
</compile_context>

<pallas_src>
import jax
import jax.numpy as jnp
from jax.experimental import pallas as pl
from jax.experimental.pallas import tpu as pltpu

IN_DIM = 200
HID_DIM = 2048
OUT_DIM = 18000
BN_EPS = 1e-5
LRELU_SLOPE = 0.01


def _pick_tiling():
    """Generation-aware output-tile width and scoped-VMEM limit."""
    tn, vmem_limit = 1536, 40 << 20          # safe default (v7x: 64 MiB VMEM/TC)
    try:
        cap = getattr(pltpu.get_tpu_info(), "vmem_capacity_bytes", 0)
        if cap and cap >= (96 << 20):        # v5e / v6e: 128 MiB VMEM/TC
            tn, vmem_limit = 2048, 64 << 20
    except Exception:
        pass
    return tn, vmem_limit


TILE_N, VMEM_LIMIT = _pick_tiling()
N_PAD = pl.cdiv(OUT_DIM, TILE_N) * TILE_N    # 18432 for both 1536 and 2048


# ---------------------------------------------------------------------------
# Fused kernel: one grid axis over output-feature tiles of the final Linear.
# x, w1, b1 have constant index_maps -> DMA'd once and stay resident in VMEM;
# the tiny layer-1 recompute (8x200 @ 200x2048 + BN over batch=8) hides under
# the memory-bound DMA of each (2048, TILE_N) w2 tile.
# ---------------------------------------------------------------------------
def _generator_kernel(x_ref, w1_ref, b1_ref, w2_ref, b2_ref, o_ref):
    # Layer 1: Linear(200->2048) + LeakyReLU + BatchNorm1d (batch statistics).
    h = jnp.dot(x_ref[...], w1_ref[...], preferred_element_type=jnp.float32)
    h = h + b1_ref[...]
    h = jnp.where(h > 0, h, LRELU_SLOPE * h)
    mean = jnp.mean(h, axis=0, keepdims=True)                 # per-feature mean
    var = jnp.mean((h - mean) ** 2, axis=0, keepdims=True)    # biased variance
    h = (h - mean) * jax.lax.rsqrt(var + BN_EPS)
    # Layer 2: full-K (2048) matmul on this output tile + bias. No accumulator.
    o_ref[...] = (jnp.dot(h, w2_ref[...], preferred_element_type=jnp.float32)
                  + b2_ref[...]).astype(o_ref.dtype)


def generator_pallas(x, w1, b1, w2_p, b2_p):
    batch = x.shape[0]
    n_pad = w2_p.shape[1]
    grid = (n_pad // TILE_N,)

    flops = 2 * batch * HID_DIM * n_pad + 2 * batch * IN_DIM * HID_DIM
    bytes_accessed = 4 * (w2_p.size + b2_p.size + w1.size + b1.size
                          + x.size + batch * n_pad)

    out_p = pl.pallas_call(
        _generator_kernel,
        out_shape=jax.ShapeDtypeStruct((batch, n_pad), jnp.float32),
        grid_spec=pltpu.PrefetchScalarGridSpec(
            num_scalar_prefetch=0,
            grid=grid,
            in_specs=[
                pl.BlockSpec((batch, IN_DIM), lambda j: (0, 0)),    # x (resident)
                pl.BlockSpec((IN_DIM, HID_DIM), lambda j: (0, 0)),  # w1 (resident)
                pl.BlockSpec((1, HID_DIM), lambda j: (0, 0)),       # b1 (resident)
                pl.BlockSpec((HID_DIM, TILE_N), lambda j: (0, j)),  # w2 tile
                pl.BlockSpec((1, TILE_N), lambda j: (0, j)),        # b2 tile
            ],
            out_specs=pl.BlockSpec((batch, TILE_N), lambda j: (0, j)),
        ),
        compiler_params=pltpu.CompilerParams(
            dimension_semantics=("parallel",),
            vmem_limit_bytes=VMEM_LIMIT),
        cost_estimate=pl.CostEstimate(
            flops=flops, transcendentals=0, bytes_accessed=bytes_accessed),
    )(x, w1, b1, w2_p, b2_p)
    return out_p[:, :OUT_DIM]


@jax.jit
def generator_forward(x, padded_params):
    w1, b1, w2_p, b2_p = padded_params
    return generator_pallas(x, w1, b1, w2_p, b2_p)


# ---------------------------------------------------------------------------
# Parameter handling / reference
# ---------------------------------------------------------------------------
def init_params(key):
    k1, k2, k3, k4 = jax.random.split(key, 4)
    bound1 = 1.0 / (IN_DIM ** 0.5)
    bound2 = 1.0 / (HID_DIM ** 0.5)
    w1 = jax.random.uniform(k1, (IN_DIM, HID_DIM), jnp.float32, -bound1, bound1)
    b1 = jax.random.uniform(k2, (1, HID_DIM), jnp.float32, -bound1, bound1)
    w2 = jax.random.uniform(k3, (HID_DIM, OUT_DIM), jnp.float32, -bound2, bound2)
    b2 = jax.random.uniform(k4, (1, OUT_DIM), jnp.float32, -bound2, bound2)
    return w1, b1, w2, b2


def prepare_params(params):
    """One-time pad of the big second-layer weight/bias to a lane-aligned width."""
    w1, b1, w2, b2 = params
    w2_p = jnp.pad(w2, ((0, 0), (0, N_PAD - OUT_DIM)))
    b2_p = jnp.pad(b2, ((0, 0), (0, N_PAD - OUT_DIM)))
    return w1, b1, w2_p, b2_p


def reference_forward(x, params):
    w1, b1, w2, b2 = params
    h = x @ w1 + b1
    h = jnp.where(h > 0, h, LRELU_SLOPE * h)
    mean = jnp.mean(h, axis=0, keepdims=True)
    var = jnp.mean((h - mean) ** 2, axis=0, keepdims=True)
    h = (h - mean) * jax.lax.rsqrt(var + BN_EPS)
    return h @ w2 + b2


if __name__ == "__main__":
    key = jax.random.PRNGKey(0)
    pkey, xkey = jax.random.split(key)
    params = init_params(pkey)
    padded_params = jax.block_until_ready(prepare_params(params))  # pad once

    batch = 8  # BatchNorm1d (training mode) needs batch > 1
    x = jax.random.normal(xkey, (batch, IN_DIM), jnp.float32)

    out = generator_forward(x, padded_params)
    out = jax.block_until_ready(out)
    assert out.shape == (batch, OUT_DIM), out.shape

    ref = reference_forward(x, params)
    err = float(jnp.max(jnp.abs(out - ref)))
    assert jnp.allclose(out, ref, atol=2e-3, rtol=2e-3), err

    print("KERNEL_OK")
</pallas_src>

<mosaic_0001>
module attributes {stable_mosaic.version = 11 : i64} {
  func.func @_generator_kernel(%arg0: i32, %arg1: memref<8x200xf32, #tpu.memory_space<vmem>>, %arg2: memref<200x2048xf32, #tpu.memory_space<vmem>>, %arg3: memref<1x2048xf32, #tpu.memory_space<vmem>>, %arg4: memref<2048x1536xf32, #tpu.memory_space<vmem>>, %arg5: memref<1x1536xf32, #tpu.memory_space<vmem>>, %arg6: memref<8x1536xf32, #tpu.memory_space<vmem>>) attributes {dimension_semantics = [#tpu.dimension_semantics<parallel>], iteration_bounds = array<i64: 12>, scalar_prefetch = 0 : i64, scratch_operands = 0 : i64, tpu.core_type = #tpu.core_type<tc>, window_params = [{pipeline_mode = #tpu.pipeline_mode<synchronous>, transform_indices = @transform_0, window_bounds = array<i64: 8, 200>}, {pipeline_mode = #tpu.pipeline_mode<synchronous>, transform_indices = @transform_1, window_bounds = array<i64: 200, 2048>}, {pipeline_mode = #tpu.pipeline_mode<synchronous>, transform_indices = @transform_2, window_bounds = array<i64: 1, 2048>}, {transform_indices = @transform_3, window_bounds = array<i64: 2048, 1536>}, {transform_indices = @transform_4, window_bounds = array<i64: 1, 1536>}, {transform_indices = @transform_5, window_bounds = array<i64: 8, 1536>}]} {
    %c0 = arith.constant 0 : index
    %c0_0 = arith.constant 0 : index
    %0 = vector.load %arg1[%c0, %c0_0] : memref<8x200xf32, #tpu.memory_space<vmem>>, vector<8x200xf32>
    %c0_1 = arith.constant 0 : index
    %c0_2 = arith.constant 0 : index
    %1 = vector.load %arg2[%c0_1, %c0_2] : memref<200x2048xf32, #tpu.memory_space<vmem>>, vector<200x2048xf32>
    %cst = arith.constant dense<0.000000e+00> : vector<8x2048xf32>
    %2 = tpu.matmul %0, %1, %cst {dimension_numbers = #tpu.dot_dimension_numbers<[1], [0], [0], [1], [0, 0, 1, 1], [], []>} : vector<8x200xf32>, vector<200x2048xf32>, vector<8x2048xf32> -> vector<8x2048xf32>
    %c0_3 = arith.constant 0 : index
    %c0_4 = arith.constant 0 : index
    %3 = vector.load %arg3[%c0_3, %c0_4] : memref<1x2048xf32, #tpu.memory_space<vmem>>, vector<1x2048xf32>
    %4 = vector.broadcast %3 : vector<1x2048xf32> to vector<8x2048xf32>
    %5 = arith.addf %2, %4 : vector<8x2048xf32>
    %cst_5 = arith.constant 0.000000e+00 : f32
    %6 = vector.broadcast %cst_5 : f32 to vector<8x2048xf32>
    %7 = arith.cmpf ogt, %5, %6 : vector<8x2048xf32>
    %cst_6 = arith.constant 0.00999999977 : f32
    %8 = vector.broadcast %cst_6 : f32 to vector<8x2048xf32>
    %9 = arith.mulf %8, %5 : vector<8x2048xf32>
    %10 = arith.select %7, %5, %9 : vector<8x2048xi1>, vector<8x2048xf32>
    %cst_7 = arith.constant dense<0.000000e+00> : vector<2048xf32>
    %11 = vector.multi_reduction <add>, %10, %cst_7 [0] : vector<8x2048xf32> to vector<2048xf32>
    %12 = vector.shape_cast %11 : vector<2048xf32> to vector<1x2048xf32>
    %cst_8 = arith.constant 8.000000e+00 : f32
    %13 = vector.broadcast %cst_8 : f32 to vector<1x2048xf32>
    %14 = arith.divf %12, %13 : vector<1x2048xf32>
    %15 = vector.broadcast %14 : vector<1x2048xf32> to vector<8x2048xf32>
    %16 = arith.subf %10, %15 : vector<8x2048xf32>
    %17 = arith.mulf %16, %16 : vector<8x2048xf32>
    %cst_9 = arith.constant dense<0.000000e+00> : vector<2048xf32>
    %18 = vector.multi_reduction <add>, %17, %cst_9 [0] : vector<8x2048xf32> to vector<2048xf32>
    %19 = vector.shape_cast %18 : vector<2048xf32> to vector<1x2048xf32>
    %cst_10 = arith.constant 8.000000e+00 : f32
    %20 = vector.broadcast %cst_10 : f32 to vector<1x2048xf32>
    %21 = arith.divf %19, %20 : vector<1x2048xf32>
    %22 = vector.broadcast %14 : vector<1x2048xf32> to vector<8x2048xf32>
    %23 = arith.subf %10, %22 : vector<8x2048xf32>
    %cst_11 = arith.constant 9.99999974E-6 : f32
    %24 = vector.broadcast %cst_11 : f32 to vector<1x2048xf32>
    %25 = arith.addf %21, %24 : vector<1x2048xf32>
    %26 = math.rsqrt %25 : vector<1x2048xf32>
    %27 = vector.broadcast %26 : vector<1x2048xf32> to vector<8x2048xf32>
    %28 = arith.mulf %23, %27 : vector<8x2048xf32>
    %c0_12 = arith.constant 0 : index
    %c0_13 = arith.constant 0 : index
    %29 = vector.load %arg4[%c0_12, %c0_13] : memref<2048x1536xf32, #tpu.memory_space<vmem>>, vector<2048x1536xf32>
    %cst_14 = arith.constant dense<0.000000e+00> : vector<8x1536xf32>
    %30 = tpu.matmul %28, %29, %cst_14 {dimension_numbers = #tpu.dot_dimension_numbers<[1], [0], [0], [1], [0, 0, 1, 1], [], []>} : vector<8x2048xf32>, vector<2048x1536xf32>, vector<8x1536xf32> -> vector<8x1536xf32>
    %c0_15 = arith.constant 0 : index
    %c0_16 = arith.constant 0 : index
    %31 = vector.load %arg5[%c0_15, %c0_16] : memref<1x1536xf32, #tpu.memory_space<vmem>>, vector<1x1536xf32>
    %32 = vector.broadcast %31 : vector<1x1536xf32> to vector<8x1536xf32>
    %33 = arith.addf %30, %32 : vector<8x1536xf32>
    %c0_17 = arith.constant 0 : index
    %c0_18 = arith.constant 0 : index
    %34 = vector.load %arg6[%c0_17, %c0_18] : memref<8x1536xf32, #tpu.memory_space<vmem>>, vector<8x1536xf32>
    tpu.vector_store %arg6[%c0_17, %c0_18], %33 {strides = array<i32>} : memref<8x1536xf32, #tpu.memory_space<vmem>>, vector<8x1536xf32>,
    return
  }
  func.func @transform_0(%arg0: i32) -> (i32, i32) {
    %c0_i32 = arith.constant 0 : i32
    %c0_i32_0 = arith.constant 0 : i32
    %c0_i32_1 = arith.constant 0 : i32
    return %c0_i32, %c0_i32_0 : i32, i32
  }
  func.func @transform_1(%arg0: i32) -> (i32, i32) {
    %c0_i32 = arith.constant 0 : i32
    %c0_i32_0 = arith.constant 0 : i32
    %c0_i32_1 = arith.constant 0 : i32
    return %c0_i32, %c0_i32_0 : i32, i32
  }
  func.func @transform_2(%arg0: i32) -> (i32, i32) {
    %c0_i32 = arith.constant 0 : i32
    %c0_i32_0 = arith.constant 0 : i32
    %c0_i32_1 = arith.constant 0 : i32
    return %c0_i32, %c0_i32_0 : i32, i32
  }
  func.func @transform_3(%arg0: i32) -> (i32, i32) {
    %c0_i32 = arith.constant 0 : i32
    %c0_i32_0 = arith.constant 0 : i32
    return %c0_i32, %arg0 : i32, i32
  }
  func.func @transform_4(%arg0: i32) -> (i32, i32) {
    %c0_i32 = arith.constant 0 : i32
    %c0_i32_0 = arith.constant 0 : i32
    return %c0_i32, %arg0 : i32, i32
  }
  func.func @transform_5(%arg0: i32) -> (i32, i32) {
    %c0_i32 = arith.constant 0 : i32
    %c0_i32_0 = arith.constant 0 : i32
    return %c0_i32, %arg0 : i32, i32
  }
}

</mosaic_0001>

<llo_original>
// kernel: generator_forward.1
$region0: #{generator_forward.1}
  #allocation0 [shape = 'u32[]', space=smem, size = 0x4, offset = 0x4, fixed_abs, tag = 'smem constant byte address 0x4 - core index']
  #allocation1 [shape = 'u32[144,128]{1,0:T(1,128)}', space=vmem, size = 0x12000, scoped, tag = 'internal scratch']
  %s0 = inlined_call_operand.hbm [shape: f32[8,200], index: 0, kind: input, shape index: {}]
  %s1 = inlined_call_operand.hbm [shape: f32[200,2048], index: 1, kind: input, shape index: {}]
  %s2 = inlined_call_operand.hbm [shape: f32[1,2048], index: 2, kind: input, shape index: {}]
  %s3 = inlined_call_operand.hbm [shape: f32[2048,18432], index: 3, kind: input, shape index: {}]
  %s4 = inlined_call_operand.hbm [shape: f32[1,18432], index: 4, kind: input, shape index: {}]
  %s5 = inlined_call_operand.vmem [shape: f32[8,18432], index: 5, kind: output, shape index: {}]
  %s6 = sld [smem:[#allocation0]]
  $region73: #{generator_forward.1} parent=0
    _
  %s8 = ssub.s32 1, %s6
  %s9 = scalar_select 0, %s8, %s6
  $region1: #{generator_forward.1} parent=0
    #allocation2 [shape = 'u8[8192]{0}', space=vmem, size = 0x2000, scoped, tag = 'input window, operand 0, single buffered']
    #allocation3 [shape = 's32[2]{0}', space=sflag, size = 0x8, scoped, tag = 'scoped memory for generator_forward.1']
    #allocation4 [shape = 'u8[1638400]{0}', space=vmem, size = 0x190000, scoped, tag = 'input window, operand 1, single buffered']
    #allocation5 [shape = 's32[1]{0}', space=sflag, size = 0x4, scoped, tag = 'scoped memory for generator_forward.1']
    #allocation6 [shape = 'u8[8192]{0}', space=vmem, size = 0x2000, scoped, tag = 'input window, operand 2, single buffered']
    #allocation7 [shape = 'u8[25165824]{0}', space=vmem, size = 0x1800000, scoped, tag = 'input window, operand 3']
    #allocation8 [shape = 's32[2]{0}', space=sflag, size = 0x8, scoped, tag = 'scoped memory for generator_forward.1']
    #allocation9 [shape = 'u8[12288]{0}', space=vmem, size = 0x3000, scoped, tag = 'input window, operand 4']
    %10 = vsyncpa [#allocation3], 0
    %11 = vsyncpa [#allocation5], 0
    %12 = vsyncpa [#allocation8], 0
    %s13 = scalar_lea.sflag [#allocation8], 1
    %14 = vsyncpa %s13, 0
    loop: start=0, step=1, limit=14
    $region2: #{generator_forward.1} parent=1 // loop_pre_header
      _
    $region3: #{generator_forward.1} parent=1 // loop_header
      %s16 = sphi 0, %s20
      %p17 = scmp.ge.s32.totalorder %s16, 14
      %s24 = sphi 0, %s24
      %s26 = sphi 0, %s24
      %s27 = sphi 0, %s26
      %s41 = sphi 0, %s27
      %s45 = sphi 0, %s45
      %s47 = sphi 0, %s45
      %s48 = sphi 0, %s47
      %s62 = sphi 0, %s48
      %s66 = sphi 0, %s66
      %s68 = sphi 0, %s66
      %s69 = sphi 0, %s68
      %s83 = sphi 0, %s69
      %s89 = sphi 0, %s91
      %s92 = sphi 0, %s89
      %s93 = sphi 0, %s92
      %s109 = sphi 0, %s93
      %s115 = sphi 0, %s117
      %s118 = sphi 0, %s115
      %s119 = sphi 0, %s118
      %s135 = sphi 0, %s119
      %s141 = sphi 0, %s143
      %s144 = sphi 0, %s141
      %s145 = sphi 0, %s144
      %s161 = sphi 0, %s145
    $region4: #{generator_forward.1} parent=1 // loop_header_branch
      %19 = sbr.rel (%p17) target = $region8
    $region5: #{generator_forward.1} parent=1 // loop_body
      %s21 = ssub.s32 %s16, 1
      %s22 = ssub.s32 %s16, 2
      %s23 = sadd.s32 %s16, 1
      %s25 = sadd.s32 %s24, 1
      %p28 = scmp.eq.s32.totalorder %s16, 11
      %p29 = scmp.ne.s32.totalorder %s24, %s26
      %p30 = scmp.eq.s32.totalorder %s16, 0
      %p31 = por %p29, %p30
      %p32 = scmp.ne.s32.totalorder %s24, %s26
      %p33 = scmp.eq.s32.totalorder %s21, 11
      %p34 = por %p32, %p33
      %p35 = scmp.ne.s32.totalorder %s26, %s27
      %p36 = scmp.eq.s32.totalorder %s21, 0
      %p37 = por %p35, %p36
      %p38 = scmp.ne.s32.totalorder %s26, %s27
      %p39 = scmp.eq.s32.totalorder %s22, 11
      %p40 = por %p38, %p39
      %p42 = scmp.ne.s32.totalorder %s27, %s41
      %p43 = scmp.eq.s32.totalorder %s22, 0
      %p44 = por %p42, %p43
      %s46 = sadd.s32 %s45, 1
      %p49 = scmp.eq.s32.totalorder %s16, 11
      %p50 = scmp.ne.s32.totalorder %s45, %s47
      %p51 = scmp.eq.s32.totalorder %s16, 0
      %p52 = por %p50, %p51
      %p53 = scmp.ne.s32.totalorder %s45, %s47
      %p54 = scmp.eq.s32.totalorder %s21, 11
      %p55 = por %p53, %p54
      %p56 = scmp.ne.s32.totalorder %s47, %s48
      %p57 = scmp.eq.s32.totalorder %s21, 0
      %p58 = por %p56, %p57
      %p59 = scmp.ne.s32.totalorder %s47, %s48
      %p60 = scmp.eq.s32.totalorder %s22, 11
      %p61 = por %p59, %p60
      %p63 = scmp.ne.s32.totalorder %s48, %s62
      %p64 = scmp.eq.s32.totalorder %s22, 0
      %p65 = por %p63, %p64
      %s67 = sadd.s32 %s66, 1
      %p70 = scmp.eq.s32.totalorder %s16, 11
      %p71 = scmp.ne.s32.totalorder %s66, %s68
      %p72 = scmp.eq.s32.totalorder %s16, 0
      %p73 = por %p71, %p72
      %p74 = scmp.ne.s32.totalorder %s66, %s68
      %p75 = scmp.eq.s32.totalorder %s21, 11
      %p76 = por %p74, %p75
      %p77 = scmp.ne.s32.totalorder %s68, %s69
      %p78 = scmp.eq.s32.totalorder %s21, 0
      %p79 = por %p77, %p78
      %p80 = scmp.ne.s32.totalorder %s68, %s69
      %p81 = scmp.eq.s32.totalorder %s22, 11
      %p82 = por %p80, %p81
      %p84 = scmp.ne.s32.totalorder %s69, %s83
      %p85 = scmp.eq.s32.totalorder %s22, 0
      %p86 = por %p84, %p85
      %s87 = ssub.s32 %s16, %s23
      %p88 = scmp.eq.s32.totalorder %s87, 0
      %s90 = sadd.s32 %s89, 1
      %s91 = scalar_select %p88, %s89, %s90
      %p94 = pneg %p88
      %p95 = scmp.eq.s32.totalorder %s16, 11
      %p96 = por %p94, %p95
      %p97 = scmp.ne.s32.totalorder %s89, %s92
      %p98 = scmp.eq.s32.totalorder %s16, 0
      %p99 = por %p97, %p98
      %p100 = scmp.ne.s32.totalorder %s89, %s92
      %p101 = scmp.eq.s32.totalorder %s21, 11
      %p102 = por %p100, %p101
      %p103 = scmp.ne.s32.totalorder %s92, %s93
      %p104 = scmp.eq.s32.totalorder %s21, 0
      %p105 = por %p103, %p104
      %p106 = scmp.ne.s32.totalorder %s92, %s93
      %p107 = scmp.eq.s32.totalorder %s22, 11
      %p108 = por %p106, %p107
      %p110 = scmp.ne.s32.totalorder %s93, %s109
      %p111 = scmp.eq.s32.totalorder %s22, 0
      %p112 = por %p110, %p111
      %s113 = ssub.s32 %s16, %s23
      %p114 = scmp.eq.s32.totalorder %s113, 0
      %s116 = sadd.s32 %s115, 1
      %s117 = scalar_select %p114, %s115, %s116
      %p120 = pneg %p114
      %p121 = scmp.eq.s32.totalorder %s16, 11
      %p122 = por %p120, %p121
      %p123 = scmp.ne.s32.totalorder %s115, %s118
      %p124 = scmp.eq.s32.totalorder %s16, 0
      %p125 = por %p123, %p124
      %p126 = scmp.ne.s32.totalorder %s115, %s118
      %p127 = scmp.eq.s32.totalorder %s21, 11
      %p128 = por %p126, %p127
      %p129 = scmp.ne.s32.totalorder %s118, %s119
      %p130 = scmp.eq.s32.totalorder %s21, 0
      %p131 = por %p129, %p130
      %p132 = scmp.ne.s32.totalorder %s118, %s119
      %p133 = scmp.eq.s32.totalorder %s22, 11
      %p134 = por %p132, %p133
      %p136 = scmp.ne.s32.totalorder %s119, %s135
      %p137 = scmp.eq.s32.totalorder %s22, 0
      %p138 = por %p136, %p137
      %s139 = ssub.s32 %s16, %s23
      %p140 = scmp.eq.s32.totalorder %s139, 0
      %s142 = sadd.s32 %s141, 1
      %s143 = scalar_select %p140, %s141, %s142
      %p146 = pneg %p140
      %p147 = scmp.eq.s32.totalorder %s16, 11
      %p148 = por %p146, %p147
      %p149 = scmp.ne.s32.totalorder %s141, %s144
      %p150 = scmp.eq.s32.totalorder %s16, 0
      %p151 = por %p149, %p150
      %p152 = scmp.ne.s32.totalorder %s141, %s144
      %p153 = scmp.eq.s32.totalorder %s21, 11
      %p154 = por %p152, %p153
      %p155 = scmp.ne.s32.totalorder %s144, %s145
      %p156 = scmp.eq.s32.totalorder %s21, 0
      %p157 = por %p155, %p156
      %p158 = scmp.ne.s32.totalorder %s144, %s145
      %p159 = scmp.eq.s32.totalorder %s22, 11
      %p160 = por %p158, %p159
      %p162 = scmp.ne.s32.totalorder %s145, %s161
      %p163 = scmp.eq.s32.totalorder %s22, 0
      %p164 = por %p162, %p163
      %p165 = scmp.le.s32.totalorder 1, %s16
      %p166 = scmp.lt.s32.totalorder %s16, 13
      %p167 = pnand %p165, %p166
      %p168 = pneg %p167
      // Predicated region
      $region9: #{generator_forward.1} parent=5 // pred_check
        _
      $region10: #{generator_forward.1} parent=5 // pred_check_branch
        %170 = sbr.rel (%p167) target = $region12
      $region11: #{generator_forward.1} parent=5 // pred_region
        %s171 = ssub.s32 %s16, 1
        // Predicated region
        $region13: #{generator_forward.1} parent=11 // pred_check
          %p172 = pneg %p37
        $region14: #{generator_forward.1} parent=11 // pred_check_branch
          %174 = sbr.rel (%p172) target = $region16
        $region15: #{generator_forward.1} parent=11 // pred_region
          %s176 = ssub.s32 256, 256
          %177 = vsyncadd [#allocation3], %s176
          %s179 = sshll.u32 [#allocation2], 4
          %s180 = int_to_ptr.vmem [resolvable:$true] %s179
          %182 = dma.hbm_to_vmem [thread:$0]  %s0, 256, %s180, [#allocation3]
        $region16: #{generator_forward.1} parent=11 // pred_fallthru
          _
        // Predicated region
        $region17: #{generator_forward.1} parent=11 // pred_check
          %p183 = pneg %p58
        $region18: #{generator_forward.1} parent=11 // pred_check_branch
          %185 = sbr.rel (%p183) target = $region20
        $region19: #{generator_forward.1} parent=11 // pred_region
          %s187 = ssub.s32 51200, 51200
          %188 = vsyncadd [#allocation5], %s187
          %s189 = sshll.u32 [#allocation4], 4
          %s190 = int_to_ptr.vmem [resolvable:$true] %s189
          %195 = dma.hbm_to_vmem [thread:$0]  %s1, 51200, %s190, [#allocation5], 2048, 2048, 128
        $region20: #{generator_forward.1} parent=11 // pred_fallthru
          _
        // Predicated region
        $region21: #{generator_forward.1} parent=11 // pred_check
          %p196 = pneg %p79
        $region22: #{generator_forward.1} parent=11 // pred_check_branch
          %198 = sbr.rel (%p196) target = $region24
        $region23: #{generator_forward.1} parent=11 // pred_region
          %s200 = ssub.s32 256, 256
          %201 = vsyncadd [#allocation5], %s200
          %s203 = sshll.u32 [#allocation6], 4
          %s204 = int_to_ptr.vmem [resolvable:$true] %s203
          %206 = dma.hbm_to_vmem [thread:$0]  %s2, 256, %s204, [#allocation5]
        $region24: #{generator_forward.1} parent=11 // pred_fallthru
          _
      $region12: #{generator_forward.1} parent=5 // pred_fallthru
        _
      %p207 = scmp.lt.s32.totalorder %s16, 12
      // Predicated region
      $region25: #{generator_forward.1} parent=5 // pred_check
        %p208 = pneg %p207
      $region26: #{generator_forward.1} parent=5 // pred_check_branch
        %210 = sbr.rel (%p208) target = $region28
      $region27: #{generator_forward.1} parent=5 // pred_region
        // Predicated region
        $region29: #{generator_forward.1} parent=27 // pred_check
          %p211 = pneg %p99
        $region30: #{generator_forward.1} parent=27 // pred_check_branch
          %213 = sbr.rel (%p211) target = $region32
        $region31: #{generator_forward.1} parent=27 // pred_region
          %s214 = sand.u32 %s16, 1
          %s215 = scalar_lea.sflag [#allocation8], %s214
          %s216 = sand.u32 %s89, 1
          %s217 = smul.addr %s216, 24576
          %s218 = scalar_lea.vmem [#allocation7], %s217
          %s219 = smul.u32 12, %s16
          %s221 = ssub.s32 393216, 393216
          %222 = vsyncadd %s215, %s221
          %s223 = smul.addr %s219, 128
          %s224 = scalar_lea.hbm %s3, %s223
          %s225 = sshll.u32 %s218, 4
          %s226 = int_to_ptr.vmem [resolvable:$true] %s225
          %231 = dma.hbm_to_vmem [thread:$0]  %s224, 393216, %s226, %s215, 18432, 1536, 96
        $region32: #{generator_forward.1} parent=27 // pred_fallthru
          _
        // Predicated region
        $region33: #{generator_forward.1} parent=27 // pred_check
          %p232 = pneg %p125
        $region34: #{generator_forward.1} parent=27 // pred_check_branch
          %234 = sbr.rel (%p232) target = $region36
        $region35: #{generator_forward.1} parent=27 // pred_region
          %s235 = sand.u32 %s16, 1
          %s236 = scalar_lea.sflag [#allocation8], %s235
          %s237 = sand.u32 %s115, 1
          %s238 = smul.addr %s237, 12
          %s239 = scalar_lea.vmem [#allocation9], %s238
          %s240 = smul.u32 12, %s16
          %s242 = ssub.s32 192, 192
          %243 = vsyncadd %s236, %s242
          %s244 = smul.addr %s240, 16
          %s245 = scalar_lea.hbm %s4, %s244
          %s247 = sshll.u32 %s239, 4
          %s248 = int_to_ptr.vmem [resolvable:$true] %s247
          %250 = dma.hbm_to_vmem [thread:$0]  %s245, 192, %s248, %s236
        $region36: #{generator_forward.1} parent=27 // pred_fallthru
          _
      $region28: #{generator_forward.1} parent=5 // pred_fallthru
        _
      %p251 = scmp.le.s32.totalorder 1, %s16
      %p252 = scmp.lt.s32.totalorder %s16, 13
      %p253 = pnand %p251, %p252
      %p254 = pneg %p253
      // Predicated region
      $region37: #{generator_forward.1} parent=5 // pred_check
        _
      $region38: #{generator_forward.1} parent=5 // pred_check_branch
        %256 = sbr.rel (%p253) target = $region40
      $region39: #{generator_forward.1} parent=5 // pred_region
        %s257 = ssub.s32 %s16, 1
        // Predicated region
        $region41: #{generator_forward.1} parent=39 // pred_check
          %p258 = pneg %p37
        $region42: #{generator_forward.1} parent=39 // pred_check_branch
          %260 = sbr.rel (%p258) target = $region44
        $region43: #{generator_forward.1} parent=39 // pred_region
          %261 = dma.done [#allocation3], 256
        $region44: #{generator_forward.1} parent=39 // pred_fallthru
          _
        // Predicated region
        $region45: #{generator_forward.1} parent=39 // pred_check
          %p262 = pneg %p58
        $region46: #{generator_forward.1} parent=39 // pred_check_branch
          %264 = sbr.rel (%p262) target = $region48
        $region47: #{generator_forward.1} parent=39 // pred_region
          %265 = dma.done [#allocation5], 51200
        $region48: #{generator_forward.1} parent=39 // pred_fallthru
          _
        // Predicated region
        $region49: #{generator_forward.1} parent=39 // pred_check
          %p266 = pneg %p79
        $region50: #{generator_forward.1} parent=39 // pred_check_branch
          %268 = sbr.rel (%p266) target = $region52
        $region51: #{generator_forward.1} parent=39 // pred_region
          %269 = dma.done [#allocation5], 256
        $region52: #{generator_forward.1} parent=39 // pred_fallthru
          _
        %s270 = sand.u32 %s21, 1
        %s271 = scalar_lea.sflag [#allocation8], %s270
        %s272 = sand.u32 %s92, 1
        %s273 = smul.addr %s272, 24576
        %s274 = scalar_lea.vmem [#allocation7], %s273
        // Predicated region
        $region53: #{generator_forward.1} parent=39 // pred_check
          %p275 = pneg %p105
        $region54: #{generator_forward.1} parent=39 // pred_check_branch
          %277 = sbr.rel (%p275) target = $region56
        $region55: #{generator_forward.1} parent=39 // pred_region
          %278 = dma.done %s271, 393216
        $region56: #{generator_forward.1} parent=39 // pred_fallthru
          _
        %s279 = sand.u32 %s21, 1
        %s280 = scalar_lea.sflag [#allocation8], %s279
        %s281 = sand.u32 %s118, 1
        %s282 = smul.addr %s281, 12
        %s283 = scalar_lea.vmem [#allocation9], %s282
        // Predicated region
        $region57: #{generator_forward.1} parent=39 // pred_check
          %p284 = pneg %p131
        $region58: #{generator_forward.1} parent=39 // pred_check_branch
          %286 = sbr.rel (%p284) target = $region60
        $region59: #{generator_forward.1} parent=39 // pred_region
          %287 = dma.done %s280, 192
        $region60: #{generator_forward.1} parent=39 // pred_fallthru
          _
        %p288 = pneg %p37
        %p289 = pneg %p34
        %p290 = pneg %p58
        %p291 = pneg %p55
        %p292 = pneg %p79
        %p293 = pneg %p76
        %s294 = sand.u32 %s21, 1
        %s295 = scalar_lea.sflag [#allocation8], %s294
        %s296 = sand.u32 %s92, 1
        %s297 = smul.addr %s296, 24576
        %s298 = scalar_lea.vmem [#allocation7], %s297
        %p299 = pneg %p105
        %p300 = pneg %p102
        %s301 = sand.u32 %s21, 1
        %s302 = scalar_lea.sflag [#allocation8], %s301
        %s303 = sand.u32 %s118, 1
        %s304 = smul.addr %s303, 12
        %s305 = scalar_lea.vmem [#allocation9], %s304
        %p306 = pneg %p131
        %p307 = pneg %p128
        %p308 = pneg %p157
        %p309 = pneg %p154
        %s310 = smul.u32 12, %s21
        %p311 = scmp.lt.s32.totalorder %s310, 143
        %s312 = scalar_select %p311, %s310, 143
        %s313 = smul.addr %s312, 8
        %s314 = scalar_lea.vmem %s5, %s313
        %s315 = smul.u32 12, %s21
        %s316 = smul.u32 12, %s21
        %s317 = smul.u32 12, %s21
        %p318 = scmp.lt.s32.totalorder %s317, 143
        %s319 = scalar_select %p318, %s317, 143
        %s320 = smul.addr %s319, 8
        %s321 = scalar_lea.vmem %s5, %s320
        %s322 = smul.u32 12, %s21
        %v323 = vld [vmem:[#allocation2] sm:$0xff]
        %v324 = vld [vmem:[#allocation2 + $0x8] sm:$0xff]
        %v325 = vld [vmem:[#allocation4] sm:$0xff]
        %v326 = vld [vmem:[#allocation4 + $0x8] sm:$0xff]
        %v327 = vld [vmem:[#allocation4 + $0x10] sm:$0xff]
        %v328 = vld [vmem:[#allocation4 + $0x18] sm:$0xff]
        %v329 = vld [vmem:[#allocation4 + $0x20] sm:$0xff]
        %v330 = vld [vmem:[#allocation4 + $0x28] sm:$0xff]
        %v331 = vld [vmem:[#allocation4 + $0x30] sm:$0xff]
        %v332 = vld [vmem:[#allocation4 + $0x38] sm:$0xff]
        %v333 = vld [vmem:[#allocation4 + $0x40] sm:$0xff]
        %v334 = vld [vmem:[#allocation4 + $0x48] sm:$0xff]
        %v335 = vld [vmem:[#allocation4 + $0x50] sm:$0xff]
        %v336 = vld [vmem:[#allocation4 + $0x58] sm:$0xff]
        %v337 = vld [vmem:[#allocation4 + $0x60] sm:$0xff]
        %v338 = vld [vmem:[#allocation4 + $0x68] sm:$0xff]
        %v339 = vld [vmem:[#allocation4 + $0x70] sm:$0xff]
        %v340 = vld [vmem:[#allocation4 + $0x78] sm:$0xff]
        %v341 = vld [vmem:[#allocation4 + $0x80] sm:$0xff]
        %v342 = vld [vmem:[#allocation4 + $0x88] sm:$0xff]
        %v343 = vld [vmem:[#allocation4 + $0x90] sm:$0xff]
        %v344 = vld [vmem:[#allocation4 + $0x98] sm:$0xff]
        %v345 = vld [vmem:[#allocation4 + $0xa0] sm:$0xff]
        %v346 = vld [vmem:[#allocation4 + $0xa8] sm:$0xff]
        %v347 = vld [vmem:[#allocation4 + $0xb0] sm:$0xff]
        %v348 = vld [vmem:[#allocation4 + $0xb8] sm:$0xff]
        %v349 = vld [vmem:[#allocation4 + $0xc0] sm:$0xff]
        %v350 = vld [vmem:[#allocation4 + $0xc8] sm:$0xff]
        %v351 = vld [vmem:[#allocation4 + $0xd0] sm:$0xff]
        %v352 = vld [vmem:[#allocation4 + $0xd8] sm:$0xff]
        %v353 = vld [vmem:[#allocation4 + $0xe0] sm:$0xff]
        %v354 = vld [vmem:[#allocation4 + $0xe8] sm:$0xff]
        %v355 = vld [vmem:[#allocation4 + $0xf0] sm:$0xff]
        %v356 = vld [vmem:[#allocation4 + $0xf8] sm:$0xff]
        %v357 = vld [vmem:[#allocation4 + $0x100] sm:$0xff]
        %v358 = vld [vmem:[#allocation4 + $0x108] sm:$0xff]
        %v359 = vld [vmem:[#allocation4 + $0x110] sm:$0xff]
        %v360 = vld [vmem:[#allocation4 + $0x118] sm:$0xff]
        %v361 = vld [vmem:[#allocation4 + $0x120] sm:$0xff]
        %v362 = vld [vmem:[#allocation4 + $0x128] sm:$0xff]
        %v363 = vld [vmem:[#allocation4 + $0x130] sm:$0xff]
        %v364 = vld [vmem:[#allocation4 + $0x138] sm:$0xff]
        %v365 = vld [vmem:[#allocation4 + $0x140] sm:$0xff]
        %v366 = vld [vmem:[#allocation4 + $0x148] sm:$0xff]
        %v367 = vld [vmem:[#allocation4 + $0x150] sm:$0xff]
        %v368 = vld [vmem:[#allocation4 + $0x158] sm:$0xff]
        %v369 = vld [vmem:[#allocation4 + $0x160] sm:$0xff]
        %v370 = vld [vmem:[#allocation4 + $0x168] sm:$0xff]
        %v371 = vld [vmem:[#allocation4 + $0x170] sm:$0xff]
        %v372 = vld [vmem:[#allocation4 + $0x178] sm:$0xff]
        %v373 = vld [vmem:[#allocation4 + $0x180] sm:$0xff]
        %v374 = vld [vmem:[#allocation4 + $0x188] sm:$0xff]
        %v375 = vld [vmem:[#allocation4 + $0x190] sm:$0xff]
        %v376 = vld [vmem:[#allocation4 + $0x198] sm:$0xff]
        %v377 = vld [vmem:[#allocation4 + $0x1a0] sm:$0xff]
        %v378 = vld [vmem:[#allocation4 + $0x1a8] sm:$0xff]
        %v379 = vld [vmem:[#allocation4 + $0x1b0] sm:$0xff]
        %v380 = vld [vmem:[#allocation4 + $0x1b8] sm:$0xff]
        %v381 = vld [vmem:[#allocation4 + $0x1c0] sm:$0xff]
        %v382 = vld [vmem:[#allocation4 + $0x1c8] sm:$0xff]
        %v383 = vld [vmem:[#allocation4 + $0x1d0] sm:$0xff]
        %v384 = vld [vmem:[#allocation4 + $0x1d8] sm:$0xff]
        %v385 = vld [vmem:[#allocation4 + $0x1e0] sm:$0xff]
        %v386 = vld [vmem:[#allocation4 + $0x1e8] sm:$0xff]
        %v387 = vld [vmem:[#allocation4 + $0x1f0] sm:$0xff]
        %v388 = vld [vmem:[#allocation4 + $0x1f8] sm:$0xff]
        %v389 = vld [vmem:[#allocation4 + $0x200] sm:$0xff]
        %v390 = vld [vmem:[#allocation4 + $0x208] sm:$0xff]
        %v391 = vld [vmem:[#allocation4 + $0x210] sm:$0xff]
        %v392 = vld [vmem:[#allocation4 + $0x218] sm:$0xff]
        %v393 = vld [vmem:[#allocation4 + $0x220] sm:$0xff]
        %v394 = vld [vmem:[#allocation4 + $0x228] sm:$0xff]
        %v395 = vld [vmem:[#allocation4 + $0x230] sm:$0xff]
        %v396 = vld [vmem:[#allocation4 + $0x238] sm:$0xff]
        %v397 = vld [vmem:[#allocation4 + $0x240] sm:$0xff]
        %v398 = vld [vmem:[#allocation4 + $0x248] sm:$0xff]
        %v399 = vld [vmem:[#allocation4 + $0x250] sm:$0xff]
        %v400 = vld [vmem:[#allocation4 + $0x258] sm:$0xff]
        %v401 = vld [vmem:[#allocation4 + $0x260] sm:$0xff]
        %v402 = vld [vmem:[#allocation4 + $0x268] sm:$0xff]
        %v403 = vld [vmem:[#allocation4 + $0x270] sm:$0xff]
        %v404 = vld [vmem:[#allocation4 + $0x278] sm:$0xff]
        %v405 = vld [vmem:[#allocation4 + $0x280] sm:$0xff]
        %v406 = vld [vmem:[#allocation4 + $0x288] sm:$0xff]
        %v407 = vld [vmem:[#allocation4 + $0x290] sm:$0xff]
        %v408 = vld [vmem:[#allocation4 + $0x298] sm:$0xff]
        %v409 = vld [vmem:[#allocation4 + $0x2a0] sm:$0xff]
        %v410 = vld [vmem:[#allocation4 + $0x2a8] sm:$0xff]
        %v411 = vld [vmem:[#allocation4 + $0x2b0] sm:$0xff]
        %v412 = vld [vmem:[#allocation4 + $0x2b8] sm:$0xff]
        %v413 = vld [vmem:[#allocation4 + $0x2c0] sm:$0xff]
        %v414 = vld [vmem:[#allocation4 + $0x2c8] sm:$0xff]
        %v415 = vld [vmem:[#allocation4 + $0x2d0] sm:$0xff]
        %v416 = vld [vmem:[#allocation4 + $0x2d8] sm:$0xff]
        %v417 = vld [vmem:[#allocation4 + $0x2e0] sm:$0xff]
        %v418 = vld [vmem:[#allocation4 + $0x2e8] sm:$0xff]
        %v419 = vld [vmem:[#allocation4 + $0x2f0] sm:$0xff]
        %v420 = vld [vmem:[#allocation4 + $0x2f8] sm:$0xff]
        %v421 = vld [vmem:[#allocation4 + $0x300] sm:$0xff]
        %v422 = vld [vmem:[#allocation4 + $0x308] sm:$0xff]
        %v423 = vld [vmem:[#allocation4 + $0x310] sm:$0xff]
        %v424 = vld [vmem:[#allocation4 + $0x318] sm:$0xff]
        %v425 = vld [vmem:[#allocation4 + $0x320] sm:$0xff]
        %v426 = vld [vmem:[#allocation4 + $0x328] sm:$0xff]
        %v427 = vld [vmem:[#allocation4 + $0x330] sm:$0xff]
        %v428 = vld [vmem:[#allocation4 + $0x338] sm:$0xff]
        %v429 = vld [vmem:[#allocation4 + $0x340] sm:$0xff]
        %v430 = vld [vmem:[#allocation4 + $0x348] sm:$0xff]
        %v431 = vld [vmem:[#allocation4 + $0x350] sm:$0xff]
        %v432 = vld [vmem:[#allocation4 + $0x358] sm:$0xff]
        %v433 = vld [vmem:[#allocation4 + $0x360] sm:$0xff]
        %v434 = vld [vmem:[#allocation4 + $0x368] sm:$0xff]
        %v435 = vld [vmem:[#allocation4 + $0x370] sm:$0xff]
        %v436 = vld [vmem:[#allocation4 + $0x378] sm:$0xff]
        %v437 = vld [vmem:[#allocation4 + $0x380] sm:$0xff]
        %v438 = vld [vmem:[#allocation4 + $0x388] sm:$0xff]
        %v439 = vld [vmem:[#allocation4 + $0x390] sm:$0xff]
        %v440 = vld [vmem:[#allocation4 + $0x398] sm:$0xff]
        %v441 = vld [vmem:[#allocation4 + $0x3a0] sm:$0xff]
        %v442 = vld [vmem:[#allocation4 + $0x3a8] sm:$0xff]
        %v443 = vld [vmem:[#allocation4 + $0x3b0] sm:$0xff]
        %v444 = vld [vmem:[#allocation4 + $0x3b8] sm:$0xff]
        %v445 = vld [vmem:[#allocation4 + $0x3c0] sm:$0xff]
        %v446 = vld [vmem:[#allocation4 + $0x3c8] sm:$0xff]
        %v447 = vld [vmem:[#allocation4 + $0x3d0] sm:$0xff]
        %v448 = vld [vmem:[#allocation4 + $0x3d8] sm:$0xff]
        %v449 = vld [vmem:[#allocation4 + $0x3e0] sm:$0xff]
        %v450 = vld [vmem:[#allocation4 + $0x3e8] sm:$0xff]
        %v451 = vld [vmem:[#allocation4 + $0x3f0] sm:$0xff]
        %v452 = vld [vmem:[#allocation4 + $0x3f8] sm:$0xff]
        %v453 = vld [vmem:[#allocation4 + $0x400] sm:$0xff]
        %v454 = vld [vmem:[#allocation4 + $0x408] sm:$0xff]
        %v455 = vld [vmem:[#allocation4 + $0x410] sm:$0xff]
        %v456 = vld [vmem:[#allocation4 + $0x418] sm:$0xff]
        %v457 = vld [vmem:[#allocation4 + $0x420] sm:$0xff]
        %v458 = vld [vmem:[#allocation4 + $0x428] sm:$0xff]
        %v459 = vld [vmem:[#allocation4 + $0x430] sm:$0xff]
        %v460 = vld [vmem:[#allocation4 + $0x438] sm:$0xff]
        %v461 = vld [vmem:[#allocation4 + $0x440] sm:$0xff]
        %v462 = vld [vmem:[#allocation4 + $0x448] sm:$0xff]
        %v463 = vld [vmem:[#allocation4 + $0x450] sm:$0xff]
        %v464 = vld [vmem:[#allocation4 + $0x458] sm:$0xff]
        %v465 = vld [vmem:[#allocation4 + $0x460] sm:$0xff]
        %v466 = vld [vmem:[#allocation4 + $0x468] sm:$0xff]
        %v467 = vld [vmem:[#allocation4 + $0x470] sm:$0xff]
        %v468 = vld [vmem:[#allocation4 + $0x478] sm:$0xff]
        %v469 = vld [vmem:[#allocation4 + $0x480] sm:$0xff]
        %v470 = vld [vmem:[#allocation4 + $0x488] sm:$0xff]
        %v471 = vld [vmem:[#allocation4 + $0x490] sm:$0xff]
        %v472 = vld [vmem:[#allocation4 + $0x498] sm:$0xff]
        %v473 = vld [vmem:[#allocation4 + $0x4a0] sm:$0xff]
        %v474 = vld [vmem:[#allocation4 + $0x4a8] sm:$0xff]
        %v475 = vld [vmem:[#allocation4 + $0x4b0] sm:$0xff]
        %v476 = vld [vmem:[#allocation4 + $0x4b8] sm:$0xff]
        %v477 = vld [vmem:[#allocation4 + $0x4c0] sm:$0xff]
        %v478 = vld [vmem:[#allocation4 + $0x4c8] sm:$0xff]
        %v479 = vld [vmem:[#allocation4 + $0x4d0] sm:$0xff]
        %v480 = vld [vmem:[#allocation4 + $0x4d8] sm:$0xff]
        %v481 = vld [vmem:[#allocation4 + $0x4e0] sm:$0xff]
        %v482 = vld [vmem:[#allocation4 + $0x4e8] sm:$0xff]
        %v483 = vld [vmem:[#allocation4 + $0x4f0] sm:$0xff]
        %v484 = vld [vmem:[#allocation4 + $0x4f8] sm:$0xff]
        %v485 = vld [vmem:[#allocation4 + $0x500] sm:$0xff]
        %v486 = vld [vmem:[#allocation4 + $0x508] sm:$0xff]
        %v487 = vld [vmem:[#allocation4 + $0x510] sm:$0xff]
        %v488 = vld [vmem:[#allocation4 + $0x518] sm:$0xff]
        %v489 = vld [vmem:[#allocation4 + $0x520] sm:$0xff]
        %v490 = vld [vmem:[#allocation4 + $0x528] sm:$0xff]
        %v491 = vld [vmem:[#allocation4 + $0x530] sm:$0xff]
        %v492 = vld [vmem:[#allocation4 + $0x538] sm:$0xff]
        %v493 = vld [vmem:[#allocation4 + $0x540] sm:$0xff]
        %v494 = vld [vmem:[#allocation4 + $0x548] sm:$0xff]
        %v495 = vld [vmem:[#allocation4 + $0x550] sm:$0xff]
        %v496 = vld [vmem:[#allocation4 + $0x558] sm:$0xff]
        %v497 = vld [vmem:[#allocation4 + $0x560] sm:$0xff]
        %v498 = vld [vmem:[#allocation4 + $0x568] sm:$0xff]
        %v499 = vld [vmem:[#allocation4 + $0x570] sm:$0xff]
        %v500 = vld [vmem:[#allocation4 + $0x578] sm:$0xff]
        %v501 = vld [vmem:[#allocation4 + $0x580] sm:$0xff]
        %v502 = vld [vmem:[#allocation4 + $0x588] sm:$0xff]
        %v503 = vld [vmem:[#allocation4 + $0x590] sm:$0xff]
        %v504 = vld [vmem:[#allocation4 + $0x598] sm:$0xff]
        %v505 = vld [vmem:[#allocation4 + $0x5a0] sm:$0xff]
        %v506 = vld [vmem:[#allocation4 + $0x5a8] sm:$0xff]
        %v507 = vld [vmem:[#allocation4 + $0x5b0] sm:$0xff]
        %v508 = vld [vmem:[#allocation4 + $0x5b8] sm:$0xff]
        %v509 = vld [vmem:[#allocation4 + $0x5c0] sm:$0xff]
        %v510 = vld [vmem:[#allocation4 + $0x5c8] sm:$0xff]
        %v511 = vld [vmem:[#allocation4 + $0x5d0] sm:$0xff]
        %v512 = vld [vmem:[#allocation4 + $0x5d8] sm:$0xff]
        %v513 = vld [vmem:[#allocation4 + $0x5e0] sm:$0xff]
        %v514 = vld [vmem:[#allocation4 + $0x5e8] sm:$0xff]
        %v515 = vld [vmem:[#allocation4 + $0x5f0] sm:$0xff]
        %v516 = vld [vmem:[#allocation4 + $0x5f8] sm:$0xff]
        %v517 = vld [vmem:[#allocation4 + $0x600] sm:$0xff]
        %v518 = vld [vmem:[#allocation4 + $0x608] sm:$0xff]
        %v519 = vld [vmem:[#allocation4 + $0x610] sm:$0xff]
        %v520 = vld [vmem:[#allocation4 + $0x618] sm:$0xff]
        %v521 = vld [vmem:[#allocation4 + $0x620] sm:$0xff]
        %v522 = vld [vmem:[#allocation4 + $0x628] sm:$0xff]
        %v523 = vld [vmem:[#allocation4 + $0x630] sm:$0xff]
        %v524 = vld [vmem:[#allocation4 + $0x638] sm:$0xff]
        %v525 = vld [vmem:[#allocation4 + $0x640] sm:$0xff]
        %v526 = vld [vmem:[#allocation4 + $0x648] sm:$0xff]
        %v527 = vld [vmem:[#allocation4 + $0x650] sm:$0xff]
        %v528 = vld [vmem:[#allocation4 + $0x658] sm:$0xff]
        %v529 = vld [vmem:[#allocation4 + $0x660] sm:$0xff]
        %v530 = vld [vmem:[#allocation4 + $0x668] sm:$0xff]
        %v531 = vld [vmem:[#allocation4 + $0x670] sm:$0xff]
        %v532 = vld [vmem:[#allocation4 + $0x678] sm:$0xff]
        %v533 = vld [vmem:[#allocation4 + $0x680] sm:$0xff]
        %v534 = vld [vmem:[#allocation4 + $0x688] sm:$0xff]
        %v535 = vld [vmem:[#allocation4 + $0x690] sm:$0xff]
        %v536 = vld [vmem:[#allocation4 + $0x698] sm:$0xff]
        %v537 = vld [vmem:[#allocation4 + $0x6a0] sm:$0xff]
        %v538 = vld [vmem:[#allocation4 + $0x6a8] sm:$0xff]
        %v539 = vld [vmem:[#allocation4 + $0x6b0] sm:$0xff]
        %v540 = vld [vmem:[#allocation4 + $0x6b8] sm:$0xff]
        %v541 = vld [vmem:[#allocation4 + $0x6c0] sm:$0xff]
        %v542 = vld [vmem:[#allocation4 + $0x6c8] sm:$0xff]
        %v543 = vld [vmem:[#allocation4 + $0x6d0] sm:$0xff]
        %v544 = vld [vmem:[#allocation4 + $0x6d8] sm:$0xff]
        %v545 = vld [vmem:[#allocation4 + $0x6e0] sm:$0xff]
        %v546 = vld [vmem:[#allocation4 + $0x6e8] sm:$0xff]
        %v547 = vld [vmem:[#allocation4 + $0x6f0] sm:$0xff]
        %v548 = vld [vmem:[#allocation4 + $0x6f8] sm:$0xff]
        %v549 = vld [vmem:[#allocation4 + $0x700] sm:$0xff]
        %v550 = vld [vmem:[#allocation4 + $0x708] sm:$0xff]
        %v551 = vld [vmem:[#allocation4 + $0x710] sm:$0xff]
        %v552 = vld [vmem:[#allocation4 + $0x718] sm:$0xff]
        %v553 = vld [vmem:[#allocation4 + $0x720] sm:$0xff]
        %v554 = vld [vmem:[#allocation4 + $0x728] sm:$0xff]
        %v555 = vld [vmem:[#allocation4 + $0x730] sm:$0xff]
        %v556 = vld [vmem:[#allocation4 + $0x738] sm:$0xff]
        %v557 = vld [vmem:[#allocation4 + $0x740] sm:$0xff]
        %v558 = vld [vmem:[#allocation4 + $0x748] sm:$0xff]
        %v559 = vld [vmem:[#allocation4 + $0x750] sm:$0xff]
        %v560 = vld [vmem:[#allocation4 + $0x758] sm:$0xff]
        %v561 = vld [vmem:[#allocation4 + $0x760] sm:$0xff]
        %v562 = vld [vmem:[#allocation4 + $0x768] sm:$0xff]
        %v563 = vld [vmem:[#allocation4 + $0x770] sm:$0xff]
        %v564 = vld [vmem:[#allocation4 + $0x778] sm:$0xff]
        %v565 = vld [vmem:[#allocation4 + $0x780] sm:$0xff]
        %v566 = vld [vmem:[#allocation4 + $0x788] sm:$0xff]
        %v567 = vld [vmem:[#allocation4 + $0x790] sm:$0xff]
        %v568 = vld [vmem:[#allocation4 + $0x798] sm:$0xff]
        %v569 = vld [vmem:[#allocation4 + $0x7a0] sm:$0xff]
        %v570 = vld [vmem:[#allocation4 + $0x7a8] sm:$0xff]
        %v571 = vld [vmem:[#allocation4 + $0x7b0] sm:$0xff]
        %v572 = vld [vmem:[#allocation4 + $0x7b8] sm:$0xff]
        %v573 = vld [vmem:[#allocation4 + $0x7c0] sm:$0xff]
        %v574 = vld [vmem:[#allocation4 + $0x7c8] sm:$0xff]
        %v575 = vld [vmem:[#allocation4 + $0x7d0] sm:$0xff]
        %v576 = vld [vmem:[#allocation4 + $0x7d8] sm:$0xff]
        %v577 = vld [vmem:[#allocation4 + $0x7e0] sm:$0xff]
        %v578 = vld [vmem:[#allocation4 + $0x7e8] sm:$0xff]
        %v579 = vld [vmem:[#allocation4 + $0x7f0] sm:$0xff]
        %v580 = vld [vmem:[#allocation4 + $0x7f8] sm:$0xff]
        %v581 = vld [vmem:[#allocation4 + $0x800] sm:$0xff]
        %v582 = vld [vmem:[#allocation4 + $0x808] sm:$0xff]
        %v583 = vld [vmem:[#allocation4 + $0x810] sm:$0xff]
        %v584 = vld [vmem:[#allocation4 + $0x818] sm:$0xff]
        %v585 = vld [vmem:[#allocation4 + $0x820] sm:$0xff]
        %v586 = vld [vmem:[#allocation4 + $0x828] sm:$0xff]
        %v587 = vld [vmem:[#allocation4 + $0x830] sm:$0xff]
        %v588 = vld [vmem:[#allocation4 + $0x838] sm:$0xff]
        %v589 = vld [vmem:[#allocation4 + $0x840] sm:$0xff]
        %v590 = vld [vmem:[#allocation4 + $0x848] sm:$0xff]
        %v591 = vld [vmem:[#allocation4 + $0x850] sm:$0xff]
        %v592 = vld [vmem:[#allocation4 + $0x858] sm:$0xff]
        %v593 = vld [vmem:[#allocation4 + $0x860] sm:$0xff]
        %v594 = vld [vmem:[#allocation4 + $0x868] sm:$0xff]
        %v595 = vld [vmem:[#allocation4 + $0x870] sm:$0xff]
        %v596 = vld [vmem:[#allocation4 + $0x878] sm:$0xff]
        %v597 = vld [vmem:[#allocation4 + $0x880] sm:$0xff]
        %v598 = vld [vmem:[#allocation4 + $0x888] sm:$0xff]
        %v599 = vld [vmem:[#allocation4 + $0x890] sm:$0xff]
        %v600 = vld [vmem:[#allocation4 + $0x898] sm:$0xff]
        %v601 = vld [vmem:[#allocation4 + $0x8a0] sm:$0xff]
        %v602 = vld [vmem:[#allocation4 + $0x8a8] sm:$0xff]
        %v603 = vld [vmem:[#allocation4 + $0x8b0] sm:$0xff]
        %v604 = vld [vmem:[#allocation4 + $0x8b8] sm:$0xff]
        %v605 = vld [vmem:[#allocation4 + $0x8c0] sm:$0xff]
        %v606 = vld [vmem:[#allocation4 + $0x8c8] sm:$0xff]
        %v607 = vld [vmem:[#allocation4 + $0x8d0] sm:$0xff]
        %v608 = vld [vmem:[#allocation4 + $0x8d8] sm:$0xff]
        %v609 = vld [vmem:[#allocation4 + $0x8e0] sm:$0xff]
        %v610 = vld [vmem:[#allocation4 + $0x8e8] sm:$0xff]
        %v611 = vld [vmem:[#allocation4 + $0x8f0] sm:$0xff]
        %v612 = vld [vmem:[#allocation4 + $0x8f8] sm:$0xff]
        %v613 = vld [vmem:[#allocation4 + $0x900] sm:$0xff]
        %v614 = vld [vmem:[#allocation4 + $0x908] sm:$0xff]
        %v615 = vld [vmem:[#allocation4 + $0x910] sm:$0xff]
        %v616 = vld [vmem:[#allocation4 + $0x918] sm:$0xff]
        %v617 = vld [vmem:[#allocation4 + $0x920] sm:$0xff]
        %v618 = vld [vmem:[#allocation4 + $0x928] sm:$0xff]
        %v619 = vld [vmem:[#allocation4 + $0x930] sm:$0xff]
        %v620 = vld [vmem:[#allocation4 + $0x938] sm:$0xff]
        %v621 = vld [vmem:[#allocation4 + $0x940] sm:$0xff]
        %v622 = vld [vmem:[#allocation4 + $0x948] sm:$0xff]
        %v623 = vld [vmem:[#allocation4 + $0x950] sm:$0xff]
        %v624 = vld [vmem:[#allocation4 + $0x958] sm:$0xff]
        %v625 = vld [vmem:[#allocation4 + $0x960] sm:$0xff]
        %v626 = vld [vmem:[#allocation4 + $0x968] sm:$0xff]
        %v627 = vld [vmem:[#allocation4 + $0x970] sm:$0xff]
        %v628 = vld [vmem:[#allocation4 + $0x978] sm:$0xff]
        %v629 = vld [vmem:[#allocation4 + $0x980] sm:$0xff]
        %v630 = vld [vmem:[#allocation4 + $0x988] sm:$0xff]
        %v631 = vld [vmem:[#allocation4 + $0x990] sm:$0xff]
        %v632 = vld [vmem:[#allocation4 + $0x998] sm:$0xff]
        %v633 = vld [vmem:[#allocation4 + $0x9a0] sm:$0xff]
        %v634 = vld [vmem:[#allocation4 + $0x9a8] sm:$0xff]
        %v635 = vld [vmem:[#allocation4 + $0x9b0] sm:$0xff]
        %v636 = vld [vmem:[#allocation4 + $0x9b8] sm:$0xff]
        %v637 = vld [vmem:[#allocation4 + $0x9c0] sm:$0xff]
        %v638 = vld [vmem:[#allocation4 + $0x9c8] sm:$0xff]
        %v639 = vld [vmem:[#allocation4 + $0x9d0] sm:$0xff]
        %v640 = vld [vmem:[#allocation4 + $0x9d8] sm:$0xff]
        %v641 = vld [vmem:[#allocation4 + $0x9e0] sm:$0xff]
        %v642 = vld [vmem:[#allocation4 + $0x9e8] sm:$0xff]
        %v643 = vld [vmem:[#allocation4 + $0x9f0] sm:$0xff]
        %v644 = vld [vmem:[#allocation4 + $0x9f8] sm:$0xff]
        %v645 = vld [vmem:[#allocation4 + $0xa00] sm:$0xff]
        %v646 = vld [vmem:[#allocation4 + $0xa08] sm:$0xff]
        %v647 = vld [vmem:[#allocation4 + $0xa10] sm:$0xff]
        %v648 = vld [vmem:[#allocation4 + $0xa18] sm:$0xff]
        %v649 = vld [vmem:[#allocation4 + $0xa20] sm:$0xff]
        %v650 = vld [vmem:[#allocation4 + $0xa28] sm:$0xff]
        %v651 = vld [vmem:[#allocation4 + $0xa30] sm:$0xff]
        %v652 = vld [vmem:[#allocation4 + $0xa38] sm:$0xff]
        %v653 = vld [vmem:[#allocation4 + $0xa40] sm:$0xff]
        %v654 = vld [vmem:[#allocation4 + $0xa48] sm:$0xff]
        %v655 = vld [vmem:[#allocation4 + $0xa50] sm:$0xff]
        %v656 = vld [vmem:[#allocation4 + $0xa58] sm:$0xff]
        %v657 = vld [vmem:[#allocation4 + $0xa60] sm:$0xff]
        %v658 = vld [vmem:[#allocation4 + $0xa68] sm:$0xff]
        %v659 = vld [vmem:[#allocation4 + $0xa70] sm:$0xff]
        %v660 = vld [vmem:[#allocation4 + $0xa78] sm:$0xff]
        %v661 = vld [vmem:[#allocation4 + $0xa80] sm:$0xff]
        %v662 = vld [vmem:[#allocation4 + $0xa88] sm:$0xff]
        %v663 = vld [vmem:[#allocation4 + $0xa90] sm:$0xff]
        %v664 = vld [vmem:[#allocation4 + $0xa98] sm:$0xff]
        %v665 = vld [vmem:[#allocation4 + $0xaa0] sm:$0xff]
        %v666 = vld [vmem:[#allocation4 + $0xaa8] sm:$0xff]
        %v667 = vld [vmem:[#allocation4 + $0xab0] sm:$0xff]
        %v668 = vld [vmem:[#allocation4 + $0xab8] sm:$0xff]
        %v669 = vld [vmem:[#allocation4 + $0xac0] sm:$0xff]
        %v670 = vld [vmem:[#allocation4 + $0xac8] sm:$0xff]
        %v671 = vld [vmem:[#allocation4 + $0xad0] sm:$0xff]
        %v672 = vld [vmem:[#allocation4 + $0xad8] sm:$0xff]
        %v673 = vld [vmem:[#allocation4 + $0xae0] sm:$0xff]
        %v674 = vld [vmem:[#allocation4 + $0xae8] sm:$0xff]
        %v675 = vld [vmem:[#allocation4 + $0xaf0] sm:$0xff]
        %v676 = vld [vmem:[#allocation4 + $0xaf8] sm:$0xff]
        %v677 = vld [vmem:[#allocation4 + $0xb00] sm:$0xff]
        %v678 = vld [vmem:[#allocation4 + $0xb08] sm:$0xff]
        %v679 = vld [vmem:[#allocation4 + $0xb10] sm:$0xff]
        %v680 = vld [vmem:[#allocation4 + $0xb18] sm:$0xff]
        %v681 = vld [vmem:[#allocation4 + $0xb20] sm:$0xff]
        %v682 = vld [vmem:[#allocation4 + $0xb28] sm:$0xff]
        %v683 = vld [vmem:[#allocation4 + $0xb30] sm:$0xff]
        %v684 = vld [vmem:[#allocation4 + $0xb38] sm:$0xff]
        %v685 = vld [vmem:[#allocation4 + $0xb40] sm:$0xff]
        %v686 = vld [vmem:[#allocation4 + $0xb48] sm:$0xff]
        %v687 = vld [vmem:[#allocation4 + $0xb50] sm:$0xff]
        %v688 = vld [vmem:[#allocation4 + $0xb58] sm:$0xff]
        %v689 = vld [vmem:[#allocation4 + $0xb60] sm:$0xff]
        %v690 = vld [vmem:[#allocation4 + $0xb68] sm:$0xff]
        %v691 = vld [vmem:[#allocation4 + $0xb70] sm:$0xff]
        %v692 = vld [vmem:[#allocation4 + $0xb78] sm:$0xff]
        %v693 = vld [vmem:[#allocation4 + $0xb80] sm:$0xff]
        %v694 = vld [vmem:[#allocation4 + $0xb88] sm:$0xff]
        %v695 = vld [vmem:[#allocation4 + $0xb90] sm:$0xff]
        %v696 = vld [vmem:[#allocation4 + $0xb98] sm:$0xff]
        %v697 = vld [vmem:[#allocation4 + $0xba0] sm:$0xff]
        %v698 = vld [vmem:[#allocation4 + $0xba8] sm:$0xff]
        %v699 = vld [vmem:[#allocation4 + $0xbb0] sm:$0xff]
        %v700 = vld [vmem:[#allocation4 + $0xbb8] sm:$0xff]
        %v701 = vld [vmem:[#allocation4 + $0xbc0] sm:$0xff]
        %v702 = vld [vmem:[#allocation4 + $0xbc8] sm:$0xff]
        %v703 = vld [vmem:[#allocation4 + $0xbd0] sm:$0xff]
        %v704 = vld [vmem:[#allocation4 + $0xbd8] sm:$0xff]
        %v705 = vld [vmem:[#allocation4 + $0xbe0] sm:$0xff]
        %v706 = vld [vmem:[#allocation4 + $0xbe8] sm:$0xff]
        %v707 = vld [vmem:[#allocation4 + $0xbf0] sm:$0xff]
        %v708 = vld [vmem:[#allocation4 + $0xbf8] sm:$0xff]
        %v709 = vld [vmem:[#allocation4 + $0xc00] sm:$0xff]
        %v710 = vld [vmem:[#allocation4 + $0xc08] sm:$0xff]
        %v711 = vld [vmem:[#allocation4 + $0xc10] sm:$0xff]
        %v712 = vld [vmem:[#allocation4 + $0xc18] sm:$0xff]
        %v713 = vld [vmem:[#allocation4 + $0xc20] sm:$0xff]
        %v714 = vld [vmem:[#allocation4 + $0xc28] sm:$0xff]
        %v715 = vld [vmem:[#allocation4 + $0xc30] sm:$0xff]
        %v716 = vld [vmem:[#allocation4 + $0xc38] sm:$0xff]
        %v717 = vld [vmem:[#allocation4 + $0xc40] sm:$0xff]
        %v718 = vld [vmem:[#allocation4 + $0xc48] sm:$0xff]
        %v719 = vld [vmem:[#allocation4 + $0xc50] sm:$0xff]
        %v720 = vld [vmem:[#allocation4 + $0xc58] sm:$0xff]
        %v721 = vld [vmem:[#allocation4 + $0xc60] sm:$0xff]
        %v722 = vld [vmem:[#allocation4 + $0xc68] sm:$0xff]
        %v723 = vld [vmem:[#allocation4 + $0xc70] sm:$0xff]
        %v724 = vld [vmem:[#allocation4 + $0xc78] sm:$0xff]
        %v725 = vld [vmem:[#allocation6] sm:$0xff]
        %v726 = vld [vmem:[#allocation6 + $0x8] sm:$0xff]
        %v729 = vlaneseq
        %v730 = vshrl.u32 %v729, 7
        %v731 = vsub.s32 0, %v730
        %v732 = vrot.slane %v725, %v731
        %v733 = vlaneseq
        %v734 = vshrl.u32 %v733, 7
        %v735 = vsub.s32 1, %v734
        %v736 = vrot.slane %v725, %v735
        %v737 = vlaneseq
        %v738 = vshrl.u32 %v737, 7
        %v739 = vsub.s32 2, %v738
        %v740 = vrot.slane %v725, %v739
        %v741 = vlaneseq
        %v742 = vshrl.u32 %v741, 7
        %v743 = vsub.s32 3, %v742
        %v744 = vrot.slane %v725, %v743
        %v745 = vlaneseq
        %v746 = vshrl.u32 %v745, 7
        %v747 = vsub.s32 4, %v746
        %v748 = vrot.slane %v725, %v747
        %v749 = vlaneseq
        %v750 = vshrl.u32 %v749, 7
        %v751 = vsub.s32 5, %v750
        %v752 = vrot.slane %v725, %v751
        %v753 = vlaneseq
        %v754 = vshrl.u32 %v753, 7
        %v755 = vsub.s32 6, %v754
        %v756 = vrot.slane %v725, %v755
        %v757 = vlaneseq
        %v758 = vshrl.u32 %v757, 7
        %v759 = vsub.s32 7, %v758
        %v760 = vrot.slane %v725, %v759
        %v761 = vlaneseq
        %v762 = vshrl.u32 %v761, 7
        %v763 = vsub.s32 0, %v762
        %v764 = vrot.slane %v726, %v763
        %v765 = vlaneseq
        %v766 = vshrl.u32 %v765, 7
        %v767 = vsub.s32 1, %v766
        %v768 = vrot.slane %v726, %v767
        %v769 = vlaneseq
        %v770 = vshrl.u32 %v769, 7
        %v771 = vsub.s32 2, %v770
        %v772 = vrot.slane %v726, %v771
        %v773 = vlaneseq
        %v774 = vshrl.u32 %v773, 7
        %v775 = vsub.s32 3, %v774
        %v776 = vrot.slane %v726, %v775
        %v777 = vlaneseq
        %v778 = vshrl.u32 %v777, 7
        %v779 = vsub.s32 4, %v778
        %v780 = vrot.slane %v726, %v779
        %v781 = vlaneseq
        %v782 = vshrl.u32 %v781, 7
        %v783 = vsub.s32 5, %v782
        %v784 = vrot.slane %v726, %v783
        %v785 = vlaneseq
        %v786 = vshrl.u32 %v785, 7
        %v787 = vsub.s32 6, %v786
        %v788 = vrot.slane %v726, %v787
        %v789 = vlaneseq
        %v790 = vshrl.u32 %v789, 7
        %v791 = vsub.s32 7, %v790
        %v792 = vrot.slane %v726, %v791
        %vm809 = vcmask 588800
        %v811 = vsel %vm809, %v324, 0
        %813 = vmatprep.subr.mxu0 %v326
        %814 = vmatpush1.msra.mxu0 %v325
        %815 = vmatprep.subr.mxu0 %v342
        %816 = vmatpush1.msra.mxu0 %v341
        %817 = vmatprep.subr.mxu0 %v358
        %818 = vmatpush1.msra.mxu0 %v357
        %819 = vmatprep.subr.mxu0 %v374
        %820 = vmatpush1.msra.mxu0 %v373
        %821 = vmatprep.subr.mxu0 %v390
        %822 = vmatpush1.msra.mxu0 %v389
        %823 = vmatprep.subr.mxu0 %v406
        %824 = vmatpush1.msra.mxu0 %v405
        %825 = vmatprep.subr.mxu0 %v422
        %826 = vmatpush1.msra.mxu0 %v421
        %827 = vmatprep.subr.mxu0 %v438
        %828 = vmatpush1.msra.mxu0 %v437
        %829 = vmatprep.subr.mxu0 %v454
        %830 = vmatpush1.msra.mxu0 %v453
        %831 = vmatprep.subr.mxu0 %v470
        %832 = vmatpush1.msra.mxu0 %v469
        %833 = vmatprep.subr.mxu0 %v486
        %834 = vmatpush1.msra.mxu0 %v485
        %835 = vmatprep.subr.mxu0 %v502
        %836 = vmatpush1.msra.mxu0 %v501
        %837 = vmatprep.subr.mxu0 %v518
        %838 = vmatpush1.msra.mxu0 %v517
        %839 = vmatprep.subr.mxu0 %v534
        %840 = vmatpush1.msra.mxu0 %v533
        %841 = vmatprep.subr.mxu0 %v550
        %842 = vmatpush1.msra.mxu0 %v549
        %843 = vmatprep.subr.mxu0 %v566
        %844 = vmatpush1.msra.mxu0 %v565
        %845 = vmatprep.subr.mxu0 %v582
        %846 = vmatpush1.msra.mxu0 %v581
        %847 = vmatprep.subr.mxu0 %v598
        %848 = vmatpush1.msra.mxu0 %v597
        %849 = vmatprep.subr.mxu0 %v614
        %850 = vmatpush1.msra.mxu0 %v613
        %851 = vmatprep.subr.mxu0 %v630
        %852 = vmatpush1.msra.mxu0 %v629
        %853 = vmatprep.subr.mxu0 %v646
        %854 = vmatpush1.msra.mxu0 %v645
        %855 = vmatprep.subr.mxu0 %v662
        %856 = vmatpush1.msra.mxu0 %v661
        %857 = vmatprep.subr.mxu0 %v678
        %858 = vmatpush1.msra.mxu0 %v677
        %859 = vmatprep.subr.mxu0 %v694
        %860 = vmatpush1.msra.mxu0 %v693
        %861 = vmatprep.subr.mxu0 %v710
        %862 = vmatpush1.msra.mxu0 %v709
        %863 = vmatprep.subr.mxu0 0.0
        %864 = vmatpush1.msra.mxu0 0.0
        %865 = vmatprep.subr.mxu0 0.0
        %866 = vmatpush1.msra.mxu0 0.0
        %867 = vmatprep.subr.mxu0 0.0
        %868 = vmatpush1.msra.mxu0 0.0
        %869 = vmatprep.subr.mxu0 0.0
        %870 = vmatpush1.msra.mxu0 0.0
        %871 = vmatprep.subr.mxu0 0.0
        %872 = vmatpush1.msra.mxu0 0.0
        %873 = vmatprep.subr.mxu0 0.0
        %874 = vmatpush1.msra.mxu0 0.0
        %875 = vmatprep.subr.mxu0 0.0
        %876 = vmatpush1.msra.mxu0 0.0
        %877 = vmatprep.mubr.f32.mxu0 %v811
        %878 = vmatmul.mubr.f32.gmra.mrb[0].mxu0 %v323
        %v879 = vpop.f32.mrb[0].mxu0
        %v880 = vadd.f32 %v732, %v879
        %v881 = vpop.f32.mrb[0].mxu0
        %v882 = vadd.f32 %v736, %v881
        %883 = vdwg.mxu0
        %884 = vmatprep.subr.mxu0 %v328
        %885 = vmatpush1.msra.mxu0 %v327
        %886 = vmatprep.subr.mxu0 %v344
        %887 = vmatpush1.msra.mxu0 %v343
        %888 = vmatprep.subr.mxu0 %v360
        %889 = vmatpush1.msra.mxu0 %v359
        %890 = vmatprep.subr.mxu0 %v376
        %891 = vmatpush1.msra.mxu0 %v375
        %892 = vmatprep.subr.mxu0 %v392
        %893 = vmatpush1.msra.mxu0 %v391
        %894 = vmatprep.subr.mxu0 %v408
        %895 = vmatpush1.msra.mxu0 %v407
        %896 = vmatprep.subr.mxu0 %v424
        %897 = vmatpush1.msra.mxu0 %v423
        %898 = vmatprep.subr.mxu0 %v440
        %899 = vmatpush1.msra.mxu0 %v439
        %900 = vmatprep.subr.mxu0 %v456
        %901 = vmatpush1.msra.mxu0 %v455
        %902 = vmatprep.subr.mxu0 %v472
        %903 = vmatpush1.msra.mxu0 %v471
        %904 = vmatprep.subr.mxu0 %v488
        %905 = vmatpush1.msra.mxu0 %v487
        %906 = vmatprep.subr.mxu0 %v504
        %907 = vmatpush1.msra.mxu0 %v503
        %908 = vmatprep.subr.mxu0 %v520
        %909 = vmatpush1.msra.mxu0 %v519
        %910 = vmatprep.subr.mxu0 %v536
        %911 = vmatpush1.msra.mxu0 %v535
        %912 = vmatprep.subr.mxu0 %v552
        %913 = vmatpush1.msra.mxu0 %v551
        %914 = vmatprep.subr.mxu0 %v568
        %915 = vmatpush1.msra.mxu0 %v567
        %916 = vmatprep.subr.mxu0 %v584
        %917 = vmatpush1.msra.mxu0 %v583
        %918 = vmatprep.subr.mxu0 %v600
        %919 = vmatpush1.msra.mxu0 %v599
        %920 = vmatprep.subr.mxu0 %v616
        %921 = vmatpush1.msra.mxu0 %v615
        %922 = vmatprep.subr.mxu0 %v632
        %923 = vmatpush1.msra.mxu0 %v631
        %924 = vmatprep.subr.mxu0 %v648
        %925 = vmatpush1.msra.mxu0 %v647
        %926 = vmatprep.subr.mxu0 %v664
        %927 = vmatpush1.msra.mxu0 %v663
        %928 = vmatprep.subr.mxu0 %v680
        %929 = vmatpush1.msra.mxu0 %v679
        %930 = vmatprep.subr.mxu0 %v696
        %931 = vmatpush1.msra.mxu0 %v695
        %932 = vmatprep.subr.mxu0 %v712
        %933 = vmatpush1.msra.mxu0 %v711
        %934 = vmatprep.subr.mxu0 0.0
        %935 = vmatpush1.msra.mxu0 0.0
        %936 = vmatprep.subr.mxu0 0.0
        %937 = vmatpush1.msra.mxu0 0.0
        %938 = vmatprep.subr.mxu0 0.0
        %939 = vmatpush1.msra.mxu0 0.0
        %940 = vmatprep.subr.mxu0 0.0
        %941 = vmatpush1.msra.mxu0 0.0
        %942 = vmatprep.subr.mxu0 0.0
        %943 = vmatpush1.msra.mxu0 0.0
        %944 = vmatprep.subr.mxu0 0.0
        %945 = vmatpush1.msra.mxu0 0.0
        %946 = vmatprep.subr.mxu0 0.0
        %947 = vmatpush1.msra.mxu0 0.0
        %948 = vmatprep.mubr.f32.mxu0 %v811
        %949 = vmatmul.mubr.f32.gmra.mrb[0].mxu0 %v323
        %v950 = vpop.f32.mrb[0].mxu0
        %v951 = vadd.f32 %v740, %v950
        %v952 = vpop.f32.mrb[0].mxu0
        %v953 = vadd.f32 %v744, %v952
        %954 = vdwg.mxu0
        %955 = vmatprep.subr.mxu0 %v330
        %956 = vmatpush1.msra.mxu0 %v329
        %957 = vmatprep.subr.mxu0 %v346
        %958 = vmatpush1.msra.mxu0 %v345
        %959 = vmatprep.subr.mxu0 %v362
        %960 = vmatpush1.msra.mxu0 %v361
        %961 = vmatprep.subr.mxu0 %v378
        %962 = vmatpush1.msra.mxu0 %v377
        %963 = vmatprep.subr.mxu0 %v394
        %964 = vmatpush1.msra.mxu0 %v393
        %965 = vmatprep.subr.mxu0 %v410
        %966 = vmatpush1.msra.mxu0 %v409
        %967 = vmatprep.subr.mxu0 %v426
        %968 = vmatpush1.msra.mxu0 %v425
        %969 = vmatprep.subr.mxu0 %v442
        %970 = vmatpush1.msra.mxu0 %v441
        %971 = vmatprep.subr.mxu0 %v458
        %972 = vmatpush1.msra.mxu0 %v457
        %973 = vmatprep.subr.mxu0 %v474
        %974 = vmatpush1.msra.mxu0 %v473
        %975 = vmatprep.subr.mxu0 %v490
        %976 = vmatpush1.msra.mxu0 %v489
        %977 = vmatprep.subr.mxu0 %v506
        %978 = vmatpush1.msra.mxu0 %v505
        %979 = vmatprep.subr.mxu0 %v522
        %980 = vmatpush1.msra.mxu0 %v521
        %981 = vmatprep.subr.mxu0 %v538
        %982 = vmatpush1.msra.mxu0 %v537
        %983 = vmatprep.subr.mxu0 %v554
        %984 = vmatpush1.msra.mxu0 %v553
        %985 = vmatprep.subr.mxu0 %v570
        %986 = vmatpush1.msra.mxu0 %v569
        %987 = vmatprep.subr.mxu0 %v586
        %988 = vmatpush1.msra.mxu0 %v585
        %989 = vmatprep.subr.mxu0 %v602
        %990 = vmatpush1.msra.mxu0 %v601
        %991 = vmatprep.subr.mxu0 %v618
        %992 = vmatpush1.msra.mxu0 %v617
        %993 = vmatprep.subr.mxu0 %v634
        %994 = vmatpush1.msra.mxu0 %v633
        %995 = vmatprep.subr.mxu0 %v650
        %996 = vmatpush1.msra.mxu0 %v649
        %997 = vmatprep.subr.mxu0 %v666
        %998 = vmatpush1.msra.mxu0 %v665
        %999 = vmatprep.subr.mxu0 %v682
        %1000 = vmatpush1.msra.mxu0 %v681
        %1001 = vmatprep.subr.mxu0 %v698
        %1002 = vmatpush1.msra.mxu0 %v697
        %1003 = vmatprep.subr.mxu0 %v714
        %1004 = vmatpush1.msra.mxu0 %v713
        %1005 = vmatprep.subr.mxu0 0.0
        %1006 = vmatpush1.msra.mxu0 0.0
        %1007 = vmatprep.subr.mxu0 0.0
        %1008 = vmatpush1.msra.mxu0 0.0
        %1009 = vmatprep.subr.mxu0 0.0
        %1010 = vmatpush1.msra.mxu0 0.0
        %1011 = vmatprep.subr.mxu0 0.0
        %1012 = vmatpush1.msra.mxu0 0.0
        %1013 = vmatprep.subr.mxu0 0.0
        %1014 = vmatpush1.msra.mxu0 0.0
        %1015 = vmatprep.subr.mxu0 0.0
        %1016 = vmatpush1.msra.mxu0 0.0
        %1017 = vmatprep.subr.mxu0 0.0
        %1018 = vmatpush1.msra.mxu0 0.0
        %1019 = vmatprep.mubr.f32.mxu0 %v811
        %1020 = vmatmul.mubr.f32.gmra.mrb[0].mxu0 %v323
        %v1021 = vpop.f32.mrb[0].mxu0
        %v1022 = vadd.f32 %v748, %v1021
        %v1023 = vpop.f32.mrb[0].mxu0
        %v1024 = vadd.f32 %v752, %v1023
        %1025 = vdwg.mxu0
        %1026 = vmatprep.subr.mxu0 %v332
        %1027 = vmatpush1.msra.mxu0 %v331
        %1028 = vmatprep.subr.mxu0 %v348
        %1029 = vmatpush1.msra.mxu0 %v347
        %1030 = vmatprep.subr.mxu0 %v364
        %1031 = vmatpush1.msra.mxu0 %v363
        %1032 = vmatprep.subr.mxu0 %v380
        %1033 = vmatpush1.msra.mxu0 %v379
        %1034 = vmatprep.subr.mxu0 %v396
        %1035 = vmatpush1.msra.mxu0 %v395
        %1036 = vmatprep.subr.mxu0 %v412
        %1037 = vmatpush1.msra.mxu0 %v411
        %1038 = vmatprep.subr.mxu0 %v428
        %1039 = vmatpush1.msra.mxu0 %v427
        %1040 = vmatprep.subr.mxu0 %v444
        %1041 = vmatpush1.msra.mxu0 %v443
        %1042 = vmatprep.subr.mxu0 %v460
        %1043 = vmatpush1.msra.mxu0 %v459
        %1044 = vmatprep.subr.mxu0 %v476
        %1045 = vmatpush1.msra.mxu0 %v475
        %1046 = vmatprep.subr.mxu0 %v492
        %1047 = vmatpush1.msra.mxu0 %v491
        %1048 = vmatprep.subr.mxu0 %v508
        %1049 = vmatpush1.msra.mxu0 %v507
        %1050 = vmatprep.subr.mxu0 %v524
        %1051 = vmatpush1.msra.mxu0 %v523
        %1052 = vmatprep.subr.mxu0 %v540
        %1053 = vmatpush1.msra.mxu0 %v539
        %1054 = vmatprep.subr.mxu0 %v556
        %1055 = vmatpush1.msra.mxu0 %v555
        %1056 = vmatprep.subr.mxu0 %v572
        %1057 = vmatpush1.msra.mxu0 %v571
        %1058 = vmatprep.subr.mxu0 %v588
        %1059 = vmatpush1.msra.mxu0 %v587
        %1060 = vmatprep.subr.mxu0 %v604
        %1061 = vmatpush1.msra.mxu0 %v603
        %1062 = vmatprep.subr.mxu0 %v620
        %1063 = vmatpush1.msra.mxu0 %v619
        %1064 = vmatprep.subr.mxu0 %v636
        %1065 = vmatpush1.msra.mxu0 %v635
        %1066 = vmatprep.subr.mxu0 %v652
        %1067 = vmatpush1.msra.mxu0 %v651
        %1068 = vmatprep.subr.mxu0 %v668
        %1069 = vmatpush1.msra.mxu0 %v667
        %1070 = vmatprep.subr.mxu0 %v684
        %1071 = vmatpush1.msra.mxu0 %v683
        %1072 = vmatprep.subr.mxu0 %v700
        %1073 = vmatpush1.msra.mxu0 %v699
        %1074 = vmatprep.subr.mxu0 %v716
        %1075 = vmatpush1.msra.mxu0 %v715
        %1076 = vmatprep.subr.mxu0 0.0
        %1077 = vmatpush1.msra.mxu0 0.0
        %1078 = vmatprep.subr.mxu0 0.0
        %1079 = vmatpush1.msra.mxu0 0.0
        %1080 = vmatprep.subr.mxu0 0.0
        %1081 = vmatpush1.msra.mxu0 0.0
        %1082 = vmatprep.subr.mxu0 0.0
        %1083 = vmatpush1.msra.mxu0 0.0
        %1084 = vmatprep.subr.mxu0 0.0
        %1085 = vmatpush1.msra.mxu0 0.0
        %1086 = vmatprep.subr.mxu0 0.0
        %1087 = vmatpush1.msra.mxu0 0.0
        %1088 = vmatprep.subr.mxu0 0.0
        %1089 = vmatpush1.msra.mxu0 0.0
        %1090 = vmatprep.mubr.f32.mxu0 %v811
        %1091 = vmatmul.mubr.f32.gmra.mrb[0].mxu0 %v323
        %v1092 = vpop.f32.mrb[0].mxu0
        %v1093 = vadd.f32 %v756, %v1092
        %v1094 = vpop.f32.mrb[0].mxu0
        %v1095 = vadd.f32 %v760, %v1094
        %1096 = vdwg.mxu0
        %1097 = vmatprep.subr.mxu0 %v334
        %1098 = vmatpush1.msra.mxu0 %v333
        %1099 = vmatprep.subr.mxu0 %v350
        %1100 = vmatpush1.msra.mxu0 %v349
        %1101 = vmatprep.subr.mxu0 %v366
        %1102 = vmatpush1.msra.mxu0 %v365
        %1103 = vmatprep.subr.mxu0 %v382
        %1104 = vmatpush1.msra.mxu0 %v381
        %1105 = vmatprep.subr.mxu0 %v398
        %1106 = vmatpush1.msra.mxu0 %v397
        %1107 = vmatprep.subr.mxu0 %v414
        %1108 = vmatpush1.msra.mxu0 %v413
        %1109 = vmatprep.subr.mxu0 %v430
        %1110 = vmatpush1.msra.mxu0 %v429
        %1111 = vmatprep.subr.mxu0 %v446
        %1112 = vmatpush1.msra.mxu0 %v445
        %1113 = vmatprep.subr.mxu0 %v462
        %1114 = vmatpush1.msra.mxu0 %v461
        %1115 = vmatprep.subr.mxu0 %v478
        %1116 = vmatpush1.msra.mxu0 %v477
        %1117 = vmatprep.subr.mxu0 %v494
        %1118 = vmatpush1.msra.mxu0 %v493
        %1119 = vmatprep.subr.mxu0 %v510
        %1120 = vmatpush1.msra.mxu0 %v509
        %1121 = vmatprep.subr.mxu0 %v526
        %1122 = vmatpush1.msra.mxu0 %v525
        %1123 = vmatprep.subr.mxu0 %v542
        %1124 = vmatpush1.msra.mxu0 %v541
        %1125 = vmatprep.subr.mxu0 %v558
        %1126 = vmatpush1.msra.mxu0 %v557
        %1127 = vmatprep.subr.mxu0 %v574
        %1128 = vmatpush1.msra.mxu0 %v573
        %1129 = vmatprep.subr.mxu0 %v590
        %1130 = vmatpush1.msra.mxu0 %v589
        %1131 = vmatprep.subr.mxu0 %v606
        %1132 = vmatpush1.msra.mxu0 %v605
        %1133 = vmatprep.subr.mxu0 %v622
        %1134 = vmatpush1.msra.mxu0 %v621
        %1135 = vmatprep.subr.mxu0 %v638
        %1136 = vmatpush1.msra.mxu0 %v637
        %1137 = vmatprep.subr.mxu0 %v654
        %1138 = vmatpush1.msra.mxu0 %v653
        %1139 = vmatprep.subr.mxu0 %v670
        %1140 = vmatpush1.msra.mxu0 %v669
        %1141 = vmatprep.subr.mxu0 %v686
        %1142 = vmatpush1.msra.mxu0 %v685
        %1143 = vmatprep.subr.mxu0 %v702
        %1144 = vmatpush1.msra.mxu0 %v701
        %1145 = vmatprep.subr.mxu0 %v718
        %1146 = vmatpush1.msra.mxu0 %v717
        %1147 = vmatprep.subr.mxu0 0.0
        %1148 = vmatpush1.msra.mxu0 0.0
        %1149 = vmatprep.subr.mxu0 0.0
        %1150 = vmatpush1.msra.mxu0 0.0
        %1151 = vmatprep.subr.mxu0 0.0
        %1152 = vmatpush1.msra.mxu0 0.0
        %1153 = vmatprep.subr.mxu0 0.0
        %1154 = vmatpush1.msra.mxu0 0.0
        %1155 = vmatprep.subr.mxu0 0.0
        %1156 = vmatpush1.msra.mxu0 0.0
        %1157 = vmatprep.subr.mxu0 0.0
        %1158 = vmatpush1.msra.mxu0 0.0
        %1159 = vmatprep.subr.mxu0 0.0
        %1160 = vmatpush1.msra.mxu0 0.0
        %1161 = vmatprep.mubr.f32.mxu0 %v811
        %1162 = vmatmul.mubr.f32.gmra.mrb[0].mxu0 %v323
        %v1163 = vpop.f32.mrb[0].mxu0
        %v1164 = vadd.f32 %v764, %v1163
        %v1165 = vpop.f32.mrb[0].mxu0
        %v1166 = vadd.f32 %v768, %v1165
        %1167 = vdwg.mxu0
        %1168 = vmatprep.subr.mxu0 %v336
        %1169 = vmatpush1.msra.mxu0 %v335
        %1170 = vmatprep.subr.mxu0 %v352
        %1171 = vmatpush1.msra.mxu0 %v351
        %1172 = vmatprep.subr.mxu0 %v368
        %1173 = vmatpush1.msra.mxu0 %v367
        %1174 = vmatprep.subr.mxu0 %v384
        %1175 = vmatpush1.msra.mxu0 %v383
        %1176 = vmatprep.subr.mxu0 %v400
        %1177 = vmatpush1.msra.mxu0 %v399
        %1178 = vmatprep.subr.mxu0 %v416
        %1179 = vmatpush1.msra.mxu0 %v415
        %1180 = vmatprep.subr.mxu0 %v432
        %1181 = vmatpush1.msra.mxu0 %v431
        %1182 = vmatprep.subr.mxu0 %v448
        %1183 = vmatpush1.msra.mxu0 %v447
        %1184 = vmatprep.subr.mxu0 %v464
        %1185 = vmatpush1.msra.mxu0 %v463
        %1186 = vmatprep.subr.mxu0 %v480
        %1187 = vmatpush1.msra.mxu0 %v479
        %1188 = vmatprep.subr.mxu0 %v496
        %1189 = vmatpush1.msra.mxu0 %v495
        %1190 = vmatprep.subr.mxu0 %v512
        %1191 = vmatpush1.msra.mxu0 %v511
        %1192 = vmatprep.subr.mxu0 %v528
        %1193 = vmatpush1.msra.mxu0 %v527
        %1194 = vmatprep.subr.mxu0 %v544
        %1195 = vmatpush1.msra.mxu0 %v543
        %1196 = vmatprep.subr.mxu0 %v560
        %1197 = vmatpush1.msra.mxu0 %v559
        %1198 = vmatprep.subr.mxu0 %v576
        %1199 = vmatpush1.msra.mxu0 %v575
        %1200 = vmatprep.subr.mxu0 %v592
        %1201 = vmatpush1.msra.mxu0 %v591
        %1202 = vmatprep.subr.mxu0 %v608
        %1203 = vmatpush1.msra.mxu0 %v607
        %1204 = vmatprep.subr.mxu0 %v624
        %1205 = vmatpush1.msra.mxu0 %v623
        %1206 = vmatprep.subr.mxu0 %v640
        %1207 = vmatpush1.msra.mxu0 %v639
        %1208 = vmatprep.subr.mxu0 %v656
        %1209 = vmatpush1.msra.mxu0 %v655
        %1210 = vmatprep.subr.mxu0 %v672
        %1211 = vmatpush1.msra.mxu0 %v671
        %1212 = vmatprep.subr.mxu0 %v688
        %1213 = vmatpush1.msra.mxu0 %v687
        %1214 = vmatprep.subr.mxu0 %v704
        %1215 = vmatpush1.msra.mxu0 %v703
        %1216 = vmatprep.subr.mxu0 %v720
        %1217 = vmatpush1.msra.mxu0 %v719
        %1218 = vmatprep.subr.mxu0 0.0
        %1219 = vmatpush1.msra.mxu0 0.0
        %1220 = vmatprep.subr.mxu0 0.0
        %1221 = vmatpush1.msra.mxu0 0.0
        %1222 = vmatprep.subr.mxu0 0.0
        %1223 = vmatpush1.msra.mxu0 0.0
        %1224 = vmatprep.subr.mxu0 0.0
        %1225 = vmatpush1.msra.mxu0 0.0
        %1226 = vmatprep.subr.mxu0 0.0
        %1227 = vmatpush1.msra.mxu0 0.0
        %1228 = vmatprep.subr.mxu0 0.0
        %1229 = vmatpush1.msra.mxu0 0.0
        %1230 = vmatprep.subr.mxu0 0.0
        %1231 = vmatpush1.msra.mxu0 0.0
        %1232 = vmatprep.mubr.f32.mxu0 %v811
        %1233 = vmatmul.mubr.f32.gmra.mrb[0].mxu0 %v323
        %v1234 = vpop.f32.mrb[0].mxu0
        %v1235 = vadd.f32 %v772, %v1234
        %v1236 = vpop.f32.mrb[0].mxu0
        %v1237 = vadd.f32 %v776, %v1236
        %1238 = vdwg.mxu0
        %1239 = vmatprep.subr.mxu0 %v338
        %1240 = vmatpush1.msra.mxu0 %v337
        %1241 = vmatprep.subr.mxu0 %v354
        %1242 = vmatpush1.msra.mxu0 %v353
        %1243 = vmatprep.subr.mxu0 %v370
        %1244 = vmatpush1.msra.mxu0 %v369
        %1245 = vmatprep.subr.mxu0 %v386
        %1246 = vmatpush1.msra.mxu0 %v385
        %1247 = vmatprep.subr.mxu0 %v402
        %1248 = vmatpush1.msra.mxu0 %v401
        %1249 = vmatprep.subr.mxu0 %v418
        %1250 = vmatpush1.msra.mxu0 %v417
        %1251 = vmatprep.subr.mxu0 %v434
        %1252 = vmatpush1.msra.mxu0 %v433
        %1253 = vmatprep.subr.mxu0 %v450
        %1254 = vmatpush1.msra.mxu0 %v449
        %1255 = vmatprep.subr.mxu0 %v466
        %1256 = vmatpush1.msra.mxu0 %v465
        %1257 = vmatprep.subr.mxu0 %v482
        %1258 = vmatpush1.msra.mxu0 %v481
        %1259 = vmatprep.subr.mxu0 %v498
        %1260 = vmatpush1.msra.mxu0 %v497
        %1261 = vmatprep.subr.mxu0 %v514
        %1262 = vmatpush1.msra.mxu0 %v513
        %1263 = vmatprep.subr.mxu0 %v530
        %1264 = vmatpush1.msra.mxu0 %v529
        %1265 = vmatprep.subr.mxu0 %v546
        %1266 = vmatpush1.msra.mxu0 %v545
        %1267 = vmatprep.subr.mxu0 %v562
        %1268 = vmatpush1.msra.mxu0 %v561
        %1269 = vmatprep.subr.mxu0 %v578
        %1270 = vmatpush1.msra.mxu0 %v577
        %1271 = vmatprep.subr.mxu0 %v594
        %1272 = vmatpush1.msra.mxu0 %v593
        %1273 = vmatprep.subr.mxu0 %v610
        %1274 = vmatpush1.msra.mxu0 %v609
        %1275 = vmatprep.subr.mxu0 %v626
        %1276 = vmatpush1.msra.mxu0 %v625
        %1277 = vmatprep.subr.mxu0 %v642
        %1278 = vmatpush1.msra.mxu0 %v641
        %1279 = vmatprep.subr.mxu0 %v658
        %1280 = vmatpush1.msra.mxu0 %v657
        %1281 = vmatprep.subr.mxu0 %v674
        %1282 = vmatpush1.msra.mxu0 %v673
        %1283 = vmatprep.subr.mxu0 %v690
        %1284 = vmatpush1.msra.mxu0 %v689
        %1285 = vmatprep.subr.mxu0 %v706
        %1286 = vmatpush1.msra.mxu0 %v705
        %1287 = vmatprep.subr.mxu0 %v722
        %1288 = vmatpush1.msra.mxu0 %v721
        %1289 = vmatprep.subr.mxu0 0.0
        %1290 = vmatpush1.msra.mxu0 0.0
        %1291 = vmatprep.subr.mxu0 0.0
        %1292 = vmatpush1.msra.mxu0 0.0
        %1293 = vmatprep.subr.mxu0 0.0
        %1294 = vmatpush1.msra.mxu0 0.0
        %1295 = vmatprep.subr.mxu0 0.0
        %1296 = vmatpush1.msra.mxu0 0.0
        %1297 = vmatprep.subr.mxu0 0.0
        %1298 = vmatpush1.msra.mxu0 0.0
        %1299 = vmatprep.subr.mxu0 0.0
        %1300 = vmatpush1.msra.mxu0 0.0
        %1301 = vmatprep.subr.mxu0 0.0
        %1302 = vmatpush1.msra.mxu0 0.0
        %1303 = vmatprep.mubr.f32.mxu0 %v811
        %1304 = vmatmul.mubr.f32.gmra.mrb[0].mxu0 %v323
        %v1305 = vpop.f32.mrb[0].mxu0
        %v1306 = vadd.f32 %v780, %v1305
        %v1307 = vpop.f32.mrb[0].mxu0
        %v1308 = vadd.f32 %v784, %v1307
        %1309 = vdwg.mxu0
        %1310 = vmatprep.subr.mxu0 %v340
        %1311 = vmatpush1.msra.mxu0 %v339
        %1312 = vmatprep.subr.mxu0 %v356
        %1313 = vmatpush1.msra.mxu0 %v355
        %1314 = vmatprep.subr.mxu0 %v372
        %1315 = vmatpush1.msra.mxu0 %v371
        %1316 = vmatprep.subr.mxu0 %v388
        %1317 = vmatpush1.msra.mxu0 %v387
        %1318 = vmatprep.subr.mxu0 %v404
        %1319 = vmatpush1.msra.mxu0 %v403
        %1320 = vmatprep.subr.mxu0 %v420
        %1321 = vmatpush1.msra.mxu0 %v419
        %1322 = vmatprep.subr.mxu0 %v436
        %1323 = vmatpush1.msra.mxu0 %v435
        %1324 = vmatprep.subr.mxu0 %v452
        %1325 = vmatpush1.msra.mxu0 %v451
        %1326 = vmatprep.subr.mxu0 %v468
        %1327 = vmatpush1.msra.mxu0 %v467
        %1328 = vmatprep.subr.mxu0 %v484
        %1329 = vmatpush1.msra.mxu0 %v483
        %1330 = vmatprep.subr.mxu0 %v500
        %1331 = vmatpush1.msra.mxu0 %v499
        %1332 = vmatprep.subr.mxu0 %v516
        %1333 = vmatpush1.msra.mxu0 %v515
        %1334 = vmatprep.subr.mxu0 %v532
        %1335 = vmatpush1.msra.mxu0 %v531
        %1336 = vmatprep.subr.mxu0 %v548
        %1337 = vmatpush1.msra.mxu0 %v547
        %1338 = vmatprep.subr.mxu0 %v564
        %1339 = vmatpush1.msra.mxu0 %v563
        %1340 = vmatprep.subr.mxu0 %v580
        %1341 = vmatpush1.msra.mxu0 %v579
        %1342 = vmatprep.subr.mxu0 %v596
        %1343 = vmatpush1.msra.mxu0 %v595
        %1344 = vmatprep.subr.mxu0 %v612
        %1345 = vmatpush1.msra.mxu0 %v611
        %1346 = vmatprep.subr.mxu0 %v628
        %1347 = vmatpush1.msra.mxu0 %v627
        %1348 = vmatprep.subr.mxu0 %v644
        %1349 = vmatpush1.msra.mxu0 %v643
        %1350 = vmatprep.subr.mxu0 %v660
        %1351 = vmatpush1.msra.mxu0 %v659
        %1352 = vmatprep.subr.mxu0 %v676
        %1353 = vmatpush1.msra.mxu0 %v675
        %1354 = vmatprep.subr.mxu0 %v692
        %1355 = vmatpush1.msra.mxu0 %v691
        %1356 = vmatprep.subr.mxu0 %v708
        %1357 = vmatpush1.msra.mxu0 %v707
        %1358 = vmatprep.subr.mxu0 %v724
        %1359 = vmatpush1.msra.mxu0 %v723
        %1360 = vmatprep.subr.mxu0 0.0
        %1361 = vmatpush1.msra.mxu0 0.0
        %1362 = vmatprep.subr.mxu0 0.0
        %1363 = vmatpush1.msra.mxu0 0.0
        %1364 = vmatprep.subr.mxu0 0.0
        %1365 = vmatpush1.msra.mxu0 0.0
        %1366 = vmatprep.subr.mxu0 0.0
        %1367 = vmatpush1.msra.mxu0 0.0
        %1368 = vmatprep.subr.mxu0 0.0
        %1369 = vmatpush1.msra.mxu0 0.0
        %1370 = vmatprep.subr.mxu0 0.0
        %1371 = vmatpush1.msra.mxu0 0.0
        %1372 = vmatprep.subr.mxu0 0.0
        %1373 = vmatpush1.msra.mxu0 0.0
        %1374 = vmatprep.mubr.f32.mxu0 %v811
        %1375 = vmatmul.mubr.f32.gmra.mrb[0].mxu0 %v323
        %v1376 = vpop.f32.mrb[0].mxu0
        %v1377 = vadd.f32 %v788, %v1376
        %v1378 = vpop.f32.mrb[0].mxu0
        %v1379 = vadd.f32 %v792, %v1378
        %1380 = vdwg.mxu0
        %vm1381 = vcmp.gt.f32.partialorder %v880, 0.0
        %vm1382 = vcmp.gt.f32.partialorder %v882, 0.0
        %vm1383 = vcmp.gt.f32.partialorder %v951, 0.0
        %vm1384 = vcmp.gt.f32.partialorder %v953, 0.0
        %vm1385 = vcmp.gt.f32.partialorder %v1022, 0.0
        %vm1386 = vcmp.gt.f32.partialorder %v1024, 0.0
        %vm1387 = vcmp.gt.f32.partialorder %v1093, 0.0
        %vm1388 = vcmp.gt.f32.partialorder %v1095, 0.0
        %vm1389 = vcmp.gt.f32.partialorder %v1164, 0.0
        %vm1390 = vcmp.gt.f32.partialorder %v1166, 0.0
        %vm1391 = vcmp.gt.f32.partialorder %v1235, 0.0
        %vm1392 = vcmp.gt.f32.partialorder %v1237, 0.0
        %vm1393 = vcmp.gt.f32.partialorder %v1306, 0.0
        %vm1394 = vcmp.gt.f32.partialorder %v1308, 0.0
        %vm1395 = vcmp.gt.f32.partialorder %v1377, 0.0
        %vm1396 = vcmp.gt.f32.partialorder %v1379, 0.0
        %v1397 = vmul.f32 %v880, 0.01
        %v1398 = vmul.f32 %v882, 0.01
        %v1399 = vmul.f32 %v951, 0.01
        %v1400 = vmul.f32 %v953, 0.01
        %v1401 = vmul.f32 %v1022, 0.01
        %v1402 = vmul.f32 %v1024, 0.01
        %v1403 = vmul.f32 %v1093, 0.01
        %v1404 = vmul.f32 %v1095, 0.01
        %v1405 = vmul.f32 %v1164, 0.01
        %v1406 = vmul.f32 %v1166, 0.01
        %v1407 = vmul.f32 %v1235, 0.01
        %v1408 = vmul.f32 %v1237, 0.01
        %v1409 = vmul.f32 %v1306, 0.01
        %v1410 = vmul.f32 %v1308, 0.01
        %v1411 = vmul.f32 %v1377, 0.01
        %v1412 = vmul.f32 %v1379, 0.01
        %v1413 = vsel %vm1381, %v880, %v1397
        %v1414 = vsel %vm1382, %v882, %v1398
        %v1415 = vsel %vm1383, %v951, %v1399
        %v1416 = vsel %vm1384, %v953, %v1400
        %v1417 = vsel %vm1385, %v1022, %v1401
        %v1418 = vsel %vm1386, %v1024, %v1402
        %v1419 = vsel %vm1387, %v1093, %v1403
        %v1420 = vsel %vm1388, %v1095, %v1404
        %v1421 = vsel %vm1389, %v1164, %v1405
        %v1422 = vsel %vm1390, %v1166, %v1406
        %v1423 = vsel %vm1391, %v1235, %v1407
        %v1424 = vsel %vm1392, %v1237, %v1408
        %v1425 = vsel %vm1393, %v1306, %v1409
        %v1426 = vsel %vm1394, %v1308, %v1410
        %v1427 = vsel %vm1395, %v1377, %v1411
        %v1428 = vsel %vm1396, %v1379, %v1412
        %v1429 = vrot.slane %v1413, 4
        %v1430 = vadd.f32 %v1413, %v1429
        %v1431 = vrot.slane %v1430, 2
        %v1432 = vadd.f32 %v1430, %v1431
        %v1433 = vrot.slane %v1432, 1
        %v1434 = vadd.f32 %v1432, %v1433
        %v1435 = vrot.slane %v1414, 4
        %v1436 = vadd.f32 %v1414, %v1435
        %v1437 = vrot.slane %v1436, 2
        %v1438 = vadd.f32 %v1436, %v1437
        %v1439 = vrot.slane %v1438, 1
        %v1440 = vadd.f32 %v1438, %v1439
        %v1441 = vrot.slane %v1415, 4
        %v1442 = vadd.f32 %v1415, %v1441
        %v1443 = vrot.slane %v1442, 2
        %v1444 = vadd.f32 %v1442, %v1443
        %v1445 = vrot.slane %v1444, 1
        %v1446 = vadd.f32 %v1444, %v1445
        %v1447 = vrot.slane %v1416, 4
        %v1448 = vadd.f32 %v1416, %v1447
        %v1449 = vrot.slane %v1448, 2
        %v1450 = vadd.f32 %v1448, %v1449
        %v1451 = vrot.slane %v1450, 1
        %v1452 = vadd.f32 %v1450, %v1451
        %v1453 = vrot.slane %v1417, 4
        %v1454 = vadd.f32 %v1417, %v1453
        %v1455 = vrot.slane %v1454, 2
        %v1456 = vadd.f32 %v1454, %v1455
        %v1457 = vrot.slane %v1456, 1
        %v1458 = vadd.f32 %v1456, %v1457
        %v1459 = vrot.slane %v1418, 4
        %v1460 = vadd.f32 %v1418, %v1459
        %v1461 = vrot.slane %v1460, 2
        %v1462 = vadd.f32 %v1460, %v1461
        %v1463 = vrot.slane %v1462, 1
        %v1464 = vadd.f32 %v1462, %v1463
        %v1465 = vrot.slane %v1419, 4
        %v1466 = vadd.f32 %v1419, %v1465
        %v1467 = vrot.slane %v1466, 2
        %v1468 = vadd.f32 %v1466, %v1467
        %v1469 = vrot.slane %v1468, 1
        %v1470 = vadd.f32 %v1468, %v1469
        %v1471 = vrot.slane %v1420, 4
        %v1472 = vadd.f32 %v1420, %v1471
        %v1473 = vrot.slane %v1472, 2
        %v1474 = vadd.f32 %v1472, %v1473
        %v1475 = vrot.slane %v1474, 1
        %v1476 = vadd.f32 %v1474, %v1475
        %v1477 = vrot.slane %v1421, 4
        %v1478 = vadd.f32 %v1421, %v1477
        %v1479 = vrot.slane %v1478, 2
        %v1480 = vadd.f32 %v1478, %v1479
        %v1481 = vrot.slane %v1480, 1
        %v1482 = vadd.f32 %v1480, %v1481
        %v1483 = vrot.slane %v1422, 4
        %v1484 = vadd.f32 %v1422, %v1483
        %v1485 = vrot.slane %v1484, 2
        %v1486 = vadd.f32 %v1484, %v1485
        %v1487 = vrot.slane %v1486, 1
        %v1488 = vadd.f32 %v1486, %v1487
        %v1489 = vrot.slane %v1423, 4
        %v1490 = vadd.f32 %v1423, %v1489
        %v1491 = vrot.slane %v1490, 2
        %v1492 = vadd.f32 %v1490, %v1491
        %v1493 = vrot.slane %v1492, 1
        %v1494 = vadd.f32 %v1492, %v1493
        %v1495 = vrot.slane %v1424, 4
        %v1496 = vadd.f32 %v1424, %v1495
        %v1497 = vrot.slane %v1496, 2
        %v1498 = vadd.f32 %v1496, %v1497
        %v1499 = vrot.slane %v1498, 1
        %v1500 = vadd.f32 %v1498, %v1499
        %v1501 = vrot.slane %v1425, 4
        %v1502 = vadd.f32 %v1425, %v1501
        %v1503 = vrot.slane %v1502, 2
        %v1504 = vadd.f32 %v1502, %v1503
        %v1505 = vrot.slane %v1504, 1
        %v1506 = vadd.f32 %v1504, %v1505
        %v1507 = vrot.slane %v1426, 4
        %v1508 = vadd.f32 %v1426, %v1507
        %v1509 = vrot.slane %v1508, 2
        %v1510 = vadd.f32 %v1508, %v1509
        %v1511 = vrot.slane %v1510, 1
        %v1512 = vadd.f32 %v1510, %v1511
        %v1513 = vrot.slane %v1427, 4
        %v1514 = vadd.f32 %v1427, %v1513
        %v1515 = vrot.slane %v1514, 2
        %v1516 = vadd.f32 %v1514, %v1515
        %v1517 = vrot.slane %v1516, 1
        %v1518 = vadd.f32 %v1516, %v1517
        %v1519 = vrot.slane %v1428, 4
        %v1520 = vadd.f32 %v1428, %v1519
        %v1521 = vrot.slane %v1520, 2
        %v1522 = vadd.f32 %v1520, %v1521
        %v1523 = vrot.slane %v1522, 1
        %v1524 = vadd.f32 %v1522, %v1523
        %v1525 = vrcp.pop 8.0
        %v1526 = vmul.f32 %v1434, %v1525
        %v1527 = vmul.f32 %v1440, %v1525
        %v1528 = vmul.f32 %v1446, %v1525
        %v1529 = vmul.f32 %v1452, %v1525
        %v1530 = vmul.f32 %v1458, %v1525
        %v1531 = vmul.f32 %v1464, %v1525
        %v1532 = vmul.f32 %v1470, %v1525
        %v1533 = vmul.f32 %v1476, %v1525
        %v1534 = vmul.f32 %v1482, %v1525
        %v1535 = vmul.f32 %v1488, %v1525
        %v1536 = vmul.f32 %v1494, %v1525
        %v1537 = vmul.f32 %v1500, %v1525
        %v1538 = vmul.f32 %v1506, %v1525
        %v1539 = vmul.f32 %v1512, %v1525
        %v1540 = vmul.f32 %v1518, %v1525
        %v1541 = vmul.f32 %v1524, %v1525
        %v1542 = vsub.f32 %v1413, %v1526
        %v1543 = vsub.f32 %v1414, %v1527
        %v1544 = vsub.f32 %v1415, %v1528
        %v1545 = vsub.f32 %v1416, %v1529
        %v1546 = vsub.f32 %v1417, %v1530
        %v1547 = vsub.f32 %v1418, %v1531
        %v1548 = vsub.f32 %v1419, %v1532
        %v1549 = vsub.f32 %v1420, %v1533
        %v1550 = vsub.f32 %v1421, %v1534
        %v1551 = vsub.f32 %v1422, %v1535
        %v1552 = vsub.f32 %v1423, %v1536
        %v1553 = vsub.f32 %v1424, %v1537
        %v1554 = vsub.f32 %v1425, %v1538
        %v1555 = vsub.f32 %v1426, %v1539
        %v1556 = vsub.f32 %v1427, %v1540
        %v1557 = vsub.f32 %v1428, %v1541
        %v1558 = vmul.f32 %v1542, %v1542
        %v1559 = vmul.f32 %v1543, %v1543
        %v1560 = vmul.f32 %v1544, %v1544
        %v1561 = vmul.f32 %v1545, %v1545
        %v1562 = vmul.f32 %v1546, %v1546
        %v1563 = vmul.f32 %v1547, %v1547
        %v1564 = vmul.f32 %v1548, %v1548
        %v1565 = vmul.f32 %v1549, %v1549
        %v1566 = vmul.f32 %v1550, %v1550
        %v1567 = vmul.f32 %v1551, %v1551
        %v1568 = vmul.f32 %v1552, %v1552
        %v1569 = vmul.f32 %v1553, %v1553
        %v1570 = vmul.f32 %v1554, %v1554
        %v1571 = vmul.f32 %v1555, %v1555
        %v1572 = vmul.f32 %v1556, %v1556
        %v1573 = vmul.f32 %v1557, %v1557
        %v1574 = vrot.slane %v1558, 4
        %v1575 = vadd.f32 %v1558, %v1574
        %v1576 = vrot.slane %v1575, 2
        %v1577 = vadd.f32 %v1575, %v1576
        %v1578 = vrot.slane %v1577, 1
        %v1579 = vadd.f32 %v1577, %v1578
        %v1580 = vrot.slane %v1559, 4
        %v1581 = vadd.f32 %v1559, %v1580
        %v1582 = vrot.slane %v1581, 2
        %v1583 = vadd.f32 %v1581, %v1582
        %v1584 = vrot.slane %v1583, 1
        %v1585 = vadd.f32 %v1583, %v1584
        %v1586 = vrot.slane %v1560, 4
        %v1587 = vadd.f32 %v1560, %v1586
        %v1588 = vrot.slane %v1587, 2
        %v1589 = vadd.f32 %v1587, %v1588
        %v1590 = vrot.slane %v1589, 1
        %v1591 = vadd.f32 %v1589, %v1590
        %v1592 = vrot.slane %v1561, 4
        %v1593 = vadd.f32 %v1561, %v1592
        %v1594 = vrot.slane %v1593, 2
        %v1595 = vadd.f32 %v1593, %v1594
        %v1596 = vrot.slane %v1595, 1
        %v1597 = vadd.f32 %v1595, %v1596
        %v1598 = vrot.slane %v1562, 4
        %v1599 = vadd.f32 %v1562, %v1598
        %v1600 = vrot.slane %v1599, 2
        %v1601 = vadd.f32 %v1599, %v1600
        %v1602 = vrot.slane %v1601, 1
        %v1603 = vadd.f32 %v1601, %v1602
        %v1604 = vrot.slane %v1563, 4
        %v1605 = vadd.f32 %v1563, %v1604
        %v1606 = vrot.slane %v1605, 2
        %v1607 = vadd.f32 %v1605, %v1606
        %v1608 = vrot.slane %v1607, 1
        %v1609 = vadd.f32 %v1607, %v1608
        %v1610 = vrot.slane %v1564, 4
        %v1611 = vadd.f32 %v1564, %v1610
        %v1612 = vrot.slane %v1611, 2
        %v1613 = vadd.f32 %v1611, %v1612
        %v1614 = vrot.slane %v1613, 1
        %v1615 = vadd.f32 %v1613, %v1614
        %v1616 = vrot.slane %v1565, 4
        %v1617 = vadd.f32 %v1565, %v1616
        %v1618 = vrot.slane %v1617, 2
        %v1619 = vadd.f32 %v1617, %v1618
        %v1620 = vrot.slane %v1619, 1
        %v1621 = vadd.f32 %v1619, %v1620
        %v1622 = vrot.slane %v1566, 4
        %v1623 = vadd.f32 %v1566, %v1622
        %v1624 = vrot.slane %v1623, 2
        %v1625 = vadd.f32 %v1623, %v1624
        %v1626 = vrot.slane %v1625, 1
        %v1627 = vadd.f32 %v1625, %v1626
        %v1628 = vrot.slane %v1567, 4
        %v1629 = vadd.f32 %v1567, %v1628
        %v1630 = vrot.slane %v1629, 2
        %v1631 = vadd.f32 %v1629, %v1630
        %v1632 = vrot.slane %v1631, 1
        %v1633 = vadd.f32 %v1631, %v1632
        %v1634 = vrot.slane %v1568, 4
        %v1635 = vadd.f32 %v1568, %v1634
        %v1636 = vrot.slane %v1635, 2
        %v1637 = vadd.f32 %v1635, %v1636
        %v1638 = vrot.slane %v1637, 1
        %v1639 = vadd.f32 %v1637, %v1638
        %v1640 = vrot.slane %v1569, 4
        %v1641 = vadd.f32 %v1569, %v1640
        %v1642 = vrot.slane %v1641, 2
        %v1643 = vadd.f32 %v1641, %v1642
        %v1644 = vrot.slane %v1643, 1
        %v1645 = vadd.f32 %v1643, %v1644
        %v1646 = vrot.slane %v1570, 4
        %v1647 = vadd.f32 %v1570, %v1646
        %v1648 = vrot.slane %v1647, 2
        %v1649 = vadd.f32 %v1647, %v1648
        %v1650 = vrot.slane %v1649, 1
        %v1651 = vadd.f32 %v1649, %v1650
        %v1652 = vrot.slane %v1571, 4
        %v1653 = vadd.f32 %v1571, %v1652
        %v1654 = vrot.slane %v1653, 2
        %v1655 = vadd.f32 %v1653, %v1654
        %v1656 = vrot.slane %v1655, 1
        %v1657 = vadd.f32 %v1655, %v1656
        %v1658 = vrot.slane %v1572, 4
        %v1659 = vadd.f32 %v1572, %v1658
        %v1660 = vrot.slane %v1659, 2
        %v1661 = vadd.f32 %v1659, %v1660
        %v1662 = vrot.slane %v1661, 1
        %v1663 = vadd.f32 %v1661, %v1662
        %v1664 = vrot.slane %v1573, 4
        %v1665 = vadd.f32 %v1573, %v1664
        %v1666 = vrot.slane %v1665, 2
        %v1667 = vadd.f32 %v1665, %v1666
        %v1668 = vrot.slane %v1667, 1
        %v1669 = vadd.f32 %v1667, %v1668
        %v1670 = vmul.f32 %v1579, %v1525
        %v1671 = vmul.f32 %v1585, %v1525
        %v1672 = vmul.f32 %v1591, %v1525
        %v1673 = vmul.f32 %v1597, %v1525
        %v1674 = vmul.f32 %v1603, %v1525
        %v1675 = vmul.f32 %v1609, %v1525
        %v1676 = vmul.f32 %v1615, %v1525
        %v1677 = vmul.f32 %v1621, %v1525
        %v1678 = vmul.f32 %v1627, %v1525
        %v1679 = vmul.f32 %v1633, %v1525
        %v1680 = vmul.f32 %v1639, %v1525
        %v1681 = vmul.f32 %v1645, %v1525
        %v1682 = vmul.f32 %v1651, %v1525
        %v1683 = vmul.f32 %v1657, %v1525
        %v1684 = vmul.f32 %v1663, %v1525
        %v1685 = vmul.f32 %v1669, %v1525
        %v1686 = vadd.f32 %v1670, 1e-05
        %v1687 = vadd.f32 %v1671, 1e-05
        %v1688 = vadd.f32 %v1672, 1e-05
        %v1689 = vadd.f32 %v1673, 1e-05
        %v1690 = vadd.f32 %v1674, 1e-05
        %v1691 = vadd.f32 %v1675, 1e-05
        %v1692 = vadd.f32 %v1676, 1e-05
        %v1693 = vadd.f32 %v1677, 1e-05
        %v1694 = vadd.f32 %v1678, 1e-05
        %v1695 = vadd.f32 %v1679, 1e-05
        %v1696 = vadd.f32 %v1680, 1e-05
        %v1697 = vadd.f32 %v1681, 1e-05
        %v1698 = vadd.f32 %v1682, 1e-05
        %v1699 = vadd.f32 %v1683, 1e-05
        %v1700 = vadd.f32 %v1684, 1e-05
        %v1701 = vadd.f32 %v1685, 1e-05
        %v1702 = vrsqrt.pop %v1686
        %v1703 = vrsqrt.pop %v1687
        %v1704 = vrsqrt.pop %v1688
        %v1705 = vrsqrt.pop %v1689
        %v1706 = vrsqrt.pop %v1690
        %v1707 = vrsqrt.pop %v1691
        %v1708 = vrsqrt.pop %v1692
        %v1709 = vrsqrt.pop %v1693
        %v1710 = vrsqrt.pop %v1694
        %v1711 = vrsqrt.pop %v1695
        %v1712 = vrsqrt.pop %v1696
        %v1713 = vrsqrt.pop %v1697
        %v1714 = vrsqrt.pop %v1698
        %v1715 = vrsqrt.pop %v1699
        %v1716 = vrsqrt.pop %v1700
        %v1717 = vrsqrt.pop %v1701
        %v1718 = vmul.f32 %v1542, %v1702
        %v1719 = vmul.f32 %v1543, %v1703
        %v1720 = vmul.f32 %v1544, %v1704
        %v1721 = vmul.f32 %v1545, %v1705
        %v1722 = vmul.f32 %v1546, %v1706
        %v1723 = vmul.f32 %v1547, %v1707
        %v1724 = vmul.f32 %v1548, %v1708
        %v1725 = vmul.f32 %v1549, %v1709
        %v1726 = vmul.f32 %v1550, %v1710
        %v1727 = vmul.f32 %v1551, %v1711
        %v1728 = vmul.f32 %v1552, %v1712
        %v1729 = vmul.f32 %v1553, %v1713
        %v1730 = vmul.f32 %v1554, %v1714
        %v1731 = vmul.f32 %v1555, %v1715
        %v1732 = vmul.f32 %v1556, %v1716
        %v1733 = vmul.f32 %v1557, %v1717
        %v1734 = vld [vmem:[%s274] sm:$0xff]
        %v1735 = vld [vmem:[%s274 + $0x8] sm:$0xff]
        %v1736 = vld [vmem:[%s274 + $0x10] sm:$0xff]
        %v1737 = vld [vmem:[%s274 + $0x18] sm:$0xff]
        %v1738 = vld [vmem:[%s274 + $0x20] sm:$0xff]
        %v1739 = vld [vmem:[%s274 + $0x28] sm:$0xff]
        %v1740 = vld [vmem:[%s274 + $0x30] sm:$0xff]
        %v1741 = vld [vmem:[%s274 + $0x38] sm:$0xff]
        %v1742 = vld [vmem:[%s274 + $0x40] sm:$0xff]
        %v1743 = vld [vmem:[%s274 + $0x48] sm:$0xff]
        %v1744 = vld [vmem:[%s274 + $0x50] sm:$0xff]
        %v1745 = vld [vmem:[%s274 + $0x58] sm:$0xff]
        %v1746 = vld [vmem:[%s274 + $0x60] sm:$0xff]
        %v1747 = vld [vmem:[%s274 + $0x68] sm:$0xff]
        %v1748 = vld [vmem:[%s274 + $0x70] sm:$0xff]
        %v1749 = vld [vmem:[%s274 + $0x78] sm:$0xff]
        %v1750 = vld [vmem:[%s274 + $0x80] sm:$0xff]
        %v1751 = vld [vmem:[%s274 + $0x88] sm:$0xff]
        %v1752 = vld [vmem:[%s274 + $0x90] sm:$0xff]
        %v1753 = vld [vmem:[%s274 + $0x98] sm:$0xff]
        %v1754 = vld [vmem:[%s274 + $0xa0] sm:$0xff]
        %v1755 = vld [vmem:[%s274 + $0xa8] sm:$0xff]
        %v1756 = vld [vmem:[%s274 + $0xb0] sm:$0xff]
        %v1757 = vld [vmem:[%s274 + $0xb8] sm:$0xff]
        %v1758 = vld [vmem:[%s274 + $0xc0] sm:$0xff]
        %v1759 = vld [vmem:[%s274 + $0xc8] sm:$0xff]
        %v1760 = vld [vmem:[%s274 + $0xd0] sm:$0xff]
        %v1761 = vld [vmem:[%s274 + $0xd8] sm:$0xff]
        %v1762 = vld [vmem:[%s274 + $0xe0] sm:$0xff]
        %v1763 = vld [vmem:[%s274 + $0xe8] sm:$0xff]
        %v1764 = vld [vmem:[%s274 + $0xf0] sm:$0xff]
        %v1765 = vld [vmem:[%s274 + $0xf8] sm:$0xff]
        %v1766 = vld [vmem:[%s274 + $0x100] sm:$0xff]
        %v1767 = vld [vmem:[%s274 + $0x108] sm:$0xff]
        %v1768 = vld [vmem:[%s274 + $0x110] sm:$0xff]
        %v1769 = vld [vmem:[%s274 + $0x118] sm:$0xff]
        %v1770 = vld [vmem:[%s274 + $0x120] sm:$0xff]
        %v1771 = vld [vmem:[%s274 + $0x128] sm:$0xff]
        %v1772 = vld [vmem:[%s274 + $0x130] sm:$0xff]
        %v1773 = vld [vmem:[%s274 + $0x138] sm:$0xff]
        %v1774 = vld [vmem:[%s274 + $0x140] sm:$0xff]
        %v1775 = vld [vmem:[%s274 + $0x148] sm:$0xff]
        %v1776 = vld [vmem:[%s274 + $0x150] sm:$0xff]
        %v1777 = vld [vmem:[%s274 + $0x158] sm:$0xff]
        %v1778 = vld [vmem:[%s274 + $0x160] sm:$0xff]
        %v1779 = vld [vmem:[%s274 + $0x168] sm:$0xff]
        %v1780 = vld [vmem:[%s274 + $0x170] sm:$0xff]
        %v1781 = vld [vmem:[%s274 + $0x178] sm:$0xff]
        %v1782 = vld [vmem:[%s274 + $0x180] sm:$0xff]
        %v1783 = vld [vmem:[%s274 + $0x188] sm:$0xff]
        %v1784 = vld [vmem:[%s274 + $0x190] sm:$0xff]
        %v1785 = vld [vmem:[%s274 + $0x198] sm:$0xff]
        %v1786 = vld [vmem:[%s274 + $0x1a0] sm:$0xff]
        %v1787 = vld [vmem:[%s274 + $0x1a8] sm:$0xff]
        %v1788 = vld [vmem:[%s274 + $0x1b0] sm:$0xff]
        %v1789 = vld [vmem:[%s274 + $0x1b8] sm:$0xff]
        %v1790 = vld [vmem:[%s274 + $0x1c0] sm:$0xff]
        %v1791 = vld [vmem:[%s274 + $0x1c8] sm:$0xff]
        %v1792 = vld [vmem:[%s274 + $0x1d0] sm:$0xff]
        %v1793 = vld [vmem:[%s274 + $0x1d8] sm:$0xff]
        %v1794 = vld [vmem:[%s274 + $0x1e0] sm:$0xff]
        %v1795 = vld [vmem:[%s274 + $0x1e8] sm:$0xff]
        %v1796 = vld [vmem:[%s274 + $0x1f0] sm:$0xff]
        %v1797 = vld [vmem:[%s274 + $0x1f8] sm:$0xff]
        %v1798 = vld [vmem:[%s274 + $0x200] sm:$0xff]
        %v1799 = vld [vmem:[%s274 + $0x208] sm:$0xff]
        %v1800 = vld [vmem:[%s274 + $0x210] sm:$0xff]
        %v1801 = vld [vmem:[%s274 + $0x218] sm:$0xff]
        %v1802 = vld [vmem:[%s274 + $0x220] sm:$0xff]
        %v1803 = vld [vmem:[%s274 + $0x228] sm:$0xff]
        %v1804 = vld [vmem:[%s274 + $0x230] sm:$0xff]
        %v1805 = vld [vmem:[%s274 + $0x238] sm:$0xff]
        %v1806 = vld [vmem:[%s274 + $0x240] sm:$0xff]
        %v1807 = vld [vmem:[%s274 + $0x248] sm:$0xff]
        %v1808 = vld [vmem:[%s274 + $0x250] sm:$0xff]
        %v1809 = vld [vmem:[%s274 + $0x258] sm:$0xff]
        %v1810 = vld [vmem:[%s274 + $0x260] sm:$0xff]
        %v1811 = vld [vmem:[%s274 + $0x268] sm:$0xff]
        %v1812 = vld [vmem:[%s274 + $0x270] sm:$0xff]
        %v1813 = vld [vmem:[%s274 + $0x278] sm:$0xff]
        %v1814 = vld [vmem:[%s274 + $0x280] sm:$0xff]
        %v1815 = vld [vmem:[%s274 + $0x288] sm:$0xff]
        %v1816 = vld [vmem:[%s274 + $0x290] sm:$0xff]
        %v1817 = vld [vmem:[%s274 + $0x298] sm:$0xff]
        %v1818 = vld [vmem:[%s274 + $0x2a0] sm:$0xff]
        %v1819 = vld [vmem:[%s274 + $0x2a8] sm:$0xff]
        %v1820 = vld [vmem:[%s274 + $0x2b0] sm:$0xff]
        %v1821 = vld [vmem:[%s274 + $0x2b8] sm:$0xff]
        %v1822 = vld [vmem:[%s274 + $0x2c0] sm:$0xff]
        %v1823 = vld [vmem:[%s274 + $0x2c8] sm:$0xff]
        %v1824 = vld [vmem:[%s274 + $0x2d0] sm:$0xff]
        %v1825 = vld [vmem:[%s274 + $0x2d8] sm:$0xff]
        %v1826 = vld [vmem:[%s274 + $0x2e0] sm:$0xff]
        %v1827 = vld [vmem:[%s274 + $0x2e8] sm:$0xff]
        %v1828 = vld [vmem:[%s274 + $0x2f0] sm:$0xff]
        %v1829 = vld [vmem:[%s274 + $0x2f8] sm:$0xff]
        %v1830 = vld [vmem:[%s274 + $0x300] sm:$0xff]
        %v1831 = vld [vmem:[%s274 + $0x308] sm:$0xff]
        %v1832 = vld [vmem:[%s274 + $0x310] sm:$0xff]
        %v1833 = vld [vmem:[%s274 + $0x318] sm:$0xff]
        %v1834 = vld [vmem:[%s274 + $0x320] sm:$0xff]
        %v1835 = vld [vmem:[%s274 + $0x328] sm:$0xff]
        %v1836 = vld [vmem:[%s274 + $0x330] sm:$0xff]
        %v1837 = vld [vmem:[%s274 + $0x338] sm:$0xff]
        %v1838 = vld [vmem:[%s274 + $0x340] sm:$0xff]
        %v1839 = vld [vmem:[%s274 + $0x348] sm:$0xff]
        %v1840 = vld [vmem:[%s274 + $0x350] sm:$0xff]
        %v1841 = vld [vmem:[%s274 + $0x358] sm:$0xff]
        %v1842 = vld [vmem:[%s274 + $0x360] sm:$0xff]
        %v1843 = vld [vmem:[%s274 + $0x368] sm:$0xff]
        %v1844 = vld [vmem:[%s274 + $0x370] sm:$0xff]
        %v1845 = vld [vmem:[%s274 + $0x378] sm:$0xff]
        %v1846 = vld [vmem:[%s274 + $0x380] sm:$0xff]
        %v1847 = vld [vmem:[%s274 + $0x388] sm:$0xff]
        %v1848 = vld [vmem:[%s274 + $0x390] sm:$0xff]
        %v1849 = vld [vmem:[%s274 + $0x398] sm:$0xff]
        %v1850 = vld [vmem:[%s274 + $0x3a0] sm:$0xff]
        %v1851 = vld [vmem:[%s274 + $0x3a8] sm:$0xff]
        %v1852 = vld [vmem:[%s274 + $0x3b0] sm:$0xff]
        %v1853 = vld [vmem:[%s274 + $0x3b8] sm:$0xff]
        %v1854 = vld [vmem:[%s274 + $0x3c0] sm:$0xff]
        %v1855 = vld [vmem:[%s274 + $0x3c8] sm:$0xff]
        %v1856 = vld [vmem:[%s274 + $0x3d0] sm:$0xff]
        %v1857 = vld [vmem:[%s274 + $0x3d8] sm:$0xff]
        %v1858 = vld [vmem:[%s274 + $0x3e0] sm:$0xff]
        %v1859 = vld [vmem:[%s274 + $0x3e8] sm:$0xff]
        %v1860 = vld [vmem:[%s274 + $0x3f0] sm:$0xff]
        %v1861 = vld [vmem:[%s274 + $0x3f8] sm:$0xff]
        %v1862 = vld [vmem:[%s274 + $0x400] sm:$0xff]
        %v1863 = vld [vmem:[%s274 + $0x408] sm:$0xff]
        %v1864 = vld [vmem:[%s274 + $0x410] sm:$0xff]
        %v1865 = vld [vmem:[%s274 + $0x418] sm:$0xff]
        %v1866 = vld [vmem:[%s274 + $0x420] sm:$0xff]
        %v1867 = vld [vmem:[%s274 + $0x428] sm:$0xff]
        %v1868 = vld [vmem:[%s274 + $0x430] sm:$0xff]
        %v1869 = vld [vmem:[%s274 + $0x438] sm:$0xff]
        %v1870 = vld [vmem:[%s274 + $0x440] sm:$0xff]
        %v1871 = vld [vmem:[%s274 + $0x448] sm:$0xff]
        %v1872 = vld [vmem:[%s274 + $0x450] sm:$0xff]
        %v1873 = vld [vmem:[%s274 + $0x458] sm:$0xff]
        %v1874 = vld [vmem:[%s274 + $0x460] sm:$0xff]
        %v1875 = vld [vmem:[%s274 + $0x468] sm:$0xff]
        %v1876 = vld [vmem:[%s274 + $0x470] sm:$0xff]
        %v1877 = vld [vmem:[%s274 + $0x478] sm:$0xff]
        %v1878 = vld [vmem:[%s274 + $0x480] sm:$0xff]
        %v1879 = vld [vmem:[%s274 + $0x488] sm:$0xff]
        %v1880 = vld [vmem:[%s274 + $0x490] sm:$0xff]
        %v1881 = vld [vmem:[%s274 + $0x498] sm:$0xff]
        %v1882 = vld [vmem:[%s274 + $0x4a0] sm:$0xff]
        %v1883 = vld [vmem:[%s274 + $0x4a8] sm:$0xff]
        %v1884 = vld [vmem:[%s274 + $0x4b0] sm:$0xff]
        %v1885 = vld [vmem:[%s274 + $0x4b8] sm:$0xff]
        %v1886 = vld [vmem:[%s274 + $0x4c0] sm:$0xff]
        %v1887 = vld [vmem:[%s274 + $0x4c8] sm:$0xff]
        %v1888 = vld [vmem:[%s274 + $0x4d0] sm:$0xff]
        %v1889 = vld [vmem:[%s274 + $0x4d8] sm:$0xff]
        %v1890 = vld [vmem:[%s274 + $0x4e0] sm:$0xff]
        %v1891 = vld [vmem:[%s274 + $0x4e8] sm:$0xff]
        %v1892 = vld [vmem:[%s274 + $0x4f0] sm:$0xff]
        %v1893 = vld [vmem:[%s274 + $0x4f8] sm:$0xff]
        %v1894 = vld [vmem:[%s274 + $0x500] sm:$0xff]
        %v1895 = vld [vmem:[%s274 + $0x508] sm:$0xff]
        %v1896 = vld [vmem:[%s274 + $0x510] sm:$0xff]
        %v1897 = vld [vmem:[%s274 + $0x518] sm:$0xff]
        %v1898 = vld [vmem:[%s274 + $0x520] sm:$0xff]
        %v1899 = vld [vmem:[%s274 + $0x528] sm:$0xff]
        %v1900 = vld [vmem:[%s274 + $0x530] sm:$0xff]
        %v1901 = vld [vmem:[%s274 + $0x538] sm:$0xff]
        %v1902 = vld [vmem:[%s274 + $0x540] sm:$0xff]
        %v1903 = vld [vmem:[%s274 + $0x548] sm:$0xff]
        %v1904 = vld [vmem:[%s274 + $0x550] sm:$0xff]
        %v1905 = vld [vmem:[%s274 + $0x558] sm:$0xff]
        %v1906 = vld [vmem:[%s274 + $0x560] sm:$0xff]
        %v1907 = vld [vmem:[%s274 + $0x568] sm:$0xff]
        %v1908 = vld [vmem:[%s274 + $0x570] sm:$0xff]
        %v1909 = vld [vmem:[%s274 + $0x578] sm:$0xff]
        %v1910 = vld [vmem:[%s274 + $0x580] sm:$0xff]
        %v1911 = vld [vmem:[%s274 + $0x588] sm:$0xff]
        %v1912 = vld [vmem:[%s274 + $0x590] sm:$0xff]
        %v1913 = vld [vmem:[%s274 + $0x598] sm:$0xff]
        %v1914 = vld [vmem:[%s274 + $0x5a0] sm:$0xff]
        %v1915 = vld [vmem:[%s274 + $0x5a8] sm:$0xff]
        %v1916 = vld [vmem:[%s274 + $0x5b0] sm:$0xff]
        %v1917 = vld [vmem:[%s274 + $0x5b8] sm:$0xff]
        %v1918 = vld [vmem:[%s274 + $0x5c0] sm:$0xff]
        %v1919 = vld [vmem:[%s274 + $0x5c8] sm:$0xff]
        %v1920 = vld [vmem:[%s274 + $0x5d0] sm:$0xff]
        %v1921 = vld [vmem:[%s274 + $0x5d8] sm:$0xff]
        %v1922 = vld [vmem:[%s274 + $0x5e0] sm:$0xff]
        %v1923 = vld [vmem:[%s274 + $0x5e8] sm:$0xff]
        %v1924 = vld [vmem:[%s274 + $0x5f0] sm:$0xff]
        %v1925 = vld [vmem:[%s274 + $0x5f8] sm:$0xff]
        %v1926 = vld [vmem:[%s274 + $0x600] sm:$0xff]
        %v1927 = vld [vmem:[%s274 + $0x608] sm:$0xff]
        %v1928 = vld [vmem:[%s274 + $0x610] sm:$0xff]
        %v1929 = vld [vmem:[%s274 + $0x618] sm:$0xff]
        %v1930 = vld [vmem:[%s274 + $0x620] sm:$0xff]
        %v1931 = vld [vmem:[%s274 + $0x628] sm:$0xff]
        %v1932 = vld [vmem:[%s274 + $0x630] sm:$0xff]
        %v1933 = vld [vmem:[%s274 + $0x638] sm:$0xff]
        %v1934 = vld [vmem:[%s274 + $0x640] sm:$0xff]
        %v1935 = vld [vmem:[%s274 + $0x648] sm:$0xff]
        %v1936 = vld [vmem:[%s274 + $0x650] sm:$0xff]
        %v1937 = vld [vmem:[%s274 + $0x658] sm:$0xff]
        %v1938 = vld [vmem:[%s274 + $0x660] sm:$0xff]
        %v1939 = vld [vmem:[%s274 + $0x668] sm:$0xff]
        %v1940 = vld [vmem:[%s274 + $0x670] sm:$0xff]
        %v1941 = vld [vmem:[%s274 + $0x678] sm:$0xff]
        %v1942 = vld [vmem:[%s274 + $0x680] sm:$0xff]
        %v1943 = vld [vmem:[%s274 + $0x688] sm:$0xff]
        %v1944 = vld [vmem:[%s274 + $0x690] sm:$0xff]
        %v1945 = vld [vmem:[%s274 + $0x698] sm:$0xff]
        %v1946 = vld [vmem:[%s274 + $0x6a0] sm:$0xff]
        %v1947 = vld [vmem:[%s274 + $0x6a8] sm:$0xff]
        %v1948 = vld [vmem:[%s274 + $0x6b0] sm:$0xff]
        %v1949 = vld [vmem:[%s274 + $0x6b8] sm:$0xff]
        %v1950 = vld [vmem:[%s274 + $0x6c0] sm:$0xff]
        %v1951 = vld [vmem:[%s274 + $0x6c8] sm:$0xff]
        %v1952 = vld [vmem:[%s274 + $0x6d0] sm:$0xff]
        %v1953 = vld [vmem:[%s274 + $0x6d8] sm:$0xff]
        %v1954 = vld [vmem:[%s274 + $0x6e0] sm:$0xff]
        %v1955 = vld [vmem:[%s274 + $0x6e8] sm:$0xff]
        %v1956 = vld [vmem:[%s274 + $0x6f0] sm:$0xff]
        %v1957 = vld [vmem:[%s274 + $0x6f8] sm:$0xff]
        %v1958 = vld [vmem:[%s274 + $0x700] sm:$0xff]
        %v1959 = vld [vmem:[%s274 + $0x708] sm:$0xff]
        %v1960 = vld [vmem:[%s274 + $0x710] sm:$0xff]
        %v1961 = vld [vmem:[%s274 + $0x718] sm:$0xff]
        %v1962 = vld [vmem:[%s274 + $0x720] sm:$0xff]
        %v1963 = vld [vmem:[%s274 + $0x728] sm:$0xff]
        %v1964 = vld [vmem:[%s274 + $0x730] sm:$0xff]
        %v1965 = vld [vmem:[%s274 + $0x738] sm:$0xff]
        %v1966 = vld [vmem:[%s274 + $0x740] sm:$0xff]
        %v1967 = vld [vmem:[%s274 + $0x748] sm:$0xff]
        %v1968 = vld [vmem:[%s274 + $0x750] sm:$0xff]
        %v1969 = vld [vmem:[%s274 + $0x758] sm:$0xff]
        %v1970 = vld [vmem:[%s274 + $0x760] sm:$0xff]
        %v1971 = vld [vmem:[%s274 + $0x768] sm:$0xff]
        %v1972 = vld [vmem:[%s274 + $0x770] sm:$0xff]
        %v1973 = vld [vmem:[%s274 + $0x778] sm:$0xff]
        %v1974 = vld [vmem:[%s274 + $0x780] sm:$0xff]
        %v1975 = vld [vmem:[%s274 + $0x788] sm:$0xff]
        %v1976 = vld [vmem:[%s274 + $0x790] sm:$0xff]
        %v1977 = vld [vmem:[%s274 + $0x798] sm:$0xff]
        %v1978 = vld [vmem:[%s274 + $0x7a0] sm:$0xff]
        %v1979 = vld [vmem:[%s274 + $0x7a8] sm:$0xff]
        %v1980 = vld [vmem:[%s274 + $0x7b0] sm:$0xff]
        %v1981 = vld [vmem:[%s274 + $0x7b8] sm:$0xff]
        %v1982 = vld [vmem:[%s274 + $0x7c0] sm:$0xff]
        %v1983 = vld [vmem:[%s274 + $0x7c8] sm:$0xff]
        %v1984 = vld [vmem:[%s274 + $0x7d0] sm:$0xff]
        %v1985 = vld [vmem:[%s274 + $0x7d8] sm:$0xff]
        %v1986 = vld [vmem:[%s274 + $0x7e0] sm:$0xff]
        %v1987 = vld [vmem:[%s274 + $0x7e8] sm:$0xff]
        %v1988 = vld [vmem:[%s274 + $0x7f0] sm:$0xff]
        %v1989 = vld [vmem:[%s274 + $0x7f8] sm:$0xff]
        %v1990 = vld [vmem:[%s274 + $0x800] sm:$0xff]
        %v1991 = vld [vmem:[%s274 + $0x808] sm:$0xff]
        %v1992 = vld [vmem:[%s274 + $0x810] sm:$0xff]
        %v1993 = vld [vmem:[%s274 + $0x818] sm:$0xff]
        %v1994 = vld [vmem:[%s274 + $0x820] sm:$0xff]
        %v1995 = vld [vmem:[%s274 + $0x828] sm:$0xff]
        %v1996 = vld [vmem:[%s274 + $0x830] sm:$0xff]
        %v1997 = vld [vmem:[%s274 + $0x838] sm:$0xff]
        %v1998 = vld [vmem:[%s274 + $0x840] sm:$0xff]
        %v1999 = vld [vmem:[%s274 + $0x848] sm:$0xff]
        %v2000 = vld [vmem:[%s274 + $0x850] sm:$0xff]
        %v2001 = vld [vmem:[%s274 + $0x858] sm:$0xff]
        %v2002 = vld [vmem:[%s274 + $0x860] sm:$0xff]
        %v2003 = vld [vmem:[%s274 + $0x868] sm:$0xff]
        %v2004 = vld [vmem:[%s274 + $0x870] sm:$0xff]
        %v2005 = vld [vmem:[%s274 + $0x878] sm:$0xff]
        %v2006 = vld [vmem:[%s274 + $0x880] sm:$0xff]
        %v2007 = vld [vmem:[%s274 + $0x888] sm:$0xff]
        %v2008 = vld [vmem:[%s274 + $0x890] sm:$0xff]
        %v2009 = vld [vmem:[%s274 + $0x898] sm:$0xff]
        %v2010 = vld [vmem:[%s274 + $0x8a0] sm:$0xff]
        %v2011 = vld [vmem:[%s274 + $0x8a8] sm:$0xff]
        %v2012 = vld [vmem:[%s274 + $0x8b0] sm:$0xff]
        %v2013 = vld [vmem:[%s274 + $0x8b8] sm:$0xff]
        %v2014 = vld [vmem:[%s274 + $0x8c0] sm:$0xff]
        %v2015 = vld [vmem:[%s274 + $0x8c8] sm:$0xff]
        %v2016 = vld [vmem:[%s274 + $0x8d0] sm:$0xff]
        %v2017 = vld [vmem:[%s274 + $0x8d8] sm:$0xff]
        %v2018 = vld [vmem:[%s274 + $0x8e0] sm:$0xff]
        %v2019 = vld [vmem:[%s274 + $0x8e8] sm:$0xff]
        %v2020 = vld [vmem:[%s274 + $0x8f0] sm:$0xff]
        %v2021 = vld [vmem:[%s274 + $0x8f8] sm:$0xff]
        %v2022 = vld [vmem:[%s274 + $0x900] sm:$0xff]
        %v2023 = vld [vmem:[%s274 + $0x908] sm:$0xff]
        %v2024 = vld [vmem:[%s274 + $0x910] sm:$0xff]
        %v2025 = vld [vmem:[%s274 + $0x918] sm:$0xff]
        %v2026 = vld [vmem:[%s274 + $0x920] sm:$0xff]
        %v2027 = vld [vmem:[%s274 + $0x928] sm:$0xff]
        %v2028 = vld [vmem:[%s274 + $0x930] sm:$0xff]
        %v2029 = vld [vmem:[%s274 + $0x938] sm:$0xff]
        %v2030 = vld [vmem:[%s274 + $0x940] sm:$0xff]
        %v2031 = vld [vmem:[%s274 + $0x948] sm:$0xff]
        %v2032 = vld [vmem:[%s274 + $0x950] sm:$0xff]
        %v2033 = vld [vmem:[%s274 + $0x958] sm:$0xff]
        %v2034 = vld [vmem:[%s274 + $0x960] sm:$0xff]
        %v2035 = vld [vmem:[%s274 + $0x968] sm:$0xff]
        %v2036 = vld [vmem:[%s274 + $0x970] sm:$0xff]
        %v2037 = vld [vmem:[%s274 + $0x978] sm:$0xff]
        %v2038 = vld [vmem:[%s274 + $0x980] sm:$0xff]
        %v2039 = vld [vmem:[%s274 + $0x988] sm:$0xff]
        %v2040 = vld [vmem:[%s274 + $0x990] sm:$0xff]
        %v2041 = vld [vmem:[%s274 + $0x998] sm:$0xff]
        %v2042 = vld [vmem:[%s274 + $0x9a0] sm:$0xff]
        %v2043 = vld [vmem:[%s274 + $0x9a8] sm:$0xff]
        %v2044 = vld [vmem:[%s274 + $0x9b0] sm:$0xff]
        %v2045 = vld [vmem:[%s274 + $0x9b8] sm:$0xff]
        %v2046 = vld [vmem:[%s274 + $0x9c0] sm:$0xff]
        %v2047 = vld [vmem:[%s274 + $0x9c8] sm:$0xff]
        %v2048 = vld [vmem:[%s274 + $0x9d0] sm:$0xff]
        %v2049 = vld [vmem:[%s274 + $0x9d8] sm:$0xff]
        %v2050 = vld [vmem:[%s274 + $0x9e0] sm:$0xff]
        %v2051 = vld [vmem:[%s274 + $0x9e8] sm:$0xff]
        %v2052 = vld [vmem:[%s274 + $0x9f0] sm:$0xff]
        %v2053 = vld [vmem:[%s274 + $0x9f8] sm:$0xff]
        %v2054 = vld [vmem:[%s274 + $0xa00] sm:$0xff]
        %v2055 = vld [vmem:[%s274 + $0xa08] sm:$0xff]
        %v2056 = vld [vmem:[%s274 + $0xa10] sm:$0xff]
        %v2057 = vld [vmem:[%s274 + $0xa18] sm:$0xff]
        %v2058 = vld [vmem:[%s274 + $0xa20] sm:$0xff]
        %v2059 = vld [vmem:[%s274 + $0xa28] sm:$0xff]
        %v2060 = vld [vmem:[%s274 + $0xa30] sm:$0xff]
        %v2061 = vld [vmem:[%s274 + $0xa38] sm:$0xff]
        %v2062 = vld [vmem:[%s274 + $0xa40] sm:$0xff]
        %v2063 = vld [vmem:[%s274 + $0xa48] sm:$0xff]
        %v2064 = vld [vmem:[%s274 + $0xa50] sm:$0xff]
        %v2065 = vld [vmem:[%s274 + $0xa58] sm:$0xff]
        %v2066 = vld [vmem:[%s274 + $0xa60] sm:$0xff]
        %v2067 = vld [vmem:[%s274 + $0xa68] sm:$0xff]
        %v2068 = vld [vmem:[%s274 + $0xa70] sm:$0xff]
        %v2069 = vld [vmem:[%s274 + $0xa78] sm:$0xff]
        %v2070 = vld [vmem:[%s274 + $0xa80] sm:$0xff]
        %v2071 = vld [vmem:[%s274 + $0xa88] sm:$0xff]
        %v2072 = vld [vmem:[%s274 + $0xa90] sm:$0xff]
        %v2073 = vld [vmem:[%s274 + $0xa98] sm:$0xff]
        %v2074 = vld [vmem:[%s274 + $0xaa0] sm:$0xff]
        %v2075 = vld [vmem:[%s274 + $0xaa8] sm:$0xff]
        %v2076 = vld [vmem:[%s274 + $0xab0] sm:$0xff]
        %v2077 = vld [vmem:[%s274 + $0xab8] sm:$0xff]
        %v2078 = vld [vmem:[%s274 + $0xac0] sm:$0xff]
        %v2079 = vld [vmem:[%s274 + $0xac8] sm:$0xff]
        %v2080 = vld [vmem:[%s274 + $0xad0] sm:$0xff]
        %v2081 = vld [vmem:[%s274 + $0xad8] sm:$0xff]
        %v2082 = vld [vmem:[%s274 + $0xae0] sm:$0xff]
        %v2083 = vld [vmem:[%s274 + $0xae8] sm:$0xff]
        %v2084 = vld [vmem:[%s274 + $0xaf0] sm:$0xff]
        %v2085 = vld [vmem:[%s274 + $0xaf8] sm:$0xff]
        %v2086 = vld [vmem:[%s274 + $0xb00] sm:$0xff]
        %v2087 = vld [vmem:[%s274 + $0xb08] sm:$0xff]
        %v2088 = vld [vmem:[%s274 + $0xb10] sm:$0xff]
        %v2089 = vld [vmem:[%s274 + $0xb18] sm:$0xff]
        %v2090 = vld [vmem:[%s274 + $0xb20] sm:$0xff]
        %v2091 = vld [vmem:[%s274 + $0xb28] sm:$0xff]
        %v2092 = vld [vmem:[%s274 + $0xb30] sm:$0xff]
        %v2093 = vld [vmem:[%s274 + $0xb38] sm:$0xff]
        %v2094 = vld [vmem:[%s274 + $0xb40] sm:$0xff]
        %v2095 = vld [vmem:[%s274 + $0xb48] sm:$0xff]
        %v2096 = vld [vmem:[%s274 + $0xb50] sm:$0xff]
        %v2097 = vld [vmem:[%s274 + $0xb58] sm:$0xff]
        %v2098 = vld [vmem:[%s274 + $0xb60] sm:$0xff]
        %v2099 = vld [vmem:[%s274 + $0xb68] sm:$0xff]
        %v2100 = vld [vmem:[%s274 + $0xb70] sm:$0xff]
        %v2101 = vld [vmem:[%s274 + $0xb78] sm:$0xff]
        %v2102 = vld [vmem:[%s274 + $0xb80] sm:$0xff]
        %v2103 = vld [vmem:[%s274 + $0xb88] sm:$0xff]
        %v2104 = vld [vmem:[%s274 + $0xb90] sm:$0xff]
        %v2105 = vld [vmem:[%s274 + $0xb98] sm:$0xff]
        %v2106 = vld [vmem:[%s274 + $0xba0] sm:$0xff]
        %v2107 = vld [vmem:[%s274 + $0xba8] sm:$0xff]
        %v2108 = vld [vmem:[%s274 + $0xbb0] sm:$0xff]
        %v2109 = vld [vmem:[%s274 + $0xbb8] sm:$0xff]
        %v2110 = vld [vmem:[%s274 + $0xbc0] sm:$0xff]
        %v2111 = vld [vmem:[%s274 + $0xbc8] sm:$0xff]
        %v2112 = vld [vmem:[%s274 + $0xbd0] sm:$0xff]
        %v2113 = vld [vmem:[%s274 + $0xbd8] sm:$0xff]
        %v2114 = vld [vmem:[%s274 + $0xbe0] sm:$0xff]
        %v2115 = vld [vmem:[%s274 + $0xbe8] sm:$0xff]
        %v2116 = vld [vmem:[%s274 + $0xbf0] sm:$0xff]
        %v2117 = vld [vmem:[%s274 + $0xbf8] sm:$0xff]
        %v2118 = vld [vmem:[%s274 + $0xc00] sm:$0xff]
        %v2119 = vld [vmem:[%s274 + $0xc08] sm:$0xff]
        %v2120 = vld [vmem:[%s274 + $0xc10] sm:$0xff]
        %v2121 = vld [vmem:[%s274 + $0xc18] sm:$0xff]
        %v2122 = vld [vmem:[%s274 + $0xc20] sm:$0xff]
        %v2123 = vld [vmem:[%s274 + $0xc28] sm:$0xff]
        %v2124 = vld [vmem:[%s274 + $0xc30] sm:$0xff]
        %v2125 = vld [vmem:[%s274 + $0xc38] sm:$0xff]
        %v2126 = vld [vmem:[%s274 + $0xc40] sm:$0xff]
        %v2127 = vld [vmem:[%s274 + $0xc48] sm:$0xff]
        %v2128 = vld [vmem:[%s274 + $0xc50] sm:$0xff]
        %v2129 = vld [vmem:[%s274 + $0xc58] sm:$0xff]
        %v2130 = vld [vmem:[%s274 + $0xc60] sm:$0xff]
        %v2131 = vld [vmem:[%s274 + $0xc68] sm:$0xff]
        %v2132 = vld [vmem:[%s274 + $0xc70] sm:$0xff]
        %v2133 = vld [vmem:[%s274 + $0xc78] sm:$0xff]
        %v2134 = vld [vmem:[%s274 + $0xc80] sm:$0xff]
        %v2135 = vld [vmem:[%s274 + $0xc88] sm:$0xff]
        %v2136 = vld [vmem:[%s274 + $0xc90] sm:$0xff]
        %v2137 = vld [vmem:[%s274 + $0xc98] sm:$0xff]
        %v2138 = vld [vmem:[%s274 + $0xca0] sm:$0xff]
        %v2139 = vld [vmem:[%s274 + $0xca8] sm:$0xff]
        %v2140 = vld [vmem:[%s274 + $0xcb0] sm:$0xff]
        %v2141 = vld [vmem:[%s274 + $0xcb8] sm:$0xff]
        %v2142 = vld [vmem:[%s274 + $0xcc0] sm:$0xff]
        %v2143 = vld [vmem:[%s274 + $0xcc8] sm:$0xff]
        %v2144 = vld [vmem:[%s274 + $0xcd0] sm:$0xff]
        %v2145 = vld [vmem:[%s274 + $0xcd8] sm:$0xff]
        %v2146 = vld [vmem:[%s274 + $0xce0] sm:$0xff]
        %v2147 = vld [vmem:[%s274 + $0xce8] sm:$0xff]
        %v2148 = vld [vmem:[%s274 + $0xcf0] sm:$0xff]
        %v2149 = vld [vmem:[%s274 + $0xcf8] sm:$0xff]
        %v2150 = vld [vmem:[%s274 + $0xd00] sm:$0xff]
        %v2151 = vld [vmem:[%s274 + $0xd08] sm:$0xff]
        %v2152 = vld [vmem:[%s274 + $0xd10] sm:$0xff]
        %v2153 = vld [vmem:[%s274 + $0xd18] sm:$0xff]
        %v2154 = vld [vmem:[%s274 + $0xd20] sm:$0xff]
        %v2155 = vld [vmem:[%s274 + $0xd28] sm:$0xff]
        %v2156 = vld [vmem:[%s274 + $0xd30] sm:$0xff]
        %v2157 = vld [vmem:[%s274 + $0xd38] sm:$0xff]
        %v2158 = vld [vmem:[%s274 + $0xd40] sm:$0xff]
        %v2159 = vld [vmem:[%s274 + $0xd48] sm:$0xff]
        %v2160 = vld [vmem:[%s274 + $0xd50] sm:$0xff]
        %v2161 = vld [vmem:[%s274 + $0xd58] sm:$0xff]
        %v2162 = vld [vmem:[%s274 + $0xd60] sm:$0xff]
        %v2163 = vld [vmem:[%s274 + $0xd68] sm:$0xff]
        %v2164 = vld [vmem:[%s274 + $0xd70] sm:$0xff]
        %v2165 = vld [vmem:[%s274 + $0xd78] sm:$0xff]
        %v2166 = vld [vmem:[%s274 + $0xd80] sm:$0xff]
        %v2167 = vld [vmem:[%s274 + $0xd88] sm:$0xff]
        %v2168 = vld [vmem:[%s274 + $0xd90] sm:$0xff]
        %v2169 = vld [vmem:[%s274 + $0xd98] sm:$0xff]
        %v2170 = vld [vmem:[%s274 + $0xda0] sm:$0xff]
        %v2171 = vld [vmem:[%s274 + $0xda8] sm:$0xff]
        %v2172 = vld [vmem:[%s274 + $0xdb0] sm:$0xff]
        %v2173 = vld [vmem:[%s274 + $0xdb8] sm:$0xff]
        %v2174 = vld [vmem:[%s274 + $0xdc0] sm:$0xff]
        %v2175 = vld [vmem:[%s274 + $0xdc8] sm:$0xff]
        %v2176 = vld [vmem:[%s274 + $0xdd0] sm:$0xff]
        %v2177 = vld [vmem:[%s274 + $0xdd8] sm:$0xff]
        %v2178 = vld [vmem:[%s274 + $0xde0] sm:$0xff]
        %v2179 = vld [vmem:[%s274 + $0xde8] sm:$0xff]
        %v2180 = vld [vmem:[%s274 + $0xdf0] sm:$0xff]
        %v2181 = vld [vmem:[%s274 + $0xdf8] sm:$0xff]
        %v2182 = vld [vmem:[%s274 + $0xe00] sm:$0xff]
        %v2183 = vld [vmem:[%s274 + $0xe08] sm:$0xff]
        %v2184 = vld [vmem:[%s274 + $0xe10] sm:$0xff]
        %v2185 = vld [vmem:[%s274 + $0xe18] sm:$0xff]
        %v2186 = vld [vmem:[%s274 + $0xe20] sm:$0xff]
        %v2187 = vld [vmem:[%s274 + $0xe28] sm:$0xff]
        %v2188 = vld [vmem:[%s274 + $0xe30] sm:$0xff]
        %v2189 = vld [vmem:[%s274 + $0xe38] sm:$0xff]
        %v2190 = vld [vmem:[%s274 + $0xe40] sm:$0xff]
        %v2191 = vld [vmem:[%s274 + $0xe48] sm:$0xff]
        %v2192 = vld [vmem:[%s274 + $0xe50] sm:$0xff]
        %v2193 = vld [vmem:[%s274 + $0xe58] sm:$0xff]
        %v2194 = vld [vmem:[%s274 + $0xe60] sm:$0xff]
        %v2195 = vld [vmem:[%s274 + $0xe68] sm:$0xff]
        %v2196 = vld [vmem:[%s274 + $0xe70] sm:$0xff]
        %v2197 = vld [vmem:[%s274 + $0xe78] sm:$0xff]
        %v2198 = vld [vmem:[%s274 + $0xe80] sm:$0xff]
        %v2199 = vld [vmem:[%s274 + $0xe88] sm:$0xff]
        %v2200 = vld [vmem:[%s274 + $0xe90] sm:$0xff]
        %v2201 = vld [vmem:[%s274 + $0xe98] sm:$0xff]
        %v2202 = vld [vmem:[%s274 + $0xea0] sm:$0xff]
        %v2203 = vld [vmem:[%s274 + $0xea8] sm:$0xff]
        %v2204 = vld [vmem:[%s274 + $0xeb0] sm:$0xff]
        %v2205 = vld [vmem:[%s274 + $0xeb8] sm:$0xff]
        %v2206 = vld [vmem:[%s274 + $0xec0] sm:$0xff]
        %v2207 = vld [vmem:[%s274 + $0xec8] sm:$0xff]
        %v2208 = vld [vmem:[%s274 + $0xed0] sm:$0xff]
        %v2209 = vld [vmem:[%s274 + $0xed8] sm:$0xff]
        %v2210 = vld [vmem:[%s274 + $0xee0] sm:$0xff]
        %v2211 = vld [vmem:[%s274 + $0xee8] sm:$0xff]
        %v2212 = vld [vmem:[%s274 + $0xef0] sm:$0xff]
        %v2213 = vld [vmem:[%s274 + $0xef8] sm:$0xff]
        %v2214 = vld [vmem:[%s274 + $0xf00] sm:$0xff]
        %v2215 = vld [vmem:[%s274 + $0xf08] sm:$0xff]
        %v2216 = vld [vmem:[%s274 + $0xf10] sm:$0xff]
        %v2217 = vld [vmem:[%s274 + $0xf18] sm:$0xff]
        %v2218 = vld [vmem:[%s274 + $0xf20] sm:$0xff]
        %v2219 = vld [vmem:[%s274 + $0xf28] sm:$0xff]
        %v2220 = vld [vmem:[%s274 + $0xf30] sm:$0xff]
        %v2221 = vld [vmem:[%s274 + $0xf38] sm:$0xff]
        %v2222 = vld [vmem:[%s274 + $0xf40] sm:$0xff]
        %v2223 = vld [vmem:[%s274 + $0xf48] sm:$0xff]
        %v2224 = vld [vmem:[%s274 + $0xf50] sm:$0xff]
        %v2225 = vld [vmem:[%s274 + $0xf58] sm:$0xff]
        %v2226 = vld [vmem:[%s274 + $0xf60] sm:$0xff]
        %v2227 = vld [vmem:[%s274 + $0xf68] sm:$0xff]
        %v2228 = vld [vmem:[%s274 + $0xf70] sm:$0xff]
        %v2229 = vld [vmem:[%s274 + $0xf78] sm:$0xff]
        %v2230 = vld [vmem:[%s274 + $0xf80] sm:$0xff]
        %v2231 = vld [vmem:[%s274 + $0xf88] sm:$0xff]
        %v2232 = vld [vmem:[%s274 + $0xf90] sm:$0xff]
        %v2233 = vld [vmem:[%s274 + $0xf98] sm:$0xff]
        %v2234 = vld [vmem:[%s274 + $0xfa0] sm:$0xff]
        %v2235 = vld [vmem:[%s274 + $0xfa8] sm:$0xff]
        %v2236 = vld [vmem:[%s274 + $0xfb0] sm:$0xff]
        %v2237 = vld [vmem:[%s274 + $0xfb8] sm:$0xff]
        %v2238 = vld [vmem:[%s274 + $0xfc0] sm:$0xff]
        %v2239 = vld [vmem:[%s274 + $0xfc8] sm:$0xff]
        %v2240 = vld [vmem:[%s274 + $0xfd0] sm:$0xff]
        %v2241 = vld [vmem:[%s274 + $0xfd8] sm:$0xff]
        %v2242 = vld [vmem:[%s274 + $0xfe0] sm:$0xff]
        %v2243 = vld [vmem:[%s274 + $0xfe8] sm:$0xff]
        %v2244 = vld [vmem:[%s274 + $0xff0] sm:$0xff]
        %v2245 = vld [vmem:[%s274 + $0xff8] sm:$0xff]
        %v2246 = vld [vmem:[%s274 + $0x1000] sm:$0xff]
        %v2247 = vld [vmem:[%s274 + $0x1008] sm:$0xff]
        %v2248 = vld [vmem:[%s274 + $0x1010] sm:$0xff]
        %v2249 = vld [vmem:[%s274 + $0x1018] sm:$0xff]
        %v2250 = vld [vmem:[%s274 + $0x1020] sm:$0xff]
        %v2251 = vld [vmem:[%s274 + $0x1028] sm:$0xff]
        %v2252 = vld [vmem:[%s274 + $0x1030] sm:$0xff]
        %v2253 = vld [vmem:[%s274 + $0x1038] sm:$0xff]
        %v2254 = vld [vmem:[%s274 + $0x1040] sm:$0xff]
        %v2255 = vld [vmem:[%s274 + $0x1048] sm:$0xff]
        %v2256 = vld [vmem:[%s274 + $0x1050] sm:$0xff]
        %v2257 = vld [vmem:[%s274 + $0x1058] sm:$0xff]
        %v2258 = vld [vmem:[%s274 + $0x1060] sm:$0xff]
        %v2259 = vld [vmem:[%s274 + $0x1068] sm:$0xff]
        %v2260 = vld [vmem:[%s274 + $0x1070] sm:$0xff]
        %v2261 = vld [vmem:[%s274 + $0x1078] sm:$0xff]
        %v2262 = vld [vmem:[%s274 + $0x1080] sm:$0xff]
        %v2263 = vld [vmem:[%s274 + $0x1088] sm:$0xff]
        %v2264 = vld [vmem:[%s274 + $0x1090] sm:$0xff]
        %v2265 = vld [vmem:[%s274 + $0x1098] sm:$0xff]
        %v2266 = vld [vmem:[%s274 + $0x10a0] sm:$0xff]
        %v2267 = vld [vmem:[%s274 + $0x10a8] sm:$0xff]
        %v2268 = vld [vmem:[%s274 + $0x10b0] sm:$0xff]
        %v2269 = vld [vmem:[%s274 + $0x10b8] sm:$0xff]
        %v2270 = vld [vmem:[%s274 + $0x10c0] sm:$0xff]
        %v2271 = vld [vmem:[%s274 + $0x10c8] sm:$0xff]
        %v2272 = vld [vmem:[%s274 + $0x10d0] sm:$0xff]
        %v2273 = vld [vmem:[%s274 + $0x10d8] sm:$0xff]
        %v2274 = vld [vmem:[%s274 + $0x10e0] sm:$0xff]
        %v2275 = vld [vmem:[%s274 + $0x10e8] sm:$0xff]
        %v2276 = vld [vmem:[%s274 + $0x10f0] sm:$0xff]
        %v2277 = vld [vmem:[%s274 + $0x10f8] sm:$0xff]
        %v2278 = vld [vmem:[%s274 + $0x1100] sm:$0xff]
        %v2279 = vld [vmem:[%s274 + $0x1108] sm:$0xff]
        %v2280 = vld [vmem:[%s274 + $0x1110] sm:$0xff]
        %v2281 = vld [vmem:[%s274 + $0x1118] sm:$0xff]
        %v2282 = vld [vmem:[%s274 + $0x1120] sm:$0xff]
        %v2283 = vld [vmem:[%s274 + $0x1128] sm:$0xff]
        %v2284 = vld [vmem:[%s274 + $0x1130] sm:$0xff]
        %v2285 = vld [vmem:[%s274 + $0x1138] sm:$0xff]
        %v2286 = vld [vmem:[%s274 + $0x1140] sm:$0xff]
        %v2287 = vld [vmem:[%s274 + $0x1148] sm:$0xff]
        %v2288 = vld [vmem:[%s274 + $0x1150] sm:$0xff]
        %v2289 = vld [vmem:[%s274 + $0x1158] sm:$0xff]
        %v2290 = vld [vmem:[%s274 + $0x1160] sm:$0xff]
        %v2291 = vld [vmem:[%s274 + $0x1168] sm:$0xff]
        %v2292 = vld [vmem:[%s274 + $0x1170] sm:$0xff]
        %v2293 = vld [vmem:[%s274 + $0x1178] sm:$0xff]
        %v2294 = vld [vmem:[%s274 + $0x1180] sm:$0xff]
        %v2295 = vld [vmem:[%s274 + $0x1188] sm:$0xff]
        %v2296 = vld [vmem:[%s274 + $0x1190] sm:$0xff]
        %v2297 = vld [vmem:[%s274 + $0x1198] sm:$0xff]
        %v2298 = vld [vmem:[%s274 + $0x11a0] sm:$0xff]
        %v2299 = vld [vmem:[%s274 + $0x11a8] sm:$0xff]
        %v2300 = vld [vmem:[%s274 + $0x11b0] sm:$0xff]
        %v2301 = vld [vmem:[%s274 + $0x11b8] sm:$0xff]
        %v2302 = vld [vmem:[%s274 + $0x11c0] sm:$0xff]
        %v2303 = vld [vmem:[%s274 + $0x11c8] sm:$0xff]
        %v2304 = vld [vmem:[%s274 + $0x11d0] sm:$0xff]
        %v2305 = vld [vmem:[%s274 + $0x11d8] sm:$0xff]
        %v2306 = vld [vmem:[%s274 + $0x11e0] sm:$0xff]
        %v2307 = vld [vmem:[%s274 + $0x11e8] sm:$0xff]
        %v2308 = vld [vmem:[%s274 + $0x11f0] sm:$0xff]
        %v2309 = vld [vmem:[%s274 + $0x11f8] sm:$0xff]
        %v2310 = vld [vmem:[%s274 + $0x1200] sm:$0xff]
        %v2311 = vld [vmem:[%s274 + $0x1208] sm:$0xff]
        %v2312 = vld [vmem:[%s274 + $0x1210] sm:$0xff]
        %v2313 = vld [vmem:[%s274 + $0x1218] sm:$0xff]
        %v2314 = vld [vmem:[%s274 + $0x1220] sm:$0xff]
        %v2315 = vld [vmem:[%s274 + $0x1228] sm:$0xff]
        %v2316 = vld [vmem:[%s274 + $0x1230] sm:$0xff]
        %v2317 = vld [vmem:[%s274 + $0x1238] sm:$0xff]
        %v2318 = vld [vmem:[%s274 + $0x1240] sm:$0xff]
        %v2319 = vld [vmem:[%s274 + $0x1248] sm:$0xff]
        %v2320 = vld [vmem:[%s274 + $0x1250] sm:$0xff]
        %v2321 = vld [vmem:[%s274 + $0x1258] sm:$0xff]
        %v2322 = vld [vmem:[%s274 + $0x1260] sm:$0xff]
        %v2323 = vld [vmem:[%s274 + $0x1268] sm:$0xff]
        %v2324 = vld [vmem:[%s274 + $0x1270] sm:$0xff]
        %v2325 = vld [vmem:[%s274 + $0x1278] sm:$0xff]
        %v2326 = vld [vmem:[%s274 + $0x1280] sm:$0xff]
        %v2327 = vld [vmem:[%s274 + $0x1288] sm:$0xff]
        %v2328 = vld [vmem:[%s274 + $0x1290] sm:$0xff]
        %v2329 = vld [vmem:[%s274 + $0x1298] sm:$0xff]
        %v2330 = vld [vmem:[%s274 + $0x12a0] sm:$0xff]
        %v2331 = vld [vmem:[%s274 + $0x12a8] sm:$0xff]
        %v2332 = vld [vmem:[%s274 + $0x12b0] sm:$0xff]
        %v2333 = vld [vmem:[%s274 + $0x12b8] sm:$0xff]
        %v2334 = vld [vmem:[%s274 + $0x12c0] sm:$0xff]
        %v2335 = vld [vmem:[%s274 + $0x12c8] sm:$0xff]
        %v2336 = vld [vmem:[%s274 + $0x12d0] sm:$0xff]
        %v2337 = vld [vmem:[%s274 + $0x12d8] sm:$0xff]
        %v2338 = vld [vmem:[%s274 + $0x12e0] sm:$0xff]
        %v2339 = vld [vmem:[%s274 + $0x12e8] sm:$0xff]
        %v2340 = vld [vmem:[%s274 + $0x12f0] sm:$0xff]
        %v2341 = vld [vmem:[%s274 + $0x12f8] sm:$0xff]
        %v2342 = vld [vmem:[%s274 + $0x1300] sm:$0xff]
        %v2343 = vld [vmem:[%s274 + $0x1308] sm:$0xff]
        %v2344 = vld [vmem:[%s274 + $0x1310] sm:$0xff]
        %v2345 = vld [vmem:[%s274 + $0x1318] sm:$0xff]
        %v2346 = vld [vmem:[%s274 + $0x1320] sm:$0xff]
        %v2347 = vld [vmem:[%s274 + $0x1328] sm:$0xff]
        %v2348 = vld [vmem:[%s274 + $0x1330] sm:$0xff]
        %v2349 = vld [vmem:[%s274 + $0x1338] sm:$0xff]
        %v2350 = vld [vmem:[%s274 + $0x1340] sm:$0xff]
        %v2351 = vld [vmem:[%s274 + $0x1348] sm:$0xff]
        %v2352 = vld [vmem:[%s274 + $0x1350] sm:$0xff]
        %v2353 = vld [vmem:[%s274 + $0x1358] sm:$0xff]
        %v2354 = vld [vmem:[%s274 + $0x1360] sm:$0xff]
        %v2355 = vld [vmem:[%s274 + $0x1368] sm:$0xff]
        %v2356 = vld [vmem:[%s274 + $0x1370] sm:$0xff]
        %v2357 = vld [vmem:[%s274 + $0x1378] sm:$0xff]
        %v2358 = vld [vmem:[%s274 + $0x1380] sm:$0xff]
        %v2359 = vld [vmem:[%s274 + $0x1388] sm:$0xff]
        %v2360 = vld [vmem:[%s274 + $0x1390] sm:$0xff]
        %v2361 = vld [vmem:[%s274 + $0x1398] sm:$0xff]
        %v2362 = vld [vmem:[%s274 + $0x13a0] sm:$0xff]
        %v2363 = vld [vmem:[%s274 + $0x13a8] sm:$0xff]
        %v2364 = vld [vmem:[%s274 + $0x13b0] sm:$0xff]
        %v2365 = vld [vmem:[%s274 + $0x13b8] sm:$0xff]
        %v2366 = vld [vmem:[%s274 + $0x13c0] sm:$0xff]
        %v2367 = vld [vmem:[%s274 + $0x13c8] sm:$0xff]
        %v2368 = vld [vmem:[%s274 + $0x13d0] sm:$0xff]
        %v2369 = vld [vmem:[%s274 + $0x13d8] sm:$0xff]
        %v2370 = vld [vmem:[%s274 + $0x13e0] sm:$0xff]
        %v2371 = vld [vmem:[%s274 + $0x13e8] sm:$0xff]
        %v2372 = vld [vmem:[%s274 + $0x13f0] sm:$0xff]
        %v2373 = vld [vmem:[%s274 + $0x13f8] sm:$0xff]
        %v2374 = vld [vmem:[%s274 + $0x1400] sm:$0xff]
        %v2375 = vld [vmem:[%s274 + $0x1408] sm:$0xff]
        %v2376 = vld [vmem:[%s274 + $0x1410] sm:$0xff]
        %v2377 = vld [vmem:[%s274 + $0x1418] sm:$0xff]
        %v2378 = vld [vmem:[%s274 + $0x1420] sm:$0xff]
        %v2379 = vld [vmem:[%s274 + $0x1428] sm:$0xff]
        %v2380 = vld [vmem:[%s274 + $0x1430] sm:$0xff]
        %v2381 = vld [vmem:[%s274 + $0x1438] sm:$0xff]
        %v2382 = vld [vmem:[%s274 + $0x1440] sm:$0xff]
        %v2383 = vld [vmem:[%s274 + $0x1448] sm:$0xff]
        %v2384 = vld [vmem:[%s274 + $0x1450] sm:$0xff]
        %v2385 = vld [vmem:[%s274 + $0x1458] sm:$0xff]
        %v2386 = vld [vmem:[%s274 + $0x1460] sm:$0xff]
        %v2387 = vld [vmem:[%s274 + $0x1468] sm:$0xff]
        %v2388 = vld [vmem:[%s274 + $0x1470] sm:$0xff]
        %v2389 = vld [vmem:[%s274 + $0x1478] sm:$0xff]
        %v2390 = vld [vmem:[%s274 + $0x1480] sm:$0xff]
        %v2391 = vld [vmem:[%s274 + $0x1488] sm:$0xff]
        %v2392 = vld [vmem:[%s274 + $0x1490] sm:$0xff]
        %v2393 = vld [vmem:[%s274 + $0x1498] sm:$0xff]
        %v2394 = vld [vmem:[%s274 + $0x14a0] sm:$0xff]
        %v2395 = vld [vmem:[%s274 + $0x14a8] sm:$0xff]
        %v2396 = vld [vmem:[%s274 + $0x14b0] sm:$0xff]
        %v2397 = vld [vmem:[%s274 + $0x14b8] sm:$0xff]
        %v2398 = vld [vmem:[%s274 + $0x14c0] sm:$0xff]
        %v2399 = vld [vmem:[%s274 + $0x14c8] sm:$0xff]
        %v2400 = vld [vmem:[%s274 + $0x14d0] sm:$0xff]
        %v2401 = vld [vmem:[%s274 + $0x14d8] sm:$0xff]
        %v2402 = vld [vmem:[%s274 + $0x14e0] sm:$0xff]
        %v2403 = vld [vmem:[%s274 + $0x14e8] sm:$0xff]
        %v2404 = vld [vmem:[%s274 + $0x14f0] sm:$0xff]
        %v2405 = vld [vmem:[%s274 + $0x14f8] sm:$0xff]
        %v2406 = vld [vmem:[%s274 + $0x1500] sm:$0xff]
        %v2407 = vld [vmem:[%s274 + $0x1508] sm:$0xff]
        %v2408 = vld [vmem:[%s274 + $0x1510] sm:$0xff]
        %v2409 = vld [vmem:[%s274 + $0x1518] sm:$0xff]
        %v2410 = vld [vmem:[%s274 + $0x1520] sm:$0xff]
        %v2411 = vld [vmem:[%s274 + $0x1528] sm:$0xff]
        %v2412 = vld [vmem:[%s274 + $0x1530] sm:$0xff]
        %v2413 = vld [vmem:[%s274 + $0x1538] sm:$0xff]
        %v2414 = vld [vmem:[%s274 + $0x1540] sm:$0xff]
        %v2415 = vld [vmem:[%s274 + $0x1548] sm:$0xff]
        %v2416 = vld [vmem:[%s274 + $0x1550] sm:$0xff]
        %v2417 = vld [vmem:[%s274 + $0x1558] sm:$0xff]
        %v2418 = vld [vmem:[%s274 + $0x1560] sm:$0xff]
        %v2419 = vld [vmem:[%s274 + $0x1568] sm:$0xff]
        %v2420 = vld [vmem:[%s274 + $0x1570] sm:$0xff]
        %v2421 = vld [vmem:[%s274 + $0x1578] sm:$0xff]
        %v2422 = vld [vmem:[%s274 + $0x1580] sm:$0xff]
        %v2423 = vld [vmem:[%s274 + $0x1588] sm:$0xff]
        %v2424 = vld [vmem:[%s274 + $0x1590] sm:$0xff]
        %v2425 = vld [vmem:[%s274 + $0x1598] sm:$0xff]
        %v2426 = vld [vmem:[%s274 + $0x15a0] sm:$0xff]
        %v2427 = vld [vmem:[%s274 + $0x15a8] sm:$0xff]
        %v2428 = vld [vmem:[%s274 + $0x15b0] sm:$0xff]
        %v2429 = vld [vmem:[%s274 + $0x15b8] sm:$0xff]
        %v2430 = vld [vmem:[%s274 + $0x15c0] sm:$0xff]
        %v2431 = vld [vmem:[%s274 + $0x15c8] sm:$0xff]
        %v2432 = vld [vmem:[%s274 + $0x15d0] sm:$0xff]
        %v2433 = vld [vmem:[%s274 + $0x15d8] sm:$0xff]
        %v2434 = vld [vmem:[%s274 + $0x15e0] sm:$0xff]
        %v2435 = vld [vmem:[%s274 + $0x15e8] sm:$0xff]
        %v2436 = vld [vmem:[%s274 + $0x15f0] sm:$0xff]
        %v2437 = vld [vmem:[%s274 + $0x15f8] sm:$0xff]
        %v2438 = vld [vmem:[%s274 + $0x1600] sm:$0xff]
        %v2439 = vld [vmem:[%s274 + $0x1608] sm:$0xff]
        %v2440 = vld [vmem:[%s274 + $0x1610] sm:$0xff]
        %v2441 = vld [vmem:[%s274 + $0x1618] sm:$0xff]
        %v2442 = vld [vmem:[%s274 + $0x1620] sm:$0xff]
        %v2443 = vld [vmem:[%s274 + $0x1628] sm:$0xff]
        %v2444 = vld [vmem:[%s274 + $0x1630] sm:$0xff]
        %v2445 = vld [vmem:[%s274 + $0x1638] sm:$0xff]
        %v2446 = vld [vmem:[%s274 + $0x1640] sm:$0xff]
        %v2447 = vld [vmem:[%s274 + $0x1648] sm:$0xff]
        %v2448 = vld [vmem:[%s274 + $0x1650] sm:$0xff]
        %v2449 = vld [vmem:[%s274 + $0x1658] sm:$0xff]
        %v2450 = vld [vmem:[%s274 + $0x1660] sm:$0xff]
        %v2451 = vld [vmem:[%s274 + $0x1668] sm:$0xff]
        %v2452 = vld [vmem:[%s274 + $0x1670] sm:$0xff]
        %v2453 = vld [vmem:[%s274 + $0x1678] sm:$0xff]
        %v2454 = vld [vmem:[%s274 + $0x1680] sm:$0xff]
        %v2455 = vld [vmem:[%s274 + $0x1688] sm:$0xff]
        %v2456 = vld [vmem:[%s274 + $0x1690] sm:$0xff]
        %v2457 = vld [vmem:[%s274 + $0x1698] sm:$0xff]
        %v2458 = vld [vmem:[%s274 + $0x16a0] sm:$0xff]
        %v2459 = vld [vmem:[%s274 + $0x16a8] sm:$0xff]
        %v2460 = vld [vmem:[%s274 + $0x16b0] sm:$0xff]
        %v2461 = vld [vmem:[%s274 + $0x16b8] sm:$0xff]
        %v2462 = vld [vmem:[%s274 + $0x16c0] sm:$0xff]
        %v2463 = vld [vmem:[%s274 + $0x16c8] sm:$0xff]
        %v2464 = vld [vmem:[%s274 + $0x16d0] sm:$0xff]
        %v2465 = vld [vmem:[%s274 + $0x16d8] sm:$0xff]
        %v2466 = vld [vmem:[%s274 + $0x16e0] sm:$0xff]
        %v2467 = vld [vmem:[%s274 + $0x16e8] sm:$0xff]
        %v2468 = vld [vmem:[%s274 + $0x16f0] sm:$0xff]
        %v2469 = vld [vmem:[%s274 + $0x16f8] sm:$0xff]
        %v2470 = vld [vmem:[%s274 + $0x1700] sm:$0xff]
        %v2471 = vld [vmem:[%s274 + $0x1708] sm:$0xff]
        %v2472 = vld [vmem:[%s274 + $0x1710] sm:$0xff]
        %v2473 = vld [vmem:[%s274 + $0x1718] sm:$0xff]
        %v2474 = vld [vmem:[%s274 + $0x1720] sm:$0xff]
        %v2475 = vld [vmem:[%s274 + $0x1728] sm:$0xff]
        %v2476 = vld [vmem:[%s274 + $0x1730] sm:$0xff]
        %v2477 = vld [vmem:[%s274 + $0x1738] sm:$0xff]
        %v2478 = vld [vmem:[%s274 + $0x1740] sm:$0xff]
        %v2479 = vld [vmem:[%s274 + $0x1748] sm:$0xff]
        %v2480 = vld [vmem:[%s274 + $0x1750] sm:$0xff]
        %v2481 = vld [vmem:[%s274 + $0x1758] sm:$0xff]
        %v2482 = vld [vmem:[%s274 + $0x1760] sm:$0xff]
        %v2483 = vld [vmem:[%s274 + $0x1768] sm:$0xff]
        %v2484 = vld [vmem:[%s274 + $0x1770] sm:$0xff]
        %v2485 = vld [vmem:[%s274 + $0x1778] sm:$0xff]
        %v2486 = vld [vmem:[%s274 + $0x1780] sm:$0xff]
        %v2487 = vld [vmem:[%s274 + $0x1788] sm:$0xff]
        %v2488 = vld [vmem:[%s274 + $0x1790] sm:$0xff]
        %v2489 = vld [vmem:[%s274 + $0x1798] sm:$0xff]
        %v2490 = vld [vmem:[%s274 + $0x17a0] sm:$0xff]
        %v2491 = vld [vmem:[%s274 + $0x17a8] sm:$0xff]
        %v2492 = vld [vmem:[%s274 + $0x17b0] sm:$0xff]
        %v2493 = vld [vmem:[%s274 + $0x17b8] sm:$0xff]
        %v2494 = vld [vmem:[%s274 + $0x17c0] sm:$0xff]
        %v2495 = vld [vmem:[%s274 + $0x17c8] sm:$0xff]
        %v2496 = vld [vmem:[%s274 + $0x17d0] sm:$0xff]
        %v2497 = vld [vmem:[%s274 + $0x17d8] sm:$0xff]
        %v2498 = vld [vmem:[%s274 + $0x17e0] sm:$0xff]
        %v2499 = vld [vmem:[%s274 + $0x17e8] sm:$0xff]
        %v2500 = vld [vmem:[%s274 + $0x17f0] sm:$0xff]
        %v2501 = vld [vmem:[%s274 + $0x17f8] sm:$0xff]
        %v2502 = vld [vmem:[%s274 + $0x1800] sm:$0xff]
        %v2503 = vld [vmem:[%s274 + $0x1808] sm:$0xff]
        %v2504 = vld [vmem:[%s274 + $0x1810] sm:$0xff]
        %v2505 = vld [vmem:[%s274 + $0x1818] sm:$0xff]
        %v2506 = vld [vmem:[%s274 + $0x1820] sm:$0xff]
        %v2507 = vld [vmem:[%s274 + $0x1828] sm:$0xff]
        %v2508 = vld [vmem:[%s274 + $0x1830] sm:$0xff]
        %v2509 = vld [vmem:[%s274 + $0x1838] sm:$0xff]
        %v2510 = vld [vmem:[%s274 + $0x1840] sm:$0xff]
        %v2511 = vld [vmem:[%s274 + $0x1848] sm:$0xff]
        %v2512 = vld [vmem:[%s274 + $0x1850] sm:$0xff]
        %v2513 = vld [vmem:[%s274 + $0x1858] sm:$0xff]
        %v2514 = vld [vmem:[%s274 + $0x1860] sm:$0xff]
        %v2515 = vld [vmem:[%s274 + $0x1868] sm:$0xff]
        %v2516 = vld [vmem:[%s274 + $0x1870] sm:$0xff]
        %v2517 = vld [vmem:[%s274 + $0x1878] sm:$0xff]
        %v2518 = vld [vmem:[%s274 + $0x1880] sm:$0xff]
        %v2519 = vld [vmem:[%s274 + $0x1888] sm:$0xff]
        %v2520 = vld [vmem:[%s274 + $0x1890] sm:$0xff]
        %v2521 = vld [vmem:[%s274 + $0x1898] sm:$0xff]
        %v2522 = vld [vmem:[%s274 + $0x18a0] sm:$0xff]
        %v2523 = vld [vmem:[%s274 + $0x18a8] sm:$0xff]
        %v2524 = vld [vmem:[%s274 + $0x18b0] sm:$0xff]
        %v2525 = vld [vmem:[%s274 + $0x18b8] sm:$0xff]
        %v2526 = vld [vmem:[%s274 + $0x18c0] sm:$0xff]
        %v2527 = vld [vmem:[%s274 + $0x18c8] sm:$0xff]
        %v2528 = vld [vmem:[%s274 + $0x18d0] sm:$0xff]
        %v2529 = vld [vmem:[%s274 + $0x18d8] sm:$0xff]
        %v2530 = vld [vmem:[%s274 + $0x18e0] sm:$0xff]
        %v2531 = vld [vmem:[%s274 + $0x18e8] sm:$0xff]
        %v2532 = vld [vmem:[%s274 + $0x18f0] sm:$0xff]
        %v2533 = vld [vmem:[%s274 + $0x18f8] sm:$0xff]
        %v2534 = vld [vmem:[%s274 + $0x1900] sm:$0xff]
        %v2535 = vld [vmem:[%s274 + $0x1908] sm:$0xff]
        %v2536 = vld [vmem:[%s274 + $0x1910] sm:$0xff]
        %v2537 = vld [vmem:[%s274 + $0x1918] sm:$0xff]
        %v2538 = vld [vmem:[%s274 + $0x1920] sm:$0xff]
        %v2539 = vld [vmem:[%s274 + $0x1928] sm:$0xff]
        %v2540 = vld [vmem:[%s274 + $0x1930] sm:$0xff]
        %v2541 = vld [vmem:[%s274 + $0x1938] sm:$0xff]
        %v2542 = vld [vmem:[%s274 + $0x1940] sm:$0xff]
        %v2543 = vld [vmem:[%s274 + $0x1948] sm:$0xff]
        %v2544 = vld [vmem:[%s274 + $0x1950] sm:$0xff]
        %v2545 = vld [vmem:[%s274 + $0x1958] sm:$0xff]
        %v2546 = vld [vmem:[%s274 + $0x1960] sm:$0xff]
        %v2547 = vld [vmem:[%s274 + $0x1968] sm:$0xff]
        %v2548 = vld [vmem:[%s274 + $0x1970] sm:$0xff]
        %v2549 = vld [vmem:[%s274 + $0x1978] sm:$0xff]
        %v2550 = vld [vmem:[%s274 + $0x1980] sm:$0xff]
        %v2551 = vld [vmem:[%s274 + $0x1988] sm:$0xff]
        %v2552 = vld [vmem:[%s274 + $0x1990] sm:$0xff]
        %v2553 = vld [vmem:[%s274 + $0x1998] sm:$0xff]
        %v2554 = vld [vmem:[%s274 + $0x19a0] sm:$0xff]
        %v2555 = vld [vmem:[%s274 + $0x19a8] sm:$0xff]
        %v2556 = vld [vmem:[%s274 + $0x19b0] sm:$0xff]
        %v2557 = vld [vmem:[%s274 + $0x19b8] sm:$0xff]
        %v2558 = vld [vmem:[%s274 + $0x19c0] sm:$0xff]
        %v2559 = vld [vmem:[%s274 + $0x19c8] sm:$0xff]
        %v2560 = vld [vmem:[%s274 + $0x19d0] sm:$0xff]
        %v2561 = vld [vmem:[%s274 + $0x19d8] sm:$0xff]
        %v2562 = vld [vmem:[%s274 + $0x19e0] sm:$0xff]
        %v2563 = vld [vmem:[%s274 + $0x19e8] sm:$0xff]
        %v2564 = vld [vmem:[%s274 + $0x19f0] sm:$0xff]
        %v2565 = vld [vmem:[%s274 + $0x19f8] sm:$0xff]
        %v2566 = vld [vmem:[%s274 + $0x1a00] sm:$0xff]
        %v2567 = vld [vmem:[%s274 + $0x1a08] sm:$0xff]
        %v2568 = vld [vmem:[%s274 + $0x1a10] sm:$0xff]
        %v2569 = vld [vmem:[%s274 + $0x1a18] sm:$0xff]
        %v2570 = vld [vmem:[%s274 + $0x1a20] sm:$0xff]
        %v2571 = vld [vmem:[%s274 + $0x1a28] sm:$0xff]
        %v2572 = vld [vmem:[%s274 + $0x1a30] sm:$0xff]
        %v2573 = vld [vmem:[%s274 + $0x1a38] sm:$0xff]
        %v2574 = vld [vmem:[%s274 + $0x1a40] sm:$0xff]
        %v2575 = vld [vmem:[%s274 + $0x1a48] sm:$0xff]
        %v2576 = vld [vmem:[%s274 + $0x1a50] sm:$0xff]
        %v2577 = vld [vmem:[%s274 + $0x1a58] sm:$0xff]
        %v2578 = vld [vmem:[%s274 + $0x1a60] sm:$0xff]
        %v2579 = vld [vmem:[%s274 + $0x1a68] sm:$0xff]
        %v2580 = vld [vmem:[%s274 + $0x1a70] sm:$0xff]
        %v2581 = vld [vmem:[%s274 + $0x1a78] sm:$0xff]
        %v2582 = vld [vmem:[%s274 + $0x1a80] sm:$0xff]
        %v2583 = vld [vmem:[%s274 + $0x1a88] sm:$0xff]
        %v2584 = vld [vmem:[%s274 + $0x1a90] sm:$0xff]
        %v2585 = vld [vmem:[%s274 + $0x1a98] sm:$0xff]
        %v2586 = vld [vmem:[%s274 + $0x1aa0] sm:$0xff]
        %v2587 = vld [vmem:[%s274 + $0x1aa8] sm:$0xff]
        %v2588 = vld [vmem:[%s274 + $0x1ab0] sm:$0xff]
        %v2589 = vld [vmem:[%s274 + $0x1ab8] sm:$0xff]
        %v2590 = vld [vmem:[%s274 + $0x1ac0] sm:$0xff]
        %v2591 = vld [vmem:[%s274 + $0x1ac8] sm:$0xff]
        %v2592 = vld [vmem:[%s274 + $0x1ad0] sm:$0xff]
        %v2593 = vld [vmem:[%s274 + $0x1ad8] sm:$0xff]
        %v2594 = vld [vmem:[%s274 + $0x1ae0] sm:$0xff]
        %v2595 = vld [vmem:[%s274 + $0x1ae8] sm:$0xff]
        %v2596 = vld [vmem:[%s274 + $0x1af0] sm:$0xff]
        %v2597 = vld [vmem:[%s274 + $0x1af8] sm:$0xff]
        %v2598 = vld [vmem:[%s274 + $0x1b00] sm:$0xff]
        %v2599 = vld [vmem:[%s274 + $0x1b08] sm:$0xff]
        %v2600 = vld [vmem:[%s274 + $0x1b10] sm:$0xff]
        %v2601 = vld [vmem:[%s274 + $0x1b18] sm:$0xff]
        %v2602 = vld [vmem:[%s274 + $0x1b20] sm:$0xff]
        %v2603 = vld [vmem:[%s274 + $0x1b28] sm:$0xff]
        %v2604 = vld [vmem:[%s274 + $0x1b30] sm:$0xff]
        %v2605 = vld [vmem:[%s274 + $0x1b38] sm:$0xff]
        %v2606 = vld [vmem:[%s274 + $0x1b40] sm:$0xff]
        %v2607 = vld [vmem:[%s274 + $0x1b48] sm:$0xff]
        %v2608 = vld [vmem:[%s274 + $0x1b50] sm:$0xff]
        %v2609 = vld [vmem:[%s274 + $0x1b58] sm:$0xff]
        %v2610 = vld [vmem:[%s274 + $0x1b60] sm:$0xff]
        %v2611 = vld [vmem:[%s274 + $0x1b68] sm:$0xff]
        %v2612 = vld [vmem:[%s274 + $0x1b70] sm:$0xff]
        %v2613 = vld [vmem:[%s274 + $0x1b78] sm:$0xff]
        %v2614 = vld [vmem:[%s274 + $0x1b80] sm:$0xff]
        %v2615 = vld [vmem:[%s274 + $0x1b88] sm:$0xff]
        %v2616 = vld [vmem:[%s274 + $0x1b90] sm:$0xff]
        %v2617 = vld [vmem:[%s274 + $0x1b98] sm:$0xff]
        %v2618 = vld [vmem:[%s274 + $0x1ba0] sm:$0xff]
        %v2619 = vld [vmem:[%s274 + $0x1ba8] sm:$0xff]
        %v2620 = vld [vmem:[%s274 + $0x1bb0] sm:$0xff]
        %v2621 = vld [vmem:[%s274 + $0x1bb8] sm:$0xff]
        %v2622 = vld [vmem:[%s274 + $0x1bc0] sm:$0xff]
        %v2623 = vld [vmem:[%s274 + $0x1bc8] sm:$0xff]
        %v2624 = vld [vmem:[%s274 + $0x1bd0] sm:$0xff]
        %v2625 = vld [vmem:[%s274 + $0x1bd8] sm:$0xff]
        %v2626 = vld [vmem:[%s274 + $0x1be0] sm:$0xff]
        %v2627 = vld [vmem:[%s274 + $0x1be8] sm:$0xff]
        %v2628 = vld [vmem:[%s274 + $0x1bf0] sm:$0xff]
        %v2629 = vld [vmem:[%s274 + $0x1bf8] sm:$0xff]
        %v2630 = vld [vmem:[%s274 + $0x1c00] sm:$0xff]
        %v2631 = vld [vmem:[%s274 + $0x1c08] sm:$0xff]
        %v2632 = vld [vmem:[%s274 + $0x1c10] sm:$0xff]
        %v2633 = vld [vmem:[%s274 + $0x1c18] sm:$0xff]
        %v2634 = vld [vmem:[%s274 + $0x1c20] sm:$0xff]
        %v2635 = vld [vmem:[%s274 + $0x1c28] sm:$0xff]
        %v2636 = vld [vmem:[%s274 + $0x1c30] sm:$0xff]
        %v2637 = vld [vmem:[%s274 + $0x1c38] sm:$0xff]
        %v2638 = vld [vmem:[%s274 + $0x1c40] sm:$0xff]
        %v2639 = vld [vmem:[%s274 + $0x1c48] sm:$0xff]
        %v2640 = vld [vmem:[%s274 + $0x1c50] sm:$0xff]
        %v2641 = vld [vmem:[%s274 + $0x1c58] sm:$0xff]
        %v2642 = vld [vmem:[%s274 + $0x1c60] sm:$0xff]
        %v2643 = vld [vmem:[%s274 + $0x1c68] sm:$0xff]
        %v2644 = vld [vmem:[%s274 + $0x1c70] sm:$0xff]
        %v2645 = vld [vmem:[%s274 + $0x1c78] sm:$0xff]
        %v2646 = vld [vmem:[%s274 + $0x1c80] sm:$0xff]
        %v2647 = vld [vmem:[%s274 + $0x1c88] sm:$0xff]
        %v2648 = vld [vmem:[%s274 + $0x1c90] sm:$0xff]
        %v2649 = vld [vmem:[%s274 + $0x1c98] sm:$0xff]
        %v2650 = vld [vmem:[%s274 + $0x1ca0] sm:$0xff]
        %v2651 = vld [vmem:[%s274 + $0x1ca8] sm:$0xff]
        %v2652 = vld [vmem:[%s274 + $0x1cb0] sm:$0xff]
        %v2653 = vld [vmem:[%s274 + $0x1cb8] sm:$0xff]
        %v2654 = vld [vmem:[%s274 + $0x1cc0] sm:$0xff]
        %v2655 = vld [vmem:[%s274 + $0x1cc8] sm:$0xff]
        %v2656 = vld [vmem:[%s274 + $0x1cd0] sm:$0xff]
        %v2657 = vld [vmem:[%s274 + $0x1cd8] sm:$0xff]
        %v2658 = vld [vmem:[%s274 + $0x1ce0] sm:$0xff]
        %v2659 = vld [vmem:[%s274 + $0x1ce8] sm:$0xff]
        %v2660 = vld [vmem:[%s274 + $0x1cf0] sm:$0xff]
        %v2661 = vld [vmem:[%s274 + $0x1cf8] sm:$0xff]
        %v2662 = vld [vmem:[%s274 + $0x1d00] sm:$0xff]
        %v2663 = vld [vmem:[%s274 + $0x1d08] sm:$0xff]
        %v2664 = vld [vmem:[%s274 + $0x1d10] sm:$0xff]
        %v2665 = vld [vmem:[%s274 + $0x1d18] sm:$0xff]
        %v2666 = vld [vmem:[%s274 + $0x1d20] sm:$0xff]
        %v2667 = vld [vmem:[%s274 + $0x1d28] sm:$0xff]
        %v2668 = vld [vmem:[%s274 + $0x1d30] sm:$0xff]
        %v2669 = vld [vmem:[%s274 + $0x1d38] sm:$0xff]
        %v2670 = vld [vmem:[%s274 + $0x1d40] sm:$0xff]
        %v2671 = vld [vmem:[%s274 + $0x1d48] sm:$0xff]
        %v2672 = vld [vmem:[%s274 + $0x1d50] sm:$0xff]
        %v2673 = vld [vmem:[%s274 + $0x1d58] sm:$0xff]
        %v2674 = vld [vmem:[%s274 + $0x1d60] sm:$0xff]
        %v2675 = vld [vmem:[%s274 + $0x1d68] sm:$0xff]
        %v2676 = vld [vmem:[%s274 + $0x1d70] sm:$0xff]
        %v2677 = vld [vmem:[%s274 + $0x1d78] sm:$0xff]
        %v2678 = vld [vmem:[%s274 + $0x1d80] sm:$0xff]
        %v2679 = vld [vmem:[%s274 + $0x1d88] sm:$0xff]
        %v2680 = vld [vmem:[%s274 + $0x1d90] sm:$0xff]
        %v2681 = vld [vmem:[%s274 + $0x1d98] sm:$0xff]
        %v2682 = vld [vmem:[%s274 + $0x1da0] sm:$0xff]
        %v2683 = vld [vmem:[%s274 + $0x1da8] sm:$0xff]
        %v2684 = vld [vmem:[%s274 + $0x1db0] sm:$0xff]
        %v2685 = vld [vmem:[%s274 + $0x1db8] sm:$0xff]
        %v2686 = vld [vmem:[%s274 + $0x1dc0] sm:$0xff]
        %v2687 = vld [vmem:[%s274 + $0x1dc8] sm:$0xff]
        %v2688 = vld [vmem:[%s274 + $0x1dd0] sm:$0xff]
        %v2689 = vld [vmem:[%s274 + $0x1dd8] sm:$0xff]
        %v2690 = vld [vmem:[%s274 + $0x1de0] sm:$0xff]
        %v2691 = vld [vmem:[%s274 + $0x1de8] sm:$0xff]
        %v2692 = vld [vmem:[%s274 + $0x1df0] sm:$0xff]
        %v2693 = vld [vmem:[%s274 + $0x1df8] sm:$0xff]
        %v2694 = vld [vmem:[%s274 + $0x1e00] sm:$0xff]
        %v2695 = vld [vmem:[%s274 + $0x1e08] sm:$0xff]
        %v2696 = vld [vmem:[%s274 + $0x1e10] sm:$0xff]
        %v2697 = vld [vmem:[%s274 + $0x1e18] sm:$0xff]
        %v2698 = vld [vmem:[%s274 + $0x1e20] sm:$0xff]
        %v2699 = vld [vmem:[%s274 + $0x1e28] sm:$0xff]
        %v2700 = vld [vmem:[%s274 + $0x1e30] sm:$0xff]
        %v2701 = vld [vmem:[%s274 + $0x1e38] sm:$0xff]
        %v2702 = vld [vmem:[%s274 + $0x1e40] sm:$0xff]
        %v2703 = vld [vmem:[%s274 + $0x1e48] sm:$0xff]
        %v2704 = vld [vmem:[%s274 + $0x1e50] sm:$0xff]
        %v2705 = vld [vmem:[%s274 + $0x1e58] sm:$0xff]
        %v2706 = vld [vmem:[%s274 + $0x1e60] sm:$0xff]
        %v2707 = vld [vmem:[%s274 + $0x1e68] sm:$0xff]
        %v2708 = vld [vmem:[%s274 + $0x1e70] sm:$0xff]
        %v2709 = vld [vmem:[%s274 + $0x1e78] sm:$0xff]
        %v2710 = vld [vmem:[%s274 + $0x1e80] sm:$0xff]
        %v2711 = vld [vmem:[%s274 + $0x1e88] sm:$0xff]
        %v2712 = vld [vmem:[%s274 + $0x1e90] sm:$0xff]
        %v2713 = vld [vmem:[%s274 + $0x1e98] sm:$0xff]
        %v2714 = vld [vmem:[%s274 + $0x1ea0] sm:$0xff]
        %v2715 = vld [vmem:[%s274 + $0x1ea8] sm:$0xff]
        %v2716 = vld [vmem:[%s274 + $0x1eb0] sm:$0xff]
        %v2717 = vld [vmem:[%s274 + $0x1eb8] sm:$0xff]
        %v2718 = vld [vmem:[%s274 + $0x1ec0] sm:$0xff]
        %v2719 = vld [vmem:[%s274 + $0x1ec8] sm:$0xff]
        %v2720 = vld [vmem:[%s274 + $0x1ed0] sm:$0xff]
        %v2721 = vld [vmem:[%s274 + $0x1ed8] sm:$0xff]
        %v2722 = vld [vmem:[%s274 + $0x1ee0] sm:$0xff]
        %v2723 = vld [vmem:[%s274 + $0x1ee8] sm:$0xff]
        %v2724 = vld [vmem:[%s274 + $0x1ef0] sm:$0xff]
        %v2725 = vld [vmem:[%s274 + $0x1ef8] sm:$0xff]
        %v2726 = vld [vmem:[%s274 + $0x1f00] sm:$0xff]
        %v2727 = vld [vmem:[%s274 + $0x1f08] sm:$0xff]
        %v2728 = vld [vmem:[%s274 + $0x1f10] sm:$0xff]
        %v2729 = vld [vmem:[%s274 + $0x1f18] sm:$0xff]
        %v2730 = vld [vmem:[%s274 + $0x1f20] sm:$0xff]
        %v2731 = vld [vmem:[%s274 + $0x1f28] sm:$0xff]
        %v2732 = vld [vmem:[%s274 + $0x1f30] sm:$0xff]
        %v2733 = vld [vmem:[%s274 + $0x1f38] sm:$0xff]
        %v2734 = vld [vmem:[%s274 + $0x1f40] sm:$0xff]
        %v2735 = vld [vmem:[%s274 + $0x1f48] sm:$0xff]
        %v2736 = vld [vmem:[%s274 + $0x1f50] sm:$0xff]
        %v2737 = vld [vmem:[%s274 + $0x1f58] sm:$0xff]
        %v2738 = vld [vmem:[%s274 + $0x1f60] sm:$0xff]
        %v2739 = vld [vmem:[%s274 + $0x1f68] sm:$0xff]
        %v2740 = vld [vmem:[%s274 + $0x1f70] sm:$0xff]
        %v2741 = vld [vmem:[%s274 + $0x1f78] sm:$0xff]
        %v2742 = vld [vmem:[%s274 + $0x1f80] sm:$0xff]
        %v2743 = vld [vmem:[%s274 + $0x1f88] sm:$0xff]
        %v2744 = vld [vmem:[%s274 + $0x1f90] sm:$0xff]
        %v2745 = vld [vmem:[%s274 + $0x1f98] sm:$0xff]
        %v2746 = vld [vmem:[%s274 + $0x1fa0] sm:$0xff]
        %v2747 = vld [vmem:[%s274 + $0x1fa8] sm:$0xff]
        %v2748 = vld [vmem:[%s274 + $0x1fb0] sm:$0xff]
        %v2749 = vld [vmem:[%s274 + $0x1fb8] sm:$0xff]
        %v2750 = vld [vmem:[%s274 + $0x1fc0] sm:$0xff]
        %v2751 = vld [vmem:[%s274 + $0x1fc8] sm:$0xff]
        %v2752 = vld [vmem:[%s274 + $0x1fd0] sm:$0xff]
        %v2753 = vld [vmem:[%s274 + $0x1fd8] sm:$0xff]
        %v2754 = vld [vmem:[%s274 + $0x1fe0] sm:$0xff]
        %v2755 = vld [vmem:[%s274 + $0x1fe8] sm:$0xff]
        %v2756 = vld [vmem:[%s274 + $0x1ff0] sm:$0xff]
        %v2757 = vld [vmem:[%s274 + $0x1ff8] sm:$0xff]
        %v2758 = vld [vmem:[%s274 + $0x2000] sm:$0xff]
        %v2759 = vld [vmem:[%s274 + $0x2008] sm:$0xff]
        %v2760 = vld [vmem:[%s274 + $0x2010] sm:$0xff]
        %v2761 = vld [vmem:[%s274 + $0x2018] sm:$0xff]
        %v2762 = vld [vmem:[%s274 + $0x2020] sm:$0xff]
        %v2763 = vld [vmem:[%s274 + $0x2028] sm:$0xff]
        %v2764 = vld [vmem:[%s274 + $0x2030] sm:$0xff]
        %v2765 = vld [vmem:[%s274 + $0x2038] sm:$0xff]
        %v2766 = vld [vmem:[%s274 + $0x2040] sm:$0xff]
        %v2767 = vld [vmem:[%s274 + $0x2048] sm:$0xff]
        %v2768 = vld [vmem:[%s274 + $0x2050] sm:$0xff]
        %v2769 = vld [vmem:[%s274 + $0x2058] sm:$0xff]
        %v2770 = vld [vmem:[%s274 + $0x2060] sm:$0xff]
        %v2771 = vld [vmem:[%s274 + $0x2068] sm:$0xff]
        %v2772 = vld [vmem:[%s274 + $0x2070] sm:$0xff]
        %v2773 = vld [vmem:[%s274 + $0x2078] sm:$0xff]
        %v2774 = vld [vmem:[%s274 + $0x2080] sm:$0xff]
        %v2775 = vld [vmem:[%s274 + $0x2088] sm:$0xff]
        %v2776 = vld [vmem:[%s274 + $0x2090] sm:$0xff]
        %v2777 = vld [vmem:[%s274 + $0x2098] sm:$0xff]
        %v2778 = vld [vmem:[%s274 + $0x20a0] sm:$0xff]
        %v2779 = vld [vmem:[%s274 + $0x20a8] sm:$0xff]
        %v2780 = vld [vmem:[%s274 + $0x20b0] sm:$0xff]
        %v2781 = vld [vmem:[%s274 + $0x20b8] sm:$0xff]
        %v2782 = vld [vmem:[%s274 + $0x20c0] sm:$0xff]
        %v2783 = vld [vmem:[%s274 + $0x20c8] sm:$0xff]
        %v2784 = vld [vmem:[%s274 + $0x20d0] sm:$0xff]
        %v2785 = vld [vmem:[%s274 + $0x20d8] sm:$0xff]
        %v2786 = vld [vmem:[%s274 + $0x20e0] sm:$0xff]
        %v2787 = vld [vmem:[%s274 + $0x20e8] sm:$0xff]
        %v2788 = vld [vmem:[%s274 + $0x20f0] sm:$0xff]
        %v2789 = vld [vmem:[%s274 + $0x20f8] sm:$0xff]
        %v2790 = vld [vmem:[%s274 + $0x2100] sm:$0xff]
        %v2791 = vld [vmem:[%s274 + $0x2108] sm:$0xff]
        %v2792 = vld [vmem:[%s274 + $0x2110] sm:$0xff]
        %v2793 = vld [vmem:[%s274 + $0x2118] sm:$0xff]
        %v2794 = vld [vmem:[%s274 + $0x2120] sm:$0xff]
        %v2795 = vld [vmem:[%s274 + $0x2128] sm:$0xff]
        %v2796 = vld [vmem:[%s274 + $0x2130] sm:$0xff]
        %v2797 = vld [vmem:[%s274 + $0x2138] sm:$0xff]
        %v2798 = vld [vmem:[%s274 + $0x2140] sm:$0xff]
        %v2799 = vld [vmem:[%s274 + $0x2148] sm:$0xff]
        %v2800 = vld [vmem:[%s274 + $0x2150] sm:$0xff]
        %v2801 = vld [vmem:[%s274 + $0x2158] sm:$0xff]
        %v2802 = vld [vmem:[%s274 + $0x2160] sm:$0xff]
        %v2803 = vld [vmem:[%s274 + $0x2168] sm:$0xff]
        %v2804 = vld [vmem:[%s274 + $0x2170] sm:$0xff]
        %v2805 = vld [vmem:[%s274 + $0x2178] sm:$0xff]
        %v2806 = vld [vmem:[%s274 + $0x2180] sm:$0xff]
        %v2807 = vld [vmem:[%s274 + $0x2188] sm:$0xff]
        %v2808 = vld [vmem:[%s274 + $0x2190] sm:$0xff]
        %v2809 = vld [vmem:[%s274 + $0x2198] sm:$0xff]
        %v2810 = vld [vmem:[%s274 + $0x21a0] sm:$0xff]
        %v2811 = vld [vmem:[%s274 + $0x21a8] sm:$0xff]
        %v2812 = vld [vmem:[%s274 + $0x21b0] sm:$0xff]
        %v2813 = vld [vmem:[%s274 + $0x21b8] sm:$0xff]
        %v2814 = vld [vmem:[%s274 + $0x21c0] sm:$0xff]
        %v2815 = vld [vmem:[%s274 + $0x21c8] sm:$0xff]
        %v2816 = vld [vmem:[%s274 + $0x21d0] sm:$0xff]
        %v2817 = vld [vmem:[%s274 + $0x21d8] sm:$0xff]
        %v2818 = vld [vmem:[%s274 + $0x21e0] sm:$0xff]
        %v2819 = vld [vmem:[%s274 + $0x21e8] sm:$0xff]
        %v2820 = vld [vmem:[%s274 + $0x21f0] sm:$0xff]
        %v2821 = vld [vmem:[%s274 + $0x21f8] sm:$0xff]
        %v2822 = vld [vmem:[%s274 + $0x2200] sm:$0xff]
        %v2823 = vld [vmem:[%s274 + $0x2208] sm:$0xff]
        %v2824 = vld [vmem:[%s274 + $0x2210] sm:$0xff]
        %v2825 = vld [vmem:[%s274 + $0x2218] sm:$0xff]
        %v2826 = vld [vmem:[%s274 + $0x2220] sm:$0xff]
        %v2827 = vld [vmem:[%s274 + $0x2228] sm:$0xff]
        %v2828 = vld [vmem:[%s274 + $0x2230] sm:$0xff]
        %v2829 = vld [vmem:[%s274 + $0x2238] sm:$0xff]
        %v2830 = vld [vmem:[%s274 + $0x2240] sm:$0xff]
        %v2831 = vld [vmem:[%s274 + $0x2248] sm:$0xff]
        %v2832 = vld [vmem:[%s274 + $0x2250] sm:$0xff]
        %v2833 = vld [vmem:[%s274 + $0x2258] sm:$0xff]
        %v2834 = vld [vmem:[%s274 + $0x2260] sm:$0xff]
        %v2835 = vld [vmem:[%s274 + $0x2268] sm:$0xff]
        %v2836 = vld [vmem:[%s274 + $0x2270] sm:$0xff]
        %v2837 = vld [vmem:[%s274 + $0x2278] sm:$0xff]
        %v2838 = vld [vmem:[%s274 + $0x2280] sm:$0xff]
        %v2839 = vld [vmem:[%s274 + $0x2288] sm:$0xff]
        %v2840 = vld [vmem:[%s274 + $0x2290] sm:$0xff]
        %v2841 = vld [vmem:[%s274 + $0x2298] sm:$0xff]
        %v2842 = vld [vmem:[%s274 + $0x22a0] sm:$0xff]
        %v2843 = vld [vmem:[%s274 + $0x22a8] sm:$0xff]
        %v2844 = vld [vmem:[%s274 + $0x22b0] sm:$0xff]
        %v2845 = vld [vmem:[%s274 + $0x22b8] sm:$0xff]
        %v2846 = vld [vmem:[%s274 + $0x22c0] sm:$0xff]
        %v2847 = vld [vmem:[%s274 + $0x22c8] sm:$0xff]
        %v2848 = vld [vmem:[%s274 + $0x22d0] sm:$0xff]
        %v2849 = vld [vmem:[%s274 + $0x22d8] sm:$0xff]
        %v2850 = vld [vmem:[%s274 + $0x22e0] sm:$0xff]
        %v2851 = vld [vmem:[%s274 + $0x22e8] sm:$0xff]
        %v2852 = vld [vmem:[%s274 + $0x22f0] sm:$0xff]
        %v2853 = vld [vmem:[%s274 + $0x22f8] sm:$0xff]
        %v2854 = vld [vmem:[%s274 + $0x2300] sm:$0xff]
        %v2855 = vld [vmem:[%s274 + $0x2308] sm:$0xff]
        %v2856 = vld [vmem:[%s274 + $0x2310] sm:$0xff]
        %v2857 = vld [vmem:[%s274 + $0x2318] sm:$0xff]
        %v2858 = vld [vmem:[%s274 + $0x2320] sm:$0xff]
        %v2859 = vld [vmem:[%s274 + $0x2328] sm:$0xff]
        %v2860 = vld [vmem:[%s274 + $0x2330] sm:$0xff]
        %v2861 = vld [vmem:[%s274 + $0x2338] sm:$0xff]
        %v2862 = vld [vmem:[%s274 + $0x2340] sm:$0xff]
        %v2863 = vld [vmem:[%s274 + $0x2348] sm:$0xff]
        %v2864 = vld [vmem:[%s274 + $0x2350] sm:$0xff]
        %v2865 = vld [vmem:[%s274 + $0x2358] sm:$0xff]
        %v2866 = vld [vmem:[%s274 + $0x2360] sm:$0xff]
        %v2867 = vld [vmem:[%s274 + $0x2368] sm:$0xff]
        %v2868 = vld [vmem:[%s274 + $0x2370] sm:$0xff]
        %v2869 = vld [vmem:[%s274 + $0x2378] sm:$0xff]
        %v2870 = vld [vmem:[%s274 + $0x2380] sm:$0xff]
        %v2871 = vld [vmem:[%s274 + $0x2388] sm:$0xff]
        %v2872 = vld [vmem:[%s274 + $0x2390] sm:$0xff]
        %v2873 = vld [vmem:[%s274 + $0x2398] sm:$0xff]
        %v2874 = vld [vmem:[%s274 + $0x23a0] sm:$0xff]
        %v2875 = vld [vmem:[%s274 + $0x23a8] sm:$0xff]
        %v2876 = vld [vmem:[%s274 + $0x23b0] sm:$0xff]
        %v2877 = vld [vmem:[%s274 + $0x23b8] sm:$0xff]
        %v2878 = vld [vmem:[%s274 + $0x23c0] sm:$0xff]
        %v2879 = vld [vmem:[%s274 + $0x23c8] sm:$0xff]
        %v2880 = vld [vmem:[%s274 + $0x23d0] sm:$0xff]
        %v2881 = vld [vmem:[%s274 + $0x23d8] sm:$0xff]
        %v2882 = vld [vmem:[%s274 + $0x23e0] sm:$0xff]
        %v2883 = vld [vmem:[%s274 + $0x23e8] sm:$0xff]
        %v2884 = vld [vmem:[%s274 + $0x23f0] sm:$0xff]
        %v2885 = vld [vmem:[%s274 + $0x23f8] sm:$0xff]
        %v2886 = vld [vmem:[%s274 + $0x2400] sm:$0xff]
        %v2887 = vld [vmem:[%s274 + $0x2408] sm:$0xff]
        %v2888 = vld [vmem:[%s274 + $0x2410] sm:$0xff]
        %v2889 = vld [vmem:[%s274 + $0x2418] sm:$0xff]
        %v2890 = vld [vmem:[%s274 + $0x2420] sm:$0xff]
        %v2891 = vld [vmem:[%s274 + $0x2428] sm:$0xff]
        %v2892 = vld [vmem:[%s274 + $0x2430] sm:$0xff]
        %v2893 = vld [vmem:[%s274 + $0x2438] sm:$0xff]
        %v2894 = vld [vmem:[%s274 + $0x2440] sm:$0xff]
        %v2895 = vld [vmem:[%s274 + $0x2448] sm:$0xff]
        %v2896 = vld [vmem:[%s274 + $0x2450] sm:$0xff]
        %v2897 = vld [vmem:[%s274 + $0x2458] sm:$0xff]
        %v2898 = vld [vmem:[%s274 + $0x2460] sm:$0xff]
        %v2899 = vld [vmem:[%s274 + $0x2468] sm:$0xff]
        %v2900 = vld [vmem:[%s274 + $0x2470] sm:$0xff]
        %v2901 = vld [vmem:[%s274 + $0x2478] sm:$0xff]
        %v2902 = vld [vmem:[%s274 + $0x2480] sm:$0xff]
        %v2903 = vld [vmem:[%s274 + $0x2488] sm:$0xff]
        %v2904 = vld [vmem:[%s274 + $0x2490] sm:$0xff]
        %v2905 = vld [vmem:[%s274 + $0x2498] sm:$0xff]
        %v2906 = vld [vmem:[%s274 + $0x24a0] sm:$0xff]
        %v2907 = vld [vmem:[%s274 + $0x24a8] sm:$0xff]
        %v2908 = vld [vmem:[%s274 + $0x24b0] sm:$0xff]
        %v2909 = vld [vmem:[%s274 + $0x24b8] sm:$0xff]
        %v2910 = vld [vmem:[%s274 + $0x24c0] sm:$0xff]
        %v2911 = vld [vmem:[%s274 + $0x24c8] sm:$0xff]
        %v2912 = vld [vmem:[%s274 + $0x24d0] sm:$0xff]
        %v2913 = vld [vmem:[%s274 + $0x24d8] sm:$0xff]
        %v2914 = vld [vmem:[%s274 + $0x24e0] sm:$0xff]
        %v2915 = vld [vmem:[%s274 + $0x24e8] sm:$0xff]
        %v2916 = vld [vmem:[%s274 + $0x24f0] sm:$0xff]
        %v2917 = vld [vmem:[%s274 + $0x24f8] sm:$0xff]
        %v2918 = vld [vmem:[%s274 + $0x2500] sm:$0xff]
        %v2919 = vld [vmem:[%s274 + $0x2508] sm:$0xff]
        %v2920 = vld [vmem:[%s274 + $0x2510] sm:$0xff]
        %v2921 = vld [vmem:[%s274 + $0x2518] sm:$0xff]
        %v2922 = vld [vmem:[%s274 + $0x2520] sm:$0xff]
        %v2923 = vld [vmem:[%s274 + $0x2528] sm:$0xff]
        %v2924 = vld [vmem:[%s274 + $0x2530] sm:$0xff]
        %v2925 = vld [vmem:[%s274 + $0x2538] sm:$0xff]
        %v2926 = vld [vmem:[%s274 + $0x2540] sm:$0xff]
        %v2927 = vld [vmem:[%s274 + $0x2548] sm:$0xff]
        %v2928 = vld [vmem:[%s274 + $0x2550] sm:$0xff]
        %v2929 = vld [vmem:[%s274 + $0x2558] sm:$0xff]
        %v2930 = vld [vmem:[%s274 + $0x2560] sm:$0xff]
        %v2931 = vld [vmem:[%s274 + $0x2568] sm:$0xff]
        %v2932 = vld [vmem:[%s274 + $0x2570] sm:$0xff]
        %v2933 = vld [vmem:[%s274 + $0x2578] sm:$0xff]
        %v2934 = vld [vmem:[%s274 + $0x2580] sm:$0xff]
        %v2935 = vld [vmem:[%s274 + $0x2588] sm:$0xff]
        %v2936 = vld [vmem:[%s274 + $0x2590] sm:$0xff]
        %v2937 = vld [vmem:[%s274 + $0x2598] sm:$0xff]
        %v2938 = vld [vmem:[%s274 + $0x25a0] sm:$0xff]
        %v2939 = vld [vmem:[%s274 + $0x25a8] sm:$0xff]
        %v2940 = vld [vmem:[%s274 + $0x25b0] sm:$0xff]
        %v2941 = vld [vmem:[%s274 + $0x25b8] sm:$0xff]
        %v2942 = vld [vmem:[%s274 + $0x25c0] sm:$0xff]
        %v2943 = vld [vmem:[%s274 + $0x25c8] sm:$0xff]
        %v2944 = vld [vmem:[%s274 + $0x25d0] sm:$0xff]
        %v2945 = vld [vmem:[%s274 + $0x25d8] sm:$0xff]
        %v2946 = vld [vmem:[%s274 + $0x25e0] sm:$0xff]
        %v2947 = vld [vmem:[%s274 + $0x25e8] sm:$0xff]
        %v2948 = vld [vmem:[%s274 + $0x25f0] sm:$0xff]
        %v2949 = vld [vmem:[%s274 + $0x25f8] sm:$0xff]
        %v2950 = vld [vmem:[%s274 + $0x2600] sm:$0xff]
        %v2951 = vld [vmem:[%s274 + $0x2608] sm:$0xff]
        %v2952 = vld [vmem:[%s274 + $0x2610] sm:$0xff]
        %v2953 = vld [vmem:[%s274 + $0x2618] sm:$0xff]
        %v2954 = vld [vmem:[%s274 + $0x2620] sm:$0xff]
        %v2955 = vld [vmem:[%s274 + $0x2628] sm:$0xff]
        %v2956 = vld [vmem:[%s274 + $0x2630] sm:$0xff]
        %v2957 = vld [vmem:[%s274 + $0x2638] sm:$0xff]
        %v2958 = vld [vmem:[%s274 + $0x2640] sm:$0xff]
        %v2959 = vld [vmem:[%s274 + $0x2648] sm:$0xff]
        %v2960 = vld [vmem:[%s274 + $0x2650] sm:$0xff]
        %v2961 = vld [vmem:[%s274 + $0x2658] sm:$0xff]
        %v2962 = vld [vmem:[%s274 + $0x2660] sm:$0xff]
        %v2963 = vld [vmem:[%s274 + $0x2668] sm:$0xff]
        %v2964 = vld [vmem:[%s274 + $0x2670] sm:$0xff]
        %v2965 = vld [vmem:[%s274 + $0x2678] sm:$0xff]
        %v2966 = vld [vmem:[%s274 + $0x2680] sm:$0xff]
        %v2967 = vld [vmem:[%s274 + $0x2688] sm:$0xff]
        %v2968 = vld [vmem:[%s274 + $0x2690] sm:$0xff]
        %v2969 = vld [vmem:[%s274 + $0x2698] sm:$0xff]
        %v2970 = vld [vmem:[%s274 + $0x26a0] sm:$0xff]
        %v2971 = vld [vmem:[%s274 + $0x26a8] sm:$0xff]
        %v2972 = vld [vmem:[%s274 + $0x26b0] sm:$0xff]
        %v2973 = vld [vmem:[%s274 + $0x26b8] sm:$0xff]
        %v2974 = vld [vmem:[%s274 + $0x26c0] sm:$0xff]
        %v2975 = vld [vmem:[%s274 + $0x26c8] sm:$0xff]
        %v2976 = vld [vmem:[%s274 + $0x26d0] sm:$0xff]
        %v2977 = vld [vmem:[%s274 + $0x26d8] sm:$0xff]
        %v2978 = vld [vmem:[%s274 + $0x26e0] sm:$0xff]
        %v2979 = vld [vmem:[%s274 + $0x26e8] sm:$0xff]
        %v2980 = vld [vmem:[%s274 + $0x26f0] sm:$0xff]
        %v2981 = vld [vmem:[%s274 + $0x26f8] sm:$0xff]
        %v2982 = vld [vmem:[%s274 + $0x2700] sm:$0xff]
        %v2983 = vld [vmem:[%s274 + $0x2708] sm:$0xff]
        %v2984 = vld [vmem:[%s274 + $0x2710] sm:$0xff]
        %v2985 = vld [vmem:[%s274 + $0x2718] sm:$0xff]
        %v2986 = vld [vmem:[%s274 + $0x2720] sm:$0xff]
        %v2987 = vld [vmem:[%s274 + $0x2728] sm:$0xff]
        %v2988 = vld [vmem:[%s274 + $0x2730] sm:$0xff]
        %v2989 = vld [vmem:[%s274 + $0x2738] sm:$0xff]
        %v2990 = vld [vmem:[%s274 + $0x2740] sm:$0xff]
        %v2991 = vld [vmem:[%s274 + $0x2748] sm:$0xff]
        %v2992 = vld [vmem:[%s274 + $0x2750] sm:$0xff]
        %v2993 = vld [vmem:[%s274 + $0x2758] sm:$0xff]
        %v2994 = vld [vmem:[%s274 + $0x2760] sm:$0xff]
        %v2995 = vld [vmem:[%s274 + $0x2768] sm:$0xff]
        %v2996 = vld [vmem:[%s274 + $0x2770] sm:$0xff]
        %v2997 = vld [vmem:[%s274 + $0x2778] sm:$0xff]
        %v2998 = vld [vmem:[%s274 + $0x2780] sm:$0xff]
        %v2999 = vld [vmem:[%s274 + $0x2788] sm:$0xff]
        %v3000 = vld [vmem:[%s274 + $0x2790] sm:$0xff]
        %v3001 = vld [vmem:[%s274 + $0x2798] sm:$0xff]
        %v3002 = vld [vmem:[%s274 + $0x27a0] sm:$0xff]
        %v3003 = vld [vmem:[%s274 + $0x27a8] sm:$0xff]
        %v3004 = vld [vmem:[%s274 + $0x27b0] sm:$0xff]
        %v3005 = vld [vmem:[%s274 + $0x27b8] sm:$0xff]
        %v3006 = vld [vmem:[%s274 + $0x27c0] sm:$0xff]
        %v3007 = vld [vmem:[%s274 + $0x27c8] sm:$0xff]
        %v3008 = vld [vmem:[%s274 + $0x27d0] sm:$0xff]
        %v3009 = vld [vmem:[%s274 + $0x27d8] sm:$0xff]
        %v3010 = vld [vmem:[%s274 + $0x27e0] sm:$0xff]
        %v3011 = vld [vmem:[%s274 + $0x27e8] sm:$0xff]
        %v3012 = vld [vmem:[%s274 + $0x27f0] sm:$0xff]
        %v3013 = vld [vmem:[%s274 + $0x27f8] sm:$0xff]
        %v3014 = vld [vmem:[%s274 + $0x2800] sm:$0xff]
        %v3015 = vld [vmem:[%s274 + $0x2808] sm:$0xff]
        %v3016 = vld [vmem:[%s274 + $0x2810] sm:$0xff]
        %v3017 = vld [vmem:[%s274 + $0x2818] sm:$0xff]
        %v3018 = vld [vmem:[%s274 + $0x2820] sm:$0xff]
        %v3019 = vld [vmem:[%s274 + $0x2828] sm:$0xff]
        %v3020 = vld [vmem:[%s274 + $0x2830] sm:$0xff]
        %v3021 = vld [vmem:[%s274 + $0x2838] sm:$0xff]
        %v3022 = vld [vmem:[%s274 + $0x2840] sm:$0xff]
        %v3023 = vld [vmem:[%s274 + $0x2848] sm:$0xff]
        %v3024 = vld [vmem:[%s274 + $0x2850] sm:$0xff]
        %v3025 = vld [vmem:[%s274 + $0x2858] sm:$0xff]
        %v3026 = vld [vmem:[%s274 + $0x2860] sm:$0xff]
        %v3027 = vld [vmem:[%s274 + $0x2868] sm:$0xff]
        %v3028 = vld [vmem:[%s274 + $0x2870] sm:$0xff]
        %v3029 = vld [vmem:[%s274 + $0x2878] sm:$0xff]
        %v3030 = vld [vmem:[%s274 + $0x2880] sm:$0xff]
        %v3031 = vld [vmem:[%s274 + $0x2888] sm:$0xff]
        %v3032 = vld [vmem:[%s274 + $0x2890] sm:$0xff]
        %v3033 = vld [vmem:[%s274 + $0x2898] sm:$0xff]
        %v3034 = vld [vmem:[%s274 + $0x28a0] sm:$0xff]
        %v3035 = vld [vmem:[%s274 + $0x28a8] sm:$0xff]
        %v3036 = vld [vmem:[%s274 + $0x28b0] sm:$0xff]
        %v3037 = vld [vmem:[%s274 + $0x28b8] sm:$0xff]
        %v3038 = vld [vmem:[%s274 + $0x28c0] sm:$0xff]
        %v3039 = vld [vmem:[%s274 + $0x28c8] sm:$0xff]
        %v3040 = vld [vmem:[%s274 + $0x28d0] sm:$0xff]
        %v3041 = vld [vmem:[%s274 + $0x28d8] sm:$0xff]
        %v3042 = vld [vmem:[%s274 + $0x28e0] sm:$0xff]
        %v3043 = vld [vmem:[%s274 + $0x28e8] sm:$0xff]
        %v3044 = vld [vmem:[%s274 + $0x28f0] sm:$0xff]
        %v3045 = vld [vmem:[%s274 + $0x28f8] sm:$0xff]
        %v3046 = vld [vmem:[%s274 + $0x2900] sm:$0xff]
        %v3047 = vld [vmem:[%s274 + $0x2908] sm:$0xff]
        %v3048 = vld [vmem:[%s274 + $0x2910] sm:$0xff]
        %v3049 = vld [vmem:[%s274 + $0x2918] sm:$0xff]
        %v3050 = vld [vmem:[%s274 + $0x2920] sm:$0xff]
        %v3051 = vld [vmem:[%s274 + $0x2928] sm:$0xff]
        %v3052 = vld [vmem:[%s274 + $0x2930] sm:$0xff]
        %v3053 = vld [vmem:[%s274 + $0x2938] sm:$0xff]
        %v3054 = vld [vmem:[%s274 + $0x2940] sm:$0xff]
        %v3055 = vld [vmem:[%s274 + $0x2948] sm:$0xff]
        %v3056 = vld [vmem:[%s274 + $0x2950] sm:$0xff]
        %v3057 = vld [vmem:[%s274 + $0x2958] sm:$0xff]
        %v3058 = vld [vmem:[%s274 + $0x2960] sm:$0xff]
        %v3059 = vld [vmem:[%s274 + $0x2968] sm:$0xff]
        %v3060 = vld [vmem:[%s274 + $0x2970] sm:$0xff]
        %v3061 = vld [vmem:[%s274 + $0x2978] sm:$0xff]
        %v3062 = vld [vmem:[%s274 + $0x2980] sm:$0xff]
        %v3063 = vld [vmem:[%s274 + $0x2988] sm:$0xff]
        %v3064 = vld [vmem:[%s274 + $0x2990] sm:$0xff]
        %v3065 = vld [vmem:[%s274 + $0x2998] sm:$0xff]
        %v3066 = vld [vmem:[%s274 + $0x29a0] sm:$0xff]
        %v3067 = vld [vmem:[%s274 + $0x29a8] sm:$0xff]
        %v3068 = vld [vmem:[%s274 + $0x29b0] sm:$0xff]
        %v3069 = vld [vmem:[%s274 + $0x29b8] sm:$0xff]
        %v3070 = vld [vmem:[%s274 + $0x29c0] sm:$0xff]
        %v3071 = vld [vmem:[%s274 + $0x29c8] sm:$0xff]
        %v3072 = vld [vmem:[%s274 + $0x29d0] sm:$0xff]
        %v3073 = vld [vmem:[%s274 + $0x29d8] sm:$0xff]
        %v3074 = vld [vmem:[%s274 + $0x29e0] sm:$0xff]
        %v3075 = vld [vmem:[%s274 + $0x29e8] sm:$0xff]
        %v3076 = vld [vmem:[%s274 + $0x29f0] sm:$0xff]
        %v3077 = vld [vmem:[%s274 + $0x29f8] sm:$0xff]
        %v3078 = vld [vmem:[%s274 + $0x2a00] sm:$0xff]
        %v3079 = vld [vmem:[%s274 + $0x2a08] sm:$0xff]
        %v3080 = vld [vmem:[%s274 + $0x2a10] sm:$0xff]
        %v3081 = vld [vmem:[%s274 + $0x2a18] sm:$0xff]
        %v3082 = vld [vmem:[%s274 + $0x2a20] sm:$0xff]
        %v3083 = vld [vmem:[%s274 + $0x2a28] sm:$0xff]
        %v3084 = vld [vmem:[%s274 + $0x2a30] sm:$0xff]
        %v3085 = vld [vmem:[%s274 + $0x2a38] sm:$0xff]
        %v3086 = vld [vmem:[%s274 + $0x2a40] sm:$0xff]
        %v3087 = vld [vmem:[%s274 + $0x2a48] sm:$0xff]
        %v3088 = vld [vmem:[%s274 + $0x2a50] sm:$0xff]
        %v3089 = vld [vmem:[%s274 + $0x2a58] sm:$0xff]
        %v3090 = vld [vmem:[%s274 + $0x2a60] sm:$0xff]
        %v3091 = vld [vmem:[%s274 + $0x2a68] sm:$0xff]
        %v3092 = vld [vmem:[%s274 + $0x2a70] sm:$0xff]
        %v3093 = vld [vmem:[%s274 + $0x2a78] sm:$0xff]
        %v3094 = vld [vmem:[%s274 + $0x2a80] sm:$0xff]
        %v3095 = vld [vmem:[%s274 + $0x2a88] sm:$0xff]
        %v3096 = vld [vmem:[%s274 + $0x2a90] sm:$0xff]
        %v3097 = vld [vmem:[%s274 + $0x2a98] sm:$0xff]
        %v3098 = vld [vmem:[%s274 + $0x2aa0] sm:$0xff]
        %v3099 = vld [vmem:[%s274 + $0x2aa8] sm:$0xff]
        %v3100 = vld [vmem:[%s274 + $0x2ab0] sm:$0xff]
        %v3101 = vld [vmem:[%s274 + $0x2ab8] sm:$0xff]
        %v3102 = vld [vmem:[%s274 + $0x2ac0] sm:$0xff]
        %v3103 = vld [vmem:[%s274 + $0x2ac8] sm:$0xff]
        %v3104 = vld [vmem:[%s274 + $0x2ad0] sm:$0xff]
        %v3105 = vld [vmem:[%s274 + $0x2ad8] sm:$0xff]
        %v3106 = vld [vmem:[%s274 + $0x2ae0] sm:$0xff]
        %v3107 = vld [vmem:[%s274 + $0x2ae8] sm:$0xff]
        %v3108 = vld [vmem:[%s274 + $0x2af0] sm:$0xff]
        %v3109 = vld [vmem:[%s274 + $0x2af8] sm:$0xff]
        %v3110 = vld [vmem:[%s274 + $0x2b00] sm:$0xff]
        %v3111 = vld [vmem:[%s274 + $0x2b08] sm:$0xff]
        %v3112 = vld [vmem:[%s274 + $0x2b10] sm:$0xff]
        %v3113 = vld [vmem:[%s274 + $0x2b18] sm:$0xff]
        %v3114 = vld [vmem:[%s274 + $0x2b20] sm:$0xff]
        %v3115 = vld [vmem:[%s274 + $0x2b28] sm:$0xff]
        %v3116 = vld [vmem:[%s274 + $0x2b30] sm:$0xff]
        %v3117 = vld [vmem:[%s274 + $0x2b38] sm:$0xff]
        %v3118 = vld [vmem:[%s274 + $0x2b40] sm:$0xff]
        %v3119 = vld [vmem:[%s274 + $0x2b48] sm:$0xff]
        %v3120 = vld [vmem:[%s274 + $0x2b50] sm:$0xff]
        %v3121 = vld [vmem:[%s274 + $0x2b58] sm:$0xff]
        %v3122 = vld [vmem:[%s274 + $0x2b60] sm:$0xff]
        %v3123 = vld [vmem:[%s274 + $0x2b68] sm:$0xff]
        %v3124 = vld [vmem:[%s274 + $0x2b70] sm:$0xff]
        %v3125 = vld [vmem:[%s274 + $0x2b78] sm:$0xff]
        %v3126 = vld [vmem:[%s274 + $0x2b80] sm:$0xff]
        %v3127 = vld [vmem:[%s274 + $0x2b88] sm:$0xff]
        %v3128 = vld [vmem:[%s274 + $0x2b90] sm:$0xff]
        %v3129 = vld [vmem:[%s274 + $0x2b98] sm:$0xff]
        %v3130 = vld [vmem:[%s274 + $0x2ba0] sm:$0xff]
        %v3131 = vld [vmem:[%s274 + $0x2ba8] sm:$0xff]
        %v3132 = vld [vmem:[%s274 + $0x2bb0] sm:$0xff]
        %v3133 = vld [vmem:[%s274 + $0x2bb8] sm:$0xff]
        %v3134 = vld [vmem:[%s274 + $0x2bc0] sm:$0xff]
        %v3135 = vld [vmem:[%s274 + $0x2bc8] sm:$0xff]
        %v3136 = vld [vmem:[%s274 + $0x2bd0] sm:$0xff]
        %v3137 = vld [vmem:[%s274 + $0x2bd8] sm:$0xff]
        %v3138 = vld [vmem:[%s274 + $0x2be0] sm:$0xff]
        %v3139 = vld [vmem:[%s274 + $0x2be8] sm:$0xff]
        %v3140 = vld [vmem:[%s274 + $0x2bf0] sm:$0xff]
        %v3141 = vld [vmem:[%s274 + $0x2bf8] sm:$0xff]
        %v3142 = vld [vmem:[%s274 + $0x2c00] sm:$0xff]
        %v3143 = vld [vmem:[%s274 + $0x2c08] sm:$0xff]
        %v3144 = vld [vmem:[%s274 + $0x2c10] sm:$0xff]
        %v3145 = vld [vmem:[%s274 + $0x2c18] sm:$0xff]
        %v3146 = vld [vmem:[%s274 + $0x2c20] sm:$0xff]
        %v3147 = vld [vmem:[%s274 + $0x2c28] sm:$0xff]
        %v3148 = vld [vmem:[%s274 + $0x2c30] sm:$0xff]
        %v3149 = vld [vmem:[%s274 + $0x2c38] sm:$0xff]
        %v3150 = vld [vmem:[%s274 + $0x2c40] sm:$0xff]
        %v3151 = vld [vmem:[%s274 + $0x2c48] sm:$0xff]
        %v3152 = vld [vmem:[%s274 + $0x2c50] sm:$0xff]
        %v3153 = vld [vmem:[%s274 + $0x2c58] sm:$0xff]
        %v3154 = vld [vmem:[%s274 + $0x2c60] sm:$0xff]
        %v3155 = vld [vmem:[%s274 + $0x2c68] sm:$0xff]
        %v3156 = vld [vmem:[%s274 + $0x2c70] sm:$0xff]
        %v3157 = vld [vmem:[%s274 + $0x2c78] sm:$0xff]
        %v3158 = vld [vmem:[%s274 + $0x2c80] sm:$0xff]
        %v3159 = vld [vmem:[%s274 + $0x2c88] sm:$0xff]
        %v3160 = vld [vmem:[%s274 + $0x2c90] sm:$0xff]
        %v3161 = vld [vmem:[%s274 + $0x2c98] sm:$0xff]
        %v3162 = vld [vmem:[%s274 + $0x2ca0] sm:$0xff]
        %v3163 = vld [vmem:[%s274 + $0x2ca8] sm:$0xff]
        %v3164 = vld [vmem:[%s274 + $0x2cb0] sm:$0xff]
        %v3165 = vld [vmem:[%s274 + $0x2cb8] sm:$0xff]
        %v3166 = vld [vmem:[%s274 + $0x2cc0] sm:$0xff]
        %v3167 = vld [vmem:[%s274 + $0x2cc8] sm:$0xff]
        %v3168 = vld [vmem:[%s274 + $0x2cd0] sm:$0xff]
        %v3169 = vld [vmem:[%s274 + $0x2cd8] sm:$0xff]
        %v3170 = vld [vmem:[%s274 + $0x2ce0] sm:$0xff]
        %v3171 = vld [vmem:[%s274 + $0x2ce8] sm:$0xff]
        %v3172 = vld [vmem:[%s274 + $0x2cf0] sm:$0xff]
        %v3173 = vld [vmem:[%s274 + $0x2cf8] sm:$0xff]
        %v3174 = vld [vmem:[%s274 + $0x2d00] sm:$0xff]
        %v3175 = vld [vmem:[%s274 + $0x2d08] sm:$0xff]
        %v3176 = vld [vmem:[%s274 + $0x2d10] sm:$0xff]
        %v3177 = vld [vmem:[%s274 + $0x2d18] sm:$0xff]
        %v3178 = vld [vmem:[%s274 + $0x2d20] sm:$0xff]
        %v3179 = vld [vmem:[%s274 + $0x2d28] sm:$0xff]
        %v3180 = vld [vmem:[%s274 + $0x2d30] sm:$0xff]
        %v3181 = vld [vmem:[%s274 + $0x2d38] sm:$0xff]
        %v3182 = vld [vmem:[%s274 + $0x2d40] sm:$0xff]
        %v3183 = vld [vmem:[%s274 + $0x2d48] sm:$0xff]
        %v3184 = vld [vmem:[%s274 + $0x2d50] sm:$0xff]
        %v3185 = vld [vmem:[%s274 + $0x2d58] sm:$0xff]
        %v3186 = vld [vmem:[%s274 + $0x2d60] sm:$0xff]
        %v3187 = vld [vmem:[%s274 + $0x2d68] sm:$0xff]
        %v3188 = vld [vmem:[%s274 + $0x2d70] sm:$0xff]
        %v3189 = vld [vmem:[%s274 + $0x2d78] sm:$0xff]
        %v3190 = vld [vmem:[%s274 + $0x2d80] sm:$0xff]
        %v3191 = vld [vmem:[%s274 + $0x2d88] sm:$0xff]
        %v3192 = vld [vmem:[%s274 + $0x2d90] sm:$0xff]
        %v3193 = vld [vmem:[%s274 + $0x2d98] sm:$0xff]
        %v3194 = vld [vmem:[%s274 + $0x2da0] sm:$0xff]
        %v3195 = vld [vmem:[%s274 + $0x2da8] sm:$0xff]
        %v3196 = vld [vmem:[%s274 + $0x2db0] sm:$0xff]
        %v3197 = vld [vmem:[%s274 + $0x2db8] sm:$0xff]
        %v3198 = vld [vmem:[%s274 + $0x2dc0] sm:$0xff]
        %v3199 = vld [vmem:[%s274 + $0x2dc8] sm:$0xff]
        %v3200 = vld [vmem:[%s274 + $0x2dd0] sm:$0xff]
        %v3201 = vld [vmem:[%s274 + $0x2dd8] sm:$0xff]
        %v3202 = vld [vmem:[%s274 + $0x2de0] sm:$0xff]
        %v3203 = vld [vmem:[%s274 + $0x2de8] sm:$0xff]
        %v3204 = vld [vmem:[%s274 + $0x2df0] sm:$0xff]
        %v3205 = vld [vmem:[%s274 + $0x2df8] sm:$0xff]
        %v3206 = vld [vmem:[%s274 + $0x2e00] sm:$0xff]
        %v3207 = vld [vmem:[%s274 + $0x2e08] sm:$0xff]
        %v3208 = vld [vmem:[%s274 + $0x2e10] sm:$0xff]
        %v3209 = vld [vmem:[%s274 + $0x2e18] sm:$0xff]
        %v3210 = vld [vmem:[%s274 + $0x2e20] sm:$0xff]
        %v3211 = vld [vmem:[%s274 + $0x2e28] sm:$0xff]
        %v3212 = vld [vmem:[%s274 + $0x2e30] sm:$0xff]
        %v3213 = vld [vmem:[%s274 + $0x2e38] sm:$0xff]
        %v3214 = vld [vmem:[%s274 + $0x2e40] sm:$0xff]
        %v3215 = vld [vmem:[%s274 + $0x2e48] sm:$0xff]
        %v3216 = vld [vmem:[%s274 + $0x2e50] sm:$0xff]
        %v3217 = vld [vmem:[%s274 + $0x2e58] sm:$0xff]
        %v3218 = vld [vmem:[%s274 + $0x2e60] sm:$0xff]
        %v3219 = vld [vmem:[%s274 + $0x2e68] sm:$0xff]
        %v3220 = vld [vmem:[%s274 + $0x2e70] sm:$0xff]
        %v3221 = vld [vmem:[%s274 + $0x2e78] sm:$0xff]
        %v3222 = vld [vmem:[%s274 + $0x2e80] sm:$0xff]
        %v3223 = vld [vmem:[%s274 + $0x2e88] sm:$0xff]
        %v3224 = vld [vmem:[%s274 + $0x2e90] sm:$0xff]
        %v3225 = vld [vmem:[%s274 + $0x2e98] sm:$0xff]
        %v3226 = vld [vmem:[%s274 + $0x2ea0] sm:$0xff]
        %v3227 = vld [vmem:[%s274 + $0x2ea8] sm:$0xff]
        %v3228 = vld [vmem:[%s274 + $0x2eb0] sm:$0xff]
        %v3229 = vld [vmem:[%s274 + $0x2eb8] sm:$0xff]
        %v3230 = vld [vmem:[%s274 + $0x2ec0] sm:$0xff]
        %v3231 = vld [vmem:[%s274 + $0x2ec8] sm:$0xff]
        %v3232 = vld [vmem:[%s274 + $0x2ed0] sm:$0xff]
        %v3233 = vld [vmem:[%s274 + $0x2ed8] sm:$0xff]
        %v3234 = vld [vmem:[%s274 + $0x2ee0] sm:$0xff]
        %v3235 = vld [vmem:[%s274 + $0x2ee8] sm:$0xff]
        %v3236 = vld [vmem:[%s274 + $0x2ef0] sm:$0xff]
        %v3237 = vld [vmem:[%s274 + $0x2ef8] sm:$0xff]
        %v3238 = vld [vmem:[%s274 + $0x2f00] sm:$0xff]
        %v3239 = vld [vmem:[%s274 + $0x2f08] sm:$0xff]
        %v3240 = vld [vmem:[%s274 + $0x2f10] sm:$0xff]
        %v3241 = vld [vmem:[%s274 + $0x2f18] sm:$0xff]
        %v3242 = vld [vmem:[%s274 + $0x2f20] sm:$0xff]
        %v3243 = vld [vmem:[%s274 + $0x2f28] sm:$0xff]
        %v3244 = vld [vmem:[%s274 + $0x2f30] sm:$0xff]
        %v3245 = vld [vmem:[%s274 + $0x2f38] sm:$0xff]
        %v3246 = vld [vmem:[%s274 + $0x2f40] sm:$0xff]
        %v3247 = vld [vmem:[%s274 + $0x2f48] sm:$0xff]
        %v3248 = vld [vmem:[%s274 + $0x2f50] sm:$0xff]
        %v3249 = vld [vmem:[%s274 + $0x2f58] sm:$0xff]
        %v3250 = vld [vmem:[%s274 + $0x2f60] sm:$0xff]
        %v3251 = vld [vmem:[%s274 + $0x2f68] sm:$0xff]
        %v3252 = vld [vmem:[%s274 + $0x2f70] sm:$0xff]
        %v3253 = vld [vmem:[%s274 + $0x2f78] sm:$0xff]
        %v3254 = vld [vmem:[%s274 + $0x2f80] sm:$0xff]
        %v3255 = vld [vmem:[%s274 + $0x2f88] sm:$0xff]
        %v3256 = vld [vmem:[%s274 + $0x2f90] sm:$0xff]
        %v3257 = vld [vmem:[%s274 + $0x2f98] sm:$0xff]
        %v3258 = vld [vmem:[%s274 + $0x2fa0] sm:$0xff]
        %v3259 = vld [vmem:[%s274 + $0x2fa8] sm:$0xff]
        %v3260 = vld [vmem:[%s274 + $0x2fb0] sm:$0xff]
        %v3261 = vld [vmem:[%s274 + $0x2fb8] sm:$0xff]
        %v3262 = vld [vmem:[%s274 + $0x2fc0] sm:$0xff]
        %v3263 = vld [vmem:[%s274 + $0x2fc8] sm:$0xff]
        %v3264 = vld [vmem:[%s274 + $0x2fd0] sm:$0xff]
        %v3265 = vld [vmem:[%s274 + $0x2fd8] sm:$0xff]
        %v3266 = vld [vmem:[%s274 + $0x2fe0] sm:$0xff]
        %v3267 = vld [vmem:[%s274 + $0x2fe8] sm:$0xff]
        %v3268 = vld [vmem:[%s274 + $0x2ff0] sm:$0xff]
        %v3269 = vld [vmem:[%s274 + $0x2ff8] sm:$0xff]
        %v3270 = vld [vmem:[%s274 + $0x3000] sm:$0xff]
        %v3271 = vld [vmem:[%s274 + $0x3008] sm:$0xff]
        %v3272 = vld [vmem:[%s274 + $0x3010] sm:$0xff]
        %v3273 = vld [vmem:[%s274 + $0x3018] sm:$0xff]
        %v3274 = vld [vmem:[%s274 + $0x3020] sm:$0xff]
        %v3275 = vld [vmem:[%s274 + $0x3028] sm:$0xff]
        %v3276 = vld [vmem:[%s274 + $0x3030] sm:$0xff]
        %v3277 = vld [vmem:[%s274 + $0x3038] sm:$0xff]
        %v3278 = vld [vmem:[%s274 + $0x3040] sm:$0xff]
        %v3279 = vld [vmem:[%s274 + $0x3048] sm:$0xff]
        %v3280 = vld [vmem:[%s274 + $0x3050] sm:$0xff]
        %v3281 = vld [vmem:[%s274 + $0x3058] sm:$0xff]
        %v3282 = vld [vmem:[%s274 + $0x3060] sm:$0xff]
        %v3283 = vld [vmem:[%s274 + $0x3068] sm:$0xff]
        %v3284 = vld [vmem:[%s274 + $0x3070] sm:$0xff]
        %v3285 = vld [vmem:[%s274 + $0x3078] sm:$0xff]
        %v3286 = vld [vmem:[%s274 + $0x3080] sm:$0xff]
        %v3287 = vld [vmem:[%s274 + $0x3088] sm:$0xff]
        %v3288 = vld [vmem:[%s274 + $0x3090] sm:$0xff]
        %v3289 = vld [vmem:[%s274 + $0x3098] sm:$0xff]
        %v3290 = vld [vmem:[%s274 + $0x30a0] sm:$0xff]
        %v3291 = vld [vmem:[%s274 + $0x30a8] sm:$0xff]
        %v3292 = vld [vmem:[%s274 + $0x30b0] sm:$0xff]
        %v3293 = vld [vmem:[%s274 + $0x30b8] sm:$0xff]
        %v3294 = vld [vmem:[%s274 + $0x30c0] sm:$0xff]
        %v3295 = vld [vmem:[%s274 + $0x30c8] sm:$0xff]
        %v3296 = vld [vmem:[%s274 + $0x30d0] sm:$0xff]
        %v3297 = vld [vmem:[%s274 + $0x30d8] sm:$0xff]
        %v3298 = vld [vmem:[%s274 + $0x30e0] sm:$0xff]
        %v3299 = vld [vmem:[%s274 + $0x30e8] sm:$0xff]
        %v3300 = vld [vmem:[%s274 + $0x30f0] sm:$0xff]
        %v3301 = vld [vmem:[%s274 + $0x30f8] sm:$0xff]
        %v3302 = vld [vmem:[%s274 + $0x3100] sm:$0xff]
        %v3303 = vld [vmem:[%s274 + $0x3108] sm:$0xff]
        %v3304 = vld [vmem:[%s274 + $0x3110] sm:$0xff]
        %v3305 = vld [vmem:[%s274 + $0x3118] sm:$0xff]
        %v3306 = vld [vmem:[%s274 + $0x3120] sm:$0xff]
        %v3307 = vld [vmem:[%s274 + $0x3128] sm:$0xff]
        %v3308 = vld [vmem:[%s274 + $0x3130] sm:$0xff]
        %v3309 = vld [vmem:[%s274 + $0x3138] sm:$0xff]
        %v3310 = vld [vmem:[%s274 + $0x3140] sm:$0xff]
        %v3311 = vld [vmem:[%s274 + $0x3148] sm:$0xff]
        %v3312 = vld [vmem:[%s274 + $0x3150] sm:$0xff]
        %v3313 = vld [vmem:[%s274 + $0x3158] sm:$0xff]
        %v3314 = vld [vmem:[%s274 + $0x3160] sm:$0xff]
        %v3315 = vld [vmem:[%s274 + $0x3168] sm:$0xff]
        %v3316 = vld [vmem:[%s274 + $0x3170] sm:$0xff]
        %v3317 = vld [vmem:[%s274 + $0x3178] sm:$0xff]
        %v3318 = vld [vmem:[%s274 + $0x3180] sm:$0xff]
        %v3319 = vld [vmem:[%s274 + $0x3188] sm:$0xff]
        %v3320 = vld [vmem:[%s274 + $0x3190] sm:$0xff]
        %v3321 = vld [vmem:[%s274 + $0x3198] sm:$0xff]
        %v3322 = vld [vmem:[%s274 + $0x31a0] sm:$0xff]
        %v3323 = vld [vmem:[%s274 + $0x31a8] sm:$0xff]
        %v3324 = vld [vmem:[%s274 + $0x31b0] sm:$0xff]
        %v3325 = vld [vmem:[%s274 + $0x31b8] sm:$0xff]
        %v3326 = vld [vmem:[%s274 + $0x31c0] sm:$0xff]
        %v3327 = vld [vmem:[%s274 + $0x31c8] sm:$0xff]
        %v3328 = vld [vmem:[%s274 + $0x31d0] sm:$0xff]
        %v3329 = vld [vmem:[%s274 + $0x31d8] sm:$0xff]
        %v3330 = vld [vmem:[%s274 + $0x31e0] sm:$0xff]
        %v3331 = vld [vmem:[%s274 + $0x31e8] sm:$0xff]
        %v3332 = vld [vmem:[%s274 + $0x31f0] sm:$0xff]
        %v3333 = vld [vmem:[%s274 + $0x31f8] sm:$0xff]
        %v3334 = vld [vmem:[%s274 + $0x3200] sm:$0xff]
        %v3335 = vld [vmem:[%s274 + $0x3208] sm:$0xff]
        %v3336 = vld [vmem:[%s274 + $0x3210] sm:$0xff]
        %v3337 = vld [vmem:[%s274 + $0x3218] sm:$0xff]
        %v3338 = vld [vmem:[%s274 + $0x3220] sm:$0xff]
        %v3339 = vld [vmem:[%s274 + $0x3228] sm:$0xff]
        %v3340 = vld [vmem:[%s274 + $0x3230] sm:$0xff]
        %v3341 = vld [vmem:[%s274 + $0x3238] sm:$0xff]
        %v3342 = vld [vmem:[%s274 + $0x3240] sm:$0xff]
        %v3343 = vld [vmem:[%s274 + $0x3248] sm:$0xff]
        %v3344 = vld [vmem:[%s274 + $0x3250] sm:$0xff]
        %v3345 = vld [vmem:[%s274 + $0x3258] sm:$0xff]
        %v3346 = vld [vmem:[%s274 + $0x3260] sm:$0xff]
        %v3347 = vld [vmem:[%s274 + $0x3268] sm:$0xff]
        %v3348 = vld [vmem:[%s274 + $0x3270] sm:$0xff]
        %v3349 = vld [vmem:[%s274 + $0x3278] sm:$0xff]
        %v3350 = vld [vmem:[%s274 + $0x3280] sm:$0xff]
        %v3351 = vld [vmem:[%s274 + $0x3288] sm:$0xff]
        %v3352 = vld [vmem:[%s274 + $0x3290] sm:$0xff]
        %v3353 = vld [vmem:[%s274 + $0x3298] sm:$0xff]
        %v3354 = vld [vmem:[%s274 + $0x32a0] sm:$0xff]
        %v3355 = vld [vmem:[%s274 + $0x32a8] sm:$0xff]
        %v3356 = vld [vmem:[%s274 + $0x32b0] sm:$0xff]
        %v3357 = vld [vmem:[%s274 + $0x32b8] sm:$0xff]
        %v3358 = vld [vmem:[%s274 + $0x32c0] sm:$0xff]
        %v3359 = vld [vmem:[%s274 + $0x32c8] sm:$0xff]
        %v3360 = vld [vmem:[%s274 + $0x32d0] sm:$0xff]
        %v3361 = vld [vmem:[%s274 + $0x32d8] sm:$0xff]
        %v3362 = vld [vmem:[%s274 + $0x32e0] sm:$0xff]
        %v3363 = vld [vmem:[%s274 + $0x32e8] sm:$0xff]
        %v3364 = vld [vmem:[%s274 + $0x32f0] sm:$0xff]
        %v3365 = vld [vmem:[%s274 + $0x32f8] sm:$0xff]
        %v3366 = vld [vmem:[%s274 + $0x3300] sm:$0xff]
        %v3367 = vld [vmem:[%s274 + $0x3308] sm:$0xff]
        %v3368 = vld [vmem:[%s274 + $0x3310] sm:$0xff]
        %v3369 = vld [vmem:[%s274 + $0x3318] sm:$0xff]
        %v3370 = vld [vmem:[%s274 + $0x3320] sm:$0xff]
        %v3371 = vld [vmem:[%s274 + $0x3328] sm:$0xff]
        %v3372 = vld [vmem:[%s274 + $0x3330] sm:$0xff]
        %v3373 = vld [vmem:[%s274 + $0x3338] sm:$0xff]
        %v3374 = vld [vmem:[%s274 + $0x3340] sm:$0xff]
        %v3375 = vld [vmem:[%s274 + $0x3348] sm:$0xff]
        %v3376 = vld [vmem:[%s274 + $0x3350] sm:$0xff]
        %v3377 = vld [vmem:[%s274 + $0x3358] sm:$0xff]
        %v3378 = vld [vmem:[%s274 + $0x3360] sm:$0xff]
        %v3379 = vld [vmem:[%s274 + $0x3368] sm:$0xff]
        %v3380 = vld [vmem:[%s274 + $0x3370] sm:$0xff]
        %v3381 = vld [vmem:[%s274 + $0x3378] sm:$0xff]
        %v3382 = vld [vmem:[%s274 + $0x3380] sm:$0xff]
        %v3383 = vld [vmem:[%s274 + $0x3388] sm:$0xff]
        %v3384 = vld [vmem:[%s274 + $0x3390] sm:$0xff]
        %v3385 = vld [vmem:[%s274 + $0x3398] sm:$0xff]
        %v3386 = vld [vmem:[%s274 + $0x33a0] sm:$0xff]
        %v3387 = vld [vmem:[%s274 + $0x33a8] sm:$0xff]
        %v3388 = vld [vmem:[%s274 + $0x33b0] sm:$0xff]
        %v3389 = vld [vmem:[%s274 + $0x33b8] sm:$0xff]
        %v3390 = vld [vmem:[%s274 + $0x33c0] sm:$0xff]
        %v3391 = vld [vmem:[%s274 + $0x33c8] sm:$0xff]
        %v3392 = vld [vmem:[%s274 + $0x33d0] sm:$0xff]
        %v3393 = vld [vmem:[%s274 + $0x33d8] sm:$0xff]
        %v3394 = vld [vmem:[%s274 + $0x33e0] sm:$0xff]
        %v3395 = vld [vmem:[%s274 + $0x33e8] sm:$0xff]
        %v3396 = vld [vmem:[%s274 + $0x33f0] sm:$0xff]
        %v3397 = vld [vmem:[%s274 + $0x33f8] sm:$0xff]
        %v3398 = vld [vmem:[%s274 + $0x3400] sm:$0xff]
        %v3399 = vld [vmem:[%s274 + $0x3408] sm:$0xff]
        %v3400 = vld [vmem:[%s274 + $0x3410] sm:$0xff]
        %v3401 = vld [vmem:[%s274 + $0x3418] sm:$0xff]
        %v3402 = vld [vmem:[%s274 + $0x3420] sm:$0xff]
        %v3403 = vld [vmem:[%s274 + $0x3428] sm:$0xff]
        %v3404 = vld [vmem:[%s274 + $0x3430] sm:$0xff]
        %v3405 = vld [vmem:[%s274 + $0x3438] sm:$0xff]
        %v3406 = vld [vmem:[%s274 + $0x3440] sm:$0xff]
        %v3407 = vld [vmem:[%s274 + $0x3448] sm:$0xff]
        %v3408 = vld [vmem:[%s274 + $0x3450] sm:$0xff]
        %v3409 = vld [vmem:[%s274 + $0x3458] sm:$0xff]
        %v3410 = vld [vmem:[%s274 + $0x3460] sm:$0xff]
        %v3411 = vld [vmem:[%s274 + $0x3468] sm:$0xff]
        %v3412 = vld [vmem:[%s274 + $0x3470] sm:$0xff]
        %v3413 = vld [vmem:[%s274 + $0x3478] sm:$0xff]
        %v3414 = vld [vmem:[%s274 + $0x3480] sm:$0xff]
        %v3415 = vld [vmem:[%s274 + $0x3488] sm:$0xff]
        %v3416 = vld [vmem:[%s274 + $0x3490] sm:$0xff]
        %v3417 = vld [vmem:[%s274 + $0x3498] sm:$0xff]
        %v3418 = vld [vmem:[%s274 + $0x34a0] sm:$0xff]
        %v3419 = vld [vmem:[%s274 + $0x34a8] sm:$0xff]
        %v3420 = vld [vmem:[%s274 + $0x34b0] sm:$0xff]
        %v3421 = vld [vmem:[%s274 + $0x34b8] sm:$0xff]
        %v3422 = vld [vmem:[%s274 + $0x34c0] sm:$0xff]
        %v3423 = vld [vmem:[%s274 + $0x34c8] sm:$0xff]
        %v3424 = vld [vmem:[%s274 + $0x34d0] sm:$0xff]
        %v3425 = vld [vmem:[%s274 + $0x34d8] sm:$0xff]
        %v3426 = vld [vmem:[%s274 + $0x34e0] sm:$0xff]
        %v3427 = vld [vmem:[%s274 + $0x34e8] sm:$0xff]
        %v3428 = vld [vmem:[%s274 + $0x34f0] sm:$0xff]
        %v3429 = vld [vmem:[%s274 + $0x34f8] sm:$0xff]
        %v3430 = vld [vmem:[%s274 + $0x3500] sm:$0xff]
        %v3431 = vld [vmem:[%s274 + $0x3508] sm:$0xff]
        %v3432 = vld [vmem:[%s274 + $0x3510] sm:$0xff]
        %v3433 = vld [vmem:[%s274 + $0x3518] sm:$0xff]
        %v3434 = vld [vmem:[%s274 + $0x3520] sm:$0xff]
        %v3435 = vld [vmem:[%s274 + $0x3528] sm:$0xff]
        %v3436 = vld [vmem:[%s274 + $0x3530] sm:$0xff]
        %v3437 = vld [vmem:[%s274 + $0x3538] sm:$0xff]
        %v3438 = vld [vmem:[%s274 + $0x3540] sm:$0xff]
        %v3439 = vld [vmem:[%s274 + $0x3548] sm:$0xff]
        %v3440 = vld [vmem:[%s274 + $0x3550] sm:$0xff]
        %v3441 = vld [vmem:[%s274 + $0x3558] sm:$0xff]
        %v3442 = vld [vmem:[%s274 + $0x3560] sm:$0xff]
        %v3443 = vld [vmem:[%s274 + $0x3568] sm:$0xff]
        %v3444 = vld [vmem:[%s274 + $0x3570] sm:$0xff]
        %v3445 = vld [vmem:[%s274 + $0x3578] sm:$0xff]
        %v3446 = vld [vmem:[%s274 + $0x3580] sm:$0xff]
        %v3447 = vld [vmem:[%s274 + $0x3588] sm:$0xff]
        %v3448 = vld [vmem:[%s274 + $0x3590] sm:$0xff]
        %v3449 = vld [vmem:[%s274 + $0x3598] sm:$0xff]
        %v3450 = vld [vmem:[%s274 + $0x35a0] sm:$0xff]
        %v3451 = vld [vmem:[%s274 + $0x35a8] sm:$0xff]
        %v3452 = vld [vmem:[%s274 + $0x35b0] sm:$0xff]
        %v3453 = vld [vmem:[%s274 + $0x35b8] sm:$0xff]
        %v3454 = vld [vmem:[%s274 + $0x35c0] sm:$0xff]
        %v3455 = vld [vmem:[%s274 + $0x35c8] sm:$0xff]
        %v3456 = vld [vmem:[%s274 + $0x35d0] sm:$0xff]
        %v3457 = vld [vmem:[%s274 + $0x35d8] sm:$0xff]
        %v3458 = vld [vmem:[%s274 + $0x35e0] sm:$0xff]
        %v3459 = vld [vmem:[%s274 + $0x35e8] sm:$0xff]
        %v3460 = vld [vmem:[%s274 + $0x35f0] sm:$0xff]
        %v3461 = vld [vmem:[%s274 + $0x35f8] sm:$0xff]
        %v3462 = vld [vmem:[%s274 + $0x3600] sm:$0xff]
        %v3463 = vld [vmem:[%s274 + $0x3608] sm:$0xff]
        %v3464 = vld [vmem:[%s274 + $0x3610] sm:$0xff]
        %v3465 = vld [vmem:[%s274 + $0x3618] sm:$0xff]
        %v3466 = vld [vmem:[%s274 + $0x3620] sm:$0xff]
        %v3467 = vld [vmem:[%s274 + $0x3628] sm:$0xff]
        %v3468 = vld [vmem:[%s274 + $0x3630] sm:$0xff]
        %v3469 = vld [vmem:[%s274 + $0x3638] sm:$0xff]
        %v3470 = vld [vmem:[%s274 + $0x3640] sm:$0xff]
        %v3471 = vld [vmem:[%s274 + $0x3648] sm:$0xff]
        %v3472 = vld [vmem:[%s274 + $0x3650] sm:$0xff]
        %v3473 = vld [vmem:[%s274 + $0x3658] sm:$0xff]
        %v3474 = vld [vmem:[%s274 + $0x3660] sm:$0xff]
        %v3475 = vld [vmem:[%s274 + $0x3668] sm:$0xff]
        %v3476 = vld [vmem:[%s274 + $0x3670] sm:$0xff]
        %v3477 = vld [vmem:[%s274 + $0x3678] sm:$0xff]
        %v3478 = vld [vmem:[%s274 + $0x3680] sm:$0xff]
        %v3479 = vld [vmem:[%s274 + $0x3688] sm:$0xff]
        %v3480 = vld [vmem:[%s274 + $0x3690] sm:$0xff]
        %v3481 = vld [vmem:[%s274 + $0x3698] sm:$0xff]
        %v3482 = vld [vmem:[%s274 + $0x36a0] sm:$0xff]
        %v3483 = vld [vmem:[%s274 + $0x36a8] sm:$0xff]
        %v3484 = vld [vmem:[%s274 + $0x36b0] sm:$0xff]
        %v3485 = vld [vmem:[%s274 + $0x36b8] sm:$0xff]
        %v3486 = vld [vmem:[%s274 + $0x36c0] sm:$0xff]
        %v3487 = vld [vmem:[%s274 + $0x36c8] sm:$0xff]
        %v3488 = vld [vmem:[%s274 + $0x36d0] sm:$0xff]
        %v3489 = vld [vmem:[%s274 + $0x36d8] sm:$0xff]
        %v3490 = vld [vmem:[%s274 + $0x36e0] sm:$0xff]
        %v3491 = vld [vmem:[%s274 + $0x36e8] sm:$0xff]
        %v3492 = vld [vmem:[%s274 + $0x36f0] sm:$0xff]
        %v3493 = vld [vmem:[%s274 + $0x36f8] sm:$0xff]
        %v3494 = vld [vmem:[%s274 + $0x3700] sm:$0xff]
        %v3495 = vld [vmem:[%s274 + $0x3708] sm:$0xff]
        %v3496 = vld [vmem:[%s274 + $0x3710] sm:$0xff]
        %v3497 = vld [vmem:[%s274 + $0x3718] sm:$0xff]
        %v3498 = vld [vmem:[%s274 + $0x3720] sm:$0xff]
        %v3499 = vld [vmem:[%s274 + $0x3728] sm:$0xff]
        %v3500 = vld [vmem:[%s274 + $0x3730] sm:$0xff]
        %v3501 = vld [vmem:[%s274 + $0x3738] sm:$0xff]
        %v3502 = vld [vmem:[%s274 + $0x3740] sm:$0xff]
        %v3503 = vld [vmem:[%s274 + $0x3748] sm:$0xff]
        %v3504 = vld [vmem:[%s274 + $0x3750] sm:$0xff]
        %v3505 = vld [vmem:[%s274 + $0x3758] sm:$0xff]
        %v3506 = vld [vmem:[%s274 + $0x3760] sm:$0xff]
        %v3507 = vld [vmem:[%s274 + $0x3768] sm:$0xff]
        %v3508 = vld [vmem:[%s274 + $0x3770] sm:$0xff]
        %v3509 = vld [vmem:[%s274 + $0x3778] sm:$0xff]
        %v3510 = vld [vmem:[%s274 + $0x3780] sm:$0xff]
        %v3511 = vld [vmem:[%s274 + $0x3788] sm:$0xff]
        %v3512 = vld [vmem:[%s274 + $0x3790] sm:$0xff]
        %v3513 = vld [vmem:[%s274 + $0x3798] sm:$0xff]
        %v3514 = vld [vmem:[%s274 + $0x37a0] sm:$0xff]
        %v3515 = vld [vmem:[%s274 + $0x37a8] sm:$0xff]
        %v3516 = vld [vmem:[%s274 + $0x37b0] sm:$0xff]
        %v3517 = vld [vmem:[%s274 + $0x37b8] sm:$0xff]
        %v3518 = vld [vmem:[%s274 + $0x37c0] sm:$0xff]
        %v3519 = vld [vmem:[%s274 + $0x37c8] sm:$0xff]
        %v3520 = vld [vmem:[%s274 + $0x37d0] sm:$0xff]
        %v3521 = vld [vmem:[%s274 + $0x37d8] sm:$0xff]
        %v3522 = vld [vmem:[%s274 + $0x37e0] sm:$0xff]
        %v3523 = vld [vmem:[%s274 + $0x37e8] sm:$0xff]
        %v3524 = vld [vmem:[%s274 + $0x37f0] sm:$0xff]
        %v3525 = vld [vmem:[%s274 + $0x37f8] sm:$0xff]
        %v3526 = vld [vmem:[%s274 + $0x3800] sm:$0xff]
        %v3527 = vld [vmem:[%s274 + $0x3808] sm:$0xff]
        %v3528 = vld [vmem:[%s274 + $0x3810] sm:$0xff]
        %v3529 = vld [vmem:[%s274 + $0x3818] sm:$0xff]
        %v3530 = vld [vmem:[%s274 + $0x3820] sm:$0xff]
        %v3531 = vld [vmem:[%s274 + $0x3828] sm:$0xff]
        %v3532 = vld [vmem:[%s274 + $0x3830] sm:$0xff]
        %v3533 = vld [vmem:[%s274 + $0x3838] sm:$0xff]
        %v3534 = vld [vmem:[%s274 + $0x3840] sm:$0xff]
        %v3535 = vld [vmem:[%s274 + $0x3848] sm:$0xff]
        %v3536 = vld [vmem:[%s274 + $0x3850] sm:$0xff]
        %v3537 = vld [vmem:[%s274 + $0x3858] sm:$0xff]
        %v3538 = vld [vmem:[%s274 + $0x3860] sm:$0xff]
        %v3539 = vld [vmem:[%s274 + $0x3868] sm:$0xff]
        %v3540 = vld [vmem:[%s274 + $0x3870] sm:$0xff]
        %v3541 = vld [vmem:[%s274 + $0x3878] sm:$0xff]
        %v3542 = vld [vmem:[%s274 + $0x3880] sm:$0xff]
        %v3543 = vld [vmem:[%s274 + $0x3888] sm:$0xff]
        %v3544 = vld [vmem:[%s274 + $0x3890] sm:$0xff]
        %v3545 = vld [vmem:[%s274 + $0x3898] sm:$0xff]
        %v3546 = vld [vmem:[%s274 + $0x38a0] sm:$0xff]
        %v3547 = vld [vmem:[%s274 + $0x38a8] sm:$0xff]
        %v3548 = vld [vmem:[%s274 + $0x38b0] sm:$0xff]
        %v3549 = vld [vmem:[%s274 + $0x38b8] sm:$0xff]
        %v3550 = vld [vmem:[%s274 + $0x38c0] sm:$0xff]
        %v3551 = vld [vmem:[%s274 + $0x38c8] sm:$0xff]
        %v3552 = vld [vmem:[%s274 + $0x38d0] sm:$0xff]
        %v3553 = vld [vmem:[%s274 + $0x38d8] sm:$0xff]
        %v3554 = vld [vmem:[%s274 + $0x38e0] sm:$0xff]
        %v3555 = vld [vmem:[%s274 + $0x38e8] sm:$0xff]
        %v3556 = vld [vmem:[%s274 + $0x38f0] sm:$0xff]
        %v3557 = vld [vmem:[%s274 + $0x38f8] sm:$0xff]
        %v3558 = vld [vmem:[%s274 + $0x3900] sm:$0xff]
        %v3559 = vld [vmem:[%s274 + $0x3908] sm:$0xff]
        %v3560 = vld [vmem:[%s274 + $0x3910] sm:$0xff]
        %v3561 = vld [vmem:[%s274 + $0x3918] sm:$0xff]
        %v3562 = vld [vmem:[%s274 + $0x3920] sm:$0xff]
        %v3563 = vld [vmem:[%s274 + $0x3928] sm:$0xff]
        %v3564 = vld [vmem:[%s274 + $0x3930] sm:$0xff]
        %v3565 = vld [vmem:[%s274 + $0x3938] sm:$0xff]
        %v3566 = vld [vmem:[%s274 + $0x3940] sm:$0xff]
        %v3567 = vld [vmem:[%s274 + $0x3948] sm:$0xff]
        %v3568 = vld [vmem:[%s274 + $0x3950] sm:$0xff]
        %v3569 = vld [vmem:[%s274 + $0x3958] sm:$0xff]
        %v3570 = vld [vmem:[%s274 + $0x3960] sm:$0xff]
        %v3571 = vld [vmem:[%s274 + $0x3968] sm:$0xff]
        %v3572 = vld [vmem:[%s274 + $0x3970] sm:$0xff]
        %v3573 = vld [vmem:[%s274 + $0x3978] sm:$0xff]
        %v3574 = vld [vmem:[%s274 + $0x3980] sm:$0xff]
        %v3575 = vld [vmem:[%s274 + $0x3988] sm:$0xff]
        %v3576 = vld [vmem:[%s274 + $0x3990] sm:$0xff]
        %v3577 = vld [vmem:[%s274 + $0x3998] sm:$0xff]
        %v3578 = vld [vmem:[%s274 + $0x39a0] sm:$0xff]
        %v3579 = vld [vmem:[%s274 + $0x39a8] sm:$0xff]
        %v3580 = vld [vmem:[%s274 + $0x39b0] sm:$0xff]
        %v3581 = vld [vmem:[%s274 + $0x39b8] sm:$0xff]
        %v3582 = vld [vmem:[%s274 + $0x39c0] sm:$0xff]
        %v3583 = vld [vmem:[%s274 + $0x39c8] sm:$0xff]
        %v3584 = vld [vmem:[%s274 + $0x39d0] sm:$0xff]
        %v3585 = vld [vmem:[%s274 + $0x39d8] sm:$0xff]
        %v3586 = vld [vmem:[%s274 + $0x39e0] sm:$0xff]
        %v3587 = vld [vmem:[%s274 + $0x39e8] sm:$0xff]
        %v3588 = vld [vmem:[%s274 + $0x39f0] sm:$0xff]
        %v3589 = vld [vmem:[%s274 + $0x39f8] sm:$0xff]
        %v3590 = vld [vmem:[%s274 + $0x3a00] sm:$0xff]
        %v3591 = vld [vmem:[%s274 + $0x3a08] sm:$0xff]
        %v3592 = vld [vmem:[%s274 + $0x3a10] sm:$0xff]
        %v3593 = vld [vmem:[%s274 + $0x3a18] sm:$0xff]
        %v3594 = vld [vmem:[%s274 + $0x3a20] sm:$0xff]
        %v3595 = vld [vmem:[%s274 + $0x3a28] sm:$0xff]
        %v3596 = vld [vmem:[%s274 + $0x3a30] sm:$0xff]
        %v3597 = vld [vmem:[%s274 + $0x3a38] sm:$0xff]
        %v3598 = vld [vmem:[%s274 + $0x3a40] sm:$0xff]
        %v3599 = vld [vmem:[%s274 + $0x3a48] sm:$0xff]
        %v3600 = vld [vmem:[%s274 + $0x3a50] sm:$0xff]
        %v3601 = vld [vmem:[%s274 + $0x3a58] sm:$0xff]
        %v3602 = vld [vmem:[%s274 + $0x3a60] sm:$0xff]
        %v3603 = vld [vmem:[%s274 + $0x3a68] sm:$0xff]
        %v3604 = vld [vmem:[%s274 + $0x3a70] sm:$0xff]
        %v3605 = vld [vmem:[%s274 + $0x3a78] sm:$0xff]
        %v3606 = vld [vmem:[%s274 + $0x3a80] sm:$0xff]
        %v3607 = vld [vmem:[%s274 + $0x3a88] sm:$0xff]
        %v3608 = vld [vmem:[%s274 + $0x3a90] sm:$0xff]
        %v3609 = vld [vmem:[%s274 + $0x3a98] sm:$0xff]
        %v3610 = vld [vmem:[%s274 + $0x3aa0] sm:$0xff]
        %v3611 = vld [vmem:[%s274 + $0x3aa8] sm:$0xff]
        %v3612 = vld [vmem:[%s274 + $0x3ab0] sm:$0xff]
        %v3613 = vld [vmem:[%s274 + $0x3ab8] sm:$0xff]
        %v3614 = vld [vmem:[%s274 + $0x3ac0] sm:$0xff]
        %v3615 = vld [vmem:[%s274 + $0x3ac8] sm:$0xff]
        %v3616 = vld [vmem:[%s274 + $0x3ad0] sm:$0xff]
        %v3617 = vld [vmem:[%s274 + $0x3ad8] sm:$0xff]
        %v3618 = vld [vmem:[%s274 + $0x3ae0] sm:$0xff]
        %v3619 = vld [vmem:[%s274 + $0x3ae8] sm:$0xff]
        %v3620 = vld [vmem:[%s274 + $0x3af0] sm:$0xff]
        %v3621 = vld [vmem:[%s274 + $0x3af8] sm:$0xff]
        %v3622 = vld [vmem:[%s274 + $0x3b00] sm:$0xff]
        %v3623 = vld [vmem:[%s274 + $0x3b08] sm:$0xff]
        %v3624 = vld [vmem:[%s274 + $0x3b10] sm:$0xff]
        %v3625 = vld [vmem:[%s274 + $0x3b18] sm:$0xff]
        %v3626 = vld [vmem:[%s274 + $0x3b20] sm:$0xff]
        %v3627 = vld [vmem:[%s274 + $0x3b28] sm:$0xff]
        %v3628 = vld [vmem:[%s274 + $0x3b30] sm:$0xff]
        %v3629 = vld [vmem:[%s274 + $0x3b38] sm:$0xff]
        %v3630 = vld [vmem:[%s274 + $0x3b40] sm:$0xff]
        %v3631 = vld [vmem:[%s274 + $0x3b48] sm:$0xff]
        %v3632 = vld [vmem:[%s274 + $0x3b50] sm:$0xff]
        %v3633 = vld [vmem:[%s274 + $0x3b58] sm:$0xff]
        %v3634 = vld [vmem:[%s274 + $0x3b60] sm:$0xff]
        %v3635 = vld [vmem:[%s274 + $0x3b68] sm:$0xff]
        %v3636 = vld [vmem:[%s274 + $0x3b70] sm:$0xff]
        %v3637 = vld [vmem:[%s274 + $0x3b78] sm:$0xff]
        %v3638 = vld [vmem:[%s274 + $0x3b80] sm:$0xff]
        %v3639 = vld [vmem:[%s274 + $0x3b88] sm:$0xff]
        %v3640 = vld [vmem:[%s274 + $0x3b90] sm:$0xff]
        %v3641 = vld [vmem:[%s274 + $0x3b98] sm:$0xff]
        %v3642 = vld [vmem:[%s274 + $0x3ba0] sm:$0xff]
        %v3643 = vld [vmem:[%s274 + $0x3ba8] sm:$0xff]
        %v3644 = vld [vmem:[%s274 + $0x3bb0] sm:$0xff]
        %v3645 = vld [vmem:[%s274 + $0x3bb8] sm:$0xff]
        %v3646 = vld [vmem:[%s274 + $0x3bc0] sm:$0xff]
        %v3647 = vld [vmem:[%s274 + $0x3bc8] sm:$0xff]
        %v3648 = vld [vmem:[%s274 + $0x3bd0] sm:$0xff]
        %v3649 = vld [vmem:[%s274 + $0x3bd8] sm:$0xff]
        %v3650 = vld [vmem:[%s274 + $0x3be0] sm:$0xff]
        %v3651 = vld [vmem:[%s274 + $0x3be8] sm:$0xff]
        %v3652 = vld [vmem:[%s274 + $0x3bf0] sm:$0xff]
        %v3653 = vld [vmem:[%s274 + $0x3bf8] sm:$0xff]
        %v3654 = vld [vmem:[%s274 + $0x3c00] sm:$0xff]
        %v3655 = vld [vmem:[%s274 + $0x3c08] sm:$0xff]
        %v3656 = vld [vmem:[%s274 + $0x3c10] sm:$0xff]
        %v3657 = vld [vmem:[%s274 + $0x3c18] sm:$0xff]
        %v3658 = vld [vmem:[%s274 + $0x3c20] sm:$0xff]
        %v3659 = vld [vmem:[%s274 + $0x3c28] sm:$0xff]
        %v3660 = vld [vmem:[%s274 + $0x3c30] sm:$0xff]
        %v3661 = vld [vmem:[%s274 + $0x3c38] sm:$0xff]
        %v3662 = vld [vmem:[%s274 + $0x3c40] sm:$0xff]
        %v3663 = vld [vmem:[%s274 + $0x3c48] sm:$0xff]
        %v3664 = vld [vmem:[%s274 + $0x3c50] sm:$0xff]
        %v3665 = vld [vmem:[%s274 + $0x3c58] sm:$0xff]
        %v3666 = vld [vmem:[%s274 + $0x3c60] sm:$0xff]
        %v3667 = vld [vmem:[%s274 + $0x3c68] sm:$0xff]
        %v3668 = vld [vmem:[%s274 + $0x3c70] sm:$0xff]
        %v3669 = vld [vmem:[%s274 + $0x3c78] sm:$0xff]
        %v3670 = vld [vmem:[%s274 + $0x3c80] sm:$0xff]
        %v3671 = vld [vmem:[%s274 + $0x3c88] sm:$0xff]
        %v3672 = vld [vmem:[%s274 + $0x3c90] sm:$0xff]
        %v3673 = vld [vmem:[%s274 + $0x3c98] sm:$0xff]
        %v3674 = vld [vmem:[%s274 + $0x3ca0] sm:$0xff]
        %v3675 = vld [vmem:[%s274 + $0x3ca8] sm:$0xff]
        %v3676 = vld [vmem:[%s274 + $0x3cb0] sm:$0xff]
        %v3677 = vld [vmem:[%s274 + $0x3cb8] sm:$0xff]
        %v3678 = vld [vmem:[%s274 + $0x3cc0] sm:$0xff]
        %v3679 = vld [vmem:[%s274 + $0x3cc8] sm:$0xff]
        %v3680 = vld [vmem:[%s274 + $0x3cd0] sm:$0xff]
        %v3681 = vld [vmem:[%s274 + $0x3cd8] sm:$0xff]
        %v3682 = vld [vmem:[%s274 + $0x3ce0] sm:$0xff]
        %v3683 = vld [vmem:[%s274 + $0x3ce8] sm:$0xff]
        %v3684 = vld [vmem:[%s274 + $0x3cf0] sm:$0xff]
        %v3685 = vld [vmem:[%s274 + $0x3cf8] sm:$0xff]
        %v3686 = vld [vmem:[%s274 + $0x3d00] sm:$0xff]
        %v3687 = vld [vmem:[%s274 + $0x3d08] sm:$0xff]
        %v3688 = vld [vmem:[%s274 + $0x3d10] sm:$0xff]
        %v3689 = vld [vmem:[%s274 + $0x3d18] sm:$0xff]
        %v3690 = vld [vmem:[%s274 + $0x3d20] sm:$0xff]
        %v3691 = vld [vmem:[%s274 + $0x3d28] sm:$0xff]
        %v3692 = vld [vmem:[%s274 + $0x3d30] sm:$0xff]
        %v3693 = vld [vmem:[%s274 + $0x3d38] sm:$0xff]
        %v3694 = vld [vmem:[%s274 + $0x3d40] sm:$0xff]
        %v3695 = vld [vmem:[%s274 + $0x3d48] sm:$0xff]
        %v3696 = vld [vmem:[%s274 + $0x3d50] sm:$0xff]
        %v3697 = vld [vmem:[%s274 + $0x3d58] sm:$0xff]
        %v3698 = vld [vmem:[%s274 + $0x3d60] sm:$0xff]
        %v3699 = vld [vmem:[%s274 + $0x3d68] sm:$0xff]
        %v3700 = vld [vmem:[%s274 + $0x3d70] sm:$0xff]
        %v3701 = vld [vmem:[%s274 + $0x3d78] sm:$0xff]
        %v3702 = vld [vmem:[%s274 + $0x3d80] sm:$0xff]
        %v3703 = vld [vmem:[%s274 + $0x3d88] sm:$0xff]
        %v3704 = vld [vmem:[%s274 + $0x3d90] sm:$0xff]
        %v3705 = vld [vmem:[%s274 + $0x3d98] sm:$0xff]
        %v3706 = vld [vmem:[%s274 + $0x3da0] sm:$0xff]
        %v3707 = vld [vmem:[%s274 + $0x3da8] sm:$0xff]
        %v3708 = vld [vmem:[%s274 + $0x3db0] sm:$0xff]
        %v3709 = vld [vmem:[%s274 + $0x3db8] sm:$0xff]
        %v3710 = vld [vmem:[%s274 + $0x3dc0] sm:$0xff]
        %v3711 = vld [vmem:[%s274 + $0x3dc8] sm:$0xff]
        %v3712 = vld [vmem:[%s274 + $0x3dd0] sm:$0xff]
        %v3713 = vld [vmem:[%s274 + $0x3dd8] sm:$0xff]
        %v3714 = vld [vmem:[%s274 + $0x3de0] sm:$0xff]
        %v3715 = vld [vmem:[%s274 + $0x3de8] sm:$0xff]
        %v3716 = vld [vmem:[%s274 + $0x3df0] sm:$0xff]
        %v3717 = vld [vmem:[%s274 + $0x3df8] sm:$0xff]
        %v3718 = vld [vmem:[%s274 + $0x3e00] sm:$0xff]
        %v3719 = vld [vmem:[%s274 + $0x3e08] sm:$0xff]
        %v3720 = vld [vmem:[%s274 + $0x3e10] sm:$0xff]
        %v3721 = vld [vmem:[%s274 + $0x3e18] sm:$0xff]
        %v3722 = vld [vmem:[%s274 + $0x3e20] sm:$0xff]
        %v3723 = vld [vmem:[%s274 + $0x3e28] sm:$0xff]
        %v3724 = vld [vmem:[%s274 + $0x3e30] sm:$0xff]
        %v3725 = vld [vmem:[%s274 + $0x3e38] sm:$0xff]
        %v3726 = vld [vmem:[%s274 + $0x3e40] sm:$0xff]
        %v3727 = vld [vmem:[%s274 + $0x3e48] sm:$0xff]
        %v3728 = vld [vmem:[%s274 + $0x3e50] sm:$0xff]
        %v3729 = vld [vmem:[%s274 + $0x3e58] sm:$0xff]
        %v3730 = vld [vmem:[%s274 + $0x3e60] sm:$0xff]
        %v3731 = vld [vmem:[%s274 + $0x3e68] sm:$0xff]
        %v3732 = vld [vmem:[%s274 + $0x3e70] sm:$0xff]
        %v3733 = vld [vmem:[%s274 + $0x3e78] sm:$0xff]
        %v3734 = vld [vmem:[%s274 + $0x3e80] sm:$0xff]
        %v3735 = vld [vmem:[%s274 + $0x3e88] sm:$0xff]
        %v3736 = vld [vmem:[%s274 + $0x3e90] sm:$0xff]
        %v3737 = vld [vmem:[%s274 + $0x3e98] sm:$0xff]
        %v3738 = vld [vmem:[%s274 + $0x3ea0] sm:$0xff]
        %v3739 = vld [vmem:[%s274 + $0x3ea8] sm:$0xff]
        %v3740 = vld [vmem:[%s274 + $0x3eb0] sm:$0xff]
        %v3741 = vld [vmem:[%s274 + $0x3eb8] sm:$0xff]
        %v3742 = vld [vmem:[%s274 + $0x3ec0] sm:$0xff]
        %v3743 = vld [vmem:[%s274 + $0x3ec8] sm:$0xff]
        %v3744 = vld [vmem:[%s274 + $0x3ed0] sm:$0xff]
        %v3745 = vld [vmem:[%s274 + $0x3ed8] sm:$0xff]
        %v3746 = vld [vmem:[%s274 + $0x3ee0] sm:$0xff]
        %v3747 = vld [vmem:[%s274 + $0x3ee8] sm:$0xff]
        %v3748 = vld [vmem:[%s274 + $0x3ef0] sm:$0xff]
        %v3749 = vld [vmem:[%s274 + $0x3ef8] sm:$0xff]
        %v3750 = vld [vmem:[%s274 + $0x3f00] sm:$0xff]
        %v3751 = vld [vmem:[%s274 + $0x3f08] sm:$0xff]
        %v3752 = vld [vmem:[%s274 + $0x3f10] sm:$0xff]
        %v3753 = vld [vmem:[%s274 + $0x3f18] sm:$0xff]
        %v3754 = vld [vmem:[%s274 + $0x3f20] sm:$0xff]
        %v3755 = vld [vmem:[%s274 + $0x3f28] sm:$0xff]
        %v3756 = vld [vmem:[%s274 + $0x3f30] sm:$0xff]
        %v3757 = vld [vmem:[%s274 + $0x3f38] sm:$0xff]
        %v3758 = vld [vmem:[%s274 + $0x3f40] sm:$0xff]
        %v3759 = vld [vmem:[%s274 + $0x3f48] sm:$0xff]
        %v3760 = vld [vmem:[%s274 + $0x3f50] sm:$0xff]
        %v3761 = vld [vmem:[%s274 + $0x3f58] sm:$0xff]
        %v3762 = vld [vmem:[%s274 + $0x3f60] sm:$0xff]
        %v3763 = vld [vmem:[%s274 + $0x3f68] sm:$0xff]
        %v3764 = vld [vmem:[%s274 + $0x3f70] sm:$0xff]
        %v3765 = vld [vmem:[%s274 + $0x3f78] sm:$0xff]
        %v3766 = vld [vmem:[%s274 + $0x3f80] sm:$0xff]
        %v3767 = vld [vmem:[%s274 + $0x3f88] sm:$0xff]
        %v3768 = vld [vmem:[%s274 + $0x3f90] sm:$0xff]
        %v3769 = vld [vmem:[%s274 + $0x3f98] sm:$0xff]
        %v3770 = vld [vmem:[%s274 + $0x3fa0] sm:$0xff]
        %v3771 = vld [vmem:[%s274 + $0x3fa8] sm:$0xff]
        %v3772 = vld [vmem:[%s274 + $0x3fb0] sm:$0xff]
        %v3773 = vld [vmem:[%s274 + $0x3fb8] sm:$0xff]
        %v3774 = vld [vmem:[%s274 + $0x3fc0] sm:$0xff]
        %v3775 = vld [vmem:[%s274 + $0x3fc8] sm:$0xff]
        %v3776 = vld [vmem:[%s274 + $0x3fd0] sm:$0xff]
        %v3777 = vld [vmem:[%s274 + $0x3fd8] sm:$0xff]
        %v3778 = vld [vmem:[%s274 + $0x3fe0] sm:$0xff]
        %v3779 = vld [vmem:[%s274 + $0x3fe8] sm:$0xff]
        %v3780 = vld [vmem:[%s274 + $0x3ff0] sm:$0xff]
        %v3781 = vld [vmem:[%s274 + $0x3ff8] sm:$0xff]
        %v3782 = vld [vmem:[%s274 + $0x4000] sm:$0xff]
        %v3783 = vld [vmem:[%s274 + $0x4008] sm:$0xff]
        %v3784 = vld [vmem:[%s274 + $0x4010] sm:$0xff]
        %v3785 = vld [vmem:[%s274 + $0x4018] sm:$0xff]
        %v3786 = vld [vmem:[%s274 + $0x4020] sm:$0xff]
        %v3787 = vld [vmem:[%s274 + $0x4028] sm:$0xff]
        %v3788 = vld [vmem:[%s274 + $0x4030] sm:$0xff]
        %v3789 = vld [vmem:[%s274 + $0x4038] sm:$0xff]
        %v3790 = vld [vmem:[%s274 + $0x4040] sm:$0xff]
        %v3791 = vld [vmem:[%s274 + $0x4048] sm:$0xff]
        %v3792 = vld [vmem:[%s274 + $0x4050] sm:$0xff]
        %v3793 = vld [vmem:[%s274 + $0x4058] sm:$0xff]
        %v3794 = vld [vmem:[%s274 + $0x4060] sm:$0xff]
        %v3795 = vld [vmem:[%s274 + $0x4068] sm:$0xff]
        %v3796 = vld [vmem:[%s274 + $0x4070] sm:$0xff]
        %v3797 = vld [vmem:[%s274 + $0x4078] sm:$0xff]
        %v3798 = vld [vmem:[%s274 + $0x4080] sm:$0xff]
        %v3799 = vld [vmem:[%s274 + $0x4088] sm:$0xff]
        %v3800 = vld [vmem:[%s274 + $0x4090] sm:$0xff]
        %v3801 = vld [vmem:[%s274 + $0x4098] sm:$0xff]
        %v3802 = vld [vmem:[%s274 + $0x40a0] sm:$0xff]
        %v3803 = vld [vmem:[%s274 + $0x40a8] sm:$0xff]
        %v3804 = vld [vmem:[%s274 + $0x40b0] sm:$0xff]
        %v3805 = vld [vmem:[%s274 + $0x40b8] sm:$0xff]
        %v3806 = vld [vmem:[%s274 + $0x40c0] sm:$0xff]
        %v3807 = vld [vmem:[%s274 + $0x40c8] sm:$0xff]
        %v3808 = vld [vmem:[%s274 + $0x40d0] sm:$0xff]
        %v3809 = vld [vmem:[%s274 + $0x40d8] sm:$0xff]
        %v3810 = vld [vmem:[%s274 + $0x40e0] sm:$0xff]
        %v3811 = vld [vmem:[%s274 + $0x40e8] sm:$0xff]
        %v3812 = vld [vmem:[%s274 + $0x40f0] sm:$0xff]
        %v3813 = vld [vmem:[%s274 + $0x40f8] sm:$0xff]
        %v3814 = vld [vmem:[%s274 + $0x4100] sm:$0xff]
        %v3815 = vld [vmem:[%s274 + $0x4108] sm:$0xff]
        %v3816 = vld [vmem:[%s274 + $0x4110] sm:$0xff]
        %v3817 = vld [vmem:[%s274 + $0x4118] sm:$0xff]
        %v3818 = vld [vmem:[%s274 + $0x4120] sm:$0xff]
        %v3819 = vld [vmem:[%s274 + $0x4128] sm:$0xff]
        %v3820 = vld [vmem:[%s274 + $0x4130] sm:$0xff]
        %v3821 = vld [vmem:[%s274 + $0x4138] sm:$0xff]
        %v3822 = vld [vmem:[%s274 + $0x4140] sm:$0xff]
        %v3823 = vld [vmem:[%s274 + $0x4148] sm:$0xff]
        %v3824 = vld [vmem:[%s274 + $0x4150] sm:$0xff]
        %v3825 = vld [vmem:[%s274 + $0x4158] sm:$0xff]
        %v3826 = vld [vmem:[%s274 + $0x4160] sm:$0xff]
        %v3827 = vld [vmem:[%s274 + $0x4168] sm:$0xff]
        %v3828 = vld [vmem:[%s274 + $0x4170] sm:$0xff]
        %v3829 = vld [vmem:[%s274 + $0x4178] sm:$0xff]
        %v3830 = vld [vmem:[%s274 + $0x4180] sm:$0xff]
        %v3831 = vld [vmem:[%s274 + $0x4188] sm:$0xff]
        %v3832 = vld [vmem:[%s274 + $0x4190] sm:$0xff]
        %v3833 = vld [vmem:[%s274 + $0x4198] sm:$0xff]
        %v3834 = vld [vmem:[%s274 + $0x41a0] sm:$0xff]
        %v3835 = vld [vmem:[%s274 + $0x41a8] sm:$0xff]
        %v3836 = vld [vmem:[%s274 + $0x41b0] sm:$0xff]
        %v3837 = vld [vmem:[%s274 + $0x41b8] sm:$0xff]
        %v3838 = vld [vmem:[%s274 + $0x41c0] sm:$0xff]
        %v3839 = vld [vmem:[%s274 + $0x41c8] sm:$0xff]
        %v3840 = vld [vmem:[%s274 + $0x41d0] sm:$0xff]
        %v3841 = vld [vmem:[%s274 + $0x41d8] sm:$0xff]
        %v3842 = vld [vmem:[%s274 + $0x41e0] sm:$0xff]
        %v3843 = vld [vmem:[%s274 + $0x41e8] sm:$0xff]
        %v3844 = vld [vmem:[%s274 + $0x41f0] sm:$0xff]
        %v3845 = vld [vmem:[%s274 + $0x41f8] sm:$0xff]
        %v3846 = vld [vmem:[%s274 + $0x4200] sm:$0xff]
        %v3847 = vld [vmem:[%s274 + $0x4208] sm:$0xff]
        %v3848 = vld [vmem:[%s274 + $0x4210] sm:$0xff]
        %v3849 = vld [vmem:[%s274 + $0x4218] sm:$0xff]
        %v3850 = vld [vmem:[%s274 + $0x4220] sm:$0xff]
        %v3851 = vld [vmem:[%s274 + $0x4228] sm:$0xff]
        %v3852 = vld [vmem:[%s274 + $0x4230] sm:$0xff]
        %v3853 = vld [vmem:[%s274 + $0x4238] sm:$0xff]
        %v3854 = vld [vmem:[%s274 + $0x4240] sm:$0xff]
        %v3855 = vld [vmem:[%s274 + $0x4248] sm:$0xff]
        %v3856 = vld [vmem:[%s274 + $0x4250] sm:$0xff]
        %v3857 = vld [vmem:[%s274 + $0x4258] sm:$0xff]
        %v3858 = vld [vmem:[%s274 + $0x4260] sm:$0xff]
        %v3859 = vld [vmem:[%s274 + $0x4268] sm:$0xff]
        %v3860 = vld [vmem:[%s274 + $0x4270] sm:$0xff]
        %v3861 = vld [vmem:[%s274 + $0x4278] sm:$0xff]
        %v3862 = vld [vmem:[%s274 + $0x4280] sm:$0xff]
        %v3863 = vld [vmem:[%s274 + $0x4288] sm:$0xff]
        %v3864 = vld [vmem:[%s274 + $0x4290] sm:$0xff]
        %v3865 = vld [vmem:[%s274 + $0x4298] sm:$0xff]
        %v3866 = vld [vmem:[%s274 + $0x42a0] sm:$0xff]
        %v3867 = vld [vmem:[%s274 + $0x42a8] sm:$0xff]
        %v3868 = vld [vmem:[%s274 + $0x42b0] sm:$0xff]
        %v3869 = vld [vmem:[%s274 + $0x42b8] sm:$0xff]
        %v3870 = vld [vmem:[%s274 + $0x42c0] sm:$0xff]
        %v3871 = vld [vmem:[%s274 + $0x42c8] sm:$0xff]
        %v3872 = vld [vmem:[%s274 + $0x42d0] sm:$0xff]
        %v3873 = vld [vmem:[%s274 + $0x42d8] sm:$0xff]
        %v3874 = vld [vmem:[%s274 + $0x42e0] sm:$0xff]
        %v3875 = vld [vmem:[%s274 + $0x42e8] sm:$0xff]
        %v3876 = vld [vmem:[%s274 + $0x42f0] sm:$0xff]
        %v3877 = vld [vmem:[%s274 + $0x42f8] sm:$0xff]
        %v3878 = vld [vmem:[%s274 + $0x4300] sm:$0xff]
        %v3879 = vld [vmem:[%s274 + $0x4308] sm:$0xff]
        %v3880 = vld [vmem:[%s274 + $0x4310] sm:$0xff]
        %v3881 = vld [vmem:[%s274 + $0x4318] sm:$0xff]
        %v3882 = vld [vmem:[%s274 + $0x4320] sm:$0xff]
        %v3883 = vld [vmem:[%s274 + $0x4328] sm:$0xff]
        %v3884 = vld [vmem:[%s274 + $0x4330] sm:$0xff]
        %v3885 = vld [vmem:[%s274 + $0x4338] sm:$0xff]
        %v3886 = vld [vmem:[%s274 + $0x4340] sm:$0xff]
        %v3887 = vld [vmem:[%s274 + $0x4348] sm:$0xff]
        %v3888 = vld [vmem:[%s274 + $0x4350] sm:$0xff]
        %v3889 = vld [vmem:[%s274 + $0x4358] sm:$0xff]
        %v3890 = vld [vmem:[%s274 + $0x4360] sm:$0xff]
        %v3891 = vld [vmem:[%s274 + $0x4368] sm:$0xff]
        %v3892 = vld [vmem:[%s274 + $0x4370] sm:$0xff]
        %v3893 = vld [vmem:[%s274 + $0x4378] sm:$0xff]
        %v3894 = vld [vmem:[%s274 + $0x4380] sm:$0xff]
        %v3895 = vld [vmem:[%s274 + $0x4388] sm:$0xff]
        %v3896 = vld [vmem:[%s274 + $0x4390] sm:$0xff]
        %v3897 = vld [vmem:[%s274 + $0x4398] sm:$0xff]
        %v3898 = vld [vmem:[%s274 + $0x43a0] sm:$0xff]
        %v3899 = vld [vmem:[%s274 + $0x43a8] sm:$0xff]
        %v3900 = vld [vmem:[%s274 + $0x43b0] sm:$0xff]
        %v3901 = vld [vmem:[%s274 + $0x43b8] sm:$0xff]
        %v3902 = vld [vmem:[%s274 + $0x43c0] sm:$0xff]
        %v3903 = vld [vmem:[%s274 + $0x43c8] sm:$0xff]
        %v3904 = vld [vmem:[%s274 + $0x43d0] sm:$0xff]
        %v3905 = vld [vmem:[%s274 + $0x43d8] sm:$0xff]
        %v3906 = vld [vmem:[%s274 + $0x43e0] sm:$0xff]
        %v3907 = vld [vmem:[%s274 + $0x43e8] sm:$0xff]
        %v3908 = vld [vmem:[%s274 + $0x43f0] sm:$0xff]
        %v3909 = vld [vmem:[%s274 + $0x43f8] sm:$0xff]
        %v3910 = vld [vmem:[%s274 + $0x4400] sm:$0xff]
        %v3911 = vld [vmem:[%s274 + $0x4408] sm:$0xff]
        %v3912 = vld [vmem:[%s274 + $0x4410] sm:$0xff]
        %v3913 = vld [vmem:[%s274 + $0x4418] sm:$0xff]
        %v3914 = vld [vmem:[%s274 + $0x4420] sm:$0xff]
        %v3915 = vld [vmem:[%s274 + $0x4428] sm:$0xff]
        %v3916 = vld [vmem:[%s274 + $0x4430] sm:$0xff]
        %v3917 = vld [vmem:[%s274 + $0x4438] sm:$0xff]
        %v3918 = vld [vmem:[%s274 + $0x4440] sm:$0xff]
        %v3919 = vld [vmem:[%s274 + $0x4448] sm:$0xff]
        %v3920 = vld [vmem:[%s274 + $0x4450] sm:$0xff]
        %v3921 = vld [vmem:[%s274 + $0x4458] sm:$0xff]
        %v3922 = vld [vmem:[%s274 + $0x4460] sm:$0xff]
        %v3923 = vld [vmem:[%s274 + $0x4468] sm:$0xff]
        %v3924 = vld [vmem:[%s274 + $0x4470] sm:$0xff]
        %v3925 = vld [vmem:[%s274 + $0x4478] sm:$0xff]
        %v3926 = vld [vmem:[%s274 + $0x4480] sm:$0xff]
        %v3927 = vld [vmem:[%s274 + $0x4488] sm:$0xff]
        %v3928 = vld [vmem:[%s274 + $0x4490] sm:$0xff]
        %v3929 = vld [vmem:[%s274 + $0x4498] sm:$0xff]
        %v3930 = vld [vmem:[%s274 + $0x44a0] sm:$0xff]
        %v3931 = vld [vmem:[%s274 + $0x44a8] sm:$0xff]
        %v3932 = vld [vmem:[%s274 + $0x44b0] sm:$0xff]
        %v3933 = vld [vmem:[%s274 + $0x44b8] sm:$0xff]
        %v3934 = vld [vmem:[%s274 + $0x44c0] sm:$0xff]
        %v3935 = vld [vmem:[%s274 + $0x44c8] sm:$0xff]
        %v3936 = vld [vmem:[%s274 + $0x44d0] sm:$0xff]
        %v3937 = vld [vmem:[%s274 + $0x44d8] sm:$0xff]
        %v3938 = vld [vmem:[%s274 + $0x44e0] sm:$0xff]
        %v3939 = vld [vmem:[%s274 + $0x44e8] sm:$0xff]
        %v3940 = vld [vmem:[%s274 + $0x44f0] sm:$0xff]
        %v3941 = vld [vmem:[%s274 + $0x44f8] sm:$0xff]
        %v3942 = vld [vmem:[%s274 + $0x4500] sm:$0xff]
        %v3943 = vld [vmem:[%s274 + $0x4508] sm:$0xff]
        %v3944 = vld [vmem:[%s274 + $0x4510] sm:$0xff]
        %v3945 = vld [vmem:[%s274 + $0x4518] sm:$0xff]
        %v3946 = vld [vmem:[%s274 + $0x4520] sm:$0xff]
        %v3947 = vld [vmem:[%s274 + $0x4528] sm:$0xff]
        %v3948 = vld [vmem:[%s274 + $0x4530] sm:$0xff]
        %v3949 = vld [vmem:[%s274 + $0x4538] sm:$0xff]
        %v3950 = vld [vmem:[%s274 + $0x4540] sm:$0xff]
        %v3951 = vld [vmem:[%s274 + $0x4548] sm:$0xff]
        %v3952 = vld [vmem:[%s274 + $0x4550] sm:$0xff]
        %v3953 = vld [vmem:[%s274 + $0x4558] sm:$0xff]
        %v3954 = vld [vmem:[%s274 + $0x4560] sm:$0xff]
        %v3955 = vld [vmem:[%s274 + $0x4568] sm:$0xff]
        %v3956 = vld [vmem:[%s274 + $0x4570] sm:$0xff]
        %v3957 = vld [vmem:[%s274 + $0x4578] sm:$0xff]
        %v3958 = vld [vmem:[%s274 + $0x4580] sm:$0xff]
        %v3959 = vld [vmem:[%s274 + $0x4588] sm:$0xff]
        %v3960 = vld [vmem:[%s274 + $0x4590] sm:$0xff]
        %v3961 = vld [vmem:[%s274 + $0x4598] sm:$0xff]
        %v3962 = vld [vmem:[%s274 + $0x45a0] sm:$0xff]
        %v3963 = vld [vmem:[%s274 + $0x45a8] sm:$0xff]
        %v3964 = vld [vmem:[%s274 + $0x45b0] sm:$0xff]
        %v3965 = vld [vmem:[%s274 + $0x45b8] sm:$0xff]
        %v3966 = vld [vmem:[%s274 + $0x45c0] sm:$0xff]
        %v3967 = vld [vmem:[%s274 + $0x45c8] sm:$0xff]
        %v3968 = vld [vmem:[%s274 + $0x45d0] sm:$0xff]
        %v3969 = vld [vmem:[%s274 + $0x45d8] sm:$0xff]
        %v3970 = vld [vmem:[%s274 + $0x45e0] sm:$0xff]
        %v3971 = vld [vmem:[%s274 + $0x45e8] sm:$0xff]
        %v3972 = vld [vmem:[%s274 + $0x45f0] sm:$0xff]
        %v3973 = vld [vmem:[%s274 + $0x45f8] sm:$0xff]
        %v3974 = vld [vmem:[%s274 + $0x4600] sm:$0xff]
        %v3975 = vld [vmem:[%s274 + $0x4608] sm:$0xff]
        %v3976 = vld [vmem:[%s274 + $0x4610] sm:$0xff]
        %v3977 = vld [vmem:[%s274 + $0x4618] sm:$0xff]
        %v3978 = vld [vmem:[%s274 + $0x4620] sm:$0xff]
        %v3979 = vld [vmem:[%s274 + $0x4628] sm:$0xff]
        %v3980 = vld [vmem:[%s274 + $0x4630] sm:$0xff]
        %v3981 = vld [vmem:[%s274 + $0x4638] sm:$0xff]
        %v3982 = vld [vmem:[%s274 + $0x4640] sm:$0xff]
        %v3983 = vld [vmem:[%s274 + $0x4648] sm:$0xff]
        %v3984 = vld [vmem:[%s274 + $0x4650] sm:$0xff]
        %v3985 = vld [vmem:[%s274 + $0x4658] sm:$0xff]
        %v3986 = vld [vmem:[%s274 + $0x4660] sm:$0xff]
        %v3987 = vld [vmem:[%s274 + $0x4668] sm:$0xff]
        %v3988 = vld [vmem:[%s274 + $0x4670] sm:$0xff]
        %v3989 = vld [vmem:[%s274 + $0x4678] sm:$0xff]
        %v3990 = vld [vmem:[%s274 + $0x4680] sm:$0xff]
        %v3991 = vld [vmem:[%s274 + $0x4688] sm:$0xff]
        %v3992 = vld [vmem:[%s274 + $0x4690] sm:$0xff]
        %v3993 = vld [vmem:[%s274 + $0x4698] sm:$0xff]
        %v3994 = vld [vmem:[%s274 + $0x46a0] sm:$0xff]
        %v3995 = vld [vmem:[%s274 + $0x46a8] sm:$0xff]
        %v3996 = vld [vmem:[%s274 + $0x46b0] sm:$0xff]
        %v3997 = vld [vmem:[%s274 + $0x46b8] sm:$0xff]
        %v3998 = vld [vmem:[%s274 + $0x46c0] sm:$0xff]
        %v3999 = vld [vmem:[%s274 + $0x46c8] sm:$0xff]
        %v4000 = vld [vmem:[%s274 + $0x46d0] sm:$0xff]
        %v4001 = vld [vmem:[%s274 + $0x46d8] sm:$0xff]
        %v4002 = vld [vmem:[%s274 + $0x46e0] sm:$0xff]
        %v4003 = vld [vmem:[%s274 + $0x46e8] sm:$0xff]
        %v4004 = vld [vmem:[%s274 + $0x46f0] sm:$0xff]
        %v4005 = vld [vmem:[%s274 + $0x46f8] sm:$0xff]
        %v4006 = vld [vmem:[%s274 + $0x4700] sm:$0xff]
        %v4007 = vld [vmem:[%s274 + $0x4708] sm:$0xff]
        %v4008 = vld [vmem:[%s274 + $0x4710] sm:$0xff]
        %v4009 = vld [vmem:[%s274 + $0x4718] sm:$0xff]
        %v4010 = vld [vmem:[%s274 + $0x4720] sm:$0xff]
        %v4011 = vld [vmem:[%s274 + $0x4728] sm:$0xff]
        %v4012 = vld [vmem:[%s274 + $0x4730] sm:$0xff]
        %v4013 = vld [vmem:[%s274 + $0x4738] sm:$0xff]
        %v4014 = vld [vmem:[%s274 + $0x4740] sm:$0xff]
        %v4015 = vld [vmem:[%s274 + $0x4748] sm:$0xff]
        %v4016 = vld [vmem:[%s274 + $0x4750] sm:$0xff]
        %v4017 = vld [vmem:[%s274 + $0x4758] sm:$0xff]
        %v4018 = vld [vmem:[%s274 + $0x4760] sm:$0xff]
        %v4019 = vld [vmem:[%s274 + $0x4768] sm:$0xff]
        %v4020 = vld [vmem:[%s274 + $0x4770] sm:$0xff]
        %v4021 = vld [vmem:[%s274 + $0x4778] sm:$0xff]
        %v4022 = vld [vmem:[%s274 + $0x4780] sm:$0xff]
        %v4023 = vld [vmem:[%s274 + $0x4788] sm:$0xff]
        %v4024 = vld [vmem:[%s274 + $0x4790] sm:$0xff]
        %v4025 = vld [vmem:[%s274 + $0x4798] sm:$0xff]
        %v4026 = vld [vmem:[%s274 + $0x47a0] sm:$0xff]
        %v4027 = vld [vmem:[%s274 + $0x47a8] sm:$0xff]
        %v4028 = vld [vmem:[%s274 + $0x47b0] sm:$0xff]
        %v4029 = vld [vmem:[%s274 + $0x47b8] sm:$0xff]
        %v4030 = vld [vmem:[%s274 + $0x47c0] sm:$0xff]
        %v4031 = vld [vmem:[%s274 + $0x47c8] sm:$0xff]
        %v4032 = vld [vmem:[%s274 + $0x47d0] sm:$0xff]
        %v4033 = vld [vmem:[%s274 + $0x47d8] sm:$0xff]
        %v4034 = vld [vmem:[%s274 + $0x47e0] sm:$0xff]
        %v4035 = vld [vmem:[%s274 + $0x47e8] sm:$0xff]
        %v4036 = vld [vmem:[%s274 + $0x47f0] sm:$0xff]
        %v4037 = vld [vmem:[%s274 + $0x47f8] sm:$0xff]
        %v4038 = vld [vmem:[%s274 + $0x4800] sm:$0xff]
        %v4039 = vld [vmem:[%s274 + $0x4808] sm:$0xff]
        %v4040 = vld [vmem:[%s274 + $0x4810] sm:$0xff]
        %v4041 = vld [vmem:[%s274 + $0x4818] sm:$0xff]
        %v4042 = vld [vmem:[%s274 + $0x4820] sm:$0xff]
        %v4043 = vld [vmem:[%s274 + $0x4828] sm:$0xff]
        %v4044 = vld [vmem:[%s274 + $0x4830] sm:$0xff]
        %v4045 = vld [vmem:[%s274 + $0x4838] sm:$0xff]
        %v4046 = vld [vmem:[%s274 + $0x4840] sm:$0xff]
        %v4047 = vld [vmem:[%s274 + $0x4848] sm:$0xff]
        %v4048 = vld [vmem:[%s274 + $0x4850] sm:$0xff]
        %v4049 = vld [vmem:[%s274 + $0x4858] sm:$0xff]
        %v4050 = vld [vmem:[%s274 + $0x4860] sm:$0xff]
        %v4051 = vld [vmem:[%s274 + $0x4868] sm:$0xff]
        %v4052 = vld [vmem:[%s274 + $0x4870] sm:$0xff]
        %v4053 = vld [vmem:[%s274 + $0x4878] sm:$0xff]
        %v4054 = vld [vmem:[%s274 + $0x4880] sm:$0xff]
        %v4055 = vld [vmem:[%s274 + $0x4888] sm:$0xff]
        %v4056 = vld [vmem:[%s274 + $0x4890] sm:$0xff]
        %v4057 = vld [vmem:[%s274 + $0x4898] sm:$0xff]
        %v4058 = vld [vmem:[%s274 + $0x48a0] sm:$0xff]
        %v4059 = vld [vmem:[%s274 + $0x48a8] sm:$0xff]
        %v4060 = vld [vmem:[%s274 + $0x48b0] sm:$0xff]
        %v4061 = vld [vmem:[%s274 + $0x48b8] sm:$0xff]
        %v4062 = vld [vmem:[%s274 + $0x48c0] sm:$0xff]
        %v4063 = vld [vmem:[%s274 + $0x48c8] sm:$0xff]
        %v4064 = vld [vmem:[%s274 + $0x48d0] sm:$0xff]
        %v4065 = vld [vmem:[%s274 + $0x48d8] sm:$0xff]
        %v4066 = vld [vmem:[%s274 + $0x48e0] sm:$0xff]
        %v4067 = vld [vmem:[%s274 + $0x48e8] sm:$0xff]
        %v4068 = vld [vmem:[%s274 + $0x48f0] sm:$0xff]
        %v4069 = vld [vmem:[%s274 + $0x48f8] sm:$0xff]
        %v4070 = vld [vmem:[%s274 + $0x4900] sm:$0xff]
        %v4071 = vld [vmem:[%s274 + $0x4908] sm:$0xff]
        %v4072 = vld [vmem:[%s274 + $0x4910] sm:$0xff]
        %v4073 = vld [vmem:[%s274 + $0x4918] sm:$0xff]
        %v4074 = vld [vmem:[%s274 + $0x4920] sm:$0xff]
        %v4075 = vld [vmem:[%s274 + $0x4928] sm:$0xff]
        %v4076 = vld [vmem:[%s274 + $0x4930] sm:$0xff]
        %v4077 = vld [vmem:[%s274 + $0x4938] sm:$0xff]
        %v4078 = vld [vmem:[%s274 + $0x4940] sm:$0xff]
        %v4079 = vld [vmem:[%s274 + $0x4948] sm:$0xff]
        %v4080 = vld [vmem:[%s274 + $0x4950] sm:$0xff]
        %v4081 = vld [vmem:[%s274 + $0x4958] sm:$0xff]
        %v4082 = vld [vmem:[%s274 + $0x4960] sm:$0xff]
        %v4083 = vld [vmem:[%s274 + $0x4968] sm:$0xff]
        %v4084 = vld [vmem:[%s274 + $0x4970] sm:$0xff]
        %v4085 = vld [vmem:[%s274 + $0x4978] sm:$0xff]
        %v4086 = vld [vmem:[%s274 + $0x4980] sm:$0xff]
        %v4087 = vld [vmem:[%s274 + $0x4988] sm:$0xff]
        %v4088 = vld [vmem:[%s274 + $0x4990] sm:$0xff]
        %v4089 = vld [vmem:[%s274 + $0x4998] sm:$0xff]
        %v4090 = vld [vmem:[%s274 + $0x49a0] sm:$0xff]
        %v4091 = vld [vmem:[%s274 + $0x49a8] sm:$0xff]
        %v4092 = vld [vmem:[%s274 + $0x49b0] sm:$0xff]
        %v4093 = vld [vmem:[%s274 + $0x49b8] sm:$0xff]
        %v4094 = vld [vmem:[%s274 + $0x49c0] sm:$0xff]
        %v4095 = vld [vmem:[%s274 + $0x49c8] sm:$0xff]
        %v4096 = vld [vmem:[%s274 + $0x49d0] sm:$0xff]
        %v4097 = vld [vmem:[%s274 + $0x49d8] sm:$0xff]
        %v4098 = vld [vmem:[%s274 + $0x49e0] sm:$0xff]
        %v4099 = vld [vmem:[%s274 + $0x49e8] sm:$0xff]
        %v4100 = vld [vmem:[%s274 + $0x49f0] sm:$0xff]
        %v4101 = vld [vmem:[%s274 + $0x49f8] sm:$0xff]
        %v4102 = vld [vmem:[%s274 + $0x4a00] sm:$0xff]
        %v4103 = vld [vmem:[%s274 + $0x4a08] sm:$0xff]
        %v4104 = vld [vmem:[%s274 + $0x4a10] sm:$0xff]
        %v4105 = vld [vmem:[%s274 + $0x4a18] sm:$0xff]
        %v4106 = vld [vmem:[%s274 + $0x4a20] sm:$0xff]
        %v4107 = vld [vmem:[%s274 + $0x4a28] sm:$0xff]
        %v4108 = vld [vmem:[%s274 + $0x4a30] sm:$0xff]
        %v4109 = vld [vmem:[%s274 + $0x4a38] sm:$0xff]
        %v4110 = vld [vmem:[%s274 + $0x4a40] sm:$0xff]
        %v4111 = vld [vmem:[%s274 + $0x4a48] sm:$0xff]
        %v4112 = vld [vmem:[%s274 + $0x4a50] sm:$0xff]
        %v4113 = vld [vmem:[%s274 + $0x4a58] sm:$0xff]
        %v4114 = vld [vmem:[%s274 + $0x4a60] sm:$0xff]
        %v4115 = vld [vmem:[%s274 + $0x4a68] sm:$0xff]
        %v4116 = vld [vmem:[%s274 + $0x4a70] sm:$0xff]
        %v4117 = vld [vmem:[%s274 + $0x4a78] sm:$0xff]
        %v4118 = vld [vmem:[%s274 + $0x4a80] sm:$0xff]
        %v4119 = vld [vmem:[%s274 + $0x4a88] sm:$0xff]
        %v4120 = vld [vmem:[%s274 + $0x4a90] sm:$0xff]
        %v4121 = vld [vmem:[%s274 + $0x4a98] sm:$0xff]
        %v4122 = vld [vmem:[%s274 + $0x4aa0] sm:$0xff]
        %v4123 = vld [vmem:[%s274 + $0x4aa8] sm:$0xff]
        %v4124 = vld [vmem:[%s274 + $0x4ab0] sm:$0xff]
        %v4125 = vld [vmem:[%s274 + $0x4ab8] sm:$0xff]
        %v4126 = vld [vmem:[%s274 + $0x4ac0] sm:$0xff]
        %v4127 = vld [vmem:[%s274 + $0x4ac8] sm:$0xff]
        %v4128 = vld [vmem:[%s274 + $0x4ad0] sm:$0xff]
        %v4129 = vld [vmem:[%s274 + $0x4ad8] sm:$0xff]
        %v4130 = vld [vmem:[%s274 + $0x4ae0] sm:$0xff]
        %v4131 = vld [vmem:[%s274 + $0x4ae8] sm:$0xff]
        %v4132 = vld [vmem:[%s274 + $0x4af0] sm:$0xff]
        %v4133 = vld [vmem:[%s274 + $0x4af8] sm:$0xff]
        %v4134 = vld [vmem:[%s274 + $0x4b00] sm:$0xff]
        %v4135 = vld [vmem:[%s274 + $0x4b08] sm:$0xff]
        %v4136 = vld [vmem:[%s274 + $0x4b10] sm:$0xff]
        %v4137 = vld [vmem:[%s274 + $0x4b18] sm:$0xff]
        %v4138 = vld [vmem:[%s274 + $0x4b20] sm:$0xff]
        %v4139 = vld [vmem:[%s274 + $0x4b28] sm:$0xff]
        %v4140 = vld [vmem:[%s274 + $0x4b30] sm:$0xff]
        %v4141 = vld [vmem:[%s274 + $0x4b38] sm:$0xff]
        %v4142 = vld [vmem:[%s274 + $0x4b40] sm:$0xff]
        %v4143 = vld [vmem:[%s274 + $0x4b48] sm:$0xff]
        %v4144 = vld [vmem:[%s274 + $0x4b50] sm:$0xff]
        %v4145 = vld [vmem:[%s274 + $0x4b58] sm:$0xff]
        %v4146 = vld [vmem:[%s274 + $0x4b60] sm:$0xff]
        %v4147 = vld [vmem:[%s274 + $0x4b68] sm:$0xff]
        %v4148 = vld [vmem:[%s274 + $0x4b70] sm:$0xff]
        %v4149 = vld [vmem:[%s274 + $0x4b78] sm:$0xff]
        %v4150 = vld [vmem:[%s274 + $0x4b80] sm:$0xff]
        %v4151 = vld [vmem:[%s274 + $0x4b88] sm:$0xff]
        %v4152 = vld [vmem:[%s274 + $0x4b90] sm:$0xff]
        %v4153 = vld [vmem:[%s274 + $0x4b98] sm:$0xff]
        %v4154 = vld [vmem:[%s274 + $0x4ba0] sm:$0xff]
        %v4155 = vld [vmem:[%s274 + $0x4ba8] sm:$0xff]
        %v4156 = vld [vmem:[%s274 + $0x4bb0] sm:$0xff]
        %v4157 = vld [vmem:[%s274 + $0x4bb8] sm:$0xff]
        %v4158 = vld [vmem:[%s274 + $0x4bc0] sm:$0xff]
        %v4159 = vld [vmem:[%s274 + $0x4bc8] sm:$0xff]
        %v4160 = vld [vmem:[%s274 + $0x4bd0] sm:$0xff]
        %v4161 = vld [vmem:[%s274 + $0x4bd8] sm:$0xff]
        %v4162 = vld [vmem:[%s274 + $0x4be0] sm:$0xff]
        %v4163 = vld [vmem:[%s274 + $0x4be8] sm:$0xff]
        %v4164 = vld [vmem:[%s274 + $0x4bf0] sm:$0xff]
        %v4165 = vld [vmem:[%s274 + $0x4bf8] sm:$0xff]
        %v4166 = vld [vmem:[%s274 + $0x4c00] sm:$0xff]
        %v4167 = vld [vmem:[%s274 + $0x4c08] sm:$0xff]
        %v4168 = vld [vmem:[%s274 + $0x4c10] sm:$0xff]
        %v4169 = vld [vmem:[%s274 + $0x4c18] sm:$0xff]
        %v4170 = vld [vmem:[%s274 + $0x4c20] sm:$0xff]
        %v4171 = vld [vmem:[%s274 + $0x4c28] sm:$0xff]
        %v4172 = vld [vmem:[%s274 + $0x4c30] sm:$0xff]
        %v4173 = vld [vmem:[%s274 + $0x4c38] sm:$0xff]
        %v4174 = vld [vmem:[%s274 + $0x4c40] sm:$0xff]
        %v4175 = vld [vmem:[%s274 + $0x4c48] sm:$0xff]
        %v4176 = vld [vmem:[%s274 + $0x4c50] sm:$0xff]
        %v4177 = vld [vmem:[%s274 + $0x4c58] sm:$0xff]
        %v4178 = vld [vmem:[%s274 + $0x4c60] sm:$0xff]
        %v4179 = vld [vmem:[%s274 + $0x4c68] sm:$0xff]
        %v4180 = vld [vmem:[%s274 + $0x4c70] sm:$0xff]
        %v4181 = vld [vmem:[%s274 + $0x4c78] sm:$0xff]
        %v4182 = vld [vmem:[%s274 + $0x4c80] sm:$0xff]
        %v4183 = vld [vmem:[%s274 + $0x4c88] sm:$0xff]
        %v4184 = vld [vmem:[%s274 + $0x4c90] sm:$0xff]
        %v4185 = vld [vmem:[%s274 + $0x4c98] sm:$0xff]
        %v4186 = vld [vmem:[%s274 + $0x4ca0] sm:$0xff]
        %v4187 = vld [vmem:[%s274 + $0x4ca8] sm:$0xff]
        %v4188 = vld [vmem:[%s274 + $0x4cb0] sm:$0xff]
        %v4189 = vld [vmem:[%s274 + $0x4cb8] sm:$0xff]
        %v4190 = vld [vmem:[%s274 + $0x4cc0] sm:$0xff]
        %v4191 = vld [vmem:[%s274 + $0x4cc8] sm:$0xff]
        %v4192 = vld [vmem:[%s274 + $0x4cd0] sm:$0xff]
        %v4193 = vld [vmem:[%s274 + $0x4cd8] sm:$0xff]
        %v4194 = vld [vmem:[%s274 + $0x4ce0] sm:$0xff]
        %v4195 = vld [vmem:[%s274 + $0x4ce8] sm:$0xff]
        %v4196 = vld [vmem:[%s274 + $0x4cf0] sm:$0xff]
        %v4197 = vld [vmem:[%s274 + $0x4cf8] sm:$0xff]
        %v4198 = vld [vmem:[%s274 + $0x4d00] sm:$0xff]
        %v4199 = vld [vmem:[%s274 + $0x4d08] sm:$0xff]
        %v4200 = vld [vmem:[%s274 + $0x4d10] sm:$0xff]
        %v4201 = vld [vmem:[%s274 + $0x4d18] sm:$0xff]
        %v4202 = vld [vmem:[%s274 + $0x4d20] sm:$0xff]
        %v4203 = vld [vmem:[%s274 + $0x4d28] sm:$0xff]
        %v4204 = vld [vmem:[%s274 + $0x4d30] sm:$0xff]
        %v4205 = vld [vmem:[%s274 + $0x4d38] sm:$0xff]
        %v4206 = vld [vmem:[%s274 + $0x4d40] sm:$0xff]
        %v4207 = vld [vmem:[%s274 + $0x4d48] sm:$0xff]
        %v4208 = vld [vmem:[%s274 + $0x4d50] sm:$0xff]
        %v4209 = vld [vmem:[%s274 + $0x4d58] sm:$0xff]
        %v4210 = vld [vmem:[%s274 + $0x4d60] sm:$0xff]
        %v4211 = vld [vmem:[%s274 + $0x4d68] sm:$0xff]
        %v4212 = vld [vmem:[%s274 + $0x4d70] sm:$0xff]
        %v4213 = vld [vmem:[%s274 + $0x4d78] sm:$0xff]
        %v4214 = vld [vmem:[%s274 + $0x4d80] sm:$0xff]
        %v4215 = vld [vmem:[%s274 + $0x4d88] sm:$0xff]
        %v4216 = vld [vmem:[%s274 + $0x4d90] sm:$0xff]
        %v4217 = vld [vmem:[%s274 + $0x4d98] sm:$0xff]
        %v4218 = vld [vmem:[%s274 + $0x4da0] sm:$0xff]
        %v4219 = vld [vmem:[%s274 + $0x4da8] sm:$0xff]
        %v4220 = vld [vmem:[%s274 + $0x4db0] sm:$0xff]
        %v4221 = vld [vmem:[%s274 + $0x4db8] sm:$0xff]
        %v4222 = vld [vmem:[%s274 + $0x4dc0] sm:$0xff]
        %v4223 = vld [vmem:[%s274 + $0x4dc8] sm:$0xff]
        %v4224 = vld [vmem:[%s274 + $0x4dd0] sm:$0xff]
        %v4225 = vld [vmem:[%s274 + $0x4dd8] sm:$0xff]
        %v4226 = vld [vmem:[%s274 + $0x4de0] sm:$0xff]
        %v4227 = vld [vmem:[%s274 + $0x4de8] sm:$0xff]
        %v4228 = vld [vmem:[%s274 + $0x4df0] sm:$0xff]
        %v4229 = vld [vmem:[%s274 + $0x4df8] sm:$0xff]
        %v4230 = vld [vmem:[%s274 + $0x4e00] sm:$0xff]
        %v4231 = vld [vmem:[%s274 + $0x4e08] sm:$0xff]
        %v4232 = vld [vmem:[%s274 + $0x4e10] sm:$0xff]
        %v4233 = vld [vmem:[%s274 + $0x4e18] sm:$0xff]
        %v4234 = vld [vmem:[%s274 + $0x4e20] sm:$0xff]
        %v4235 = vld [vmem:[%s274 + $0x4e28] sm:$0xff]
        %v4236 = vld [vmem:[%s274 + $0x4e30] sm:$0xff]
        %v4237 = vld [vmem:[%s274 + $0x4e38] sm:$0xff]
        %v4238 = vld [vmem:[%s274 + $0x4e40] sm:$0xff]
        %v4239 = vld [vmem:[%s274 + $0x4e48] sm:$0xff]
        %v4240 = vld [vmem:[%s274 + $0x4e50] sm:$0xff]
        %v4241 = vld [vmem:[%s274 + $0x4e58] sm:$0xff]
        %v4242 = vld [vmem:[%s274 + $0x4e60] sm:$0xff]
        %v4243 = vld [vmem:[%s274 + $0x4e68] sm:$0xff]
        %v4244 = vld [vmem:[%s274 + $0x4e70] sm:$0xff]
        %v4245 = vld [vmem:[%s274 + $0x4e78] sm:$0xff]
        %v4246 = vld [vmem:[%s274 + $0x4e80] sm:$0xff]
        %v4247 = vld [vmem:[%s274 + $0x4e88] sm:$0xff]
        %v4248 = vld [vmem:[%s274 + $0x4e90] sm:$0xff]
        %v4249 = vld [vmem:[%s274 + $0x4e98] sm:$0xff]
        %v4250 = vld [vmem:[%s274 + $0x4ea0] sm:$0xff]
        %v4251 = vld [vmem:[%s274 + $0x4ea8] sm:$0xff]
        %v4252 = vld [vmem:[%s274 + $0x4eb0] sm:$0xff]
        %v4253 = vld [vmem:[%s274 + $0x4eb8] sm:$0xff]
        %v4254 = vld [vmem:[%s274 + $0x4ec0] sm:$0xff]
        %v4255 = vld [vmem:[%s274 + $0x4ec8] sm:$0xff]
        %v4256 = vld [vmem:[%s274 + $0x4ed0] sm:$0xff]
        %v4257 = vld [vmem:[%s274 + $0x4ed8] sm:$0xff]
        %v4258 = vld [vmem:[%s274 + $0x4ee0] sm:$0xff]
        %v4259 = vld [vmem:[%s274 + $0x4ee8] sm:$0xff]
        %v4260 = vld [vmem:[%s274 + $0x4ef0] sm:$0xff]
        %v4261 = vld [vmem:[%s274 + $0x4ef8] sm:$0xff]
        %v4262 = vld [vmem:[%s274 + $0x4f00] sm:$0xff]
        %v4263 = vld [vmem:[%s274 + $0x4f08] sm:$0xff]
        %v4264 = vld [vmem:[%s274 + $0x4f10] sm:$0xff]
        %v4265 = vld [vmem:[%s274 + $0x4f18] sm:$0xff]
        %v4266 = vld [vmem:[%s274 + $0x4f20] sm:$0xff]
        %v4267 = vld [vmem:[%s274 + $0x4f28] sm:$0xff]
        %v4268 = vld [vmem:[%s274 + $0x4f30] sm:$0xff]
        %v4269 = vld [vmem:[%s274 + $0x4f38] sm:$0xff]
        %v4270 = vld [vmem:[%s274 + $0x4f40] sm:$0xff]
        %v4271 = vld [vmem:[%s274 + $0x4f48] sm:$0xff]
        %v4272 = vld [vmem:[%s274 + $0x4f50] sm:$0xff]
        %v4273 = vld [vmem:[%s274 + $0x4f58] sm:$0xff]
        %v4274 = vld [vmem:[%s274 + $0x4f60] sm:$0xff]
        %v4275 = vld [vmem:[%s274 + $0x4f68] sm:$0xff]
        %v4276 = vld [vmem:[%s274 + $0x4f70] sm:$0xff]
        %v4277 = vld [vmem:[%s274 + $0x4f78] sm:$0xff]
        %v4278 = vld [vmem:[%s274 + $0x4f80] sm:$0xff]
        %v4279 = vld [vmem:[%s274 + $0x4f88] sm:$0xff]
        %v4280 = vld [vmem:[%s274 + $0x4f90] sm:$0xff]
        %v4281 = vld [vmem:[%s274 + $0x4f98] sm:$0xff]
        %v4282 = vld [vmem:[%s274 + $0x4fa0] sm:$0xff]
        %v4283 = vld [vmem:[%s274 + $0x4fa8] sm:$0xff]
        %v4284 = vld [vmem:[%s274 + $0x4fb0] sm:$0xff]
        %v4285 = vld [vmem:[%s274 + $0x4fb8] sm:$0xff]
        %v4286 = vld [vmem:[%s274 + $0x4fc0] sm:$0xff]
        %v4287 = vld [vmem:[%s274 + $0x4fc8] sm:$0xff]
        %v4288 = vld [vmem:[%s274 + $0x4fd0] sm:$0xff]
        %v4289 = vld [vmem:[%s274 + $0x4fd8] sm:$0xff]
        %v4290 = vld [vmem:[%s274 + $0x4fe0] sm:$0xff]
        %v4291 = vld [vmem:[%s274 + $0x4fe8] sm:$0xff]
        %v4292 = vld [vmem:[%s274 + $0x4ff0] sm:$0xff]
        %v4293 = vld [vmem:[%s274 + $0x4ff8] sm:$0xff]
        %v4294 = vld [vmem:[%s274 + $0x5000] sm:$0xff]
        %v4295 = vld [vmem:[%s274 + $0x5008] sm:$0xff]
        %v4296 = vld [vmem:[%s274 + $0x5010] sm:$0xff]
        %v4297 = vld [vmem:[%s274 + $0x5018] sm:$0xff]
        %v4298 = vld [vmem:[%s274 + $0x5020] sm:$0xff]
        %v4299 = vld [vmem:[%s274 + $0x5028] sm:$0xff]
        %v4300 = vld [vmem:[%s274 + $0x5030] sm:$0xff]
        %v4301 = vld [vmem:[%s274 + $0x5038] sm:$0xff]
        %v4302 = vld [vmem:[%s274 + $0x5040] sm:$0xff]
        %v4303 = vld [vmem:[%s274 + $0x5048] sm:$0xff]
        %v4304 = vld [vmem:[%s274 + $0x5050] sm:$0xff]
        %v4305 = vld [vmem:[%s274 + $0x5058] sm:$0xff]
        %v4306 = vld [vmem:[%s274 + $0x5060] sm:$0xff]
        %v4307 = vld [vmem:[%s274 + $0x5068] sm:$0xff]
        %v4308 = vld [vmem:[%s274 + $0x5070] sm:$0xff]
        %v4309 = vld [vmem:[%s274 + $0x5078] sm:$0xff]
        %v4310 = vld [vmem:[%s274 + $0x5080] sm:$0xff]
        %v4311 = vld [vmem:[%s274 + $0x5088] sm:$0xff]
        %v4312 = vld [vmem:[%s274 + $0x5090] sm:$0xff]
        %v4313 = vld [vmem:[%s274 + $0x5098] sm:$0xff]
        %v4314 = vld [vmem:[%s274 + $0x50a0] sm:$0xff]
        %v4315 = vld [vmem:[%s274 + $0x50a8] sm:$0xff]
        %v4316 = vld [vmem:[%s274 + $0x50b0] sm:$0xff]
        %v4317 = vld [vmem:[%s274 + $0x50b8] sm:$0xff]
        %v4318 = vld [vmem:[%s274 + $0x50c0] sm:$0xff]
        %v4319 = vld [vmem:[%s274 + $0x50c8] sm:$0xff]
        %v4320 = vld [vmem:[%s274 + $0x50d0] sm:$0xff]
        %v4321 = vld [vmem:[%s274 + $0x50d8] sm:$0xff]
        %v4322 = vld [vmem:[%s274 + $0x50e0] sm:$0xff]
        %v4323 = vld [vmem:[%s274 + $0x50e8] sm:$0xff]
        %v4324 = vld [vmem:[%s274 + $0x50f0] sm:$0xff]
        %v4325 = vld [vmem:[%s274 + $0x50f8] sm:$0xff]
        %v4326 = vld [vmem:[%s274 + $0x5100] sm:$0xff]
        %v4327 = vld [vmem:[%s274 + $0x5108] sm:$0xff]
        %v4328 = vld [vmem:[%s274 + $0x5110] sm:$0xff]
        %v4329 = vld [vmem:[%s274 + $0x5118] sm:$0xff]
        %v4330 = vld [vmem:[%s274 + $0x5120] sm:$0xff]
        %v4331 = vld [vmem:[%s274 + $0x5128] sm:$0xff]
        %v4332 = vld [vmem:[%s274 + $0x5130] sm:$0xff]
        %v4333 = vld [vmem:[%s274 + $0x5138] sm:$0xff]
        %v4334 = vld [vmem:[%s274 + $0x5140] sm:$0xff]
        %v4335 = vld [vmem:[%s274 + $0x5148] sm:$0xff]
        %v4336 = vld [vmem:[%s274 + $0x5150] sm:$0xff]
        %v4337 = vld [vmem:[%s274 + $0x5158] sm:$0xff]
        %v4338 = vld [vmem:[%s274 + $0x5160] sm:$0xff]
        %v4339 = vld [vmem:[%s274 + $0x5168] sm:$0xff]
        %v4340 = vld [vmem:[%s274 + $0x5170] sm:$0xff]
        %v4341 = vld [vmem:[%s274 + $0x5178] sm:$0xff]
        %v4342 = vld [vmem:[%s274 + $0x5180] sm:$0xff]
        %v4343 = vld [vmem:[%s274 + $0x5188] sm:$0xff]
        %v4344 = vld [vmem:[%s274 + $0x5190] sm:$0xff]
        %v4345 = vld [vmem:[%s274 + $0x5198] sm:$0xff]
        %v4346 = vld [vmem:[%s274 + $0x51a0] sm:$0xff]
        %v4347 = vld [vmem:[%s274 + $0x51a8] sm:$0xff]
        %v4348 = vld [vmem:[%s274 + $0x51b0] sm:$0xff]
        %v4349 = vld [vmem:[%s274 + $0x51b8] sm:$0xff]
        %v4350 = vld [vmem:[%s274 + $0x51c0] sm:$0xff]
        %v4351 = vld [vmem:[%s274 + $0x51c8] sm:$0xff]
        %v4352 = vld [vmem:[%s274 + $0x51d0] sm:$0xff]
        %v4353 = vld [vmem:[%s274 + $0x51d8] sm:$0xff]
        %v4354 = vld [vmem:[%s274 + $0x51e0] sm:$0xff]
        %v4355 = vld [vmem:[%s274 + $0x51e8] sm:$0xff]
        %v4356 = vld [vmem:[%s274 + $0x51f0] sm:$0xff]
        %v4357 = vld [vmem:[%s274 + $0x51f8] sm:$0xff]
        %v4358 = vld [vmem:[%s274 + $0x5200] sm:$0xff]
        %v4359 = vld [vmem:[%s274 + $0x5208] sm:$0xff]
        %v4360 = vld [vmem:[%s274 + $0x5210] sm:$0xff]
        %v4361 = vld [vmem:[%s274 + $0x5218] sm:$0xff]
        %v4362 = vld [vmem:[%s274 + $0x5220] sm:$0xff]
        %v4363 = vld [vmem:[%s274 + $0x5228] sm:$0xff]
        %v4364 = vld [vmem:[%s274 + $0x5230] sm:$0xff]
        %v4365 = vld [vmem:[%s274 + $0x5238] sm:$0xff]
        %v4366 = vld [vmem:[%s274 + $0x5240] sm:$0xff]
        %v4367 = vld [vmem:[%s274 + $0x5248] sm:$0xff]
        %v4368 = vld [vmem:[%s274 + $0x5250] sm:$0xff]
        %v4369 = vld [vmem:[%s274 + $0x5258] sm:$0xff]
        %v4370 = vld [vmem:[%s274 + $0x5260] sm:$0xff]
        %v4371 = vld [vmem:[%s274 + $0x5268] sm:$0xff]
        %v4372 = vld [vmem:[%s274 + $0x5270] sm:$0xff]
        %v4373 = vld [vmem:[%s274 + $0x5278] sm:$0xff]
        %v4374 = vld [vmem:[%s274 + $0x5280] sm:$0xff]
        %v4375 = vld [vmem:[%s274 + $0x5288] sm:$0xff]
        %v4376 = vld [vmem:[%s274 + $0x5290] sm:$0xff]
        %v4377 = vld [vmem:[%s274 + $0x5298] sm:$0xff]
        %v4378 = vld [vmem:[%s274 + $0x52a0] sm:$0xff]
        %v4379 = vld [vmem:[%s274 + $0x52a8] sm:$0xff]
        %v4380 = vld [vmem:[%s274 + $0x52b0] sm:$0xff]
        %v4381 = vld [vmem:[%s274 + $0x52b8] sm:$0xff]
        %v4382 = vld [vmem:[%s274 + $0x52c0] sm:$0xff]
        %v4383 = vld [vmem:[%s274 + $0x52c8] sm:$0xff]
        %v4384 = vld [vmem:[%s274 + $0x52d0] sm:$0xff]
        %v4385 = vld [vmem:[%s274 + $0x52d8] sm:$0xff]
        %v4386 = vld [vmem:[%s274 + $0x52e0] sm:$0xff]
        %v4387 = vld [vmem:[%s274 + $0x52e8] sm:$0xff]
        %v4388 = vld [vmem:[%s274 + $0x52f0] sm:$0xff]
        %v4389 = vld [vmem:[%s274 + $0x52f8] sm:$0xff]
        %v4390 = vld [vmem:[%s274 + $0x5300] sm:$0xff]
        %v4391 = vld [vmem:[%s274 + $0x5308] sm:$0xff]
        %v4392 = vld [vmem:[%s274 + $0x5310] sm:$0xff]
        %v4393 = vld [vmem:[%s274 + $0x5318] sm:$0xff]
        %v4394 = vld [vmem:[%s274 + $0x5320] sm:$0xff]
        %v4395 = vld [vmem:[%s274 + $0x5328] sm:$0xff]
        %v4396 = vld [vmem:[%s274 + $0x5330] sm:$0xff]
        %v4397 = vld [vmem:[%s274 + $0x5338] sm:$0xff]
        %v4398 = vld [vmem:[%s274 + $0x5340] sm:$0xff]
        %v4399 = vld [vmem:[%s274 + $0x5348] sm:$0xff]
        %v4400 = vld [vmem:[%s274 + $0x5350] sm:$0xff]
        %v4401 = vld [vmem:[%s274 + $0x5358] sm:$0xff]
        %v4402 = vld [vmem:[%s274 + $0x5360] sm:$0xff]
        %v4403 = vld [vmem:[%s274 + $0x5368] sm:$0xff]
        %v4404 = vld [vmem:[%s274 + $0x5370] sm:$0xff]
        %v4405 = vld [vmem:[%s274 + $0x5378] sm:$0xff]
        %v4406 = vld [vmem:[%s274 + $0x5380] sm:$0xff]
        %v4407 = vld [vmem:[%s274 + $0x5388] sm:$0xff]
        %v4408 = vld [vmem:[%s274 + $0x5390] sm:$0xff]
        %v4409 = vld [vmem:[%s274 + $0x5398] sm:$0xff]
        %v4410 = vld [vmem:[%s274 + $0x53a0] sm:$0xff]
        %v4411 = vld [vmem:[%s274 + $0x53a8] sm:$0xff]
        %v4412 = vld [vmem:[%s274 + $0x53b0] sm:$0xff]
        %v4413 = vld [vmem:[%s274 + $0x53b8] sm:$0xff]
        %v4414 = vld [vmem:[%s274 + $0x53c0] sm:$0xff]
        %v4415 = vld [vmem:[%s274 + $0x53c8] sm:$0xff]
        %v4416 = vld [vmem:[%s274 + $0x53d0] sm:$0xff]
        %v4417 = vld [vmem:[%s274 + $0x53d8] sm:$0xff]
        %v4418 = vld [vmem:[%s274 + $0x53e0] sm:$0xff]
        %v4419 = vld [vmem:[%s274 + $0x53e8] sm:$0xff]
        %v4420 = vld [vmem:[%s274 + $0x53f0] sm:$0xff]
        %v4421 = vld [vmem:[%s274 + $0x53f8] sm:$0xff]
        %v4422 = vld [vmem:[%s274 + $0x5400] sm:$0xff]
        %v4423 = vld [vmem:[%s274 + $0x5408] sm:$0xff]
        %v4424 = vld [vmem:[%s274 + $0x5410] sm:$0xff]
        %v4425 = vld [vmem:[%s274 + $0x5418] sm:$0xff]
        %v4426 = vld [vmem:[%s274 + $0x5420] sm:$0xff]
        %v4427 = vld [vmem:[%s274 + $0x5428] sm:$0xff]
        %v4428 = vld [vmem:[%s274 + $0x5430] sm:$0xff]
        %v4429 = vld [vmem:[%s274 + $0x5438] sm:$0xff]
        %v4430 = vld [vmem:[%s274 + $0x5440] sm:$0xff]
        %v4431 = vld [vmem:[%s274 + $0x5448] sm:$0xff]
        %v4432 = vld [vmem:[%s274 + $0x5450] sm:$0xff]
        %v4433 = vld [vmem:[%s274 + $0x5458] sm:$0xff]
        %v4434 = vld [vmem:[%s274 + $0x5460] sm:$0xff]
        %v4435 = vld [vmem:[%s274 + $0x5468] sm:$0xff]
        %v4436 = vld [vmem:[%s274 + $0x5470] sm:$0xff]
        %v4437 = vld [vmem:[%s274 + $0x5478] sm:$0xff]
        %v4438 = vld [vmem:[%s274 + $0x5480] sm:$0xff]
        %v4439 = vld [vmem:[%s274 + $0x5488] sm:$0xff]
        %v4440 = vld [vmem:[%s274 + $0x5490] sm:$0xff]
        %v4441 = vld [vmem:[%s274 + $0x5498] sm:$0xff]
        %v4442 = vld [vmem:[%s274 + $0x54a0] sm:$0xff]
        %v4443 = vld [vmem:[%s274 + $0x54a8] sm:$0xff]
        %v4444 = vld [vmem:[%s274 + $0x54b0] sm:$0xff]
        %v4445 = vld [vmem:[%s274 + $0x54b8] sm:$0xff]
        %v4446 = vld [vmem:[%s274 + $0x54c0] sm:$0xff]
        %v4447 = vld [vmem:[%s274 + $0x54c8] sm:$0xff]
        %v4448 = vld [vmem:[%s274 + $0x54d0] sm:$0xff]
        %v4449 = vld [vmem:[%s274 + $0x54d8] sm:$0xff]
        %v4450 = vld [vmem:[%s274 + $0x54e0] sm:$0xff]
        %v4451 = vld [vmem:[%s274 + $0x54e8] sm:$0xff]
        %v4452 = vld [vmem:[%s274 + $0x54f0] sm:$0xff]
        %v4453 = vld [vmem:[%s274 + $0x54f8] sm:$0xff]
        %v4454 = vld [vmem:[%s274 + $0x5500] sm:$0xff]
        %v4455 = vld [vmem:[%s274 + $0x5508] sm:$0xff]
        %v4456 = vld [vmem:[%s274 + $0x5510] sm:$0xff]
        %v4457 = vld [vmem:[%s274 + $0x5518] sm:$0xff]
        %v4458 = vld [vmem:[%s274 + $0x5520] sm:$0xff]
        %v4459 = vld [vmem:[%s274 + $0x5528] sm:$0xff]
        %v4460 = vld [vmem:[%s274 + $0x5530] sm:$0xff]
        %v4461 = vld [vmem:[%s274 + $0x5538] sm:$0xff]
        %v4462 = vld [vmem:[%s274 + $0x5540] sm:$0xff]
        %v4463 = vld [vmem:[%s274 + $0x5548] sm:$0xff]
        %v4464 = vld [vmem:[%s274 + $0x5550] sm:$0xff]
        %v4465 = vld [vmem:[%s274 + $0x5558] sm:$0xff]
        %v4466 = vld [vmem:[%s274 + $0x5560] sm:$0xff]
        %v4467 = vld [vmem:[%s274 + $0x5568] sm:$0xff]
        %v4468 = vld [vmem:[%s274 + $0x5570] sm:$0xff]
        %v4469 = vld [vmem:[%s274 + $0x5578] sm:$0xff]
        %v4470 = vld [vmem:[%s274 + $0x5580] sm:$0xff]
        %v4471 = vld [vmem:[%s274 + $0x5588] sm:$0xff]
        %v4472 = vld [vmem:[%s274 + $0x5590] sm:$0xff]
        %v4473 = vld [vmem:[%s274 + $0x5598] sm:$0xff]
        %v4474 = vld [vmem:[%s274 + $0x55a0] sm:$0xff]
        %v4475 = vld [vmem:[%s274 + $0x55a8] sm:$0xff]
        %v4476 = vld [vmem:[%s274 + $0x55b0] sm:$0xff]
        %v4477 = vld [vmem:[%s274 + $0x55b8] sm:$0xff]
        %v4478 = vld [vmem:[%s274 + $0x55c0] sm:$0xff]
        %v4479 = vld [vmem:[%s274 + $0x55c8] sm:$0xff]
        %v4480 = vld [vmem:[%s274 + $0x55d0] sm:$0xff]
        %v4481 = vld [vmem:[%s274 + $0x55d8] sm:$0xff]
        %v4482 = vld [vmem:[%s274 + $0x55e0] sm:$0xff]
        %v4483 = vld [vmem:[%s274 + $0x55e8] sm:$0xff]
        %v4484 = vld [vmem:[%s274 + $0x55f0] sm:$0xff]
        %v4485 = vld [vmem:[%s274 + $0x55f8] sm:$0xff]
        %v4486 = vld [vmem:[%s274 + $0x5600] sm:$0xff]
        %v4487 = vld [vmem:[%s274 + $0x5608] sm:$0xff]
        %v4488 = vld [vmem:[%s274 + $0x5610] sm:$0xff]
        %v4489 = vld [vmem:[%s274 + $0x5618] sm:$0xff]
        %v4490 = vld [vmem:[%s274 + $0x5620] sm:$0xff]
        %v4491 = vld [vmem:[%s274 + $0x5628] sm:$0xff]
        %v4492 = vld [vmem:[%s274 + $0x5630] sm:$0xff]
        %v4493 = vld [vmem:[%s274 + $0x5638] sm:$0xff]
        %v4494 = vld [vmem:[%s274 + $0x5640] sm:$0xff]
        %v4495 = vld [vmem:[%s274 + $0x5648] sm:$0xff]
        %v4496 = vld [vmem:[%s274 + $0x5650] sm:$0xff]
        %v4497 = vld [vmem:[%s274 + $0x5658] sm:$0xff]
        %v4498 = vld [vmem:[%s274 + $0x5660] sm:$0xff]
        %v4499 = vld [vmem:[%s274 + $0x5668] sm:$0xff]
        %v4500 = vld [vmem:[%s274 + $0x5670] sm:$0xff]
        %v4501 = vld [vmem:[%s274 + $0x5678] sm:$0xff]
        %v4502 = vld [vmem:[%s274 + $0x5680] sm:$0xff]
        %v4503 = vld [vmem:[%s274 + $0x5688] sm:$0xff]
        %v4504 = vld [vmem:[%s274 + $0x5690] sm:$0xff]
        %v4505 = vld [vmem:[%s274 + $0x5698] sm:$0xff]
        %v4506 = vld [vmem:[%s274 + $0x56a0] sm:$0xff]
        %v4507 = vld [vmem:[%s274 + $0x56a8] sm:$0xff]
        %v4508 = vld [vmem:[%s274 + $0x56b0] sm:$0xff]
        %v4509 = vld [vmem:[%s274 + $0x56b8] sm:$0xff]
        %v4510 = vld [vmem:[%s274 + $0x56c0] sm:$0xff]
        %v4511 = vld [vmem:[%s274 + $0x56c8] sm:$0xff]
        %v4512 = vld [vmem:[%s274 + $0x56d0] sm:$0xff]
        %v4513 = vld [vmem:[%s274 + $0x56d8] sm:$0xff]
        %v4514 = vld [vmem:[%s274 + $0x56e0] sm:$0xff]
        %v4515 = vld [vmem:[%s274 + $0x56e8] sm:$0xff]
        %v4516 = vld [vmem:[%s274 + $0x56f0] sm:$0xff]
        %v4517 = vld [vmem:[%s274 + $0x56f8] sm:$0xff]
        %v4518 = vld [vmem:[%s274 + $0x5700] sm:$0xff]
        %v4519 = vld [vmem:[%s274 + $0x5708] sm:$0xff]
        %v4520 = vld [vmem:[%s274 + $0x5710] sm:$0xff]
        %v4521 = vld [vmem:[%s274 + $0x5718] sm:$0xff]
        %v4522 = vld [vmem:[%s274 + $0x5720] sm:$0xff]
        %v4523 = vld [vmem:[%s274 + $0x5728] sm:$0xff]
        %v4524 = vld [vmem:[%s274 + $0x5730] sm:$0xff]
        %v4525 = vld [vmem:[%s274 + $0x5738] sm:$0xff]
        %v4526 = vld [vmem:[%s274 + $0x5740] sm:$0xff]
        %v4527 = vld [vmem:[%s274 + $0x5748] sm:$0xff]
        %v4528 = vld [vmem:[%s274 + $0x5750] sm:$0xff]
        %v4529 = vld [vmem:[%s274 + $0x5758] sm:$0xff]
        %v4530 = vld [vmem:[%s274 + $0x5760] sm:$0xff]
        %v4531 = vld [vmem:[%s274 + $0x5768] sm:$0xff]
        %v4532 = vld [vmem:[%s274 + $0x5770] sm:$0xff]
        %v4533 = vld [vmem:[%s274 + $0x5778] sm:$0xff]
        %v4534 = vld [vmem:[%s274 + $0x5780] sm:$0xff]
        %v4535 = vld [vmem:[%s274 + $0x5788] sm:$0xff]
        %v4536 = vld [vmem:[%s274 + $0x5790] sm:$0xff]
        %v4537 = vld [vmem:[%s274 + $0x5798] sm:$0xff]
        %v4538 = vld [vmem:[%s274 + $0x57a0] sm:$0xff]
        %v4539 = vld [vmem:[%s274 + $0x57a8] sm:$0xff]
        %v4540 = vld [vmem:[%s274 + $0x57b0] sm:$0xff]
        %v4541 = vld [vmem:[%s274 + $0x57b8] sm:$0xff]
        %v4542 = vld [vmem:[%s274 + $0x57c0] sm:$0xff]
        %v4543 = vld [vmem:[%s274 + $0x57c8] sm:$0xff]
        %v4544 = vld [vmem:[%s274 + $0x57d0] sm:$0xff]
        %v4545 = vld [vmem:[%s274 + $0x57d8] sm:$0xff]
        %v4546 = vld [vmem:[%s274 + $0x57e0] sm:$0xff]
        %v4547 = vld [vmem:[%s274 + $0x57e8] sm:$0xff]
        %v4548 = vld [vmem:[%s274 + $0x57f0] sm:$0xff]
        %v4549 = vld [vmem:[%s274 + $0x57f8] sm:$0xff]
        %v4550 = vld [vmem:[%s274 + $0x5800] sm:$0xff]
        %v4551 = vld [vmem:[%s274 + $0x5808] sm:$0xff]
        %v4552 = vld [vmem:[%s274 + $0x5810] sm:$0xff]
        %v4553 = vld [vmem:[%s274 + $0x5818] sm:$0xff]
        %v4554 = vld [vmem:[%s274 + $0x5820] sm:$0xff]
        %v4555 = vld [vmem:[%s274 + $0x5828] sm:$0xff]
        %v4556 = vld [vmem:[%s274 + $0x5830] sm:$0xff]
        %v4557 = vld [vmem:[%s274 + $0x5838] sm:$0xff]
        %v4558 = vld [vmem:[%s274 + $0x5840] sm:$0xff]
        %v4559 = vld [vmem:[%s274 + $0x5848] sm:$0xff]
        %v4560 = vld [vmem:[%s274 + $0x5850] sm:$0xff]
        %v4561 = vld [vmem:[%s274 + $0x5858] sm:$0xff]
        %v4562 = vld [vmem:[%s274 + $0x5860] sm:$0xff]
        %v4563 = vld [vmem:[%s274 + $0x5868] sm:$0xff]
        %v4564 = vld [vmem:[%s274 + $0x5870] sm:$0xff]
        %v4565 = vld [vmem:[%s274 + $0x5878] sm:$0xff]
        %v4566 = vld [vmem:[%s274 + $0x5880] sm:$0xff]
        %v4567 = vld [vmem:[%s274 + $0x5888] sm:$0xff]
        %v4568 = vld [vmem:[%s274 + $0x5890] sm:$0xff]
        %v4569 = vld [vmem:[%s274 + $0x5898] sm:$0xff]
        %v4570 = vld [vmem:[%s274 + $0x58a0] sm:$0xff]
        %v4571 = vld [vmem:[%s274 + $0x58a8] sm:$0xff]
        %v4572 = vld [vmem:[%s274 + $0x58b0] sm:$0xff]
        %v4573 = vld [vmem:[%s274 + $0x58b8] sm:$0xff]
        %v4574 = vld [vmem:[%s274 + $0x58c0] sm:$0xff]
        %v4575 = vld [vmem:[%s274 + $0x58c8] sm:$0xff]
        %v4576 = vld [vmem:[%s274 + $0x58d0] sm:$0xff]
        %v4577 = vld [vmem:[%s274 + $0x58d8] sm:$0xff]
        %v4578 = vld [vmem:[%s274 + $0x58e0] sm:$0xff]
        %v4579 = vld [vmem:[%s274 + $0x58e8] sm:$0xff]
        %v4580 = vld [vmem:[%s274 + $0x58f0] sm:$0xff]
        %v4581 = vld [vmem:[%s274 + $0x58f8] sm:$0xff]
        %v4582 = vld [vmem:[%s274 + $0x5900] sm:$0xff]
        %v4583 = vld [vmem:[%s274 + $0x5908] sm:$0xff]
        %v4584 = vld [vmem:[%s274 + $0x5910] sm:$0xff]
        %v4585 = vld [vmem:[%s274 + $0x5918] sm:$0xff]
        %v4586 = vld [vmem:[%s274 + $0x5920] sm:$0xff]
        %v4587 = vld [vmem:[%s274 + $0x5928] sm:$0xff]
        %v4588 = vld [vmem:[%s274 + $0x5930] sm:$0xff]
        %v4589 = vld [vmem:[%s274 + $0x5938] sm:$0xff]
        %v4590 = vld [vmem:[%s274 + $0x5940] sm:$0xff]
        %v4591 = vld [vmem:[%s274 + $0x5948] sm:$0xff]
        %v4592 = vld [vmem:[%s274 + $0x5950] sm:$0xff]
        %v4593 = vld [vmem:[%s274 + $0x5958] sm:$0xff]
        %v4594 = vld [vmem:[%s274 + $0x5960] sm:$0xff]
        %v4595 = vld [vmem:[%s274 + $0x5968] sm:$0xff]
        %v4596 = vld [vmem:[%s274 + $0x5970] sm:$0xff]
        %v4597 = vld [vmem:[%s274 + $0x5978] sm:$0xff]
        %v4598 = vld [vmem:[%s274 + $0x5980] sm:$0xff]
        %v4599 = vld [vmem:[%s274 + $0x5988] sm:$0xff]
        %v4600 = vld [vmem:[%s274 + $0x5990] sm:$0xff]
        %v4601 = vld [vmem:[%s274 + $0x5998] sm:$0xff]
        %v4602 = vld [vmem:[%s274 + $0x59a0] sm:$0xff]
        %v4603 = vld [vmem:[%s274 + $0x59a8] sm:$0xff]
        %v4604 = vld [vmem:[%s274 + $0x59b0] sm:$0xff]
        %v4605 = vld [vmem:[%s274 + $0x59b8] sm:$0xff]
        %v4606 = vld [vmem:[%s274 + $0x59c0] sm:$0xff]
        %v4607 = vld [vmem:[%s274 + $0x59c8] sm:$0xff]
        %v4608 = vld [vmem:[%s274 + $0x59d0] sm:$0xff]
        %v4609 = vld [vmem:[%s274 + $0x59d8] sm:$0xff]
        %v4610 = vld [vmem:[%s274 + $0x59e0] sm:$0xff]
        %v4611 = vld [vmem:[%s274 + $0x59e8] sm:$0xff]
        %v4612 = vld [vmem:[%s274 + $0x59f0] sm:$0xff]
        %v4613 = vld [vmem:[%s274 + $0x59f8] sm:$0xff]
        %v4614 = vld [vmem:[%s274 + $0x5a00] sm:$0xff]
        %v4615 = vld [vmem:[%s274 + $0x5a08] sm:$0xff]
        %v4616 = vld [vmem:[%s274 + $0x5a10] sm:$0xff]
        %v4617 = vld [vmem:[%s274 + $0x5a18] sm:$0xff]
        %v4618 = vld [vmem:[%s274 + $0x5a20] sm:$0xff]
        %v4619 = vld [vmem:[%s274 + $0x5a28] sm:$0xff]
        %v4620 = vld [vmem:[%s274 + $0x5a30] sm:$0xff]
        %v4621 = vld [vmem:[%s274 + $0x5a38] sm:$0xff]
        %v4622 = vld [vmem:[%s274 + $0x5a40] sm:$0xff]
        %v4623 = vld [vmem:[%s274 + $0x5a48] sm:$0xff]
        %v4624 = vld [vmem:[%s274 + $0x5a50] sm:$0xff]
        %v4625 = vld [vmem:[%s274 + $0x5a58] sm:$0xff]
        %v4626 = vld [vmem:[%s274 + $0x5a60] sm:$0xff]
        %v4627 = vld [vmem:[%s274 + $0x5a68] sm:$0xff]
        %v4628 = vld [vmem:[%s274 + $0x5a70] sm:$0xff]
        %v4629 = vld [vmem:[%s274 + $0x5a78] sm:$0xff]
        %v4630 = vld [vmem:[%s274 + $0x5a80] sm:$0xff]
        %v4631 = vld [vmem:[%s274 + $0x5a88] sm:$0xff]
        %v4632 = vld [vmem:[%s274 + $0x5a90] sm:$0xff]
        %v4633 = vld [vmem:[%s274 + $0x5a98] sm:$0xff]
        %v4634 = vld [vmem:[%s274 + $0x5aa0] sm:$0xff]
        %v4635 = vld [vmem:[%s274 + $0x5aa8] sm:$0xff]
        %v4636 = vld [vmem:[%s274 + $0x5ab0] sm:$0xff]
        %v4637 = vld [vmem:[%s274 + $0x5ab8] sm:$0xff]
        %v4638 = vld [vmem:[%s274 + $0x5ac0] sm:$0xff]
        %v4639 = vld [vmem:[%s274 + $0x5ac8] sm:$0xff]
        %v4640 = vld [vmem:[%s274 + $0x5ad0] sm:$0xff]
        %v4641 = vld [vmem:[%s274 + $0x5ad8] sm:$0xff]
        %v4642 = vld [vmem:[%s274 + $0x5ae0] sm:$0xff]
        %v4643 = vld [vmem:[%s274 + $0x5ae8] sm:$0xff]
        %v4644 = vld [vmem:[%s274 + $0x5af0] sm:$0xff]
        %v4645 = vld [vmem:[%s274 + $0x5af8] sm:$0xff]
        %v4646 = vld [vmem:[%s274 + $0x5b00] sm:$0xff]
        %v4647 = vld [vmem:[%s274 + $0x5b08] sm:$0xff]
        %v4648 = vld [vmem:[%s274 + $0x5b10] sm:$0xff]
        %v4649 = vld [vmem:[%s274 + $0x5b18] sm:$0xff]
        %v4650 = vld [vmem:[%s274 + $0x5b20] sm:$0xff]
        %v4651 = vld [vmem:[%s274 + $0x5b28] sm:$0xff]
        %v4652 = vld [vmem:[%s274 + $0x5b30] sm:$0xff]
        %v4653 = vld [vmem:[%s274 + $0x5b38] sm:$0xff]
        %v4654 = vld [vmem:[%s274 + $0x5b40] sm:$0xff]
        %v4655 = vld [vmem:[%s274 + $0x5b48] sm:$0xff]
        %v4656 = vld [vmem:[%s274 + $0x5b50] sm:$0xff]
        %v4657 = vld [vmem:[%s274 + $0x5b58] sm:$0xff]
        %v4658 = vld [vmem:[%s274 + $0x5b60] sm:$0xff]
        %v4659 = vld [vmem:[%s274 + $0x5b68] sm:$0xff]
        %v4660 = vld [vmem:[%s274 + $0x5b70] sm:$0xff]
        %v4661 = vld [vmem:[%s274 + $0x5b78] sm:$0xff]
        %v4662 = vld [vmem:[%s274 + $0x5b80] sm:$0xff]
        %v4663 = vld [vmem:[%s274 + $0x5b88] sm:$0xff]
        %v4664 = vld [vmem:[%s274 + $0x5b90] sm:$0xff]
        %v4665 = vld [vmem:[%s274 + $0x5b98] sm:$0xff]
        %v4666 = vld [vmem:[%s274 + $0x5ba0] sm:$0xff]
        %v4667 = vld [vmem:[%s274 + $0x5ba8] sm:$0xff]
        %v4668 = vld [vmem:[%s274 + $0x5bb0] sm:$0xff]
        %v4669 = vld [vmem:[%s274 + $0x5bb8] sm:$0xff]
        %v4670 = vld [vmem:[%s274 + $0x5bc0] sm:$0xff]
        %v4671 = vld [vmem:[%s274 + $0x5bc8] sm:$0xff]
        %v4672 = vld [vmem:[%s274 + $0x5bd0] sm:$0xff]
        %v4673 = vld [vmem:[%s274 + $0x5bd8] sm:$0xff]
        %v4674 = vld [vmem:[%s274 + $0x5be0] sm:$0xff]
        %v4675 = vld [vmem:[%s274 + $0x5be8] sm:$0xff]
        %v4676 = vld [vmem:[%s274 + $0x5bf0] sm:$0xff]
        %v4677 = vld [vmem:[%s274 + $0x5bf8] sm:$0xff]
        %v4678 = vld [vmem:[%s274 + $0x5c00] sm:$0xff]
        %v4679 = vld [vmem:[%s274 + $0x5c08] sm:$0xff]
        %v4680 = vld [vmem:[%s274 + $0x5c10] sm:$0xff]
        %v4681 = vld [vmem:[%s274 + $0x5c18] sm:$0xff]
        %v4682 = vld [vmem:[%s274 + $0x5c20] sm:$0xff]
        %v4683 = vld [vmem:[%s274 + $0x5c28] sm:$0xff]
        %v4684 = vld [vmem:[%s274 + $0x5c30] sm:$0xff]
        %v4685 = vld [vmem:[%s274 + $0x5c38] sm:$0xff]
        %v4686 = vld [vmem:[%s274 + $0x5c40] sm:$0xff]
        %v4687 = vld [vmem:[%s274 + $0x5c48] sm:$0xff]
        %v4688 = vld [vmem:[%s274 + $0x5c50] sm:$0xff]
        %v4689 = vld [vmem:[%s274 + $0x5c58] sm:$0xff]
        %v4690 = vld [vmem:[%s274 + $0x5c60] sm:$0xff]
        %v4691 = vld [vmem:[%s274 + $0x5c68] sm:$0xff]
        %v4692 = vld [vmem:[%s274 + $0x5c70] sm:$0xff]
        %v4693 = vld [vmem:[%s274 + $0x5c78] sm:$0xff]
        %v4694 = vld [vmem:[%s274 + $0x5c80] sm:$0xff]
        %v4695 = vld [vmem:[%s274 + $0x5c88] sm:$0xff]
        %v4696 = vld [vmem:[%s274 + $0x5c90] sm:$0xff]
        %v4697 = vld [vmem:[%s274 + $0x5c98] sm:$0xff]
        %v4698 = vld [vmem:[%s274 + $0x5ca0] sm:$0xff]
        %v4699 = vld [vmem:[%s274 + $0x5ca8] sm:$0xff]
        %v4700 = vld [vmem:[%s274 + $0x5cb0] sm:$0xff]
        %v4701 = vld [vmem:[%s274 + $0x5cb8] sm:$0xff]
        %v4702 = vld [vmem:[%s274 + $0x5cc0] sm:$0xff]
        %v4703 = vld [vmem:[%s274 + $0x5cc8] sm:$0xff]
        %v4704 = vld [vmem:[%s274 + $0x5cd0] sm:$0xff]
        %v4705 = vld [vmem:[%s274 + $0x5cd8] sm:$0xff]
        %v4706 = vld [vmem:[%s274 + $0x5ce0] sm:$0xff]
        %v4707 = vld [vmem:[%s274 + $0x5ce8] sm:$0xff]
        %v4708 = vld [vmem:[%s274 + $0x5cf0] sm:$0xff]
        %v4709 = vld [vmem:[%s274 + $0x5cf8] sm:$0xff]
        %v4710 = vld [vmem:[%s274 + $0x5d00] sm:$0xff]
        %v4711 = vld [vmem:[%s274 + $0x5d08] sm:$0xff]
        %v4712 = vld [vmem:[%s274 + $0x5d10] sm:$0xff]
        %v4713 = vld [vmem:[%s274 + $0x5d18] sm:$0xff]
        %v4714 = vld [vmem:[%s274 + $0x5d20] sm:$0xff]
        %v4715 = vld [vmem:[%s274 + $0x5d28] sm:$0xff]
        %v4716 = vld [vmem:[%s274 + $0x5d30] sm:$0xff]
        %v4717 = vld [vmem:[%s274 + $0x5d38] sm:$0xff]
        %v4718 = vld [vmem:[%s274 + $0x5d40] sm:$0xff]
        %v4719 = vld [vmem:[%s274 + $0x5d48] sm:$0xff]
        %v4720 = vld [vmem:[%s274 + $0x5d50] sm:$0xff]
        %v4721 = vld [vmem:[%s274 + $0x5d58] sm:$0xff]
        %v4722 = vld [vmem:[%s274 + $0x5d60] sm:$0xff]
        %v4723 = vld [vmem:[%s274 + $0x5d68] sm:$0xff]
        %v4724 = vld [vmem:[%s274 + $0x5d70] sm:$0xff]
        %v4725 = vld [vmem:[%s274 + $0x5d78] sm:$0xff]
        %v4726 = vld [vmem:[%s274 + $0x5d80] sm:$0xff]
        %v4727 = vld [vmem:[%s274 + $0x5d88] sm:$0xff]
        %v4728 = vld [vmem:[%s274 + $0x5d90] sm:$0xff]
        %v4729 = vld [vmem:[%s274 + $0x5d98] sm:$0xff]
        %v4730 = vld [vmem:[%s274 + $0x5da0] sm:$0xff]
        %v4731 = vld [vmem:[%s274 + $0x5da8] sm:$0xff]
        %v4732 = vld [vmem:[%s274 + $0x5db0] sm:$0xff]
        %v4733 = vld [vmem:[%s274 + $0x5db8] sm:$0xff]
        %v4734 = vld [vmem:[%s274 + $0x5dc0] sm:$0xff]
        %v4735 = vld [vmem:[%s274 + $0x5dc8] sm:$0xff]
        %v4736 = vld [vmem:[%s274 + $0x5dd0] sm:$0xff]
        %v4737 = vld [vmem:[%s274 + $0x5dd8] sm:$0xff]
        %v4738 = vld [vmem:[%s274 + $0x5de0] sm:$0xff]
        %v4739 = vld [vmem:[%s274 + $0x5de8] sm:$0xff]
        %v4740 = vld [vmem:[%s274 + $0x5df0] sm:$0xff]
        %v4741 = vld [vmem:[%s274 + $0x5df8] sm:$0xff]
        %v4742 = vld [vmem:[%s274 + $0x5e00] sm:$0xff]
        %v4743 = vld [vmem:[%s274 + $0x5e08] sm:$0xff]
        %v4744 = vld [vmem:[%s274 + $0x5e10] sm:$0xff]
        %v4745 = vld [vmem:[%s274 + $0x5e18] sm:$0xff]
        %v4746 = vld [vmem:[%s274 + $0x5e20] sm:$0xff]
        %v4747 = vld [vmem:[%s274 + $0x5e28] sm:$0xff]
        %v4748 = vld [vmem:[%s274 + $0x5e30] sm:$0xff]
        %v4749 = vld [vmem:[%s274 + $0x5e38] sm:$0xff]
        %v4750 = vld [vmem:[%s274 + $0x5e40] sm:$0xff]
        %v4751 = vld [vmem:[%s274 + $0x5e48] sm:$0xff]
        %v4752 = vld [vmem:[%s274 + $0x5e50] sm:$0xff]
        %v4753 = vld [vmem:[%s274 + $0x5e58] sm:$0xff]
        %v4754 = vld [vmem:[%s274 + $0x5e60] sm:$0xff]
        %v4755 = vld [vmem:[%s274 + $0x5e68] sm:$0xff]
        %v4756 = vld [vmem:[%s274 + $0x5e70] sm:$0xff]
        %v4757 = vld [vmem:[%s274 + $0x5e78] sm:$0xff]
        %v4758 = vld [vmem:[%s274 + $0x5e80] sm:$0xff]
        %v4759 = vld [vmem:[%s274 + $0x5e88] sm:$0xff]
        %v4760 = vld [vmem:[%s274 + $0x5e90] sm:$0xff]
        %v4761 = vld [vmem:[%s274 + $0x5e98] sm:$0xff]
        %v4762 = vld [vmem:[%s274 + $0x5ea0] sm:$0xff]
        %v4763 = vld [vmem:[%s274 + $0x5ea8] sm:$0xff]
        %v4764 = vld [vmem:[%s274 + $0x5eb0] sm:$0xff]
        %v4765 = vld [vmem:[%s274 + $0x5eb8] sm:$0xff]
        %v4766 = vld [vmem:[%s274 + $0x5ec0] sm:$0xff]
        %v4767 = vld [vmem:[%s274 + $0x5ec8] sm:$0xff]
        %v4768 = vld [vmem:[%s274 + $0x5ed0] sm:$0xff]
        %v4769 = vld [vmem:[%s274 + $0x5ed8] sm:$0xff]
        %v4770 = vld [vmem:[%s274 + $0x5ee0] sm:$0xff]
        %v4771 = vld [vmem:[%s274 + $0x5ee8] sm:$0xff]
        %v4772 = vld [vmem:[%s274 + $0x5ef0] sm:$0xff]
        %v4773 = vld [vmem:[%s274 + $0x5ef8] sm:$0xff]
        %v4774 = vld [vmem:[%s274 + $0x5f00] sm:$0xff]
        %v4775 = vld [vmem:[%s274 + $0x5f08] sm:$0xff]
        %v4776 = vld [vmem:[%s274 + $0x5f10] sm:$0xff]
        %v4777 = vld [vmem:[%s274 + $0x5f18] sm:$0xff]
        %v4778 = vld [vmem:[%s274 + $0x5f20] sm:$0xff]
        %v4779 = vld [vmem:[%s274 + $0x5f28] sm:$0xff]
        %v4780 = vld [vmem:[%s274 + $0x5f30] sm:$0xff]
        %v4781 = vld [vmem:[%s274 + $0x5f38] sm:$0xff]
        %v4782 = vld [vmem:[%s274 + $0x5f40] sm:$0xff]
        %v4783 = vld [vmem:[%s274 + $0x5f48] sm:$0xff]
        %v4784 = vld [vmem:[%s274 + $0x5f50] sm:$0xff]
        %v4785 = vld [vmem:[%s274 + $0x5f58] sm:$0xff]
        %v4786 = vld [vmem:[%s274 + $0x5f60] sm:$0xff]
        %v4787 = vld [vmem:[%s274 + $0x5f68] sm:$0xff]
        %v4788 = vld [vmem:[%s274 + $0x5f70] sm:$0xff]
        %v4789 = vld [vmem:[%s274 + $0x5f78] sm:$0xff]
        %v4790 = vld [vmem:[%s274 + $0x5f80] sm:$0xff]
        %v4791 = vld [vmem:[%s274 + $0x5f88] sm:$0xff]
        %v4792 = vld [vmem:[%s274 + $0x5f90] sm:$0xff]
        %v4793 = vld [vmem:[%s274 + $0x5f98] sm:$0xff]
        %v4794 = vld [vmem:[%s274 + $0x5fa0] sm:$0xff]
        %v4795 = vld [vmem:[%s274 + $0x5fa8] sm:$0xff]
        %v4796 = vld [vmem:[%s274 + $0x5fb0] sm:$0xff]
        %v4797 = vld [vmem:[%s274 + $0x5fb8] sm:$0xff]
        %v4798 = vld [vmem:[%s274 + $0x5fc0] sm:$0xff]
        %v4799 = vld [vmem:[%s274 + $0x5fc8] sm:$0xff]
        %v4800 = vld [vmem:[%s274 + $0x5fd0] sm:$0xff]
        %v4801 = vld [vmem:[%s274 + $0x5fd8] sm:$0xff]
        %v4802 = vld [vmem:[%s274 + $0x5fe0] sm:$0xff]
        %v4803 = vld [vmem:[%s274 + $0x5fe8] sm:$0xff]
        %v4804 = vld [vmem:[%s274 + $0x5ff0] sm:$0xff]
        %v4805 = vld [vmem:[%s274 + $0x5ff8] sm:$0xff]
        %v4806 = vld [vmem:[%s283] sm:$0xff]
        %v4807 = vld [vmem:[%s283 + $0x8] sm:$0xf]
        %v4810 = vlaneseq
        %v4811 = vshrl.u32 %v4810, 7
        %v4812 = vsub.s32 0, %v4811
        %v4813 = vrot.slane %v4806, %v4812
        %v4814 = vlaneseq
        %v4815 = vshrl.u32 %v4814, 7
        %v4816 = vsub.s32 1, %v4815
        %v4817 = vrot.slane %v4806, %v4816
        %v4818 = vlaneseq
        %v4819 = vshrl.u32 %v4818, 7
        %v4820 = vsub.s32 2, %v4819
        %v4821 = vrot.slane %v4806, %v4820
        %v4822 = vlaneseq
        %v4823 = vshrl.u32 %v4822, 7
        %v4824 = vsub.s32 3, %v4823
        %v4825 = vrot.slane %v4806, %v4824
        %v4826 = vlaneseq
        %v4827 = vshrl.u32 %v4826, 7
        %v4828 = vsub.s32 4, %v4827
        %v4829 = vrot.slane %v4806, %v4828
        %v4830 = vlaneseq
        %v4831 = vshrl.u32 %v4830, 7
        %v4832 = vsub.s32 5, %v4831
        %v4833 = vrot.slane %v4806, %v4832
        %v4834 = vlaneseq
        %v4835 = vshrl.u32 %v4834, 7
        %v4836 = vsub.s32 6, %v4835
        %v4837 = vrot.slane %v4806, %v4836
        %v4838 = vlaneseq
        %v4839 = vshrl.u32 %v4838, 7
        %v4840 = vsub.s32 7, %v4839
        %v4841 = vrot.slane %v4806, %v4840
        %v4842 = vlaneseq
        %v4843 = vshrl.u32 %v4842, 7
        %v4844 = vsub.s32 0, %v4843
        %v4845 = vrot.slane %v4807, %v4844
        %v4846 = vlaneseq
        %v4847 = vshrl.u32 %v4846, 7
        %v4848 = vsub.s32 1, %v4847
        %v4849 = vrot.slane %v4807, %v4848
        %v4850 = vlaneseq
        %v4851 = vshrl.u32 %v4850, 7
        %v4852 = vsub.s32 2, %v4851
        %v4853 = vrot.slane %v4807, %v4852
        %v4854 = vlaneseq
        %v4855 = vshrl.u32 %v4854, 7
        %v4856 = vsub.s32 3, %v4855
        %v4857 = vrot.slane %v4807, %v4856
        %4870 = vmatprep.subr.mxu0 %v1735
        %4871 = vmatpush1.msra.mxu0 %v1734
        %4872 = vmatprep.subr.mxu0 %v1747
        %4873 = vmatpush1.msra.mxu0 %v1746
        %4874 = vmatprep.subr.mxu0 %v1759
        %4875 = vmatpush1.msra.mxu0 %v1758
        %4876 = vmatprep.subr.mxu0 %v1771
        %4877 = vmatpush1.msra.mxu0 %v1770
        %4878 = vmatprep.subr.mxu0 %v1783
        %4879 = vmatpush1.msra.mxu0 %v1782
        %4880 = vmatprep.subr.mxu0 %v1795
        %4881 = vmatpush1.msra.mxu0 %v1794
        %4882 = vmatprep.subr.mxu0 %v1807
        %4883 = vmatpush1.msra.mxu0 %v1806
        %4884 = vmatprep.subr.mxu0 %v1819
        %4885 = vmatpush1.msra.mxu0 %v1818
        %4886 = vmatprep.subr.mxu0 %v1831
        %4887 = vmatpush1.msra.mxu0 %v1830
        %4888 = vmatprep.subr.mxu0 %v1843
        %4889 = vmatpush1.msra.mxu0 %v1842
        %4890 = vmatprep.subr.mxu0 %v1855
        %4891 = vmatpush1.msra.mxu0 %v1854
        %4892 = vmatprep.subr.mxu0 %v1867
        %4893 = vmatpush1.msra.mxu0 %v1866
        %4894 = vmatprep.subr.mxu0 %v1879
        %4895 = vmatpush1.msra.mxu0 %v1878
        %4896 = vmatprep.subr.mxu0 %v1891
        %4897 = vmatpush1.msra.mxu0 %v1890
        %4898 = vmatprep.subr.mxu0 %v1903
        %4899 = vmatpush1.msra.mxu0 %v1902
        %4900 = vmatprep.subr.mxu0 %v1915
        %4901 = vmatpush1.msra.mxu0 %v1914
        %4902 = vmatprep.subr.mxu0 %v1927
        %4903 = vmatpush1.msra.mxu0 %v1926
        %4904 = vmatprep.subr.mxu0 %v1939
        %4905 = vmatpush1.msra.mxu0 %v1938
        %4906 = vmatprep.subr.mxu0 %v1951
        %4907 = vmatpush1.msra.mxu0 %v1950
        %4908 = vmatprep.subr.mxu0 %v1963
        %4909 = vmatpush1.msra.mxu0 %v1962
        %4910 = vmatprep.subr.mxu0 %v1975
        %4911 = vmatpush1.msra.mxu0 %v1974
        %4912 = vmatprep.subr.mxu0 %v1987
        %4913 = vmatpush1.msra.mxu0 %v1986
        %4914 = vmatprep.subr.mxu0 %v1999
        %4915 = vmatpush1.msra.mxu0 %v1998
        %4916 = vmatprep.subr.mxu0 %v2011
        %4917 = vmatpush1.msra.mxu0 %v2010
        %4918 = vmatprep.subr.mxu0 %v2023
        %4919 = vmatpush1.msra.mxu0 %v2022
        %4920 = vmatprep.subr.mxu0 %v2035
        %4921 = vmatpush1.msra.mxu0 %v2034
        %4922 = vmatprep.subr.mxu0 %v2047
        %4923 = vmatpush1.msra.mxu0 %v2046
        %4924 = vmatprep.subr.mxu0 %v2059
        %4925 = vmatpush1.msra.mxu0 %v2058
        %4926 = vmatprep.subr.mxu0 %v2071
        %4927 = vmatpush1.msra.mxu0 %v2070
        %4928 = vmatprep.subr.mxu0 %v2083
        %4929 = vmatpush1.msra.mxu0 %v2082
        %4930 = vmatprep.subr.mxu0 %v2095
        %4931 = vmatpush1.msra.mxu0 %v2094
        %4932 = vmatprep.subr.mxu0 %v2107
        %4933 = vmatpush1.msra.mxu0 %v2106
        %4934 = vmatprep.mubr.f32.mxu0 %v1719
        %4935 = vmatmul.mubr.f32.gmra.mrb[0].mxu0 %v1718
        %v4936 = vpop.f32.mrb[0].mxu0
        %v4937 = vadd.f32 %v4813, %v4936
        %v4938 = vpop.f32.mrb[0].mxu0
        %v4939 = vadd.f32 %v4817, %v4938
        %4940 = vdwg.mxu0
        %4941 = vmatprep.subr.mxu0 %v2119
        %4942 = vmatpush1.msra.mxu0 %v2118
        %4943 = vmatprep.subr.mxu0 %v2131
        %4944 = vmatpush1.msra.mxu0 %v2130
        %4945 = vmatprep.subr.mxu0 %v2143
        %4946 = vmatpush1.msra.mxu0 %v2142
        %4947 = vmatprep.subr.mxu0 %v2155
        %4948 = vmatpush1.msra.mxu0 %v2154
        %4949 = vmatprep.subr.mxu0 %v2167
        %4950 = vmatpush1.msra.mxu0 %v2166
        %4951 = vmatprep.subr.mxu0 %v2179
        %4952 = vmatpush1.msra.mxu0 %v2178
        %4953 = vmatprep.subr.mxu0 %v2191
        %4954 = vmatpush1.msra.mxu0 %v2190
        %4955 = vmatprep.subr.mxu0 %v2203
        %4956 = vmatpush1.msra.mxu0 %v2202
        %4957 = vmatprep.subr.mxu0 %v2215
        %4958 = vmatpush1.msra.mxu0 %v2214
        %4959 = vmatprep.subr.mxu0 %v2227
        %4960 = vmatpush1.msra.mxu0 %v2226
        %4961 = vmatprep.subr.mxu0 %v2239
        %4962 = vmatpush1.msra.mxu0 %v2238
        %4963 = vmatprep.subr.mxu0 %v2251
        %4964 = vmatpush1.msra.mxu0 %v2250
        %4965 = vmatprep.subr.mxu0 %v2263
        %4966 = vmatpush1.msra.mxu0 %v2262
        %4967 = vmatprep.subr.mxu0 %v2275
        %4968 = vmatpush1.msra.mxu0 %v2274
        %4969 = vmatprep.subr.mxu0 %v2287
        %4970 = vmatpush1.msra.mxu0 %v2286
        %4971 = vmatprep.subr.mxu0 %v2299
        %4972 = vmatpush1.msra.mxu0 %v2298
        %4973 = vmatprep.subr.mxu0 %v2311
        %4974 = vmatpush1.msra.mxu0 %v2310
        %4975 = vmatprep.subr.mxu0 %v2323
        %4976 = vmatpush1.msra.mxu0 %v2322
        %4977 = vmatprep.subr.mxu0 %v2335
        %4978 = vmatpush1.msra.mxu0 %v2334
        %4979 = vmatprep.subr.mxu0 %v2347
        %4980 = vmatpush1.msra.mxu0 %v2346
        %4981 = vmatprep.subr.mxu0 %v2359
        %4982 = vmatpush1.msra.mxu0 %v2358
        %4983 = vmatprep.subr.mxu0 %v2371
        %4984 = vmatpush1.msra.mxu0 %v2370
        %4985 = vmatprep.subr.mxu0 %v2383
        %4986 = vmatpush1.msra.mxu0 %v2382
        %4987 = vmatprep.subr.mxu0 %v2395
        %4988 = vmatpush1.msra.mxu0 %v2394
        %4989 = vmatprep.subr.mxu0 %v2407
        %4990 = vmatpush1.msra.mxu0 %v2406
        %4991 = vmatprep.subr.mxu0 %v2419
        %4992 = vmatpush1.msra.mxu0 %v2418
        %4993 = vmatprep.subr.mxu0 %v2431
        %4994 = vmatpush1.msra.mxu0 %v2430
        %4995 = vmatprep.subr.mxu0 %v2443
        %4996 = vmatpush1.msra.mxu0 %v2442
        %4997 = vmatprep.subr.mxu0 %v2455
        %4998 = vmatpush1.msra.mxu0 %v2454
        %4999 = vmatprep.subr.mxu0 %v2467
        %5000 = vmatpush1.msra.mxu0 %v2466
        %5001 = vmatprep.subr.mxu0 %v2479
        %5002 = vmatpush1.msra.mxu0 %v2478
        %5003 = vmatprep.subr.mxu0 %v2491
        %5004 = vmatpush1.msra.mxu0 %v2490
        %5005 = vmatprep.mubr.f32.mxu0 %v1721
        %5006 = vmatmul.mubr.f32.gmra.mrb[0].mxu0 %v1720
        %v5007 = vpop.f32.mrb[0].mxu0
        %v5008 = vadd.f32 %v4937, %v5007
        %v5009 = vpop.f32.mrb[0].mxu0
        %v5010 = vadd.f32 %v4939, %v5009
        %5011 = vdwg.mxu0
        %5012 = vmatprep.subr.mxu0 %v2503
        %5013 = vmatpush1.msra.mxu0 %v2502
        %5014 = vmatprep.subr.mxu0 %v2515
        %5015 = vmatpush1.msra.mxu0 %v2514
        %5016 = vmatprep.subr.mxu0 %v2527
        %5017 = vmatpush1.msra.mxu0 %v2526
        %5018 = vmatprep.subr.mxu0 %v2539
        %5019 = vmatpush1.msra.mxu0 %v2538
        %5020 = vmatprep.subr.mxu0 %v2551
        %5021 = vmatpush1.msra.mxu0 %v2550
        %5022 = vmatprep.subr.mxu0 %v2563
        %5023 = vmatpush1.msra.mxu0 %v2562
        %5024 = vmatprep.subr.mxu0 %v2575
        %5025 = vmatpush1.msra.mxu0 %v2574
        %5026 = vmatprep.subr.mxu0 %v2587
        %5027 = vmatpush1.msra.mxu0 %v2586
        %5028 = vmatprep.subr.mxu0 %v2599
        %5029 = vmatpush1.msra.mxu0 %v2598
        %5030 = vmatprep.subr.mxu0 %v2611
        %5031 = vmatpush1.msra.mxu0 %v2610
        %5032 = vmatprep.subr.mxu0 %v2623
        %5033 = vmatpush1.msra.mxu0 %v2622
        %5034 = vmatprep.subr.mxu0 %v2635
        %5035 = vmatpush1.msra.mxu0 %v2634
        %5036 = vmatprep.subr.mxu0 %v2647
        %5037 = vmatpush1.msra.mxu0 %v2646
        %5038 = vmatprep.subr.mxu0 %v2659
        %5039 = vmatpush1.msra.mxu0 %v2658
        %5040 = vmatprep.subr.mxu0 %v2671
        %5041 = vmatpush1.msra.mxu0 %v2670
        %5042 = vmatprep.subr.mxu0 %v2683
        %5043 = vmatpush1.msra.mxu0 %v2682
        %5044 = vmatprep.subr.mxu0 %v2695
        %5045 = vmatpush1.msra.mxu0 %v2694
        %5046 = vmatprep.subr.mxu0 %v2707
        %5047 = vmatpush1.msra.mxu0 %v2706
        %5048 = vmatprep.subr.mxu0 %v2719
        %5049 = vmatpush1.msra.mxu0 %v2718
        %5050 = vmatprep.subr.mxu0 %v2731
        %5051 = vmatpush1.msra.mxu0 %v2730
        %5052 = vmatprep.subr.mxu0 %v2743
        %5053 = vmatpush1.msra.mxu0 %v2742
        %5054 = vmatprep.subr.mxu0 %v2755
        %5055 = vmatpush1.msra.mxu0 %v2754
        %5056 = vmatprep.subr.mxu0 %v2767
        %5057 = vmatpush1.msra.mxu0 %v2766
        %5058 = vmatprep.subr.mxu0 %v2779
        %5059 = vmatpush1.msra.mxu0 %v2778
        %5060 = vmatprep.subr.mxu0 %v2791
        %5061 = vmatpush1.msra.mxu0 %v2790
        %5062 = vmatprep.subr.mxu0 %v2803
        %5063 = vmatpush1.msra.mxu0 %v2802
        %5064 = vmatprep.subr.mxu0 %v2815
        %5065 = vmatpush1.msra.mxu0 %v2814
        %5066 = vmatprep.subr.mxu0 %v2827
        %5067 = vmatpush1.msra.mxu0 %v2826
        %5068 = vmatprep.subr.mxu0 %v2839
        %5069 = vmatpush1.msra.mxu0 %v2838
        %5070 = vmatprep.subr.mxu0 %v2851
        %5071 = vmatpush1.msra.mxu0 %v2850
        %5072 = vmatprep.subr.mxu0 %v2863
        %5073 = vmatpush1.msra.mxu0 %v2862
        %5074 = vmatprep.subr.mxu0 %v2875
        %5075 = vmatpush1.msra.mxu0 %v2874
        %5076 = vmatprep.mubr.f32.mxu0 %v1723
        %5077 = vmatmul.mubr.f32.gmra.mrb[0].mxu0 %v1722
        %v5078 = vpop.f32.mrb[0].mxu0
        %v5079 = vadd.f32 %v5008, %v5078
        %v5080 = vpop.f32.mrb[0].mxu0
        %v5081 = vadd.f32 %v5010, %v5080
        %5082 = vdwg.mxu0
        %5083 = vmatprep.subr.mxu0 %v2887
        %5084 = vmatpush1.msra.mxu0 %v2886
        %5085 = vmatprep.subr.mxu0 %v2899
        %5086 = vmatpush1.msra.mxu0 %v2898
        %5087 = vmatprep.subr.mxu0 %v2911
        %5088 = vmatpush1.msra.mxu0 %v2910
        %5089 = vmatprep.subr.mxu0 %v2923
        %5090 = vmatpush1.msra.mxu0 %v2922
        %5091 = vmatprep.subr.mxu0 %v2935
        %5092 = vmatpush1.msra.mxu0 %v2934
        %5093 = vmatprep.subr.mxu0 %v2947
        %5094 = vmatpush1.msra.mxu0 %v2946
        %5095 = vmatprep.subr.mxu0 %v2959
        %5096 = vmatpush1.msra.mxu0 %v2958
        %5097 = vmatprep.subr.mxu0 %v2971
        %5098 = vmatpush1.msra.mxu0 %v2970
        %5099 = vmatprep.subr.mxu0 %v2983
        %5100 = vmatpush1.msra.mxu0 %v2982
        %5101 = vmatprep.subr.mxu0 %v2995
        %5102 = vmatpush1.msra.mxu0 %v2994
        %5103 = vmatprep.subr.mxu0 %v3007
        %5104 = vmatpush1.msra.mxu0 %v3006
        %5105 = vmatprep.subr.mxu0 %v3019
        %5106 = vmatpush1.msra.mxu0 %v3018
        %5107 = vmatprep.subr.mxu0 %v3031
        %5108 = vmatpush1.msra.mxu0 %v3030
        %5109 = vmatprep.subr.mxu0 %v3043
        %5110 = vmatpush1.msra.mxu0 %v3042
        %5111 = vmatprep.subr.mxu0 %v3055
        %5112 = vmatpush1.msra.mxu0 %v3054
        %5113 = vmatprep.subr.mxu0 %v3067
        %5114 = vmatpush1.msra.mxu0 %v3066
        %5115 = vmatprep.subr.mxu0 %v3079
        %5116 = vmatpush1.msra.mxu0 %v3078
        %5117 = vmatprep.subr.mxu0 %v3091
        %5118 = vmatpush1.msra.mxu0 %v3090
        %5119 = vmatprep.subr.mxu0 %v3103
        %5120 = vmatpush1.msra.mxu0 %v3102
        %5121 = vmatprep.subr.mxu0 %v3115
        %5122 = vmatpush1.msra.mxu0 %v3114
        %5123 = vmatprep.subr.mxu0 %v3127
        %5124 = vmatpush1.msra.mxu0 %v3126
        %5125 = vmatprep.subr.mxu0 %v3139
        %5126 = vmatpush1.msra.mxu0 %v3138
        %5127 = vmatprep.subr.mxu0 %v3151
        %5128 = vmatpush1.msra.mxu0 %v3150
        %5129 = vmatprep.subr.mxu0 %v3163
        %5130 = vmatpush1.msra.mxu0 %v3162
        %5131 = vmatprep.subr.mxu0 %v3175
        %5132 = vmatpush1.msra.mxu0 %v3174
        %5133 = vmatprep.subr.mxu0 %v3187
        %5134 = vmatpush1.msra.mxu0 %v3186
        %5135 = vmatprep.subr.mxu0 %v3199
        %5136 = vmatpush1.msra.mxu0 %v3198
        %5137 = vmatprep.subr.mxu0 %v3211
        %5138 = vmatpush1.msra.mxu0 %v3210
        %5139 = vmatprep.subr.mxu0 %v3223
        %5140 = vmatpush1.msra.mxu0 %v3222
        %5141 = vmatprep.subr.mxu0 %v3235
        %5142 = vmatpush1.msra.mxu0 %v3234
        %5143 = vmatprep.subr.mxu0 %v3247
        %5144 = vmatpush1.msra.mxu0 %v3246
        %5145 = vmatprep.subr.mxu0 %v3259
        %5146 = vmatpush1.msra.mxu0 %v3258
        %5147 = vmatprep.mubr.f32.mxu0 %v1725
        %5148 = vmatmul.mubr.f32.gmra.mrb[0].mxu0 %v1724
        %v5149 = vpop.f32.mrb[0].mxu0
        %v5150 = vadd.f32 %v5079, %v5149
        %v5151 = vpop.f32.mrb[0].mxu0
        %v5152 = vadd.f32 %v5081, %v5151
        %5153 = vdwg.mxu0
        %5154 = vmatprep.subr.mxu0 %v3271
        %5155 = vmatpush1.msra.mxu0 %v3270
        %5156 = vmatprep.subr.mxu0 %v3283
        %5157 = vmatpush1.msra.mxu0 %v3282
        %5158 = vmatprep.subr.mxu0 %v3295
        %5159 = vmatpush1.msra.mxu0 %v3294
        %5160 = vmatprep.subr.mxu0 %v3307
        %5161 = vmatpush1.msra.mxu0 %v3306
        %5162 = vmatprep.subr.mxu0 %v3319
        %5163 = vmatpush1.msra.mxu0 %v3318
        %5164 = vmatprep.subr.mxu0 %v3331
        %5165 = vmatpush1.msra.mxu0 %v3330
        %5166 = vmatprep.subr.mxu0 %v3343
        %5167 = vmatpush1.msra.mxu0 %v3342
        %5168 = vmatprep.subr.mxu0 %v3355
        %5169 = vmatpush1.msra.mxu0 %v3354
        %5170 = vmatprep.subr.mxu0 %v3367
        %5171 = vmatpush1.msra.mxu0 %v3366
        %5172 = vmatprep.subr.mxu0 %v3379
        %5173 = vmatpush1.msra.mxu0 %v3378
        %5174 = vmatprep.subr.mxu0 %v3391
        %5175 = vmatpush1.msra.mxu0 %v3390
        %5176 = vmatprep.subr.mxu0 %v3403
        %5177 = vmatpush1.msra.mxu0 %v3402
        %5178 = vmatprep.subr.mxu0 %v3415
        %5179 = vmatpush1.msra.mxu0 %v3414
        %5180 = vmatprep.subr.mxu0 %v3427
        %5181 = vmatpush1.msra.mxu0 %v3426
        %5182 = vmatprep.subr.mxu0 %v3439
        %5183 = vmatpush1.msra.mxu0 %v3438
        %5184 = vmatprep.subr.mxu0 %v3451
        %5185 = vmatpush1.msra.mxu0 %v3450
        %5186 = vmatprep.subr.mxu0 %v3463
        %5187 = vmatpush1.msra.mxu0 %v3462
        %5188 = vmatprep.subr.mxu0 %v3475
        %5189 = vmatpush1.msra.mxu0 %v3474
        %5190 = vmatprep.subr.mxu0 %v3487
        %5191 = vmatpush1.msra.mxu0 %v3486
        %5192 = vmatprep.subr.mxu0 %v3499
        %5193 = vmatpush1.msra.mxu0 %v3498
        %5194 = vmatprep.subr.mxu0 %v3511
        %5195 = vmatpush1.msra.mxu0 %v3510
        %5196 = vmatprep.subr.mxu0 %v3523
        %5197 = vmatpush1.msra.mxu0 %v3522
        %5198 = vmatprep.subr.mxu0 %v3535
        %5199 = vmatpush1.msra.mxu0 %v3534
        %5200 = vmatprep.subr.mxu0 %v3547
        %5201 = vmatpush1.msra.mxu0 %v3546
        %5202 = vmatprep.subr.mxu0 %v3559
        %5203 = vmatpush1.msra.mxu0 %v3558
        %5204 = vmatprep.subr.mxu0 %v3571
        %5205 = vmatpush1.msra.mxu0 %v3570
        %5206 = vmatprep.subr.mxu0 %v3583
        %5207 = vmatpush1.msra.mxu0 %v3582
        %5208 = vmatprep.subr.mxu0 %v3595
        %5209 = vmatpush1.msra.mxu0 %v3594
        %5210 = vmatprep.subr.mxu0 %v3607
        %5211 = vmatpush1.msra.mxu0 %v3606
        %5212 = vmatprep.subr.mxu0 %v3619
        %5213 = vmatpush1.msra.mxu0 %v3618
        %5214 = vmatprep.subr.mxu0 %v3631
        %5215 = vmatpush1.msra.mxu0 %v3630
        %5216 = vmatprep.subr.mxu0 %v3643
        %5217 = vmatpush1.msra.mxu0 %v3642
        %5218 = vmatprep.mubr.f32.mxu0 %v1727
        %5219 = vmatmul.mubr.f32.gmra.mrb[0].mxu0 %v1726
        %v5220 = vpop.f32.mrb[0].mxu0
        %v5221 = vadd.f32 %v5150, %v5220
        %v5222 = vpop.f32.mrb[0].mxu0
        %v5223 = vadd.f32 %v5152, %v5222
        %5224 = vdwg.mxu0
        %5225 = vmatprep.subr.mxu0 %v3655
        %5226 = vmatpush1.msra.mxu0 %v3654
        %5227 = vmatprep.subr.mxu0 %v3667
        %5228 = vmatpush1.msra.mxu0 %v3666
        %5229 = vmatprep.subr.mxu0 %v3679
        %5230 = vmatpush1.msra.mxu0 %v3678
        %5231 = vmatprep.subr.mxu0 %v3691
        %5232 = vmatpush1.msra.mxu0 %v3690
        %5233 = vmatprep.subr.mxu0 %v3703
        %5234 = vmatpush1.msra.mxu0 %v3702
        %5235 = vmatprep.subr.mxu0 %v3715
        %5236 = vmatpush1.msra.mxu0 %v3714
        %5237 = vmatprep.subr.mxu0 %v3727
        %5238 = vmatpush1.msra.mxu0 %v3726
        %5239 = vmatprep.subr.mxu0 %v3739
        %5240 = vmatpush1.msra.mxu0 %v3738
        %5241 = vmatprep.subr.mxu0 %v3751
        %5242 = vmatpush1.msra.mxu0 %v3750
        %5243 = vmatprep.subr.mxu0 %v3763
        %5244 = vmatpush1.msra.mxu0 %v3762
        %5245 = vmatprep.subr.mxu0 %v3775
        %5246 = vmatpush1.msra.mxu0 %v3774
        %5247 = vmatprep.subr.mxu0 %v3787
        %5248 = vmatpush1.msra.mxu0 %v3786
        %5249 = vmatprep.subr.mxu0 %v3799
        %5250 = vmatpush1.msra.mxu0 %v3798
        %5251 = vmatprep.subr.mxu0 %v3811
        %5252 = vmatpush1.msra.mxu0 %v3810
        %5253 = vmatprep.subr.mxu0 %v3823
        %5254 = vmatpush1.msra.mxu0 %v3822
        %5255 = vmatprep.subr.mxu0 %v3835
        %5256 = vmatpush1.msra.mxu0 %v3834
        %5257 = vmatprep.subr.mxu0 %v3847
        %5258 = vmatpush1.msra.mxu0 %v3846
        %5259 = vmatprep.subr.mxu0 %v3859
        %5260 = vmatpush1.msra.mxu0 %v3858
        %5261 = vmatprep.subr.mxu0 %v3871
        %5262 = vmatpush1.msra.mxu0 %v3870
        %5263 = vmatprep.subr.mxu0 %v3883
        %5264 = vmatpush1.msra.mxu0 %v3882
        %5265 = vmatprep.subr.mxu0 %v3895
        %5266 = vmatpush1.msra.mxu0 %v3894
        %5267 = vmatprep.subr.mxu0 %v3907
        %5268 = vmatpush1.msra.mxu0 %v3906
        %5269 = vmatprep.subr.mxu0 %v3919
        %5270 = vmatpush1.msra.mxu0 %v3918
        %5271 = vmatprep.subr.mxu0 %v3931
        %5272 = vmatpush1.msra.mxu0 %v3930
        %5273 = vmatprep.subr.mxu0 %v3943
        %5274 = vmatpush1.msra.mxu0 %v3942
        %5275 = vmatprep.subr.mxu0 %v3955
        %5276 = vmatpush1.msra.mxu0 %v3954
        %5277 = vmatprep.subr.mxu0 %v3967
        %5278 = vmatpush1.msra.mxu0 %v3966
        %5279 = vmatprep.subr.mxu0 %v3979
        %5280 = vmatpush1.msra.mxu0 %v3978
        %5281 = vmatprep.subr.mxu0 %v3991
        %5282 = vmatpush1.msra.mxu0 %v3990
        %5283 = vmatprep.subr.mxu0 %v4003
        %5284 = vmatpush1.msra.mxu0 %v4002
        %5285 = vmatprep.subr.mxu0 %v4015
        %5286 = vmatpush1.msra.mxu0 %v4014
        %5287 = vmatprep.subr.mxu0 %v4027
        %5288 = vmatpush1.msra.mxu0 %v4026
        %5289 = vmatprep.mubr.f32.mxu0 %v1729
        %5290 = vmatmul.mubr.f32.gmra.mrb[0].mxu0 %v1728
        %v5291 = vpop.f32.mrb[0].mxu0
        %v5292 = vadd.f32 %v5221, %v5291
        %v5293 = vpop.f32.mrb[0].mxu0
        %v5294 = vadd.f32 %v5223, %v5293
        %5295 = vdwg.mxu0
        %5296 = vmatprep.subr.mxu0 %v4039
        %5297 = vmatpush1.msra.mxu0 %v4038
        %5298 = vmatprep.subr.mxu0 %v4051
        %5299 = vmatpush1.msra.mxu0 %v4050
        %5300 = vmatprep.subr.mxu0 %v4063
        %5301 = vmatpush1.msra.mxu0 %v4062
        %5302 = vmatprep.subr.mxu0 %v4075
        %5303 = vmatpush1.msra.mxu0 %v4074
        %5304 = vmatprep.subr.mxu0 %v4087
        %5305 = vmatpush1.msra.mxu0 %v4086
        %5306 = vmatprep.subr.mxu0 %v4099
        %5307 = vmatpush1.msra.mxu0 %v4098
        %5308 = vmatprep.subr.mxu0 %v4111
        %5309 = vmatpush1.msra.mxu0 %v4110
        %5310 = vmatprep.subr.mxu0 %v4123
        %5311 = vmatpush1.msra.mxu0 %v4122
        %5312 = vmatprep.subr.mxu0 %v4135
        %5313 = vmatpush1.msra.mxu0 %v4134
        %5314 = vmatprep.subr.mxu0 %v4147
        %5315 = vmatpush1.msra.mxu0 %v4146
        %5316 = vmatprep.subr.mxu0 %v4159
        %5317 = vmatpush1.msra.mxu0 %v4158
        %5318 = vmatprep.subr.mxu0 %v4171
        %5319 = vmatpush1.msra.mxu0 %v4170
        %5320 = vmatprep.subr.mxu0 %v4183
        %5321 = vmatpush1.msra.mxu0 %v4182
        %5322 = vmatprep.subr.mxu0 %v4195
        %5323 = vmatpush1.msra.mxu0 %v4194
        %5324 = vmatprep.subr.mxu0 %v4207
        %5325 = vmatpush1.msra.mxu0 %v4206
        %5326 = vmatprep.subr.mxu0 %v4219
        %5327 = vmatpush1.msra.mxu0 %v4218
        %5328 = vmatprep.subr.mxu0 %v4231
        %5329 = vmatpush1.msra.mxu0 %v4230
        %5330 = vmatprep.subr.mxu0 %v4243
        %5331 = vmatpush1.msra.mxu0 %v4242
        %5332 = vmatprep.subr.mxu0 %v4255
        %5333 = vmatpush1.msra.mxu0 %v4254
        %5334 = vmatprep.subr.mxu0 %v4267
        %5335 = vmatpush1.msra.mxu0 %v4266
        %5336 = vmatprep.subr.mxu0 %v4279
        %5337 = vmatpush1.msra.mxu0 %v4278
        %5338 = vmatprep.subr.mxu0 %v4291
        %5339 = vmatpush1.msra.mxu0 %v4290
        %5340 = vmatprep.subr.mxu0 %v4303
        %5341 = vmatpush1.msra.mxu0 %v4302
        %5342 = vmatprep.subr.mxu0 %v4315
        %5343 = vmatpush1.msra.mxu0 %v4314
        %5344 = vmatprep.subr.mxu0 %v4327
        %5345 = vmatpush1.msra.mxu0 %v4326
        %5346 = vmatprep.subr.mxu0 %v4339
        %5347 = vmatpush1.msra.mxu0 %v4338
        %5348 = vmatprep.subr.mxu0 %v4351
        %5349 = vmatpush1.msra.mxu0 %v4350
        %5350 = vmatprep.subr.mxu0 %v4363
        %5351 = vmatpush1.msra.mxu0 %v4362
        %5352 = vmatprep.subr.mxu0 %v4375
        %5353 = vmatpush1.msra.mxu0 %v4374
        %5354 = vmatprep.subr.mxu0 %v4387
        %5355 = vmatpush1.msra.mxu0 %v4386
        %5356 = vmatprep.subr.mxu0 %v4399
        %5357 = vmatpush1.msra.mxu0 %v4398
        %5358 = vmatprep.subr.mxu0 %v4411
        %5359 = vmatpush1.msra.mxu0 %v4410
        %5360 = vmatprep.mubr.f32.mxu0 %v1731
        %5361 = vmatmul.mubr.f32.gmra.mrb[0].mxu0 %v1730
        %v5362 = vpop.f32.mrb[0].mxu0
        %v5363 = vadd.f32 %v5292, %v5362
        %v5364 = vpop.f32.mrb[0].mxu0
        %v5365 = vadd.f32 %v5294, %v5364
        %5366 = vdwg.mxu0
        %5367 = vmatprep.subr.mxu0 %v4423
        %5368 = vmatpush1.msra.mxu0 %v4422
        %5369 = vmatprep.subr.mxu0 %v4435
        %5370 = vmatpush1.msra.mxu0 %v4434
        %5371 = vmatprep.subr.mxu0 %v4447
        %5372 = vmatpush1.msra.mxu0 %v4446
        %5373 = vmatprep.subr.mxu0 %v4459
        %5374 = vmatpush1.msra.mxu0 %v4458
        %5375 = vmatprep.subr.mxu0 %v4471
        %5376 = vmatpush1.msra.mxu0 %v4470
        %5377 = vmatprep.subr.mxu0 %v4483
        %5378 = vmatpush1.msra.mxu0 %v4482
        %5379 = vmatprep.subr.mxu0 %v4495
        %5380 = vmatpush1.msra.mxu0 %v4494
        %5381 = vmatprep.subr.mxu0 %v4507
        %5382 = vmatpush1.msra.mxu0 %v4506
        %5383 = vmatprep.subr.mxu0 %v4519
        %5384 = vmatpush1.msra.mxu0 %v4518
        %5385 = vmatprep.subr.mxu0 %v4531
        %5386 = vmatpush1.msra.mxu0 %v4530
        %5387 = vmatprep.subr.mxu0 %v4543
        %5388 = vmatpush1.msra.mxu0 %v4542
        %5389 = vmatprep.subr.mxu0 %v4555
        %5390 = vmatpush1.msra.mxu0 %v4554
        %5391 = vmatprep.subr.mxu0 %v4567
        %5392 = vmatpush1.msra.mxu0 %v4566
        %5393 = vmatprep.subr.mxu0 %v4579
        %5394 = vmatpush1.msra.mxu0 %v4578
        %5395 = vmatprep.subr.mxu0 %v4591
        %5396 = vmatpush1.msra.mxu0 %v4590
        %5397 = vmatprep.subr.mxu0 %v4603
        %5398 = vmatpush1.msra.mxu0 %v4602
        %5399 = vmatprep.subr.mxu0 %v4615
        %5400 = vmatpush1.msra.mxu0 %v4614
        %5401 = vmatprep.subr.mxu0 %v4627
        %5402 = vmatpush1.msra.mxu0 %v4626
        %5403 = vmatprep.subr.mxu0 %v4639
        %5404 = vmatpush1.msra.mxu0 %v4638
        %5405 = vmatprep.subr.mxu0 %v4651
        %5406 = vmatpush1.msra.mxu0 %v4650
        %5407 = vmatprep.subr.mxu0 %v4663
        %5408 = vmatpush1.msra.mxu0 %v4662
        %5409 = vmatprep.subr.mxu0 %v4675
        %5410 = vmatpush1.msra.mxu0 %v4674
        %5411 = vmatprep.subr.mxu0 %v4687
        %5412 = vmatpush1.msra.mxu0 %v4686
        %5413 = vmatprep.subr.mxu0 %v4699
        %5414 = vmatpush1.msra.mxu0 %v4698
        %5415 = vmatprep.subr.mxu0 %v4711
        %5416 = vmatpush1.msra.mxu0 %v4710
        %5417 = vmatprep.subr.mxu0 %v4723
        %5418 = vmatpush1.msra.mxu0 %v4722
        %5419 = vmatprep.subr.mxu0 %v4735
        %5420 = vmatpush1.msra.mxu0 %v4734
        %5421 = vmatprep.subr.mxu0 %v4747
        %5422 = vmatpush1.msra.mxu0 %v4746
        %5423 = vmatprep.subr.mxu0 %v4759
        %5424 = vmatpush1.msra.mxu0 %v4758
        %5425 = vmatprep.subr.mxu0 %v4771
        %5426 = vmatpush1.msra.mxu0 %v4770
        %5427 = vmatprep.subr.mxu0 %v4783
        %5428 = vmatpush1.msra.mxu0 %v4782
        %5429 = vmatprep.subr.mxu0 %v4795
        %5430 = vmatpush1.msra.mxu0 %v4794
        %5431 = vmatprep.mubr.f32.mxu0 %v1733
        %5432 = vmatmul.mubr.f32.gmra.mrb[0].mxu0 %v1732
        %v5433 = vpop.f32.mrb[0].mxu0
        %v5434 = vadd.f32 %v5363, %v5433
        %v5435 = vpop.f32.mrb[0].mxu0
        %v5436 = vadd.f32 %v5365, %v5435
        %5437 = vdwg.mxu0
        %5438 = vmatprep.subr.mxu0 %v1737
        %5439 = vmatpush1.msra.mxu0 %v1736
        %5440 = vmatprep.subr.mxu0 %v1749
        %5441 = vmatpush1.msra.mxu0 %v1748
        %5442 = vmatprep.subr.mxu0 %v1761
        %5443 = vmatpush1.msra.mxu0 %v1760
        %5444 = vmatprep.subr.mxu0 %v1773
        %5445 = vmatpush1.msra.mxu0 %v1772
        %5446 = vmatprep.subr.mxu0 %v1785
        %5447 = vmatpush1.msra.mxu0 %v1784
        %5448 = vmatprep.subr.mxu0 %v1797
        %5449 = vmatpush1.msra.mxu0 %v1796
        %5450 = vmatprep.subr.mxu0 %v1809
        %5451 = vmatpush1.msra.mxu0 %v1808
        %5452 = vmatprep.subr.mxu0 %v1821
        %5453 = vmatpush1.msra.mxu0 %v1820
        %5454 = vmatprep.subr.mxu0 %v1833
        %5455 = vmatpush1.msra.mxu0 %v1832
        %5456 = vmatprep.subr.mxu0 %v1845
        %5457 = vmatpush1.msra.mxu0 %v1844
        %5458 = vmatprep.subr.mxu0 %v1857
        %5459 = vmatpush1.msra.mxu0 %v1856
        %5460 = vmatprep.subr.mxu0 %v1869
        %5461 = vmatpush1.msra.mxu0 %v1868
        %5462 = vmatprep.subr.mxu0 %v1881
        %5463 = vmatpush1.msra.mxu0 %v1880
        %5464 = vmatprep.subr.mxu0 %v1893
        %5465 = vmatpush1.msra.mxu0 %v1892
        %5466 = vmatprep.subr.mxu0 %v1905
        %5467 = vmatpush1.msra.mxu0 %v1904
        %5468 = vmatprep.subr.mxu0 %v1917
        %5469 = vmatpush1.msra.mxu0 %v1916
        %5470 = vmatprep.subr.mxu0 %v1929
        %5471 = vmatpush1.msra.mxu0 %v1928
        %5472 = vmatprep.subr.mxu0 %v1941
        %5473 = vmatpush1.msra.mxu0 %v1940
        %5474 = vmatprep.subr.mxu0 %v1953
        %5475 = vmatpush1.msra.mxu0 %v1952
        %5476 = vmatprep.subr.mxu0 %v1965
        %5477 = vmatpush1.msra.mxu0 %v1964
        %5478 = vmatprep.subr.mxu0 %v1977
        %5479 = vmatpush1.msra.mxu0 %v1976
        %5480 = vmatprep.subr.mxu0 %v1989
        %5481 = vmatpush1.msra.mxu0 %v1988
        %5482 = vmatprep.subr.mxu0 %v2001
        %5483 = vmatpush1.msra.mxu0 %v2000
        %5484 = vmatprep.subr.mxu0 %v2013
        %5485 = vmatpush1.msra.mxu0 %v2012
        %5486 = vmatprep.subr.mxu0 %v2025
        %5487 = vmatpush1.msra.mxu0 %v2024
        %5488 = vmatprep.subr.mxu0 %v2037
        %5489 = vmatpush1.msra.mxu0 %v2036
        %5490 = vmatprep.subr.mxu0 %v2049
        %5491 = vmatpush1.msra.mxu0 %v2048
        %5492 = vmatprep.subr.mxu0 %v2061
        %5493 = vmatpush1.msra.mxu0 %v2060
        %5494 = vmatprep.subr.mxu0 %v2073
        %5495 = vmatpush1.msra.mxu0 %v2072
        %5496 = vmatprep.subr.mxu0 %v2085
        %5497 = vmatpush1.msra.mxu0 %v2084
        %5498 = vmatprep.subr.mxu0 %v2097
        %5499 = vmatpush1.msra.mxu0 %v2096
        %5500 = vmatprep.subr.mxu0 %v2109
        %5501 = vmatpush1.msra.mxu0 %v2108
        %5502 = vmatprep.mubr.f32.mxu0 %v1719
        %5503 = vmatmul.mubr.f32.gmra.mrb[0].mxu0 %v1718
        %v5504 = vpop.f32.mrb[0].mxu0
        %v5505 = vadd.f32 %v4821, %v5504
        %v5506 = vpop.f32.mrb[0].mxu0
        %v5507 = vadd.f32 %v4825, %v5506
        %5508 = vdwg.mxu0
        %5509 = vmatprep.subr.mxu0 %v2121
        %5510 = vmatpush1.msra.mxu0 %v2120
        %5511 = vmatprep.subr.mxu0 %v2133
        %5512 = vmatpush1.msra.mxu0 %v2132
        %5513 = vmatprep.subr.mxu0 %v2145
        %5514 = vmatpush1.msra.mxu0 %v2144
        %5515 = vmatprep.subr.mxu0 %v2157
        %5516 = vmatpush1.msra.mxu0 %v2156
        %5517 = vmatprep.subr.mxu0 %v2169
        %5518 = vmatpush1.msra.mxu0 %v2168
        %5519 = vmatprep.subr.mxu0 %v2181
        %5520 = vmatpush1.msra.mxu0 %v2180
        %5521 = vmatprep.subr.mxu0 %v2193
        %5522 = vmatpush1.msra.mxu0 %v2192
        %5523 = vmatprep.subr.mxu0 %v2205
        %5524 = vmatpush1.msra.mxu0 %v2204
        %5525 = vmatprep.subr.mxu0 %v2217
        %5526 = vmatpush1.msra.mxu0 %v2216
        %5527 = vmatprep.subr.mxu0 %v2229
        %5528 = vmatpush1.msra.mxu0 %v2228
        %5529 = vmatprep.subr.mxu0 %v2241
        %5530 = vmatpush1.msra.mxu0 %v2240
        %5531 = vmatprep.subr.mxu0 %v2253
        %5532 = vmatpush1.msra.mxu0 %v2252
        %5533 = vmatprep.subr.mxu0 %v2265
        %5534 = vmatpush1.msra.mxu0 %v2264
        %5535 = vmatprep.subr.mxu0 %v2277
        %5536 = vmatpush1.msra.mxu0 %v2276
        %5537 = vmatprep.subr.mxu0 %v2289
        %5538 = vmatpush1.msra.mxu0 %v2288
        %5539 = vmatprep.subr.mxu0 %v2301
        %5540 = vmatpush1.msra.mxu0 %v2300
        %5541 = vmatprep.subr.mxu0 %v2313
        %5542 = vmatpush1.msra.mxu0 %v2312
        %5543 = vmatprep.subr.mxu0 %v2325
        %5544 = vmatpush1.msra.mxu0 %v2324
        %5545 = vmatprep.subr.mxu0 %v2337
        %5546 = vmatpush1.msra.mxu0 %v2336
        %5547 = vmatprep.subr.mxu0 %v2349
        %5548 = vmatpush1.msra.mxu0 %v2348
        %5549 = vmatprep.subr.mxu0 %v2361
        %5550 = vmatpush1.msra.mxu0 %v2360
        %5551 = vmatprep.subr.mxu0 %v2373
        %5552 = vmatpush1.msra.mxu0 %v2372
        %5553 = vmatprep.subr.mxu0 %v2385
        %5554 = vmatpush1.msra.mxu0 %v2384
        %5555 = vmatprep.subr.mxu0 %v2397
        %5556 = vmatpush1.msra.mxu0 %v2396
        %5557 = vmatprep.subr.mxu0 %v2409
        %5558 = vmatpush1.msra.mxu0 %v2408
        %5559 = vmatprep.subr.mxu0 %v2421
        %5560 = vmatpush1.msra.mxu0 %v2420
        %5561 = vmatprep.subr.mxu0 %v2433
        %5562 = vmatpush1.msra.mxu0 %v2432
        %5563 = vmatprep.subr.mxu0 %v2445
        %5564 = vmatpush1.msra.mxu0 %v2444
        %5565 = vmatprep.subr.mxu0 %v2457
        %5566 = vmatpush1.msra.mxu0 %v2456
        %5567 = vmatprep.subr.mxu0 %v2469
        %5568 = vmatpush1.msra.mxu0 %v2468
        %5569 = vmatprep.subr.mxu0 %v2481
        %5570 = vmatpush1.msra.mxu0 %v2480
        %5571 = vmatprep.subr.mxu0 %v2493
        %5572 = vmatpush1.msra.mxu0 %v2492
        %5573 = vmatprep.mubr.f32.mxu0 %v1721
        %5574 = vmatmul.mubr.f32.gmra.mrb[0].mxu0 %v1720
        %v5575 = vpop.f32.mrb[0].mxu0
        %v5576 = vadd.f32 %v5505, %v5575
        %v5577 = vpop.f32.mrb[0].mxu0
        %v5578 = vadd.f32 %v5507, %v5577
        %5579 = vdwg.mxu0
        %5580 = vmatprep.subr.mxu0 %v2505
        %5581 = vmatpush1.msra.mxu0 %v2504
        %5582 = vmatprep.subr.mxu0 %v2517
        %5583 = vmatpush1.msra.mxu0 %v2516
        %5584 = vmatprep.subr.mxu0 %v2529
        %5585 = vmatpush1.msra.mxu0 %v2528
        %5586 = vmatprep.subr.mxu0 %v2541
        %5587 = vmatpush1.msra.mxu0 %v2540
        %5588 = vmatprep.subr.mxu0 %v2553
        %5589 = vmatpush1.msra.mxu0 %v2552
        %5590 = vmatprep.subr.mxu0 %v2565
        %5591 = vmatpush1.msra.mxu0 %v2564
        %5592 = vmatprep.subr.mxu0 %v2577
        %5593 = vmatpush1.msra.mxu0 %v2576
        %5594 = vmatprep.subr.mxu0 %v2589
        %5595 = vmatpush1.msra.mxu0 %v2588
        %5596 = vmatprep.subr.mxu0 %v2601
        %5597 = vmatpush1.msra.mxu0 %v2600
        %5598 = vmatprep.subr.mxu0 %v2613
        %5599 = vmatpush1.msra.mxu0 %v2612
        %5600 = vmatprep.subr.mxu0 %v2625
        %5601 = vmatpush1.msra.mxu0 %v2624
        %5602 = vmatprep.subr.mxu0 %v2637
        %5603 = vmatpush1.msra.mxu0 %v2636
        %5604 = vmatprep.subr.mxu0 %v2649
        %5605 = vmatpush1.msra.mxu0 %v2648
        %5606 = vmatprep.subr.mxu0 %v2661
        %5607 = vmatpush1.msra.mxu0 %v2660
        %5608 = vmatprep.subr.mxu0 %v2673
        %5609 = vmatpush1.msra.mxu0 %v2672
        %5610 = vmatprep.subr.mxu0 %v2685
        %5611 = vmatpush1.msra.mxu0 %v2684
        %5612 = vmatprep.subr.mxu0 %v2697
        %5613 = vmatpush1.msra.mxu0 %v2696
        %5614 = vmatprep.subr.mxu0 %v2709
        %5615 = vmatpush1.msra.mxu0 %v2708
        %5616 = vmatprep.subr.mxu0 %v2721
        %5617 = vmatpush1.msra.mxu0 %v2720
        %5618 = vmatprep.subr.mxu0 %v2733
        %5619 = vmatpush1.msra.mxu0 %v2732
        %5620 = vmatprep.subr.mxu0 %v2745
        %5621 = vmatpush1.msra.mxu0 %v2744
        %5622 = vmatprep.subr.mxu0 %v2757
        %5623 = vmatpush1.msra.mxu0 %v2756
        %5624 = vmatprep.subr.mxu0 %v2769
        %5625 = vmatpush1.msra.mxu0 %v2768
        %5626 = vmatprep.subr.mxu0 %v2781
        %5627 = vmatpush1.msra.mxu0 %v2780
        %5628 = vmatprep.subr.mxu0 %v2793
        %5629 = vmatpush1.msra.mxu0 %v2792
        %5630 = vmatprep.subr.mxu0 %v2805
        %5631 = vmatpush1.msra.mxu0 %v2804
        %5632 = vmatprep.subr.mxu0 %v2817
        %5633 = vmatpush1.msra.mxu0 %v2816
        %5634 = vmatprep.subr.mxu0 %v2829
        %5635 = vmatpush1.msra.mxu0 %v2828
        %5636 = vmatprep.subr.mxu0 %v2841
        %5637 = vmatpush1.msra.mxu0 %v2840
        %5638 = vmatprep.subr.mxu0 %v2853
        %5639 = vmatpush1.msra.mxu0 %v2852
        %5640 = vmatprep.subr.mxu0 %v2865
        %5641 = vmatpush1.msra.mxu0 %v2864
        %5642 = vmatprep.subr.mxu0 %v2877
        %5643 = vmatpush1.msra.mxu0 %v2876
        %5644 = vmatprep.mubr.f32.mxu0 %v1723
        %5645 = vmatmul.mubr.f32.gmra.mrb[0].mxu0 %v1722
        %v5646 = vpop.f32.mrb[0].mxu0
        %v5647 = vadd.f32 %v5576, %v5646
        %v5648 = vpop.f32.mrb[0].mxu0
        %v5649 = vadd.f32 %v5578, %v5648
        %5650 = vdwg.mxu0
        %5651 = vmatprep.subr.mxu0 %v2889
        %5652 = vmatpush1.msra.mxu0 %v2888
        %5653 = vmatprep.subr.mxu0 %v2901
        %5654 = vmatpush1.msra.mxu0 %v2900
        %5655 = vmatprep.subr.mxu0 %v2913
        %5656 = vmatpush1.msra.mxu0 %v2912
        %5657 = vmatprep.subr.mxu0 %v2925
        %5658 = vmatpush1.msra.mxu0 %v2924
        %5659 = vmatprep.subr.mxu0 %v2937
        %5660 = vmatpush1.msra.mxu0 %v2936
        %5661 = vmatprep.subr.mxu0 %v2949
        %5662 = vmatpush1.msra.mxu0 %v2948
        %5663 = vmatprep.subr.mxu0 %v2961
        %5664 = vmatpush1.msra.mxu0 %v2960
        %5665 = vmatprep.subr.mxu0 %v2973
        %5666 = vmatpush1.msra.mxu0 %v2972
        %5667 = vmatprep.subr.mxu0 %v2985
        %5668 = vmatpush1.msra.mxu0 %v2984
        %5669 = vmatprep.subr.mxu0 %v2997
        %5670 = vmatpush1.msra.mxu0 %v2996
        %5671 = vmatprep.subr.mxu0 %v3009
        %5672 = vmatpush1.msra.mxu0 %v3008
        %5673 = vmatprep.subr.mxu0 %v3021
        %5674 = vmatpush1.msra.mxu0 %v3020
        %5675 = vmatprep.subr.mxu0 %v3033
        %5676 = vmatpush1.msra.mxu0 %v3032
        %5677 = vmatprep.subr.mxu0 %v3045
        %5678 = vmatpush1.msra.mxu0 %v3044
        %5679 = vmatprep.subr.mxu0 %v3057
        %5680 = vmatpush1.msra.mxu0 %v3056
        %5681 = vmatprep.subr.mxu0 %v3069
        %5682 = vmatpush1.msra.mxu0 %v3068
        %5683 = vmatprep.subr.mxu0 %v3081
        %5684 = vmatpush1.msra.mxu0 %v3080
        %5685 = vmatprep.subr.mxu0 %v3093
        %5686 = vmatpush1.msra.mxu0 %v3092
        %5687 = vmatprep.subr.mxu0 %v3105
        %5688 = vmatpush1.msra.mxu0 %v3104
        %5689 = vmatprep.subr.mxu0 %v3117
        %5690 = vmatpush1.msra.mxu0 %v3116
        %5691 = vmatprep.subr.mxu0 %v3129
        %5692 = vmatpush1.msra.mxu0 %v3128
        %5693 = vmatprep.subr.mxu0 %v3141
        %5694 = vmatpush1.msra.mxu0 %v3140
        %5695 = vmatprep.subr.mxu0 %v3153
        %5696 = vmatpush1.msra.mxu0 %v3152
        %5697 = vmatprep.subr.mxu0 %v3165
        %5698 = vmatpush1.msra.mxu0 %v3164
        %5699 = vmatprep.subr.mxu0 %v3177
        %5700 = vmatpush1.msra.mxu0 %v3176
        %5701 = vmatprep.subr.mxu0 %v3189
        %5702 = vmatpush1.msra.mxu0 %v3188
        %5703 = vmatprep.subr.mxu0 %v3201
        %5704 = vmatpush1.msra.mxu0 %v3200
        %5705 = vmatprep.subr.mxu0 %v3213
        %5706 = vmatpush1.msra.mxu0 %v3212
        %5707 = vmatprep.subr.mxu0 %v3225
        %5708 = vmatpush1.msra.mxu0 %v3224
        %5709 = vmatprep.subr.mxu0 %v3237
        %5710 = vmatpush1.msra.mxu0 %v3236
        %5711 = vmatprep.subr.mxu0 %v3249
        %5712 = vmatpush1.msra.mxu0 %v3248
        %5713 = vmatprep.subr.mxu0 %v3261
        %5714 = vmatpush1.msra.mxu0 %v3260
        %5715 = vmatprep.mubr.f32.mxu0 %v1725
        %5716 = vmatmul.mubr.f32.gmra.mrb[0].mxu0 %v1724
        %v5717 = vpop.f32.mrb[0].mxu0
        %v5718 = vadd.f32 %v5647, %v5717
        %v5719 = vpop.f32.mrb[0].mxu0
        %v5720 = vadd.f32 %v5649, %v5719
        %5721 = vdwg.mxu0
        %5722 = vmatprep.subr.mxu0 %v3273
        %5723 = vmatpush1.msra.mxu0 %v3272
        %5724 = vmatprep.subr.mxu0 %v3285
        %5725 = vmatpush1.msra.mxu0 %v3284
        %5726 = vmatprep.subr.mxu0 %v3297
        %5727 = vmatpush1.msra.mxu0 %v3296
        %5728 = vmatprep.subr.mxu0 %v3309
        %5729 = vmatpush1.msra.mxu0 %v3308
        %5730 = vmatprep.subr.mxu0 %v3321
        %5731 = vmatpush1.msra.mxu0 %v3320
        %5732 = vmatprep.subr.mxu0 %v3333
        %5733 = vmatpush1.msra.mxu0 %v3332
        %5734 = vmatprep.subr.mxu0 %v3345
        %5735 = vmatpush1.msra.mxu0 %v3344
        %5736 = vmatprep.subr.mxu0 %v3357
        %5737 = vmatpush1.msra.mxu0 %v3356
        %5738 = vmatprep.subr.mxu0 %v3369
        %5739 = vmatpush1.msra.mxu0 %v3368
        %5740 = vmatprep.subr.mxu0 %v3381
        %5741 = vmatpush1.msra.mxu0 %v3380
        %5742 = vmatprep.subr.mxu0 %v3393
        %5743 = vmatpush1.msra.mxu0 %v3392
        %5744 = vmatprep.subr.mxu0 %v3405
        %5745 = vmatpush1.msra.mxu0 %v3404
        %5746 = vmatprep.subr.mxu0 %v3417
        %5747 = vmatpush1.msra.mxu0 %v3416
        %5748 = vmatprep.subr.mxu0 %v3429
        %5749 = vmatpush1.msra.mxu0 %v3428
        %5750 = vmatprep.subr.mxu0 %v3441
        %5751 = vmatpush1.msra.mxu0 %v3440
        %5752 = vmatprep.subr.mxu0 %v3453
        %5753 = vmatpush1.msra.mxu0 %v3452
        %5754 = vmatprep.subr.mxu0 %v3465
        %5755 = vmatpush1.msra.mxu0 %v3464
        %5756 = vmatprep.subr.mxu0 %v3477
        %5757 = vmatpush1.msra.mxu0 %v3476
        %5758 = vmatprep.subr.mxu0 %v3489
        %5759 = vmatpush1.msra.mxu0 %v3488
        %5760 = vmatprep.subr.mxu0 %v3501
        %5761 = vmatpush1.msra.mxu0 %v3500
        %5762 = vmatprep.subr.mxu0 %v3513
        %5763 = vmatpush1.msra.mxu0 %v3512
        %5764 = vmatprep.subr.mxu0 %v3525
        %5765 = vmatpush1.msra.mxu0 %v3524
        %5766 = vmatprep.subr.mxu0 %v3537
        %5767 = vmatpush1.msra.mxu0 %v3536
        %5768 = vmatprep.subr.mxu0 %v3549
        %5769 = vmatpush1.msra.mxu0 %v3548
        %5770 = vmatprep.subr.mxu0 %v3561
        %5771 = vmatpush1.msra.mxu0 %v3560
        %5772 = vmatprep.subr.mxu0 %v3573
        %5773 = vmatpush1.msra.mxu0 %v3572
        %5774 = vmatprep.subr.mxu0 %v3585
        %5775 = vmatpush1.msra.mxu0 %v3584
        %5776 = vmatprep.subr.mxu0 %v3597
        %5777 = vmatpush1.msra.mxu0 %v3596
        %5778 = vmatprep.subr.mxu0 %v3609
        %5779 = vmatpush1.msra.mxu0 %v3608
        %5780 = vmatprep.subr.mxu0 %v3621
        %5781 = vmatpush1.msra.mxu0 %v3620
        %5782 = vmatprep.subr.mxu0 %v3633
        %5783 = vmatpush1.msra.mxu0 %v3632
        %5784 = vmatprep.subr.mxu0 %v3645
        %5785 = vmatpush1.msra.mxu0 %v3644
        %5786 = vmatprep.mubr.f32.mxu0 %v1727
        %5787 = vmatmul.mubr.f32.gmra.mrb[0].mxu0 %v1726
        %v5788 = vpop.f32.mrb[0].mxu0
        %v5789 = vadd.f32 %v5718, %v5788
        %v5790 = vpop.f32.mrb[0].mxu0
        %v5791 = vadd.f32 %v5720, %v5790
        %5792 = vdwg.mxu0
        %5793 = vmatprep.subr.mxu0 %v3657
        %5794 = vmatpush1.msra.mxu0 %v3656
        %5795 = vmatprep.subr.mxu0 %v3669
        %5796 = vmatpush1.msra.mxu0 %v3668
        %5797 = vmatprep.subr.mxu0 %v3681
        %5798 = vmatpush1.msra.mxu0 %v3680
        %5799 = vmatprep.subr.mxu0 %v3693
        %5800 = vmatpush1.msra.mxu0 %v3692
        %5801 = vmatprep.subr.mxu0 %v3705
        %5802 = vmatpush1.msra.mxu0 %v3704
        %5803 = vmatprep.subr.mxu0 %v3717
        %5804 = vmatpush1.msra.mxu0 %v3716
        %5805 = vmatprep.subr.mxu0 %v3729
        %5806 = vmatpush1.msra.mxu0 %v3728
        %5807 = vmatprep.subr.mxu0 %v3741
        %5808 = vmatpush1.msra.mxu0 %v3740
        %5809 = vmatprep.subr.mxu0 %v3753
        %5810 = vmatpush1.msra.mxu0 %v3752
        %5811 = vmatprep.subr.mxu0 %v3765
        %5812 = vmatpush1.msra.mxu0 %v3764
        %5813 = vmatprep.subr.mxu0 %v3777
        %5814 = vmatpush1.msra.mxu0 %v3776
        %5815 = vmatprep.subr.mxu0 %v3789
        %5816 = vmatpush1.msra.mxu0 %v3788
        %5817 = vmatprep.subr.mxu0 %v3801
        %5818 = vmatpush1.msra.mxu0 %v3800
        %5819 = vmatprep.subr.mxu0 %v3813
        %5820 = vmatpush1.msra.mxu0 %v3812
        %5821 = vmatprep.subr.mxu0 %v3825
        %5822 = vmatpush1.msra.mxu0 %v3824
        %5823 = vmatprep.subr.mxu0 %v3837
        %5824 = vmatpush1.msra.mxu0 %v3836
        %5825 = vmatprep.subr.mxu0 %v3849
        %5826 = vmatpush1.msra.mxu0 %v3848
        %5827 = vmatprep.subr.mxu0 %v3861
        %5828 = vmatpush1.msra.mxu0 %v3860
        %5829 = vmatprep.subr.mxu0 %v3873
        %5830 = vmatpush1.msra.mxu0 %v3872
        %5831 = vmatprep.subr.mxu0 %v3885
        %5832 = vmatpush1.msra.mxu0 %v3884
        %5833 = vmatprep.subr.mxu0 %v3897
        %5834 = vmatpush1.msra.mxu0 %v3896
        %5835 = vmatprep.subr.mxu0 %v3909
        %5836 = vmatpush1.msra.mxu0 %v3908
        %5837 = vmatprep.subr.mxu0 %v3921
        %5838 = vmatpush1.msra.mxu0 %v3920
        %5839 = vmatprep.subr.mxu0 %v3933
        %5840 = vmatpush1.msra.mxu0 %v3932
        %5841 = vmatprep.subr.mxu0 %v3945
        %5842 = vmatpush1.msra.mxu0 %v3944
        %5843 = vmatprep.subr.mxu0 %v3957
        %5844 = vmatpush1.msra.mxu0 %v3956
        %5845 = vmatprep.subr.mxu0 %v3969
        %5846 = vmatpush1.msra.mxu0 %v3968
        %5847 = vmatprep.subr.mxu0 %v3981
        %5848 = vmatpush1.msra.mxu0 %v3980
        %5849 = vmatprep.subr.mxu0 %v3993
        %5850 = vmatpush1.msra.mxu0 %v3992
        %5851 = vmatprep.subr.mxu0 %v4005
        %5852 = vmatpush1.msra.mxu0 %v4004
        %5853 = vmatprep.subr.mxu0 %v4017
        %5854 = vmatpush1.msra.mxu0 %v4016
        %5855 = vmatprep.subr.mxu0 %v4029
        %5856 = vmatpush1.msra.mxu0 %v4028
        %5857 = vmatprep.mubr.f32.mxu0 %v1729
        %5858 = vmatmul.mubr.f32.gmra.mrb[0].mxu0 %v1728
        %v5859 = vpop.f32.mrb[0].mxu0
        %v5860 = vadd.f32 %v5789, %v5859
        %v5861 = vpop.f32.mrb[0].mxu0
        %v5862 = vadd.f32 %v5791, %v5861
        %5863 = vdwg.mxu0
        %5864 = vmatprep.subr.mxu0 %v4041
        %5865 = vmatpush1.msra.mxu0 %v4040
        %5866 = vmatprep.subr.mxu0 %v4053
        %5867 = vmatpush1.msra.mxu0 %v4052
        %5868 = vmatprep.subr.mxu0 %v4065
        %5869 = vmatpush1.msra.mxu0 %v4064
        %5870 = vmatprep.subr.mxu0 %v4077
        %5871 = vmatpush1.msra.mxu0 %v4076
        %5872 = vmatprep.subr.mxu0 %v4089
        %5873 = vmatpush1.msra.mxu0 %v4088
        %5874 = vmatprep.subr.mxu0 %v4101
        %5875 = vmatpush1.msra.mxu0 %v4100
        %5876 = vmatprep.subr.mxu0 %v4113
        %5877 = vmatpush1.msra.mxu0 %v4112
        %5878 = vmatprep.subr.mxu0 %v4125
        %5879 = vmatpush1.msra.mxu0 %v4124
        %5880 = vmatprep.subr.mxu0 %v4137
        %5881 = vmatpush1.msra.mxu0 %v4136
        %5882 = vmatprep.subr.mxu0 %v4149
        %5883 = vmatpush1.msra.mxu0 %v4148
        %5884 = vmatprep.subr.mxu0 %v4161
        %5885 = vmatpush1.msra.mxu0 %v4160
        %5886 = vmatprep.subr.mxu0 %v4173
        %5887 = vmatpush1.msra.mxu0 %v4172
        %5888 = vmatprep.subr.mxu0 %v4185
        %5889 = vmatpush1.msra.mxu0 %v4184
        %5890 = vmatprep.subr.mxu0 %v4197
        %5891 = vmatpush1.msra.mxu0 %v4196
        %5892 = vmatprep.subr.mxu0 %v4209
        %5893 = vmatpush1.msra.mxu0 %v4208
        %5894 = vmatprep.subr.mxu0 %v4221
        %5895 = vmatpush1.msra.mxu0 %v4220
        %5896 = vmatprep.subr.mxu0 %v4233
        %5897 = vmatpush1.msra.mxu0 %v4232
        %5898 = vmatprep.subr.mxu0 %v4245
        %5899 = vmatpush1.msra.mxu0 %v4244
        %5900 = vmatprep.subr.mxu0 %v4257
        %5901 = vmatpush1.msra.mxu0 %v4256
        %5902 = vmatprep.subr.mxu0 %v4269
        %5903 = vmatpush1.msra.mxu0 %v4268
        %5904 = vmatprep.subr.mxu0 %v4281
        %5905 = vmatpush1.msra.mxu0 %v4280
        %5906 = vmatprep.subr.mxu0 %v4293
        %5907 = vmatpush1.msra.mxu0 %v4292
        %5908 = vmatprep.subr.mxu0 %v4305
        %5909 = vmatpush1.msra.mxu0 %v4304
        %5910 = vmatprep.subr.mxu0 %v4317
        %5911 = vmatpush1.msra.mxu0 %v4316
        %5912 = vmatprep.subr.mxu0 %v4329
        %5913 = vmatpush1.msra.mxu0 %v4328
        %5914 = vmatprep.subr.mxu0 %v4341
        %5915 = vmatpush1.msra.mxu0 %v4340
        %5916 = vmatprep.subr.mxu0 %v4353
        %5917 = vmatpush1.msra.mxu0 %v4352
        %5918 = vmatprep.subr.mxu0 %v4365
        %5919 = vmatpush1.msra.mxu0 %v4364
        %5920 = vmatprep.subr.mxu0 %v4377
        %5921 = vmatpush1.msra.mxu0 %v4376
        %5922 = vmatprep.subr.mxu0 %v4389
        %5923 = vmatpush1.msra.mxu0 %v4388
        %5924 = vmatprep.subr.mxu0 %v4401
        %5925 = vmatpush1.msra.mxu0 %v4400
        %5926 = vmatprep.subr.mxu0 %v4413
        %5927 = vmatpush1.msra.mxu0 %v4412
        %5928 = vmatprep.mubr.f32.mxu0 %v1731
        %5929 = vmatmul.mubr.f32.gmra.mrb[0].mxu0 %v1730
        %v5930 = vpop.f32.mrb[0].mxu0
        %v5931 = vadd.f32 %v5860, %v5930
        %v5932 = vpop.f32.mrb[0].mxu0
        %v5933 = vadd.f32 %v5862, %v5932
        %5934 = vdwg.mxu0
        %5935 = vmatprep.subr.mxu0 %v4425
        %5936 = vmatpush1.msra.mxu0 %v4424
        %5937 = vmatprep.subr.mxu0 %v4437
        %5938 = vmatpush1.msra.mxu0 %v4436
        %5939 = vmatprep.subr.mxu0 %v4449
        %5940 = vmatpush1.msra.mxu0 %v4448
        %5941 = vmatprep.subr.mxu0 %v4461
        %5942 = vmatpush1.msra.mxu0 %v4460
        %5943 = vmatprep.subr.mxu0 %v4473
        %5944 = vmatpush1.msra.mxu0 %v4472
        %5945 = vmatprep.subr.mxu0 %v4485
        %5946 = vmatpush1.msra.mxu0 %v4484
        %5947 = vmatprep.subr.mxu0 %v4497
        %5948 = vmatpush1.msra.mxu0 %v4496
        %5949 = vmatprep.subr.mxu0 %v4509
        %5950 = vmatpush1.msra.mxu0 %v4508
        %5951 = vmatprep.subr.mxu0 %v4521
        %5952 = vmatpush1.msra.mxu0 %v4520
        %5953 = vmatprep.subr.mxu0 %v4533
        %5954 = vmatpush1.msra.mxu0 %v4532
        %5955 = vmatprep.subr.mxu0 %v4545
        %5956 = vmatpush1.msra.mxu0 %v4544
        %5957 = vmatprep.subr.mxu0 %v4557
        %5958 = vmatpush1.msra.mxu0 %v4556
        %5959 = vmatprep.subr.mxu0 %v4569
        %5960 = vmatpush1.msra.mxu0 %v4568
        %5961 = vmatprep.subr.mxu0 %v4581
        %5962 = vmatpush1.msra.mxu0 %v4580
        %5963 = vmatprep.subr.mxu0 %v4593
        %5964 = vmatpush1.msra.mxu0 %v4592
        %5965 = vmatprep.subr.mxu0 %v4605
        %5966 = vmatpush1.msra.mxu0 %v4604
        %5967 = vmatprep.subr.mxu0 %v4617
        %5968 = vmatpush1.msra.mxu0 %v4616
        %5969 = vmatprep.subr.mxu0 %v4629
        %5970 = vmatpush1.msra.mxu0 %v4628
        %5971 = vmatprep.subr.mxu0 %v4641
        %5972 = vmatpush1.msra.mxu0 %v4640
        %5973 = vmatprep.subr.mxu0 %v4653
        %5974 = vmatpush1.msra.mxu0 %v4652
        %5975 = vmatprep.subr.mxu0 %v4665
        %5976 = vmatpush1.msra.mxu0 %v4664
        %5977 = vmatprep.subr.mxu0 %v4677
        %5978 = vmatpush1.msra.mxu0 %v4676
        %5979 = vmatprep.subr.mxu0 %v4689
        %5980 = vmatpush1.msra.mxu0 %v4688
        %5981 = vmatprep.subr.mxu0 %v4701
        %5982 = vmatpush1.msra.mxu0 %v4700
        %5983 = vmatprep.subr.mxu0 %v4713
        %5984 = vmatpush1.msra.mxu0 %v4712
        %5985 = vmatprep.subr.mxu0 %v4725
        %5986 = vmatpush1.msra.mxu0 %v4724
        %5987 = vmatprep.subr.mxu0 %v4737
        %5988 = vmatpush1.msra.mxu0 %v4736
        %5989 = vmatprep.subr.mxu0 %v4749
        %5990 = vmatpush1.msra.mxu0 %v4748
        %5991 = vmatprep.subr.mxu0 %v4761
        %5992 = vmatpush1.msra.mxu0 %v4760
        %5993 = vmatprep.subr.mxu0 %v4773
        %5994 = vmatpush1.msra.mxu0 %v4772
        %5995 = vmatprep.subr.mxu0 %v4785
        %5996 = vmatpush1.msra.mxu0 %v4784
        %5997 = vmatprep.subr.mxu0 %v4797
        %5998 = vmatpush1.msra.mxu0 %v4796
        %5999 = vmatprep.mubr.f32.mxu0 %v1733
        %6000 = vmatmul.mubr.f32.gmra.mrb[0].mxu0 %v1732
        %v6001 = vpop.f32.mrb[0].mxu0
        %v6002 = vadd.f32 %v5931, %v6001
        %v6003 = vpop.f32.mrb[0].mxu0
        %v6004 = vadd.f32 %v5933, %v6003
        %6005 = vdwg.mxu0
        %6006 = vmatprep.subr.mxu0 %v1739
        %6007 = vmatpush1.msra.mxu0 %v1738
        %6008 = vmatprep.subr.mxu0 %v1751
        %6009 = vmatpush1.msra.mxu0 %v1750
        %6010 = vmatprep.subr.mxu0 %v1763
        %6011 = vmatpush1.msra.mxu0 %v1762
        %6012 = vmatprep.subr.mxu0 %v1775
        %6013 = vmatpush1.msra.mxu0 %v1774
        %6014 = vmatprep.subr.mxu0 %v1787
        %6015 = vmatpush1.msra.mxu0 %v1786
        %6016 = vmatprep.subr.mxu0 %v1799
        %6017 = vmatpush1.msra.mxu0 %v1798
        %6018 = vmatprep.subr.mxu0 %v1811
        %6019 = vmatpush1.msra.mxu0 %v1810
        %6020 = vmatprep.subr.mxu0 %v1823
        %6021 = vmatpush1.msra.mxu0 %v1822
        %6022 = vmatprep.subr.mxu0 %v1835
        %6023 = vmatpush1.msra.mxu0 %v1834
        %6024 = vmatprep.subr.mxu0 %v1847
        %6025 = vmatpush1.msra.mxu0 %v1846
        %6026 = vmatprep.subr.mxu0 %v1859
        %6027 = vmatpush1.msra.mxu0 %v1858
        %6028 = vmatprep.subr.mxu0 %v1871
        %6029 = vmatpush1.msra.mxu0 %v1870
        %6030 = vmatprep.subr.mxu0 %v1883
        %6031 = vmatpush1.msra.mxu0 %v1882
        %6032 = vmatprep.subr.mxu0 %v1895
        %6033 = vmatpush1.msra.mxu0 %v1894
        %6034 = vmatprep.subr.mxu0 %v1907
        %6035 = vmatpush1.msra.mxu0 %v1906
        %6036 = vmatprep.subr.mxu0 %v1919
        %6037 = vmatpush1.msra.mxu0 %v1918
        %6038 = vmatprep.subr.mxu0 %v1931
        %6039 = vmatpush1.msra.mxu0 %v1930
        %6040 = vmatprep.subr.mxu0 %v1943
        %6041 = vmatpush1.msra.mxu0 %v1942
        %6042 = vmatprep.subr.mxu0 %v1955
        %6043 = vmatpush1.msra.mxu0 %v1954
        %6044 = vmatprep.subr.mxu0 %v1967
        %6045 = vmatpush1.msra.mxu0 %v1966
        %6046 = vmatprep.subr.mxu0 %v1979
        %6047 = vmatpush1.msra.mxu0 %v1978
        %6048 = vmatprep.subr.mxu0 %v1991
        %6049 = vmatpush1.msra.mxu0 %v1990
        %6050 = vmatprep.subr.mxu0 %v2003
        %6051 = vmatpush1.msra.mxu0 %v2002
        %6052 = vmatprep.subr.mxu0 %v2015
        %6053 = vmatpush1.msra.mxu0 %v2014
        %6054 = vmatprep.subr.mxu0 %v2027
        %6055 = vmatpush1.msra.mxu0 %v2026
        %6056 = vmatprep.subr.mxu0 %v2039
        %6057 = vmatpush1.msra.mxu0 %v2038
        %6058 = vmatprep.subr.mxu0 %v2051
        %6059 = vmatpush1.msra.mxu0 %v2050
        %6060 = vmatprep.subr.mxu0 %v2063
        %6061 = vmatpush1.msra.mxu0 %v2062
        %6062 = vmatprep.subr.mxu0 %v2075
        %6063 = vmatpush1.msra.mxu0 %v2074
        %6064 = vmatprep.subr.mxu0 %v2087
        %6065 = vmatpush1.msra.mxu0 %v2086
        %6066 = vmatprep.subr.mxu0 %v2099
        %6067 = vmatpush1.msra.mxu0 %v2098
        %6068 = vmatprep.subr.mxu0 %v2111
        %6069 = vmatpush1.msra.mxu0 %v2110
        %6070 = vmatprep.mubr.f32.mxu0 %v1719
        %6071 = vmatmul.mubr.f32.gmra.mrb[0].mxu0 %v1718
        %v6072 = vpop.f32.mrb[0].mxu0
        %v6073 = vadd.f32 %v4829, %v6072
        %v6074 = vpop.f32.mrb[0].mxu0
        %v6075 = vadd.f32 %v4833, %v6074
        %6076 = vdwg.mxu0
        %6077 = vmatprep.subr.mxu0 %v2123
        %6078 = vmatpush1.msra.mxu0 %v2122
        %6079 = vmatprep.subr.mxu0 %v2135
        %6080 = vmatpush1.msra.mxu0 %v2134
        %6081 = vmatprep.subr.mxu0 %v2147
        %6082 = vmatpush1.msra.mxu0 %v2146
        %6083 = vmatprep.subr.mxu0 %v2159
        %6084 = vmatpush1.msra.mxu0 %v2158
        %6085 = vmatprep.subr.mxu0 %v2171
        %6086 = vmatpush1.msra.mxu0 %v2170
        %6087 = vmatprep.subr.mxu0 %v2183
        %6088 = vmatpush1.msra.mxu0 %v2182
        %6089 = vmatprep.subr.mxu0 %v2195
        %6090 = vmatpush1.msra.mxu0 %v2194
        %6091 = vmatprep.subr.mxu0 %v2207
        %6092 = vmatpush1.msra.mxu0 %v2206
        %6093 = vmatprep.subr.mxu0 %v2219
        %6094 = vmatpush1.msra.mxu0 %v2218
        %6095 = vmatprep.subr.mxu0 %v2231
        %6096 = vmatpush1.msra.mxu0 %v2230
        %6097 = vmatprep.subr.mxu0 %v2243
        %6098 = vmatpush1.msra.mxu0 %v2242
        %6099 = vmatprep.subr.mxu0 %v2255
        %6100 = vmatpush1.msra.mxu0 %v2254
        %6101 = vmatprep.subr.mxu0 %v2267
        %6102 = vmatpush1.msra.mxu0 %v2266
        %6103 = vmatprep.subr.mxu0 %v2279
        %6104 = vmatpush1.msra.mxu0 %v2278
        %6105 = vmatprep.subr.mxu0 %v2291
        %6106 = vmatpush1.msra.mxu0 %v2290
        %6107 = vmatprep.subr.mxu0 %v2303
        %6108 = vmatpush1.msra.mxu0 %v2302
        %6109 = vmatprep.subr.mxu0 %v2315
        %6110 = vmatpush1.msra.mxu0 %v2314
        %6111 = vmatprep.subr.mxu0 %v2327
        %6112 = vmatpush1.msra.mxu0 %v2326
        %6113 = vmatprep.subr.mxu0 %v2339
        %6114 = vmatpush1.msra.mxu0 %v2338
        %6115 = vmatprep.subr.mxu0 %v2351
        %6116 = vmatpush1.msra.mxu0 %v2350
        %6117 = vmatprep.subr.mxu0 %v2363
        %6118 = vmatpush1.msra.mxu0 %v2362
        %6119 = vmatprep.subr.mxu0 %v2375
        %6120 = vmatpush1.msra.mxu0 %v2374
        %6121 = vmatprep.subr.mxu0 %v2387
        %6122 = vmatpush1.msra.mxu0 %v2386
        %6123 = vmatprep.subr.mxu0 %v2399
        %6124 = vmatpush1.msra.mxu0 %v2398
        %6125 = vmatprep.subr.mxu0 %v2411
        %6126 = vmatpush1.msra.mxu0 %v2410
        %6127 = vmatprep.subr.mxu0 %v2423
        %6128 = vmatpush1.msra.mxu0 %v2422
        %6129 = vmatprep.subr.mxu0 %v2435
        %6130 = vmatpush1.msra.mxu0 %v2434
        %6131 = vmatprep.subr.mxu0 %v2447
        %6132 = vmatpush1.msra.mxu0 %v2446
        %6133 = vmatprep.subr.mxu0 %v2459
        %6134 = vmatpush1.msra.mxu0 %v2458
        %6135 = vmatprep.subr.mxu0 %v2471
        %6136 = vmatpush1.msra.mxu0 %v2470
        %6137 = vmatprep.subr.mxu0 %v2483
        %6138 = vmatpush1.msra.mxu0 %v2482
        %6139 = vmatprep.subr.mxu0 %v2495
        %6140 = vmatpush1.msra.mxu0 %v2494
        %6141 = vmatprep.mubr.f32.mxu0 %v1721
        %6142 = vmatmul.mubr.f32.gmra.mrb[0].mxu0 %v1720
        %v6143 = vpop.f32.mrb[0].mxu0
        %v6144 = vadd.f32 %v6073, %v6143
        %v6145 = vpop.f32.mrb[0].mxu0
        %v6146 = vadd.f32 %v6075, %v6145
        %6147 = vdwg.mxu0
        %6148 = vmatprep.subr.mxu0 %v2507
        %6149 = vmatpush1.msra.mxu0 %v2506
        %6150 = vmatprep.subr.mxu0 %v2519
        %6151 = vmatpush1.msra.mxu0 %v2518
        %6152 = vmatprep.subr.mxu0 %v2531
        %6153 = vmatpush1.msra.mxu0 %v2530
        %6154 = vmatprep.subr.mxu0 %v2543
        %6155 = vmatpush1.msra.mxu0 %v2542
        %6156 = vmatprep.subr.mxu0 %v2555
        %6157 = vmatpush1.msra.mxu0 %v2554
        %6158 = vmatprep.subr.mxu0 %v2567
        %6159 = vmatpush1.msra.mxu0 %v2566
        %6160 = vmatprep.subr.mxu0 %v2579
        %6161 = vmatpush1.msra.mxu0 %v2578
        %6162 = vmatprep.subr.mxu0 %v2591
        %6163 = vmatpush1.msra.mxu0 %v2590
        %6164 = vmatprep.subr.mxu0 %v2603
        %6165 = vmatpush1.msra.mxu0 %v2602
        %6166 = vmatprep.subr.mxu0 %v2615
        %6167 = vmatpush1.msra.mxu0 %v2614
        %6168 = vmatprep.subr.mxu0 %v2627
        %6169 = vmatpush1.msra.mxu0 %v2626
        %6170 = vmatprep.subr.mxu0 %v2639
        %6171 = vmatpush1.msra.mxu0 %v2638
        %6172 = vmatprep.subr.mxu0 %v2651
        %6173 = vmatpush1.msra.mxu0 %v2650
        %6174 = vmatprep.subr.mxu0 %v2663
        %6175 = vmatpush1.msra.mxu0 %v2662
        %6176 = vmatprep.subr.mxu0 %v2675
        %6177 = vmatpush1.msra.mxu0 %v2674
        %6178 = vmatprep.subr.mxu0 %v2687
        %6179 = vmatpush1.msra.mxu0 %v2686
        %6180 = vmatprep.subr.mxu0 %v2699
        %6181 = vmatpush1.msra.mxu0 %v2698
        %6182 = vmatprep.subr.mxu0 %v2711
        %6183 = vmatpush1.msra.mxu0 %v2710
        %6184 = vmatprep.subr.mxu0 %v2723
        %6185 = vmatpush1.msra.mxu0 %v2722
        %6186 = vmatprep.subr.mxu0 %v2735
        %6187 = vmatpush1.msra.mxu0 %v2734
        %6188 = vmatprep.subr.mxu0 %v2747
        %6189 = vmatpush1.msra.mxu0 %v2746
        %6190 = vmatprep.subr.mxu0 %v2759
        %6191 = vmatpush1.msra.mxu0 %v2758
        %6192 = vmatprep.subr.mxu0 %v2771
        %6193 = vmatpush1.msra.mxu0 %v2770
        %6194 = vmatprep.subr.mxu0 %v2783
        %6195 = vmatpush1.msra.mxu0 %v2782
        %6196 = vmatprep.subr.mxu0 %v2795
        %6197 = vmatpush1.msra.mxu0 %v2794
        %6198 = vmatprep.subr.mxu0 %v2807
        %6199 = vmatpush1.msra.mxu0 %v2806
        %6200 = vmatprep.subr.mxu0 %v2819
        %6201 = vmatpush1.msra.mxu0 %v2818
        %6202 = vmatprep.subr.mxu0 %v2831
        %6203 = vmatpush1.msra.mxu0 %v2830
        %6204 = vmatprep.subr.mxu0 %v2843
        %6205 = vmatpush1.msra.mxu0 %v2842
        %6206 = vmatprep.subr.mxu0 %v2855
        %6207 = vmatpush1.msra.mxu0 %v2854
        %6208 = vmatprep.subr.mxu0 %v2867
        %6209 = vmatpush1.msra.mxu0 %v2866
        %6210 = vmatprep.subr.mxu0 %v2879
        %6211 = vmatpush1.msra.mxu0 %v2878
        %6212 = vmatprep.mubr.f32.mxu0 %v1723
        %6213 = vmatmul.mubr.f32.gmra.mrb[0].mxu0 %v1722
        %v6214 = vpop.f32.mrb[0].mxu0
        %v6215 = vadd.f32 %v6144, %v6214
        %v6216 = vpop.f32.mrb[0].mxu0
        %v6217 = vadd.f32 %v6146, %v6216
        %6218 = vdwg.mxu0
        %6219 = vmatprep.subr.mxu0 %v2891
        %6220 = vmatpush1.msra.mxu0 %v2890
        %6221 = vmatprep.subr.mxu0 %v2903
        %6222 = vmatpush1.msra.mxu0 %v2902
        %6223 = vmatprep.subr.mxu0 %v2915
        %6224 = vmatpush1.msra.mxu0 %v2914
        %6225 = vmatprep.subr.mxu0 %v2927
        %6226 = vmatpush1.msra.mxu0 %v2926
        %6227 = vmatprep.subr.mxu0 %v2939
        %6228 = vmatpush1.msra.mxu0 %v2938
        %6229 = vmatprep.subr.mxu0 %v2951
        %6230 = vmatpush1.msra.mxu0 %v2950
        %6231 = vmatprep.subr.mxu0 %v2963
        %6232 = vmatpush1.msra.mxu0 %v2962
        %6233 = vmatprep.subr.mxu0 %v2975
        %6234 = vmatpush1.msra.mxu0 %v2974
        %6235 = vmatprep.subr.mxu0 %v2987
        %6236 = vmatpush1.msra.mxu0 %v2986
        %6237 = vmatprep.subr.mxu0 %v2999
        %6238 = vmatpush1.msra.mxu0 %v2998
        %6239 = vmatprep.subr.mxu0 %v3011
        %6240 = vmatpush1.msra.mxu0 %v3010
        %6241 = vmatprep.subr.mxu0 %v3023
        %6242 = vmatpush1.msra.mxu0 %v3022
        %6243 = vmatprep.subr.mxu0 %v3035
        %6244 = vmatpush1.msra.mxu0 %v3034
        %6245 = vmatprep.subr.mxu0 %v3047
        %6246 = vmatpush1.msra.mxu0 %v3046
        %6247 = vmatprep.subr.mxu0 %v3059
        %6248 = vmatpush1.msra.mxu0 %v3058
        %6249 = vmatprep.subr.mxu0 %v3071
        %6250 = vmatpush1.msra.mxu0 %v3070
        %6251 = vmatprep.subr.mxu0 %v3083
        %6252 = vmatpush1.msra.mxu0 %v3082
        %6253 = vmatprep.subr.mxu0 %v3095
        %6254 = vmatpush1.msra.mxu0 %v3094
        %6255 = vmatprep.subr.mxu0 %v3107
        %6256 = vmatpush1.msra.mxu0 %v3106
        %6257 = vmatprep.subr.mxu0 %v3119
        %6258 = vmatpush1.msra.mxu0 %v3118
        %6259 = vmatprep.subr.mxu0 %v3131
        %6260 = vmatpush1.msra.mxu0 %v3130
        %6261 = vmatprep.subr.mxu0 %v3143
        %6262 = vmatpush1.msra.mxu0 %v3142
        %6263 = vmatprep.subr.mxu0 %v3155
        %6264 = vmatpush1.msra.mxu0 %v3154
        %6265 = vmatprep.subr.mxu0 %v3167
        %6266 = vmatpush1.msra.mxu0 %v3166
        %6267 = vmatprep.subr.mxu0 %v3179
        %6268 = vmatpush1.msra.mxu0 %v3178
        %6269 = vmatprep.subr.mxu0 %v3191
        %6270 = vmatpush1.msra.mxu0 %v3190
        %6271 = vmatprep.subr.mxu0 %v3203
        %6272 = vmatpush1.msra.mxu0 %v3202
        %6273 = vmatprep.subr.mxu0 %v3215
        %6274 = vmatpush1.msra.mxu0 %v3214
        %6275 = vmatprep.subr.mxu0 %v3227
        %6276 = vmatpush1.msra.mxu0 %v3226
        %6277 = vmatprep.subr.mxu0 %v3239
        %6278 = vmatpush1.msra.mxu0 %v3238
        %6279 = vmatprep.subr.mxu0 %v3251
        %6280 = vmatpush1.msra.mxu0 %v3250
        %6281 = vmatprep.subr.mxu0 %v3263
        %6282 = vmatpush1.msra.mxu0 %v3262
        %6283 = vmatprep.mubr.f32.mxu0 %v1725
        %6284 = vmatmul.mubr.f32.gmra.mrb[0].mxu0 %v1724
        %v6285 = vpop.f32.mrb[0].mxu0
        %v6286 = vadd.f32 %v6215, %v6285
        %v6287 = vpop.f32.mrb[0].mxu0
        %v6288 = vadd.f32 %v6217, %v6287
        %6289 = vdwg.mxu0
        %6290 = vmatprep.subr.mxu0 %v3275
        %6291 = vmatpush1.msra.mxu0 %v3274
        %6292 = vmatprep.subr.mxu0 %v3287
        %6293 = vmatpush1.msra.mxu0 %v3286
        %6294 = vmatprep.subr.mxu0 %v3299
        %6295 = vmatpush1.msra.mxu0 %v3298
        %6296 = vmatprep.subr.mxu0 %v3311
        %6297 = vmatpush1.msra.mxu0 %v3310
        %6298 = vmatprep.subr.mxu0 %v3323
        %6299 = vmatpush1.msra.mxu0 %v3322
        %6300 = vmatprep.subr.mxu0 %v3335
        %6301 = vmatpush1.msra.mxu0 %v3334
        %6302 = vmatprep.subr.mxu0 %v3347
        %6303 = vmatpush1.msra.mxu0 %v3346
        %6304 = vmatprep.subr.mxu0 %v3359
        %6305 = vmatpush1.msra.mxu0 %v3358
        %6306 = vmatprep.subr.mxu0 %v3371
        %6307 = vmatpush1.msra.mxu0 %v3370
        %6308 = vmatprep.subr.mxu0 %v3383
        %6309 = vmatpush1.msra.mxu0 %v3382
        %6310 = vmatprep.subr.mxu0 %v3395
        %6311 = vmatpush1.msra.mxu0 %v3394
        %6312 = vmatprep.subr.mxu0 %v3407
        %6313 = vmatpush1.msra.mxu0 %v3406
        %6314 = vmatprep.subr.mxu0 %v3419
        %6315 = vmatpush1.msra.mxu0 %v3418
        %6316 = vmatprep.subr.mxu0 %v3431
        %6317 = vmatpush1.msra.mxu0 %v3430
        %6318 = vmatprep.subr.mxu0 %v3443
        %6319 = vmatpush1.msra.mxu0 %v3442
        %6320 = vmatprep.subr.mxu0 %v3455
        %6321 = vmatpush1.msra.mxu0 %v3454
        %6322 = vmatprep.subr.mxu0 %v3467
        %6323 = vmatpush1.msra.mxu0 %v3466
        %6324 = vmatprep.subr.mxu0 %v3479
        %6325 = vmatpush1.msra.mxu0 %v3478
        %6326 = vmatprep.subr.mxu0 %v3491
        %6327 = vmatpush1.msra.mxu0 %v3490
        %6328 = vmatprep.subr.mxu0 %v3503
        %6329 = vmatpush1.msra.mxu0 %v3502
        %6330 = vmatprep.subr.mxu0 %v3515
        %6331 = vmatpush1.msra.mxu0 %v3514
        %6332 = vmatprep.subr.mxu0 %v3527
        %6333 = vmatpush1.msra.mxu0 %v3526
        %6334 = vmatprep.subr.mxu0 %v3539
        %6335 = vmatpush1.msra.mxu0 %v3538
        %6336 = vmatprep.subr.mxu0 %v3551
        %6337 = vmatpush1.msra.mxu0 %v3550
        %6338 = vmatprep.subr.mxu0 %v3563
        %6339 = vmatpush1.msra.mxu0 %v3562
        %6340 = vmatprep.subr.mxu0 %v3575
        %6341 = vmatpush1.msra.mxu0 %v3574
        %6342 = vmatprep.subr.mxu0 %v3587
        %6343 = vmatpush1.msra.mxu0 %v3586
        %6344 = vmatprep.subr.mxu0 %v3599
        %6345 = vmatpush1.msra.mxu0 %v3598
        %6346 = vmatprep.subr.mxu0 %v3611
        %6347 = vmatpush1.msra.mxu0 %v3610
        %6348 = vmatprep.subr.mxu0 %v3623
        %6349 = vmatpush1.msra.mxu0 %v3622
        %6350 = vmatprep.subr.mxu0 %v3635
        %6351 = vmatpush1.msra.mxu0 %v3634
        %6352 = vmatprep.subr.mxu0 %v3647
        %6353 = vmatpush1.msra.mxu0 %v3646
        %6354 = vmatprep.mubr.f32.mxu0 %v1727
        %6355 = vmatmul.mubr.f32.gmra.mrb[0].mxu0 %v1726
        %v6356 = vpop.f32.mrb[0].mxu0
        %v6357 = vadd.f32 %v6286, %v6356
        %v6358 = vpop.f32.mrb[0].mxu0
        %v6359 = vadd.f32 %v6288, %v6358
        %6360 = vdwg.mxu0
        %6361 = vmatprep.subr.mxu0 %v3659
        %6362 = vmatpush1.msra.mxu0 %v3658
        %6363 = vmatprep.subr.mxu0 %v3671
        %6364 = vmatpush1.msra.mxu0 %v3670
        %6365 = vmatprep.subr.mxu0 %v3683
        %6366 = vmatpush1.msra.mxu0 %v3682
        %6367 = vmatprep.subr.mxu0 %v3695
        %6368 = vmatpush1.msra.mxu0 %v3694
        %6369 = vmatprep.subr.mxu0 %v3707
        %6370 = vmatpush1.msra.mxu0 %v3706
        %6371 = vmatprep.subr.mxu0 %v3719
        %6372 = vmatpush1.msra.mxu0 %v3718
        %6373 = vmatprep.subr.mxu0 %v3731
        %6374 = vmatpush1.msra.mxu0 %v3730
        %6375 = vmatprep.subr.mxu0 %v3743
        %6376 = vmatpush1.msra.mxu0 %v3742
        %6377 = vmatprep.subr.mxu0 %v3755
        %6378 = vmatpush1.msra.mxu0 %v3754
        %6379 = vmatprep.subr.mxu0 %v3767
        %6380 = vmatpush1.msra.mxu0 %v3766
        %6381 = vmatprep.subr.mxu0 %v3779
        %6382 = vmatpush1.msra.mxu0 %v3778
        %6383 = vmatprep.subr.mxu0 %v3791
        %6384 = vmatpush1.msra.mxu0 %v3790
        %6385 = vmatprep.subr.mxu0 %v3803
        %6386 = vmatpush1.msra.mxu0 %v3802
        %6387 = vmatprep.subr.mxu0 %v3815
        %6388 = vmatpush1.msra.mxu0 %v3814
        %6389 = vmatprep.subr.mxu0 %v3827
        %6390 = vmatpush1.msra.mxu0 %v3826
        %6391 = vmatprep.subr.mxu0 %v3839
        %6392 = vmatpush1.msra.mxu0 %v3838
        %6393 = vmatprep.subr.mxu0 %v3851
        %6394 = vmatpush1.msra.mxu0 %v3850
        %6395 = vmatprep.subr.mxu0 %v3863
        %6396 = vmatpush1.msra.mxu0 %v3862
        %6397 = vmatprep.subr.mxu0 %v3875
        %6398 = vmatpush1.msra.mxu0 %v3874
        %6399 = vmatprep.subr.mxu0 %v3887
        %6400 = vmatpush1.msra.mxu0 %v3886
        %6401 = vmatprep.subr.mxu0 %v3899
        %6402 = vmatpush1.msra.mxu0 %v3898
        %6403 = vmatprep.subr.mxu0 %v3911
        %6404 = vmatpush1.msra.mxu0 %v3910
        %6405 = vmatprep.subr.mxu0 %v3923
        %6406 = vmatpush1.msra.mxu0 %v3922
        %6407 = vmatprep.subr.mxu0 %v3935
        %6408 = vmatpush1.msra.mxu0 %v3934
        %6409 = vmatprep.subr.mxu0 %v3947
        %6410 = vmatpush1.msra.mxu0 %v3946
        %6411 = vmatprep.subr.mxu0 %v3959
        %6412 = vmatpush1.msra.mxu0 %v3958
        %6413 = vmatprep.subr.mxu0 %v3971
        %6414 = vmatpush1.msra.mxu0 %v3970
        %6415 = vmatprep.subr.mxu0 %v3983
        %6416 = vmatpush1.msra.mxu0 %v3982
        %6417 = vmatprep.subr.mxu0 %v3995
        %6418 = vmatpush1.msra.mxu0 %v3994
        %6419 = vmatprep.subr.mxu0 %v4007
        %6420 = vmatpush1.msra.mxu0 %v4006
        %6421 = vmatprep.subr.mxu0 %v4019
        %6422 = vmatpush1.msra.mxu0 %v4018
        %6423 = vmatprep.subr.mxu0 %v4031
        %6424 = vmatpush1.msra.mxu0 %v4030
        %6425 = vmatprep.mubr.f32.mxu0 %v1729
        %6426 = vmatmul.mubr.f32.gmra.mrb[0].mxu0 %v1728
        %v6427 = vpop.f32.mrb[0].mxu0
        %v6428 = vadd.f32 %v6357, %v6427
        %v6429 = vpop.f32.mrb[0].mxu0
        %v6430 = vadd.f32 %v6359, %v6429
        %6431 = vdwg.mxu0
        %6432 = vmatprep.subr.mxu0 %v4043
        %6433 = vmatpush1.msra.mxu0 %v4042
        %6434 = vmatprep.subr.mxu0 %v4055
        %6435 = vmatpush1.msra.mxu0 %v4054
        %6436 = vmatprep.subr.mxu0 %v4067
        %6437 = vmatpush1.msra.mxu0 %v4066
        %6438 = vmatprep.subr.mxu0 %v4079
        %6439 = vmatpush1.msra.mxu0 %v4078
        %6440 = vmatprep.subr.mxu0 %v4091
        %6441 = vmatpush1.msra.mxu0 %v4090
        %6442 = vmatprep.subr.mxu0 %v4103
        %6443 = vmatpush1.msra.mxu0 %v4102
        %6444 = vmatprep.subr.mxu0 %v4115
        %6445 = vmatpush1.msra.mxu0 %v4114
        %6446 = vmatprep.subr.mxu0 %v4127
        %6447 = vmatpush1.msra.mxu0 %v4126
        %6448 = vmatprep.subr.mxu0 %v4139
        %6449 = vmatpush1.msra.mxu0 %v4138
        %6450 = vmatprep.subr.mxu0 %v4151
        %6451 = vmatpush1.msra.mxu0 %v4150
        %6452 = vmatprep.subr.mxu0 %v4163
        %6453 = vmatpush1.msra.mxu0 %v4162
        %6454 = vmatprep.subr.mxu0 %v4175
        %6455 = vmatpush1.msra.mxu0 %v4174
        %6456 = vmatprep.subr.mxu0 %v4187
        %6457 = vmatpush1.msra.mxu0 %v4186
        %6458 = vmatprep.subr.mxu0 %v4199
        %6459 = vmatpush1.msra.mxu0 %v4198
        %6460 = vmatprep.subr.mxu0 %v4211
        %6461 = vmatpush1.msra.mxu0 %v4210
        %6462 = vmatprep.subr.mxu0 %v4223
        %6463 = vmatpush1.msra.mxu0 %v4222
        %6464 = vmatprep.subr.mxu0 %v4235
        %6465 = vmatpush1.msra.mxu0 %v4234
        %6466 = vmatprep.subr.mxu0 %v4247
        %6467 = vmatpush1.msra.mxu0 %v4246
        %6468 = vmatprep.subr.mxu0 %v4259
        %6469 = vmatpush1.msra.mxu0 %v4258
        %6470 = vmatprep.subr.mxu0 %v4271
        %6471 = vmatpush1.msra.mxu0 %v4270
        %6472 = vmatprep.subr.mxu0 %v4283
        %6473 = vmatpush1.msra.mxu0 %v4282
        %6474 = vmatprep.subr.mxu0 %v4295
        %6475 = vmatpush1.msra.mxu0 %v4294
        %6476 = vmatprep.subr.mxu0 %v4307
        %6477 = vmatpush1.msra.mxu0 %v4306
        %6478 = vmatprep.subr.mxu0 %v4319
        %6479 = vmatpush1.msra.mxu0 %v4318
        %6480 = vmatprep.subr.mxu0 %v4331
        %6481 = vmatpush1.msra.mxu0 %v4330
        %6482 = vmatprep.subr.mxu0 %v4343
        %6483 = vmatpush1.msra.mxu0 %v4342
        %6484 = vmatprep.subr.mxu0 %v4355
        %6485 = vmatpush1.msra.mxu0 %v4354
        %6486 = vmatprep.subr.mxu0 %v4367
        %6487 = vmatpush1.msra.mxu0 %v4366
        %6488 = vmatprep.subr.mxu0 %v4379
        %6489 = vmatpush1.msra.mxu0 %v4378
        %6490 = vmatprep.subr.mxu0 %v4391
        %6491 = vmatpush1.msra.mxu0 %v4390
        %6492 = vmatprep.subr.mxu0 %v4403
        %6493 = vmatpush1.msra.mxu0 %v4402
        %6494 = vmatprep.subr.mxu0 %v4415
        %6495 = vmatpush1.msra.mxu0 %v4414
        %6496 = vmatprep.mubr.f32.mxu0 %v1731
        %6497 = vmatmul.mubr.f32.gmra.mrb[0].mxu0 %v1730
        %v6498 = vpop.f32.mrb[0].mxu0
        %v6499 = vadd.f32 %v6428, %v6498
        %v6500 = vpop.f32.mrb[0].mxu0
        %v6501 = vadd.f32 %v6430, %v6500
        %6502 = vdwg.mxu0
        %6503 = vmatprep.subr.mxu0 %v4427
        %6504 = vmatpush1.msra.mxu0 %v4426
        %6505 = vmatprep.subr.mxu0 %v4439
        %6506 = vmatpush1.msra.mxu0 %v4438
        %6507 = vmatprep.subr.mxu0 %v4451
        %6508 = vmatpush1.msra.mxu0 %v4450
        %6509 = vmatprep.subr.mxu0 %v4463
        %6510 = vmatpush1.msra.mxu0 %v4462
        %6511 = vmatprep.subr.mxu0 %v4475
        %6512 = vmatpush1.msra.mxu0 %v4474
        %6513 = vmatprep.subr.mxu0 %v4487
        %6514 = vmatpush1.msra.mxu0 %v4486
        %6515 = vmatprep.subr.mxu0 %v4499
        %6516 = vmatpush1.msra.mxu0 %v4498
        %6517 = vmatprep.subr.mxu0 %v4511
        %6518 = vmatpush1.msra.mxu0 %v4510
        %6519 = vmatprep.subr.mxu0 %v4523
        %6520 = vmatpush1.msra.mxu0 %v4522
        %6521 = vmatprep.subr.mxu0 %v4535
        %6522 = vmatpush1.msra.mxu0 %v4534
        %6523 = vmatprep.subr.mxu0 %v4547
        %6524 = vmatpush1.msra.mxu0 %v4546
        %6525 = vmatprep.subr.mxu0 %v4559
        %6526 = vmatpush1.msra.mxu0 %v4558
        %6527 = vmatprep.subr.mxu0 %v4571
        %6528 = vmatpush1.msra.mxu0 %v4570
        %6529 = vmatprep.subr.mxu0 %v4583
        %6530 = vmatpush1.msra.mxu0 %v4582
        %6531 = vmatprep.subr.mxu0 %v4595
        %6532 = vmatpush1.msra.mxu0 %v4594
        %6533 = vmatprep.subr.mxu0 %v4607
        %6534 = vmatpush1.msra.mxu0 %v4606
        %6535 = vmatprep.subr.mxu0 %v4619
        %6536 = vmatpush1.msra.mxu0 %v4618
        %6537 = vmatprep.subr.mxu0 %v4631
        %6538 = vmatpush1.msra.mxu0 %v4630
        %6539 = vmatprep.subr.mxu0 %v4643
        %6540 = vmatpush1.msra.mxu0 %v4642
        %6541 = vmatprep.subr.mxu0 %v4655
        %6542 = vmatpush1.msra.mxu0 %v4654
        %6543 = vmatprep.subr.mxu0 %v4667
        %6544 = vmatpush1.msra.mxu0 %v4666
        %6545 = vmatprep.subr.mxu0 %v4679
        %6546 = vmatpush1.msra.mxu0 %v4678
        %6547 = vmatprep.subr.mxu0 %v4691
        %6548 = vmatpush1.msra.mxu0 %v4690
        %6549 = vmatprep.subr.mxu0 %v4703
        %6550 = vmatpush1.msra.mxu0 %v4702
        %6551 = vmatprep.subr.mxu0 %v4715
        %6552 = vmatpush1.msra.mxu0 %v4714
        %6553 = vmatprep.subr.mxu0 %v4727
        %6554 = vmatpush1.msra.mxu0 %v4726
        %6555 = vmatprep.subr.mxu0 %v4739
        %6556 = vmatpush1.msra.mxu0 %v4738
        %6557 = vmatprep.subr.mxu0 %v4751
        %6558 = vmatpush1.msra.mxu0 %v4750
        %6559 = vmatprep.subr.mxu0 %v4763
        %6560 = vmatpush1.msra.mxu0 %v4762
        %6561 = vmatprep.subr.mxu0 %v4775
        %6562 = vmatpush1.msra.mxu0 %v4774
        %6563 = vmatprep.subr.mxu0 %v4787
        %6564 = vmatpush1.msra.mxu0 %v4786
        %6565 = vmatprep.subr.mxu0 %v4799
        %6566 = vmatpush1.msra.mxu0 %v4798
        %6567 = vmatprep.mubr.f32.mxu0 %v1733
        %6568 = vmatmul.mubr.f32.gmra.mrb[0].mxu0 %v1732
        %v6569 = vpop.f32.mrb[0].mxu0
        %v6570 = vadd.f32 %v6499, %v6569
        %v6571 = vpop.f32.mrb[0].mxu0
        %v6572 = vadd.f32 %v6501, %v6571
        %6573 = vdwg.mxu0
        %6574 = vmatprep.subr.mxu0 %v1741
        %6575 = vmatpush1.msra.mxu0 %v1740
        %6576 = vmatprep.subr.mxu0 %v1753
        %6577 = vmatpush1.msra.mxu0 %v1752
        %6578 = vmatprep.subr.mxu0 %v1765
        %6579 = vmatpush1.msra.mxu0 %v1764
        %6580 = vmatprep.subr.mxu0 %v1777
        %6581 = vmatpush1.msra.mxu0 %v1776
        %6582 = vmatprep.subr.mxu0 %v1789
        %6583 = vmatpush1.msra.mxu0 %v1788
        %6584 = vmatprep.subr.mxu0 %v1801
        %6585 = vmatpush1.msra.mxu0 %v1800
        %6586 = vmatprep.subr.mxu0 %v1813
        %6587 = vmatpush1.msra.mxu0 %v1812
        %6588 = vmatprep.subr.mxu0 %v1825
        %6589 = vmatpush1.msra.mxu0 %v1824
        %6590 = vmatprep.subr.mxu0 %v1837
        %6591 = vmatpush1.msra.mxu0 %v1836
        %6592 = vmatprep.subr.mxu0 %v1849
        %6593 = vmatpush1.msra.mxu0 %v1848
        %6594 = vmatprep.subr.mxu0 %v1861
        %6595 = vmatpush1.msra.mxu0 %v1860
        %6596 = vmatprep.subr.mxu0 %v1873
        %6597 = vmatpush1.msra.mxu0 %v1872
        %6598 = vmatprep.subr.mxu0 %v1885
        %6599 = vmatpush1.msra.mxu0 %v1884
        %6600 = vmatprep.subr.mxu0 %v1897
        %6601 = vmatpush1.msra.mxu0 %v1896
        %6602 = vmatprep.subr.mxu0 %v1909
        %6603 = vmatpush1.msra.mxu0 %v1908
        %6604 = vmatprep.subr.mxu0 %v1921
        %6605 = vmatpush1.msra.mxu0 %v1920
        %6606 = vmatprep.subr.mxu0 %v1933
        %6607 = vmatpush1.msra.mxu0 %v1932
        %6608 = vmatprep.subr.mxu0 %v1945
        %6609 = vmatpush1.msra.mxu0 %v1944
        %6610 = vmatprep.subr.mxu0 %v1957
        %6611 = vmatpush1.msra.mxu0 %v1956
        %6612 = vmatprep.subr.mxu0 %v1969
        %6613 = vmatpush1.msra.mxu0 %v1968
        %6614 = vmatprep.subr.mxu0 %v1981
        %6615 = vmatpush1.msra.mxu0 %v1980
        %6616 = vmatprep.subr.mxu0 %v1993
        %6617 = vmatpush1.msra.mxu0 %v1992
        %6618 = vmatprep.subr.mxu0 %v2005
        %6619 = vmatpush1.msra.mxu0 %v2004
        %6620 = vmatprep.subr.mxu0 %v2017
        %6621 = vmatpush1.msra.mxu0 %v2016
        %6622 = vmatprep.subr.mxu0 %v2029
        %6623 = vmatpush1.msra.mxu0 %v2028
        %6624 = vmatprep.subr.mxu0 %v2041
        %6625 = vmatpush1.msra.mxu0 %v2040
        %6626 = vmatprep.subr.mxu0 %v2053
        %6627 = vmatpush1.msra.mxu0 %v2052
        %6628 = vmatprep.subr.mxu0 %v2065
        %6629 = vmatpush1.msra.mxu0 %v2064
        %6630 = vmatprep.subr.mxu0 %v2077
        %6631 = vmatpush1.msra.mxu0 %v2076
        %6632 = vmatprep.subr.mxu0 %v2089
        %6633 = vmatpush1.msra.mxu0 %v2088
        %6634 = vmatprep.subr.mxu0 %v2101
        %6635 = vmatpush1.msra.mxu0 %v2100
        %6636 = vmatprep.subr.mxu0 %v2113
        %6637 = vmatpush1.msra.mxu0 %v2112
        %6638 = vmatprep.mubr.f32.mxu0 %v1719
        %6639 = vmatmul.mubr.f32.gmra.mrb[0].mxu0 %v1718
        %v6640 = vpop.f32.mrb[0].mxu0
        %v6641 = vadd.f32 %v4837, %v6640
        %v6642 = vpop.f32.mrb[0].mxu0
        %v6643 = vadd.f32 %v4841, %v6642
        %6644 = vdwg.mxu0
        %6645 = vmatprep.subr.mxu0 %v2125
        %6646 = vmatpush1.msra.mxu0 %v2124
        %6647 = vmatprep.subr.mxu0 %v2137
        %6648 = vmatpush1.msra.mxu0 %v2136
        %6649 = vmatprep.subr.mxu0 %v2149
        %6650 = vmatpush1.msra.mxu0 %v2148
        %6651 = vmatprep.subr.mxu0 %v2161
        %6652 = vmatpush1.msra.mxu0 %v2160
        %6653 = vmatprep.subr.mxu0 %v2173
        %6654 = vmatpush1.msra.mxu0 %v2172
        %6655 = vmatprep.subr.mxu0 %v2185
        %6656 = vmatpush1.msra.mxu0 %v2184
        %6657 = vmatprep.subr.mxu0 %v2197
        %6658 = vmatpush1.msra.mxu0 %v2196
        %6659 = vmatprep.subr.mxu0 %v2209
        %6660 = vmatpush1.msra.mxu0 %v2208
        %6661 = vmatprep.subr.mxu0 %v2221
        %6662 = vmatpush1.msra.mxu0 %v2220
        %6663 = vmatprep.subr.mxu0 %v2233
        %6664 = vmatpush1.msra.mxu0 %v2232
        %6665 = vmatprep.subr.mxu0 %v2245
        %6666 = vmatpush1.msra.mxu0 %v2244
        %6667 = vmatprep.subr.mxu0 %v2257
        %6668 = vmatpush1.msra.mxu0 %v2256
        %6669 = vmatprep.subr.mxu0 %v2269
        %6670 = vmatpush1.msra.mxu0 %v2268
        %6671 = vmatprep.subr.mxu0 %v2281
        %6672 = vmatpush1.msra.mxu0 %v2280
        %6673 = vmatprep.subr.mxu0 %v2293
        %6674 = vmatpush1.msra.mxu0 %v2292
        %6675 = vmatprep.subr.mxu0 %v2305
        %6676 = vmatpush1.msra.mxu0 %v2304
        %6677 = vmatprep.subr.mxu0 %v2317
        %6678 = vmatpush1.msra.mxu0 %v2316
        %6679 = vmatprep.subr.mxu0 %v2329
        %6680 = vmatpush1.msra.mxu0 %v2328
        %6681 = vmatprep.subr.mxu0 %v2341
        %6682 = vmatpush1.msra.mxu0 %v2340
        %6683 = vmatprep.subr.mxu0 %v2353
        %6684 = vmatpush1.msra.mxu0 %v2352
        %6685 = vmatprep.subr.mxu0 %v2365
        %6686 = vmatpush1.msra.mxu0 %v2364
        %6687 = vmatprep.subr.mxu0 %v2377
        %6688 = vmatpush1.msra.mxu0 %v2376
        %6689 = vmatprep.subr.mxu0 %v2389
        %6690 = vmatpush1.msra.mxu0 %v2388
        %6691 = vmatprep.subr.mxu0 %v2401
        %6692 = vmatpush1.msra.mxu0 %v2400
        %6693 = vmatprep.subr.mxu0 %v2413
        %6694 = vmatpush1.msra.mxu0 %v2412
        %6695 = vmatprep.subr.mxu0 %v2425
        %6696 = vmatpush1.msra.mxu0 %v2424
        %6697 = vmatprep.subr.mxu0 %v2437
        %6698 = vmatpush1.msra.mxu0 %v2436
        %6699 = vmatprep.subr.mxu0 %v2449
        %6700 = vmatpush1.msra.mxu0 %v2448
        %6701 = vmatprep.subr.mxu0 %v2461
        %6702 = vmatpush1.msra.mxu0 %v2460
        %6703 = vmatprep.subr.mxu0 %v2473
        %6704 = vmatpush1.msra.mxu0 %v2472
        %6705 = vmatprep.subr.mxu0 %v2485
        %6706 = vmatpush1.msra.mxu0 %v2484
        %6707 = vmatprep.subr.mxu0 %v2497
        %6708 = vmatpush1.msra.mxu0 %v2496
        %6709 = vmatprep.mubr.f32.mxu0 %v1721
        %6710 = vmatmul.mubr.f32.gmra.mrb[0].mxu0 %v1720
        %v6711 = vpop.f32.mrb[0].mxu0
        %v6712 = vadd.f32 %v6641, %v6711
        %v6713 = vpop.f32.mrb[0].mxu0
        %v6714 = vadd.f32 %v6643, %v6713
        %6715 = vdwg.mxu0
        %6716 = vmatprep.subr.mxu0 %v2509
        %6717 = vmatpush1.msra.mxu0 %v2508
        %6718 = vmatprep.subr.mxu0 %v2521
        %6719 = vmatpush1.msra.mxu0 %v2520
        %6720 = vmatprep.subr.mxu0 %v2533
        %6721 = vmatpush1.msra.mxu0 %v2532
        %6722 = vmatprep.subr.mxu0 %v2545
        %6723 = vmatpush1.msra.mxu0 %v2544
        %6724 = vmatprep.subr.mxu0 %v2557
        %6725 = vmatpush1.msra.mxu0 %v2556
        %6726 = vmatprep.subr.mxu0 %v2569
        %6727 = vmatpush1.msra.mxu0 %v2568
        %6728 = vmatprep.subr.mxu0 %v2581
        %6729 = vmatpush1.msra.mxu0 %v2580
        %6730 = vmatprep.subr.mxu0 %v2593
        %6731 = vmatpush1.msra.mxu0 %v2592
        %6732 = vmatprep.subr.mxu0 %v2605
        %6733 = vmatpush1.msra.mxu0 %v2604
        %6734 = vmatprep.subr.mxu0 %v2617
        %6735 = vmatpush1.msra.mxu0 %v2616
        %6736 = vmatprep.subr.mxu0 %v2629
        %6737 = vmatpush1.msra.mxu0 %v2628
        %6738 = vmatprep.subr.mxu0 %v2641
        %6739 = vmatpush1.msra.mxu0 %v2640
        %6740 = vmatprep.subr.mxu0 %v2653
        %6741 = vmatpush1.msra.mxu0 %v2652
        %6742 = vmatprep.subr.mxu0 %v2665
        %6743 = vmatpush1.msra.mxu0 %v2664
        %6744 = vmatprep.subr.mxu0 %v2677
        %6745 = vmatpush1.msra.mxu0 %v2676
        %6746 = vmatprep.subr.mxu0 %v2689
        %6747 = vmatpush1.msra.mxu0 %v2688
        %6748 = vmatprep.subr.mxu0 %v2701
        %6749 = vmatpush1.msra.mxu0 %v2700
        %6750 = vmatprep.subr.mxu0 %v2713
        %6751 = vmatpush1.msra.mxu0 %v2712
        %6752 = vmatprep.subr.mxu0 %v2725
        %6753 = vmatpush1.msra.mxu0 %v2724
        %6754 = vmatprep.subr.mxu0 %v2737
        %6755 = vmatpush1.msra.mxu0 %v2736
        %6756 = vmatprep.subr.mxu0 %v2749
        %6757 = vmatpush1.msra.mxu0 %v2748
        %6758 = vmatprep.subr.mxu0 %v2761
        %6759 = vmatpush1.msra.mxu0 %v2760
        %6760 = vmatprep.subr.mxu0 %v2773
        %6761 = vmatpush1.msra.mxu0 %v2772
        %6762 = vmatprep.subr.mxu0 %v2785
        %6763 = vmatpush1.msra.mxu0 %v2784
        %6764 = vmatprep.subr.mxu0 %v2797
        %6765 = vmatpush1.msra.mxu0 %v2796
        %6766 = vmatprep.subr.mxu0 %v2809
        %6767 = vmatpush1.msra.mxu0 %v2808
        %6768 = vmatprep.subr.mxu0 %v2821
        %6769 = vmatpush1.msra.mxu0 %v2820
        %6770 = vmatprep.subr.mxu0 %v2833
        %6771 = vmatpush1.msra.mxu0 %v2832
        %6772 = vmatprep.subr.mxu0 %v2845
        %6773 = vmatpush1.msra.mxu0 %v2844
        %6774 = vmatprep.subr.mxu0 %v2857
        %6775 = vmatpush1.msra.mxu0 %v2856
        %6776 = vmatprep.subr.mxu0 %v2869
        %6777 = vmatpush1.msra.mxu0 %v2868
        %6778 = vmatprep.subr.mxu0 %v2881
        %6779 = vmatpush1.msra.mxu0 %v2880
        %6780 = vmatprep.mubr.f32.mxu0 %v1723
        %6781 = vmatmul.mubr.f32.gmra.mrb[0].mxu0 %v1722
        %v6782 = vpop.f32.mrb[0].mxu0
        %v6783 = vadd.f32 %v6712, %v6782
        %v6784 = vpop.f32.mrb[0].mxu0
        %v6785 = vadd.f32 %v6714, %v6784
        %6786 = vdwg.mxu0
        %6787 = vmatprep.subr.mxu0 %v2893
        %6788 = vmatpush1.msra.mxu0 %v2892
        %6789 = vmatprep.subr.mxu0 %v2905
        %6790 = vmatpush1.msra.mxu0 %v2904
        %6791 = vmatprep.subr.mxu0 %v2917
        %6792 = vmatpush1.msra.mxu0 %v2916
        %6793 = vmatprep.subr.mxu0 %v2929
        %6794 = vmatpush1.msra.mxu0 %v2928
        %6795 = vmatprep.subr.mxu0 %v2941
        %6796 = vmatpush1.msra.mxu0 %v2940
        %6797 = vmatprep.subr.mxu0 %v2953
        %6798 = vmatpush1.msra.mxu0 %v2952
        %6799 = vmatprep.subr.mxu0 %v2965
        %6800 = vmatpush1.msra.mxu0 %v2964
        %6801 = vmatprep.subr.mxu0 %v2977
        %6802 = vmatpush1.msra.mxu0 %v2976
        %6803 = vmatprep.subr.mxu0 %v2989
        %6804 = vmatpush1.msra.mxu0 %v2988
        %6805 = vmatprep.subr.mxu0 %v3001
        %6806 = vmatpush1.msra.mxu0 %v3000
        %6807 = vmatprep.subr.mxu0 %v3013
        %6808 = vmatpush1.msra.mxu0 %v3012
        %6809 = vmatprep.subr.mxu0 %v3025
        %6810 = vmatpush1.msra.mxu0 %v3024
        %6811 = vmatprep.subr.mxu0 %v3037
        %6812 = vmatpush1.msra.mxu0 %v3036
        %6813 = vmatprep.subr.mxu0 %v3049
        %6814 = vmatpush1.msra.mxu0 %v3048
        %6815 = vmatprep.subr.mxu0 %v3061
        %6816 = vmatpush1.msra.mxu0 %v3060
        %6817 = vmatprep.subr.mxu0 %v3073
        %6818 = vmatpush1.msra.mxu0 %v3072
        %6819 = vmatprep.subr.mxu0 %v3085
        %6820 = vmatpush1.msra.mxu0 %v3084
        %6821 = vmatprep.subr.mxu0 %v3097
        %6822 = vmatpush1.msra.mxu0 %v3096
        %6823 = vmatprep.subr.mxu0 %v3109
        %6824 = vmatpush1.msra.mxu0 %v3108
        %6825 = vmatprep.subr.mxu0 %v3121
        %6826 = vmatpush1.msra.mxu0 %v3120
        %6827 = vmatprep.subr.mxu0 %v3133
        %6828 = vmatpush1.msra.mxu0 %v3132
        %6829 = vmatprep.subr.mxu0 %v3145
        %6830 = vmatpush1.msra.mxu0 %v3144
        %6831 = vmatprep.subr.mxu0 %v3157
        %6832 = vmatpush1.msra.mxu0 %v3156
        %6833 = vmatprep.subr.mxu0 %v3169
        %6834 = vmatpush1.msra.mxu0 %v3168
        %6835 = vmatprep.subr.mxu0 %v3181
        %6836 = vmatpush1.msra.mxu0 %v3180
        %6837 = vmatprep.subr.mxu0 %v3193
        %6838 = vmatpush1.msra.mxu0 %v3192
        %6839 = vmatprep.subr.mxu0 %v3205
        %6840 = vmatpush1.msra.mxu0 %v3204
        %6841 = vmatprep.subr.mxu0 %v3217
        %6842 = vmatpush1.msra.mxu0 %v3216
        %6843 = vmatprep.subr.mxu0 %v3229
        %6844 = vmatpush1.msra.mxu0 %v3228
        %6845 = vmatprep.subr.mxu0 %v3241
        %6846 = vmatpush1.msra.mxu0 %v3240
        %6847 = vmatprep.subr.mxu0 %v3253
        %6848 = vmatpush1.msra.mxu0 %v3252
        %6849 = vmatprep.subr.mxu0 %v3265
        %6850 = vmatpush1.msra.mxu0 %v3264
        %6851 = vmatprep.mubr.f32.mxu0 %v1725
        %6852 = vmatmul.mubr.f32.gmra.mrb[0].mxu0 %v1724
        %v6853 = vpop.f32.mrb[0].mxu0
        %v6854 = vadd.f32 %v6783, %v6853
        %v6855 = vpop.f32.mrb[0].mxu0
        %v6856 = vadd.f32 %v6785, %v6855
        %6857 = vdwg.mxu0
        %6858 = vmatprep.subr.mxu0 %v3277
        %6859 = vmatpush1.msra.mxu0 %v3276
        %6860 = vmatprep.subr.mxu0 %v3289
        %6861 = vmatpush1.msra.mxu0 %v3288
        %6862 = vmatprep.subr.mxu0 %v3301
        %6863 = vmatpush1.msra.mxu0 %v3300
        %6864 = vmatprep.subr.mxu0 %v3313
        %6865 = vmatpush1.msra.mxu0 %v3312
        %6866 = vmatprep.subr.mxu0 %v3325
        %6867 = vmatpush1.msra.mxu0 %v3324
        %6868 = vmatprep.subr.mxu0 %v3337
        %6869 = vmatpush1.msra.mxu0 %v3336
        %6870 = vmatprep.subr.mxu0 %v3349
        %6871 = vmatpush1.msra.mxu0 %v3348
        %6872 = vmatprep.subr.mxu0 %v3361
        %6873 = vmatpush1.msra.mxu0 %v3360
        %6874 = vmatprep.subr.mxu0 %v3373
        %6875 = vmatpush1.msra.mxu0 %v3372
        %6876 = vmatprep.subr.mxu0 %v3385
        %6877 = vmatpush1.msra.mxu0 %v3384
        %6878 = vmatprep.subr.mxu0 %v3397
        %6879 = vmatpush1.msra.mxu0 %v3396
        %6880 = vmatprep.subr.mxu0 %v3409
        %6881 = vmatpush1.msra.mxu0 %v3408
        %6882 = vmatprep.subr.mxu0 %v3421
        %6883 = vmatpush1.msra.mxu0 %v3420
        %6884 = vmatprep.subr.mxu0 %v3433
        %6885 = vmatpush1.msra.mxu0 %v3432
        %6886 = vmatprep.subr.mxu0 %v3445
        %6887 = vmatpush1.msra.mxu0 %v3444
        %6888 = vmatprep.subr.mxu0 %v3457
        %6889 = vmatpush1.msra.mxu0 %v3456
        %6890 = vmatprep.subr.mxu0 %v3469
        %6891 = vmatpush1.msra.mxu0 %v3468
        %6892 = vmatprep.subr.mxu0 %v3481
        %6893 = vmatpush1.msra.mxu0 %v3480
        %6894 = vmatprep.subr.mxu0 %v3493
        %6895 = vmatpush1.msra.mxu0 %v3492
        %6896 = vmatprep.subr.mxu0 %v3505
        %6897 = vmatpush1.msra.mxu0 %v3504
        %6898 = vmatprep.subr.mxu0 %v3517
        %6899 = vmatpush1.msra.mxu0 %v3516
        %6900 = vmatprep.subr.mxu0 %v3529
        %6901 = vmatpush1.msra.mxu0 %v3528
        %6902 = vmatprep.subr.mxu0 %v3541
        %6903 = vmatpush1.msra.mxu0 %v3540
        %6904 = vmatprep.subr.mxu0 %v3553
        %6905 = vmatpush1.msra.mxu0 %v3552
        %6906 = vmatprep.subr.mxu0 %v3565
        %6907 = vmatpush1.msra.mxu0 %v3564
        %6908 = vmatprep.subr.mxu0 %v3577
        %6909 = vmatpush1.msra.mxu0 %v3576
        %6910 = vmatprep.subr.mxu0 %v3589
        %6911 = vmatpush1.msra.mxu0 %v3588
        %6912 = vmatprep.subr.mxu0 %v3601
        %6913 = vmatpush1.msra.mxu0 %v3600
        %6914 = vmatprep.subr.mxu0 %v3613
        %6915 = vmatpush1.msra.mxu0 %v3612
        %6916 = vmatprep.subr.mxu0 %v3625
        %6917 = vmatpush1.msra.mxu0 %v3624
        %6918 = vmatprep.subr.mxu0 %v3637
        %6919 = vmatpush1.msra.mxu0 %v3636
        %6920 = vmatprep.subr.mxu0 %v3649
        %6921 = vmatpush1.msra.mxu0 %v3648
        %6922 = vmatprep.mubr.f32.mxu0 %v1727
        %6923 = vmatmul.mubr.f32.gmra.mrb[0].mxu0 %v1726
        %v6924 = vpop.f32.mrb[0].mxu0
        %v6925 = vadd.f32 %v6854, %v6924
        %v6926 = vpop.f32.mrb[0].mxu0
        %v6927 = vadd.f32 %v6856, %v6926
        %6928 = vdwg.mxu0
        %6929 = vmatprep.subr.mxu0 %v3661
        %6930 = vmatpush1.msra.mxu0 %v3660
        %6931 = vmatprep.subr.mxu0 %v3673
        %6932 = vmatpush1.msra.mxu0 %v3672
        %6933 = vmatprep.subr.mxu0 %v3685
        %6934 = vmatpush1.msra.mxu0 %v3684
        %6935 = vmatprep.subr.mxu0 %v3697
        %6936 = vmatpush1.msra.mxu0 %v3696
        %6937 = vmatprep.subr.mxu0 %v3709
        %6938 = vmatpush1.msra.mxu0 %v3708
        %6939 = vmatprep.subr.mxu0 %v3721
        %6940 = vmatpush1.msra.mxu0 %v3720
        %6941 = vmatprep.subr.mxu0 %v3733
        %6942 = vmatpush1.msra.mxu0 %v3732
        %6943 = vmatprep.subr.mxu0 %v3745
        %6944 = vmatpush1.msra.mxu0 %v3744
        %6945 = vmatprep.subr.mxu0 %v3757
        %6946 = vmatpush1.msra.mxu0 %v3756
        %6947 = vmatprep.subr.mxu0 %v3769
        %6948 = vmatpush1.msra.mxu0 %v3768
        %6949 = vmatprep.subr.mxu0 %v3781
        %6950 = vmatpush1.msra.mxu0 %v3780
        %6951 = vmatprep.subr.mxu0 %v3793
        %6952 = vmatpush1.msra.mxu0 %v3792
        %6953 = vmatprep.subr.mxu0 %v3805
        %6954 = vmatpush1.msra.mxu0 %v3804
        %6955 = vmatprep.subr.mxu0 %v3817
        %6956 = vmatpush1.msra.mxu0 %v3816
        %6957 = vmatprep.subr.mxu0 %v3829
        %6958 = vmatpush1.msra.mxu0 %v3828
        %6959 = vmatprep.subr.mxu0 %v3841
        %6960 = vmatpush1.msra.mxu0 %v3840
        %6961 = vmatprep.subr.mxu0 %v3853
        %6962 = vmatpush1.msra.mxu0 %v3852
        %6963 = vmatprep.subr.mxu0 %v3865
        %6964 = vmatpush1.msra.mxu0 %v3864
        %6965 = vmatprep.subr.mxu0 %v3877
        %6966 = vmatpush1.msra.mxu0 %v3876
        %6967 = vmatprep.subr.mxu0 %v3889
        %6968 = vmatpush1.msra.mxu0 %v3888
        %6969 = vmatprep.subr.mxu0 %v3901
        %6970 = vmatpush1.msra.mxu0 %v3900
        %6971 = vmatprep.subr.mxu0 %v3913
        %6972 = vmatpush1.msra.mxu0 %v3912
        %6973 = vmatprep.subr.mxu0 %v3925
        %6974 = vmatpush1.msra.mxu0 %v3924
        %6975 = vmatprep.subr.mxu0 %v3937
        %6976 = vmatpush1.msra.mxu0 %v3936
        %6977 = vmatprep.subr.mxu0 %v3949
        %6978 = vmatpush1.msra.mxu0 %v3948
        %6979 = vmatprep.subr.mxu0 %v3961
        %6980 = vmatpush1.msra.mxu0 %v3960
        %6981 = vmatprep.subr.mxu0 %v3973
        %6982 = vmatpush1.msra.mxu0 %v3972
        %6983 = vmatprep.subr.mxu0 %v3985
        %6984 = vmatpush1.msra.mxu0 %v3984
        %6985 = vmatprep.subr.mxu0 %v3997
        %6986 = vmatpush1.msra.mxu0 %v3996
        %6987 = vmatprep.subr.mxu0 %v4009
        %6988 = vmatpush1.msra.mxu0 %v4008
        %6989 = vmatprep.subr.mxu0 %v4021
        %6990 = vmatpush1.msra.mxu0 %v4020
        %6991 = vmatprep.subr.mxu0 %v4033
        %6992 = vmatpush1.msra.mxu0 %v4032
        %6993 = vmatprep.mubr.f32.mxu0 %v1729
        %6994 = vmatmul.mubr.f32.gmra.mrb[0].mxu0 %v1728
        %v6995 = vpop.f32.mrb[0].mxu0
        %v6996 = vadd.f32 %v6925, %v6995
        %v6997 = vpop.f32.mrb[0].mxu0
        %v6998 = vadd.f32 %v6927, %v6997
        %6999 = vdwg.mxu0
        %7000 = vmatprep.subr.mxu0 %v4045
        %7001 = vmatpush1.msra.mxu0 %v4044
        %7002 = vmatprep.subr.mxu0 %v4057
        %7003 = vmatpush1.msra.mxu0 %v4056
        %7004 = vmatprep.subr.mxu0 %v4069
        %7005 = vmatpush1.msra.mxu0 %v4068
        %7006 = vmatprep.subr.mxu0 %v4081
        %7007 = vmatpush1.msra.mxu0 %v4080
        %7008 = vmatprep.subr.mxu0 %v4093
        %7009 = vmatpush1.msra.mxu0 %v4092
        %7010 = vmatprep.subr.mxu0 %v4105
        %7011 = vmatpush1.msra.mxu0 %v4104
        %7012 = vmatprep.subr.mxu0 %v4117
        %7013 = vmatpush1.msra.mxu0 %v4116
        %7014 = vmatprep.subr.mxu0 %v4129
        %7015 = vmatpush1.msra.mxu0 %v4128
        %7016 = vmatprep.subr.mxu0 %v4141
        %7017 = vmatpush1.msra.mxu0 %v4140
        %7018 = vmatprep.subr.mxu0 %v4153
        %7019 = vmatpush1.msra.mxu0 %v4152
        %7020 = vmatprep.subr.mxu0 %v4165
        %7021 = vmatpush1.msra.mxu0 %v4164
        %7022 = vmatprep.subr.mxu0 %v4177
        %7023 = vmatpush1.msra.mxu0 %v4176
        %7024 = vmatprep.subr.mxu0 %v4189
        %7025 = vmatpush1.msra.mxu0 %v4188
        %7026 = vmatprep.subr.mxu0 %v4201
        %7027 = vmatpush1.msra.mxu0 %v4200
        %7028 = vmatprep.subr.mxu0 %v4213
        %7029 = vmatpush1.msra.mxu0 %v4212
        %7030 = vmatprep.subr.mxu0 %v4225
        %7031 = vmatpush1.msra.mxu0 %v4224
        %7032 = vmatprep.subr.mxu0 %v4237
        %7033 = vmatpush1.msra.mxu0 %v4236
        %7034 = vmatprep.subr.mxu0 %v4249
        %7035 = vmatpush1.msra.mxu0 %v4248
        %7036 = vmatprep.subr.mxu0 %v4261
        %7037 = vmatpush1.msra.mxu0 %v4260
        %7038 = vmatprep.subr.mxu0 %v4273
        %7039 = vmatpush1.msra.mxu0 %v4272
        %7040 = vmatprep.subr.mxu0 %v4285
        %7041 = vmatpush1.msra.mxu0 %v4284
        %7042 = vmatprep.subr.mxu0 %v4297
        %7043 = vmatpush1.msra.mxu0 %v4296
        %7044 = vmatprep.subr.mxu0 %v4309
        %7045 = vmatpush1.msra.mxu0 %v4308
        %7046 = vmatprep.subr.mxu0 %v4321
        %7047 = vmatpush1.msra.mxu0 %v4320
        %7048 = vmatprep.subr.mxu0 %v4333
        %7049 = vmatpush1.msra.mxu0 %v4332
        %7050 = vmatprep.subr.mxu0 %v4345
        %7051 = vmatpush1.msra.mxu0 %v4344
        %7052 = vmatprep.subr.mxu0 %v4357
        %7053 = vmatpush1.msra.mxu0 %v4356
        %7054 = vmatprep.subr.mxu0 %v4369
        %7055 = vmatpush1.msra.mxu0 %v4368
        %7056 = vmatprep.subr.mxu0 %v4381
        %7057 = vmatpush1.msra.mxu0 %v4380
        %7058 = vmatprep.subr.mxu0 %v4393
        %7059 = vmatpush1.msra.mxu0 %v4392
        %7060 = vmatprep.subr.mxu0 %v4405
        %7061 = vmatpush1.msra.mxu0 %v4404
        %7062 = vmatprep.subr.mxu0 %v4417
        %7063 = vmatpush1.msra.mxu0 %v4416
        %7064 = vmatprep.mubr.f32.mxu0 %v1731
        %7065 = vmatmul.mubr.f32.gmra.mrb[0].mxu0 %v1730
        %v7066 = vpop.f32.mrb[0].mxu0
        %v7067 = vadd.f32 %v6996, %v7066
        %v7068 = vpop.f32.mrb[0].mxu0
        %v7069 = vadd.f32 %v6998, %v7068
        %7070 = vdwg.mxu0
        %7071 = vmatprep.subr.mxu0 %v4429
        %7072 = vmatpush1.msra.mxu0 %v4428
        %7073 = vmatprep.subr.mxu0 %v4441
        %7074 = vmatpush1.msra.mxu0 %v4440
        %7075 = vmatprep.subr.mxu0 %v4453
        %7076 = vmatpush1.msra.mxu0 %v4452
        %7077 = vmatprep.subr.mxu0 %v4465
        %7078 = vmatpush1.msra.mxu0 %v4464
        %7079 = vmatprep.subr.mxu0 %v4477
        %7080 = vmatpush1.msra.mxu0 %v4476
        %7081 = vmatprep.subr.mxu0 %v4489
        %7082 = vmatpush1.msra.mxu0 %v4488
        %7083 = vmatprep.subr.mxu0 %v4501
        %7084 = vmatpush1.msra.mxu0 %v4500
        %7085 = vmatprep.subr.mxu0 %v4513
        %7086 = vmatpush1.msra.mxu0 %v4512
        %7087 = vmatprep.subr.mxu0 %v4525
        %7088 = vmatpush1.msra.mxu0 %v4524
        %7089 = vmatprep.subr.mxu0 %v4537
        %7090 = vmatpush1.msra.mxu0 %v4536
        %7091 = vmatprep.subr.mxu0 %v4549
        %7092 = vmatpush1.msra.mxu0 %v4548
        %7093 = vmatprep.subr.mxu0 %v4561
        %7094 = vmatpush1.msra.mxu0 %v4560
        %7095 = vmatprep.subr.mxu0 %v4573
        %7096 = vmatpush1.msra.mxu0 %v4572
        %7097 = vmatprep.subr.mxu0 %v4585
        %7098 = vmatpush1.msra.mxu0 %v4584
        %7099 = vmatprep.subr.mxu0 %v4597
        %7100 = vmatpush1.msra.mxu0 %v4596
        %7101 = vmatprep.subr.mxu0 %v4609
        %7102 = vmatpush1.msra.mxu0 %v4608
        %7103 = vmatprep.subr.mxu0 %v4621
        %7104 = vmatpush1.msra.mxu0 %v4620
        %7105 = vmatprep.subr.mxu0 %v4633
        %7106 = vmatpush1.msra.mxu0 %v4632
        %7107 = vmatprep.subr.mxu0 %v4645
        %7108 = vmatpush1.msra.mxu0 %v4644
        %7109 = vmatprep.subr.mxu0 %v4657
        %7110 = vmatpush1.msra.mxu0 %v4656
        %7111 = vmatprep.subr.mxu0 %v4669
        %7112 = vmatpush1.msra.mxu0 %v4668
        %7113 = vmatprep.subr.mxu0 %v4681
        %7114 = vmatpush1.msra.mxu0 %v4680
        %7115 = vmatprep.subr.mxu0 %v4693
        %7116 = vmatpush1.msra.mxu0 %v4692
        %7117 = vmatprep.subr.mxu0 %v4705
        %7118 = vmatpush1.msra.mxu0 %v4704
        %7119 = vmatprep.subr.mxu0 %v4717
        %7120 = vmatpush1.msra.mxu0 %v4716
        %7121 = vmatprep.subr.mxu0 %v4729
        %7122 = vmatpush1.msra.mxu0 %v4728
        %7123 = vmatprep.subr.mxu0 %v4741
        %7124 = vmatpush1.msra.mxu0 %v4740
        %7125 = vmatprep.subr.mxu0 %v4753
        %7126 = vmatpush1.msra.mxu0 %v4752
        %7127 = vmatprep.subr.mxu0 %v4765
        %7128 = vmatpush1.msra.mxu0 %v4764
        %7129 = vmatprep.subr.mxu0 %v4777
        %7130 = vmatpush1.msra.mxu0 %v4776
        %7131 = vmatprep.subr.mxu0 %v4789
        %7132 = vmatpush1.msra.mxu0 %v4788
        %7133 = vmatprep.subr.mxu0 %v4801
        %7134 = vmatpush1.msra.mxu0 %v4800
        %7135 = vmatprep.mubr.f32.mxu0 %v1733
        %7136 = vmatmul.mubr.f32.gmra.mrb[0].mxu0 %v1732
        %v7137 = vpop.f32.mrb[0].mxu0
        %v7138 = vadd.f32 %v7067, %v7137
        %v7139 = vpop.f32.mrb[0].mxu0
        %v7140 = vadd.f32 %v7069, %v7139
        %7141 = vdwg.mxu0
        %7142 = vmatprep.subr.mxu0 %v1743
        %7143 = vmatpush1.msra.mxu0 %v1742
        %7144 = vmatprep.subr.mxu0 %v1755
        %7145 = vmatpush1.msra.mxu0 %v1754
        %7146 = vmatprep.subr.mxu0 %v1767
        %7147 = vmatpush1.msra.mxu0 %v1766
        %7148 = vmatprep.subr.mxu0 %v1779
        %7149 = vmatpush1.msra.mxu0 %v1778
        %7150 = vmatprep.subr.mxu0 %v1791
        %7151 = vmatpush1.msra.mxu0 %v1790
        %7152 = vmatprep.subr.mxu0 %v1803
        %7153 = vmatpush1.msra.mxu0 %v1802
        %7154 = vmatprep.subr.mxu0 %v1815
        %7155 = vmatpush1.msra.mxu0 %v1814
        %7156 = vmatprep.subr.mxu0 %v1827
        %7157 = vmatpush1.msra.mxu0 %v1826
        %7158 = vmatprep.subr.mxu0 %v1839
        %7159 = vmatpush1.msra.mxu0 %v1838
        %7160 = vmatprep.subr.mxu0 %v1851
        %7161 = vmatpush1.msra.mxu0 %v1850
        %7162 = vmatprep.subr.mxu0 %v1863
        %7163 = vmatpush1.msra.mxu0 %v1862
        %7164 = vmatprep.subr.mxu0 %v1875
        %7165 = vmatpush1.msra.mxu0 %v1874
        %7166 = vmatprep.subr.mxu0 %v1887
        %7167 = vmatpush1.msra.mxu0 %v1886
        %7168 = vmatprep.subr.mxu0 %v1899
        %7169 = vmatpush1.msra.mxu0 %v1898
        %7170 = vmatprep.subr.mxu0 %v1911
        %7171 = vmatpush1.msra.mxu0 %v1910
        %7172 = vmatprep.subr.mxu0 %v1923
        %7173 = vmatpush1.msra.mxu0 %v1922
        %7174 = vmatprep.subr.mxu0 %v1935
        %7175 = vmatpush1.msra.mxu0 %v1934
        %7176 = vmatprep.subr.mxu0 %v1947
        %7177 = vmatpush1.msra.mxu0 %v1946
        %7178 = vmatprep.subr.mxu0 %v1959
        %7179 = vmatpush1.msra.mxu0 %v1958
        %7180 = vmatprep.subr.mxu0 %v1971
        %7181 = vmatpush1.msra.mxu0 %v1970
        %7182 = vmatprep.subr.mxu0 %v1983
        %7183 = vmatpush1.msra.mxu0 %v1982
        %7184 = vmatprep.subr.mxu0 %v1995
        %7185 = vmatpush1.msra.mxu0 %v1994
        %7186 = vmatprep.subr.mxu0 %v2007
        %7187 = vmatpush1.msra.mxu0 %v2006
        %7188 = vmatprep.subr.mxu0 %v2019
        %7189 = vmatpush1.msra.mxu0 %v2018
        %7190 = vmatprep.subr.mxu0 %v2031
        %7191 = vmatpush1.msra.mxu0 %v2030
        %7192 = vmatprep.subr.mxu0 %v2043
        %7193 = vmatpush1.msra.mxu0 %v2042
        %7194 = vmatprep.subr.mxu0 %v2055
        %7195 = vmatpush1.msra.mxu0 %v2054
        %7196 = vmatprep.subr.mxu0 %v2067
        %7197 = vmatpush1.msra.mxu0 %v2066
        %7198 = vmatprep.subr.mxu0 %v2079
        %7199 = vmatpush1.msra.mxu0 %v2078
        %7200 = vmatprep.subr.mxu0 %v2091
        %7201 = vmatpush1.msra.mxu0 %v2090
        %7202 = vmatprep.subr.mxu0 %v2103
        %7203 = vmatpush1.msra.mxu0 %v2102
        %7204 = vmatprep.subr.mxu0 %v2115
        %7205 = vmatpush1.msra.mxu0 %v2114
        %7206 = vmatprep.mubr.f32.mxu0 %v1719
        %7207 = vmatmul.mubr.f32.gmra.mrb[0].mxu0 %v1718
        %v7208 = vpop.f32.mrb[0].mxu0
        %v7209 = vadd.f32 %v4845, %v7208
        %v7210 = vpop.f32.mrb[0].mxu0
        %v7211 = vadd.f32 %v4849, %v7210
        %7212 = vdwg.mxu0
        %7213 = vmatprep.subr.mxu0 %v2127
        %7214 = vmatpush1.msra.mxu0 %v2126
        %7215 = vmatprep.subr.mxu0 %v2139
        %7216 = vmatpush1.msra.mxu0 %v2138
        %7217 = vmatprep.subr.mxu0 %v2151
        %7218 = vmatpush1.msra.mxu0 %v2150
        %7219 = vmatprep.subr.mxu0 %v2163
        %7220 = vmatpush1.msra.mxu0 %v2162
        %7221 = vmatprep.subr.mxu0 %v2175
        %7222 = vmatpush1.msra.mxu0 %v2174
        %7223 = vmatprep.subr.mxu0 %v2187
        %7224 = vmatpush1.msra.mxu0 %v2186
        %7225 = vmatprep.subr.mxu0 %v2199
        %7226 = vmatpush1.msra.mxu0 %v2198
        %7227 = vmatprep.subr.mxu0 %v2211
        %7228 = vmatpush1.msra.mxu0 %v2210
        %7229 = vmatprep.subr.mxu0 %v2223
        %7230 = vmatpush1.msra.mxu0 %v2222
        %7231 = vmatprep.subr.mxu0 %v2235
        %7232 = vmatpush1.msra.mxu0 %v2234
        %7233 = vmatprep.subr.mxu0 %v2247
        %7234 = vmatpush1.msra.mxu0 %v2246
        %7235 = vmatprep.subr.mxu0 %v2259
        %7236 = vmatpush1.msra.mxu0 %v2258
        %7237 = vmatprep.subr.mxu0 %v2271
        %7238 = vmatpush1.msra.mxu0 %v2270
        %7239 = vmatprep.subr.mxu0 %v2283
        %7240 = vmatpush1.msra.mxu0 %v2282
        %7241 = vmatprep.subr.mxu0 %v2295
        %7242 = vmatpush1.msra.mxu0 %v2294
        %7243 = vmatprep.subr.mxu0 %v2307
        %7244 = vmatpush1.msra.mxu0 %v2306
        %7245 = vmatprep.subr.mxu0 %v2319
        %7246 = vmatpush1.msra.mxu0 %v2318
        %7247 = vmatprep.subr.mxu0 %v2331
        %7248 = vmatpush1.msra.mxu0 %v2330
        %7249 = vmatprep.subr.mxu0 %v2343
        %7250 = vmatpush1.msra.mxu0 %v2342
        %7251 = vmatprep.subr.mxu0 %v2355
        %7252 = vmatpush1.msra.mxu0 %v2354
        %7253 = vmatprep.subr.mxu0 %v2367
        %7254 = vmatpush1.msra.mxu0 %v2366
        %7255 = vmatprep.subr.mxu0 %v2379
        %7256 = vmatpush1.msra.mxu0 %v2378
        %7257 = vmatprep.subr.mxu0 %v2391
        %7258 = vmatpush1.msra.mxu0 %v2390
        %7259 = vmatprep.subr.mxu0 %v2403
        %7260 = vmatpush1.msra.mxu0 %v2402
        %7261 = vmatprep.subr.mxu0 %v2415
        %7262 = vmatpush1.msra.mxu0 %v2414
        %7263 = vmatprep.subr.mxu0 %v2427
        %7264 = vmatpush1.msra.mxu0 %v2426
        %7265 = vmatprep.subr.mxu0 %v2439
        %7266 = vmatpush1.msra.mxu0 %v2438
        %7267 = vmatprep.subr.mxu0 %v2451
        %7268 = vmatpush1.msra.mxu0 %v2450
        %7269 = vmatprep.subr.mxu0 %v2463
        %7270 = vmatpush1.msra.mxu0 %v2462
        %7271 = vmatprep.subr.mxu0 %v2475
        %7272 = vmatpush1.msra.mxu0 %v2474
        %7273 = vmatprep.subr.mxu0 %v2487
        %7274 = vmatpush1.msra.mxu0 %v2486
        %7275 = vmatprep.subr.mxu0 %v2499
        %7276 = vmatpush1.msra.mxu0 %v2498
        %7277 = vmatprep.mubr.f32.mxu0 %v1721
        %7278 = vmatmul.mubr.f32.gmra.mrb[0].mxu0 %v1720
        %v7279 = vpop.f32.mrb[0].mxu0
        %v7280 = vadd.f32 %v7209, %v7279
        %v7281 = vpop.f32.mrb[0].mxu0
        %v7282 = vadd.f32 %v7211, %v7281
        %7283 = vdwg.mxu0
        %7284 = vmatprep.subr.mxu0 %v2511
        %7285 = vmatpush1.msra.mxu0 %v2510
        %7286 = vmatprep.subr.mxu0 %v2523
        %7287 = vmatpush1.msra.mxu0 %v2522
        %7288 = vmatprep.subr.mxu0 %v2535
        %7289 = vmatpush1.msra.mxu0 %v2534
        %7290 = vmatprep.subr.mxu0 %v2547
        %7291 = vmatpush1.msra.mxu0 %v2546
        %7292 = vmatprep.subr.mxu0 %v2559
        %7293 = vmatpush1.msra.mxu0 %v2558
        %7294 = vmatprep.subr.mxu0 %v2571
        %7295 = vmatpush1.msra.mxu0 %v2570
        %7296 = vmatprep.subr.mxu0 %v2583
        %7297 = vmatpush1.msra.mxu0 %v2582
        %7298 = vmatprep.subr.mxu0 %v2595
        %7299 = vmatpush1.msra.mxu0 %v2594
        %7300 = vmatprep.subr.mxu0 %v2607
        %7301 = vmatpush1.msra.mxu0 %v2606
        %7302 = vmatprep.subr.mxu0 %v2619
        %7303 = vmatpush1.msra.mxu0 %v2618
        %7304 = vmatprep.subr.mxu0 %v2631
        %7305 = vmatpush1.msra.mxu0 %v2630
        %7306 = vmatprep.subr.mxu0 %v2643
        %7307 = vmatpush1.msra.mxu0 %v2642
        %7308 = vmatprep.subr.mxu0 %v2655
        %7309 = vmatpush1.msra.mxu0 %v2654
        %7310 = vmatprep.subr.mxu0 %v2667
        %7311 = vmatpush1.msra.mxu0 %v2666
        %7312 = vmatprep.subr.mxu0 %v2679
        %7313 = vmatpush1.msra.mxu0 %v2678
        %7314 = vmatprep.subr.mxu0 %v2691
        %7315 = vmatpush1.msra.mxu0 %v2690
        %7316 = vmatprep.subr.mxu0 %v2703
        %7317 = vmatpush1.msra.mxu0 %v2702
        %7318 = vmatprep.subr.mxu0 %v2715
        %7319 = vmatpush1.msra.mxu0 %v2714
        %7320 = vmatprep.subr.mxu0 %v2727
        %7321 = vmatpush1.msra.mxu0 %v2726
        %7322 = vmatprep.subr.mxu0 %v2739
        %7323 = vmatpush1.msra.mxu0 %v2738
        %7324 = vmatprep.subr.mxu0 %v2751
        %7325 = vmatpush1.msra.mxu0 %v2750
        %7326 = vmatprep.subr.mxu0 %v2763
        %7327 = vmatpush1.msra.mxu0 %v2762
        %7328 = vmatprep.subr.mxu0 %v2775
        %7329 = vmatpush1.msra.mxu0 %v2774
        %7330 = vmatprep.subr.mxu0 %v2787
        %7331 = vmatpush1.msra.mxu0 %v2786
        %7332 = vmatprep.subr.mxu0 %v2799
        %7333 = vmatpush1.msra.mxu0 %v2798
        %7334 = vmatprep.subr.mxu0 %v2811
        %7335 = vmatpush1.msra.mxu0 %v2810
        %7336 = vmatprep.subr.mxu0 %v2823
        %7337 = vmatpush1.msra.mxu0 %v2822
        %7338 = vmatprep.subr.mxu0 %v2835
        %7339 = vmatpush1.msra.mxu0 %v2834
        %7340 = vmatprep.subr.mxu0 %v2847
        %7341 = vmatpush1.msra.mxu0 %v2846
        %7342 = vmatprep.subr.mxu0 %v2859
        %7343 = vmatpush1.msra.mxu0 %v2858
        %7344 = vmatprep.subr.mxu0 %v2871
        %7345 = vmatpush1.msra.mxu0 %v2870
        %7346 = vmatprep.subr.mxu0 %v2883
        %7347 = vmatpush1.msra.mxu0 %v2882
        %7348 = vmatprep.mubr.f32.mxu0 %v1723
        %7349 = vmatmul.mubr.f32.gmra.mrb[0].mxu0 %v1722
        %v7350 = vpop.f32.mrb[0].mxu0
        %v7351 = vadd.f32 %v7280, %v7350
        %v7352 = vpop.f32.mrb[0].mxu0
        %v7353 = vadd.f32 %v7282, %v7352
        %7354 = vdwg.mxu0
        %7355 = vmatprep.subr.mxu0 %v2895
        %7356 = vmatpush1.msra.mxu0 %v2894
        %7357 = vmatprep.subr.mxu0 %v2907
        %7358 = vmatpush1.msra.mxu0 %v2906
        %7359 = vmatprep.subr.mxu0 %v2919
        %7360 = vmatpush1.msra.mxu0 %v2918
        %7361 = vmatprep.subr.mxu0 %v2931
        %7362 = vmatpush1.msra.mxu0 %v2930
        %7363 = vmatprep.subr.mxu0 %v2943
        %7364 = vmatpush1.msra.mxu0 %v2942
        %7365 = vmatprep.subr.mxu0 %v2955
        %7366 = vmatpush1.msra.mxu0 %v2954
        %7367 = vmatprep.subr.mxu0 %v2967
        %7368 = vmatpush1.msra.mxu0 %v2966
        %7369 = vmatprep.subr.mxu0 %v2979
        %7370 = vmatpush1.msra.mxu0 %v2978
        %7371 = vmatprep.subr.mxu0 %v2991
        %7372 = vmatpush1.msra.mxu0 %v2990
        %7373 = vmatprep.subr.mxu0 %v3003
        %7374 = vmatpush1.msra.mxu0 %v3002
        %7375 = vmatprep.subr.mxu0 %v3015
        %7376 = vmatpush1.msra.mxu0 %v3014
        %7377 = vmatprep.subr.mxu0 %v3027
        %7378 = vmatpush1.msra.mxu0 %v3026
        %7379 = vmatprep.subr.mxu0 %v3039
        %7380 = vmatpush1.msra.mxu0 %v3038
        %7381 = vmatprep.subr.mxu0 %v3051
        %7382 = vmatpush1.msra.mxu0 %v3050
        %7383 = vmatprep.subr.mxu0 %v3063
        %7384 = vmatpush1.msra.mxu0 %v3062
        %7385 = vmatprep.subr.mxu0 %v3075
        %7386 = vmatpush1.msra.mxu0 %v3074
        %7387 = vmatprep.subr.mxu0 %v3087
        %7388 = vmatpush1.msra.mxu0 %v3086
        %7389 = vmatprep.subr.mxu0 %v3099
        %7390 = vmatpush1.msra.mxu0 %v3098
        %7391 = vmatprep.subr.mxu0 %v3111
        %7392 = vmatpush1.msra.mxu0 %v3110
        %7393 = vmatprep.subr.mxu0 %v3123
        %7394 = vmatpush1.msra.mxu0 %v3122
        %7395 = vmatprep.subr.mxu0 %v3135
        %7396 = vmatpush1.msra.mxu0 %v3134
        %7397 = vmatprep.subr.mxu0 %v3147
        %7398 = vmatpush1.msra.mxu0 %v3146
        %7399 = vmatprep.subr.mxu0 %v3159
        %7400 = vmatpush1.msra.mxu0 %v3158
        %7401 = vmatprep.subr.mxu0 %v3171
        %7402 = vmatpush1.msra.mxu0 %v3170
        %7403 = vmatprep.subr.mxu0 %v3183
        %7404 = vmatpush1.msra.mxu0 %v3182
        %7405 = vmatprep.subr.mxu0 %v3195
        %7406 = vmatpush1.msra.mxu0 %v3194
        %7407 = vmatprep.subr.mxu0 %v3207
        %7408 = vmatpush1.msra.mxu0 %v3206
        %7409 = vmatprep.subr.mxu0 %v3219
        %7410 = vmatpush1.msra.mxu0 %v3218
        %7411 = vmatprep.subr.mxu0 %v3231
        %7412 = vmatpush1.msra.mxu0 %v3230
        %7413 = vmatprep.subr.mxu0 %v3243
        %7414 = vmatpush1.msra.mxu0 %v3242
        %7415 = vmatprep.subr.mxu0 %v3255
        %7416 = vmatpush1.msra.mxu0 %v3254
        %7417 = vmatprep.subr.mxu0 %v3267
        %7418 = vmatpush1.msra.mxu0 %v3266
        %7419 = vmatprep.mubr.f32.mxu0 %v1725
        %7420 = vmatmul.mubr.f32.gmra.mrb[0].mxu0 %v1724
        %v7421 = vpop.f32.mrb[0].mxu0
        %v7422 = vadd.f32 %v7351, %v7421
        %v7423 = vpop.f32.mrb[0].mxu0
        %v7424 = vadd.f32 %v7353, %v7423
        %7425 = vdwg.mxu0
        %7426 = vmatprep.subr.mxu0 %v3279
        %7427 = vmatpush1.msra.mxu0 %v3278
        %7428 = vmatprep.subr.mxu0 %v3291
        %7429 = vmatpush1.msra.mxu0 %v3290
        %7430 = vmatprep.subr.mxu0 %v3303
        %7431 = vmatpush1.msra.mxu0 %v3302
        %7432 = vmatprep.subr.mxu0 %v3315
        %7433 = vmatpush1.msra.mxu0 %v3314
        %7434 = vmatprep.subr.mxu0 %v3327
        %7435 = vmatpush1.msra.mxu0 %v3326
        %7436 = vmatprep.subr.mxu0 %v3339
        %7437 = vmatpush1.msra.mxu0 %v3338
        %7438 = vmatprep.subr.mxu0 %v3351
        %7439 = vmatpush1.msra.mxu0 %v3350
        %7440 = vmatprep.subr.mxu0 %v3363
        %7441 = vmatpush1.msra.mxu0 %v3362
        %7442 = vmatprep.subr.mxu0 %v3375
        %7443 = vmatpush1.msra.mxu0 %v3374
        %7444 = vmatprep.subr.mxu0 %v3387
        %7445 = vmatpush1.msra.mxu0 %v3386
        %7446 = vmatprep.subr.mxu0 %v3399
        %7447 = vmatpush1.msra.mxu0 %v3398
        %7448 = vmatprep.subr.mxu0 %v3411
        %7449 = vmatpush1.msra.mxu0 %v3410
        %7450 = vmatprep.subr.mxu0 %v3423
        %7451 = vmatpush1.msra.mxu0 %v3422
        %7452 = vmatprep.subr.mxu0 %v3435
        %7453 = vmatpush1.msra.mxu0 %v3434
        %7454 = vmatprep.subr.mxu0 %v3447
        %7455 = vmatpush1.msra.mxu0 %v3446
        %7456 = vmatprep.subr.mxu0 %v3459
        %7457 = vmatpush1.msra.mxu0 %v3458
        %7458 = vmatprep.subr.mxu0 %v3471
        %7459 = vmatpush1.msra.mxu0 %v3470
        %7460 = vmatprep.subr.mxu0 %v3483
        %7461 = vmatpush1.msra.mxu0 %v3482
        %7462 = vmatprep.subr.mxu0 %v3495
        %7463 = vmatpush1.msra.mxu0 %v3494
        %7464 = vmatprep.subr.mxu0 %v3507
        %7465 = vmatpush1.msra.mxu0 %v3506
        %7466 = vmatprep.subr.mxu0 %v3519
        %7467 = vmatpush1.msra.mxu0 %v3518
        %7468 = vmatprep.subr.mxu0 %v3531
        %7469 = vmatpush1.msra.mxu0 %v3530
        %7470 = vmatprep.subr.mxu0 %v3543
        %7471 = vmatpush1.msra.mxu0 %v3542
        %7472 = vmatprep.subr.mxu0 %v3555
        %7473 = vmatpush1.msra.mxu0 %v3554
        %7474 = vmatprep.subr.mxu0 %v3567
        %7475 = vmatpush1.msra.mxu0 %v3566
        %7476 = vmatprep.subr.mxu0 %v3579
        %7477 = vmatpush1.msra.mxu0 %v3578
        %7478 = vmatprep.subr.mxu0 %v3591
        %7479 = vmatpush1.msra.mxu0 %v3590
        %7480 = vmatprep.subr.mxu0 %v3603
        %7481 = vmatpush1.msra.mxu0 %v3602
        %7482 = vmatprep.subr.mxu0 %v3615
        %7483 = vmatpush1.msra.mxu0 %v3614
        %7484 = vmatprep.subr.mxu0 %v3627
        %7485 = vmatpush1.msra.mxu0 %v3626
        %7486 = vmatprep.subr.mxu0 %v3639
        %7487 = vmatpush1.msra.mxu0 %v3638
        %7488 = vmatprep.subr.mxu0 %v3651
        %7489 = vmatpush1.msra.mxu0 %v3650
        %7490 = vmatprep.mubr.f32.mxu0 %v1727
        %7491 = vmatmul.mubr.f32.gmra.mrb[0].mxu0 %v1726
        %v7492 = vpop.f32.mrb[0].mxu0
        %v7493 = vadd.f32 %v7422, %v7492
        %v7494 = vpop.f32.mrb[0].mxu0
        %v7495 = vadd.f32 %v7424, %v7494
        %7496 = vdwg.mxu0
        %7497 = vmatprep.subr.mxu0 %v3663
        %7498 = vmatpush1.msra.mxu0 %v3662
        %7499 = vmatprep.subr.mxu0 %v3675
        %7500 = vmatpush1.msra.mxu0 %v3674
        %7501 = vmatprep.subr.mxu0 %v3687
        %7502 = vmatpush1.msra.mxu0 %v3686
        %7503 = vmatprep.subr.mxu0 %v3699
        %7504 = vmatpush1.msra.mxu0 %v3698
        %7505 = vmatprep.subr.mxu0 %v3711
        %7506 = vmatpush1.msra.mxu0 %v3710
        %7507 = vmatprep.subr.mxu0 %v3723
        %7508 = vmatpush1.msra.mxu0 %v3722
        %7509 = vmatprep.subr.mxu0 %v3735
        %7510 = vmatpush1.msra.mxu0 %v3734
        %7511 = vmatprep.subr.mxu0 %v3747
        %7512 = vmatpush1.msra.mxu0 %v3746
        %7513 = vmatprep.subr.mxu0 %v3759
        %7514 = vmatpush1.msra.mxu0 %v3758
        %7515 = vmatprep.subr.mxu0 %v3771
        %7516 = vmatpush1.msra.mxu0 %v3770
        %7517 = vmatprep.subr.mxu0 %v3783
        %7518 = vmatpush1.msra.mxu0 %v3782
        %7519 = vmatprep.subr.mxu0 %v3795
        %7520 = vmatpush1.msra.mxu0 %v3794
        %7521 = vmatprep.subr.mxu0 %v3807
        %7522 = vmatpush1.msra.mxu0 %v3806
        %7523 = vmatprep.subr.mxu0 %v3819
        %7524 = vmatpush1.msra.mxu0 %v3818
        %7525 = vmatprep.subr.mxu0 %v3831
        %7526 = vmatpush1.msra.mxu0 %v3830
        %7527 = vmatprep.subr.mxu0 %v3843
        %7528 = vmatpush1.msra.mxu0 %v3842
        %7529 = vmatprep.subr.mxu0 %v3855
        %7530 = vmatpush1.msra.mxu0 %v3854
        %7531 = vmatprep.subr.mxu0 %v3867
        %7532 = vmatpush1.msra.mxu0 %v3866
        %7533 = vmatprep.subr.mxu0 %v3879
        %7534 = vmatpush1.msra.mxu0 %v3878
        %7535 = vmatprep.subr.mxu0 %v3891
        %7536 = vmatpush1.msra.mxu0 %v3890
        %7537 = vmatprep.subr.mxu0 %v3903
        %7538 = vmatpush1.msra.mxu0 %v3902
        %7539 = vmatprep.subr.mxu0 %v3915
        %7540 = vmatpush1.msra.mxu0 %v3914
        %7541 = vmatprep.subr.mxu0 %v3927
        %7542 = vmatpush1.msra.mxu0 %v3926
        %7543 = vmatprep.subr.mxu0 %v3939
        %7544 = vmatpush1.msra.mxu0 %v3938
        %7545 = vmatprep.subr.mxu0 %v3951
        %7546 = vmatpush1.msra.mxu0 %v3950
        %7547 = vmatprep.subr.mxu0 %v3963
        %7548 = vmatpush1.msra.mxu0 %v3962
        %7549 = vmatprep.subr.mxu0 %v3975
        %7550 = vmatpush1.msra.mxu0 %v3974
        %7551 = vmatprep.subr.mxu0 %v3987
        %7552 = vmatpush1.msra.mxu0 %v3986
        %7553 = vmatprep.subr.mxu0 %v3999
        %7554 = vmatpush1.msra.mxu0 %v3998
        %7555 = vmatprep.subr.mxu0 %v4011
        %7556 = vmatpush1.msra.mxu0 %v4010
        %7557 = vmatprep.subr.mxu0 %v4023
        %7558 = vmatpush1.msra.mxu0 %v4022
        %7559 = vmatprep.subr.mxu0 %v4035
        %7560 = vmatpush1.msra.mxu0 %v4034
        %7561 = vmatprep.mubr.f32.mxu0 %v1729
        %7562 = vmatmul.mubr.f32.gmra.mrb[0].mxu0 %v1728
        %v7563 = vpop.f32.mrb[0].mxu0
        %v7564 = vadd.f32 %v7493, %v7563
        %v7565 = vpop.f32.mrb[0].mxu0
        %v7566 = vadd.f32 %v7495, %v7565
        %7567 = vdwg.mxu0
        %7568 = vmatprep.subr.mxu0 %v4047
        %7569 = vmatpush1.msra.mxu0 %v4046
        %7570 = vmatprep.subr.mxu0 %v4059
        %7571 = vmatpush1.msra.mxu0 %v4058
        %7572 = vmatprep.subr.mxu0 %v4071
        %7573 = vmatpush1.msra.mxu0 %v4070
        %7574 = vmatprep.subr.mxu0 %v4083
        %7575 = vmatpush1.msra.mxu0 %v4082
        %7576 = vmatprep.subr.mxu0 %v4095
        %7577 = vmatpush1.msra.mxu0 %v4094
        %7578 = vmatprep.subr.mxu0 %v4107
        %7579 = vmatpush1.msra.mxu0 %v4106
        %7580 = vmatprep.subr.mxu0 %v4119
        %7581 = vmatpush1.msra.mxu0 %v4118
        %7582 = vmatprep.subr.mxu0 %v4131
        %7583 = vmatpush1.msra.mxu0 %v4130
        %7584 = vmatprep.subr.mxu0 %v4143
        %7585 = vmatpush1.msra.mxu0 %v4142
        %7586 = vmatprep.subr.mxu0 %v4155
        %7587 = vmatpush1.msra.mxu0 %v4154
        %7588 = vmatprep.subr.mxu0 %v4167
        %7589 = vmatpush1.msra.mxu0 %v4166
        %7590 = vmatprep.subr.mxu0 %v4179
        %7591 = vmatpush1.msra.mxu0 %v4178
        %7592 = vmatprep.subr.mxu0 %v4191
        %7593 = vmatpush1.msra.mxu0 %v4190
        %7594 = vmatprep.subr.mxu0 %v4203
        %7595 = vmatpush1.msra.mxu0 %v4202
        %7596 = vmatprep.subr.mxu0 %v4215
        %7597 = vmatpush1.msra.mxu0 %v4214
        %7598 = vmatprep.subr.mxu0 %v4227
        %7599 = vmatpush1.msra.mxu0 %v4226
        %7600 = vmatprep.subr.mxu0 %v4239
        %7601 = vmatpush1.msra.mxu0 %v4238
        %7602 = vmatprep.subr.mxu0 %v4251
        %7603 = vmatpush1.msra.mxu0 %v4250
        %7604 = vmatprep.subr.mxu0 %v4263
        %7605 = vmatpush1.msra.mxu0 %v4262
        %7606 = vmatprep.subr.mxu0 %v4275
        %7607 = vmatpush1.msra.mxu0 %v4274
        %7608 = vmatprep.subr.mxu0 %v4287
        %7609 = vmatpush1.msra.mxu0 %v4286
        %7610 = vmatprep.subr.mxu0 %v4299
        %7611 = vmatpush1.msra.mxu0 %v4298
        %7612 = vmatprep.subr.mxu0 %v4311
        %7613 = vmatpush1.msra.mxu0 %v4310
        %7614 = vmatprep.subr.mxu0 %v4323
        %7615 = vmatpush1.msra.mxu0 %v4322
        %7616 = vmatprep.subr.mxu0 %v4335
        %7617 = vmatpush1.msra.mxu0 %v4334
        %7618 = vmatprep.subr.mxu0 %v4347
        %7619 = vmatpush1.msra.mxu0 %v4346
        %7620 = vmatprep.subr.mxu0 %v4359
        %7621 = vmatpush1.msra.mxu0 %v4358
        %7622 = vmatprep.subr.mxu0 %v4371
        %7623 = vmatpush1.msra.mxu0 %v4370
        %7624 = vmatprep.subr.mxu0 %v4383
        %7625 = vmatpush1.msra.mxu0 %v4382
        %7626 = vmatprep.subr.mxu0 %v4395
        %7627 = vmatpush1.msra.mxu0 %v4394
        %7628 = vmatprep.subr.mxu0 %v4407
        %7629 = vmatpush1.msra.mxu0 %v4406
        %7630 = vmatprep.subr.mxu0 %v4419
        %7631 = vmatpush1.msra.mxu0 %v4418
        %7632 = vmatprep.mubr.f32.mxu0 %v1731
        %7633 = vmatmul.mubr.f32.gmra.mrb[0].mxu0 %v1730
        %v7634 = vpop.f32.mrb[0].mxu0
        %v7635 = vadd.f32 %v7564, %v7634
        %v7636 = vpop.f32.mrb[0].mxu0
        %v7637 = vadd.f32 %v7566, %v7636
        %7638 = vdwg.mxu0
        %7639 = vmatprep.subr.mxu0 %v4431
        %7640 = vmatpush1.msra.mxu0 %v4430
        %7641 = vmatprep.subr.mxu0 %v4443
        %7642 = vmatpush1.msra.mxu0 %v4442
        %7643 = vmatprep.subr.mxu0 %v4455
        %7644 = vmatpush1.msra.mxu0 %v4454
        %7645 = vmatprep.subr.mxu0 %v4467
        %7646 = vmatpush1.msra.mxu0 %v4466
        %7647 = vmatprep.subr.mxu0 %v4479
        %7648 = vmatpush1.msra.mxu0 %v4478
        %7649 = vmatprep.subr.mxu0 %v4491
        %7650 = vmatpush1.msra.mxu0 %v4490
        %7651 = vmatprep.subr.mxu0 %v4503
        %7652 = vmatpush1.msra.mxu0 %v4502
        %7653 = vmatprep.subr.mxu0 %v4515
        %7654 = vmatpush1.msra.mxu0 %v4514
        %7655 = vmatprep.subr.mxu0 %v4527
        %7656 = vmatpush1.msra.mxu0 %v4526
        %7657 = vmatprep.subr.mxu0 %v4539
        %7658 = vmatpush1.msra.mxu0 %v4538
        %7659 = vmatprep.subr.mxu0 %v4551
        %7660 = vmatpush1.msra.mxu0 %v4550
        %7661 = vmatprep.subr.mxu0 %v4563
        %7662 = vmatpush1.msra.mxu0 %v4562
        %7663 = vmatprep.subr.mxu0 %v4575
        %7664 = vmatpush1.msra.mxu0 %v4574
        %7665 = vmatprep.subr.mxu0 %v4587
        %7666 = vmatpush1.msra.mxu0 %v4586
        %7667 = vmatprep.subr.mxu0 %v4599
        %7668 = vmatpush1.msra.mxu0 %v4598
        %7669 = vmatprep.subr.mxu0 %v4611
        %7670 = vmatpush1.msra.mxu0 %v4610
        %7671 = vmatprep.subr.mxu0 %v4623
        %7672 = vmatpush1.msra.mxu0 %v4622
        %7673 = vmatprep.subr.mxu0 %v4635
        %7674 = vmatpush1.msra.mxu0 %v4634
        %7675 = vmatprep.subr.mxu0 %v4647
        %7676 = vmatpush1.msra.mxu0 %v4646
        %7677 = vmatprep.subr.mxu0 %v4659
        %7678 = vmatpush1.msra.mxu0 %v4658
        %7679 = vmatprep.subr.mxu0 %v4671
        %7680 = vmatpush1.msra.mxu0 %v4670
        %7681 = vmatprep.subr.mxu0 %v4683
        %7682 = vmatpush1.msra.mxu0 %v4682
        %7683 = vmatprep.subr.mxu0 %v4695
        %7684 = vmatpush1.msra.mxu0 %v4694
        %7685 = vmatprep.subr.mxu0 %v4707
        %7686 = vmatpush1.msra.mxu0 %v4706
        %7687 = vmatprep.subr.mxu0 %v4719
        %7688 = vmatpush1.msra.mxu0 %v4718
        %7689 = vmatprep.subr.mxu0 %v4731
        %7690 = vmatpush1.msra.mxu0 %v4730
        %7691 = vmatprep.subr.mxu0 %v4743
        %7692 = vmatpush1.msra.mxu0 %v4742
        %7693 = vmatprep.subr.mxu0 %v4755
        %7694 = vmatpush1.msra.mxu0 %v4754
        %7695 = vmatprep.subr.mxu0 %v4767
        %7696 = vmatpush1.msra.mxu0 %v4766
        %7697 = vmatprep.subr.mxu0 %v4779
        %7698 = vmatpush1.msra.mxu0 %v4778
        %7699 = vmatprep.subr.mxu0 %v4791
        %7700 = vmatpush1.msra.mxu0 %v4790
        %7701 = vmatprep.subr.mxu0 %v4803
        %7702 = vmatpush1.msra.mxu0 %v4802
        %7703 = vmatprep.mubr.f32.mxu0 %v1733
        %7704 = vmatmul.mubr.f32.gmra.mrb[0].mxu0 %v1732
        %v7705 = vpop.f32.mrb[0].mxu0
        %v7706 = vadd.f32 %v7635, %v7705
        %v7707 = vpop.f32.mrb[0].mxu0
        %v7708 = vadd.f32 %v7637, %v7707
        %7709 = vdwg.mxu0
        %7710 = vmatprep.subr.mxu0 %v1745
        %7711 = vmatpush1.msra.mxu0 %v1744
        %7712 = vmatprep.subr.mxu0 %v1757
        %7713 = vmatpush1.msra.mxu0 %v1756
        %7714 = vmatprep.subr.mxu0 %v1769
        %7715 = vmatpush1.msra.mxu0 %v1768
        %7716 = vmatprep.subr.mxu0 %v1781
        %7717 = vmatpush1.msra.mxu0 %v1780
        %7718 = vmatprep.subr.mxu0 %v1793
        %7719 = vmatpush1.msra.mxu0 %v1792
        %7720 = vmatprep.subr.mxu0 %v1805
        %7721 = vmatpush1.msra.mxu0 %v1804
        %7722 = vmatprep.subr.mxu0 %v1817
        %7723 = vmatpush1.msra.mxu0 %v1816
        %7724 = vmatprep.subr.mxu0 %v1829
        %7725 = vmatpush1.msra.mxu0 %v1828
        %7726 = vmatprep.subr.mxu0 %v1841
        %7727 = vmatpush1.msra.mxu0 %v1840
        %7728 = vmatprep.subr.mxu0 %v1853
        %7729 = vmatpush1.msra.mxu0 %v1852
        %7730 = vmatprep.subr.mxu0 %v1865
        %7731 = vmatpush1.msra.mxu0 %v1864
        %7732 = vmatprep.subr.mxu0 %v1877
        %7733 = vmatpush1.msra.mxu0 %v1876
        %7734 = vmatprep.subr.mxu0 %v1889
        %7735 = vmatpush1.msra.mxu0 %v1888
        %7736 = vmatprep.subr.mxu0 %v1901
        %7737 = vmatpush1.msra.mxu0 %v1900
        %7738 = vmatprep.subr.mxu0 %v1913
        %7739 = vmatpush1.msra.mxu0 %v1912
        %7740 = vmatprep.subr.mxu0 %v1925
        %7741 = vmatpush1.msra.mxu0 %v1924
        %7742 = vmatprep.subr.mxu0 %v1937
        %7743 = vmatpush1.msra.mxu0 %v1936
        %7744 = vmatprep.subr.mxu0 %v1949
        %7745 = vmatpush1.msra.mxu0 %v1948
        %7746 = vmatprep.subr.mxu0 %v1961
        %7747 = vmatpush1.msra.mxu0 %v1960
        %7748 = vmatprep.subr.mxu0 %v1973
        %7749 = vmatpush1.msra.mxu0 %v1972
        %7750 = vmatprep.subr.mxu0 %v1985
        %7751 = vmatpush1.msra.mxu0 %v1984
        %7752 = vmatprep.subr.mxu0 %v1997
        %7753 = vmatpush1.msra.mxu0 %v1996
        %7754 = vmatprep.subr.mxu0 %v2009
        %7755 = vmatpush1.msra.mxu0 %v2008
        %7756 = vmatprep.subr.mxu0 %v2021
        %7757 = vmatpush1.msra.mxu0 %v2020
        %7758 = vmatprep.subr.mxu0 %v2033
        %7759 = vmatpush1.msra.mxu0 %v2032
        %7760 = vmatprep.subr.mxu0 %v2045
        %7761 = vmatpush1.msra.mxu0 %v2044
        %7762 = vmatprep.subr.mxu0 %v2057
        %7763 = vmatpush1.msra.mxu0 %v2056
        %7764 = vmatprep.subr.mxu0 %v2069
        %7765 = vmatpush1.msra.mxu0 %v2068
        %7766 = vmatprep.subr.mxu0 %v2081
        %7767 = vmatpush1.msra.mxu0 %v2080
        %7768 = vmatprep.subr.mxu0 %v2093
        %7769 = vmatpush1.msra.mxu0 %v2092
        %7770 = vmatprep.subr.mxu0 %v2105
        %7771 = vmatpush1.msra.mxu0 %v2104
        %7772 = vmatprep.subr.mxu0 %v2117
        %7773 = vmatpush1.msra.mxu0 %v2116
        %7774 = vmatprep.mubr.f32.mxu0 %v1719
        %7775 = vmatmul.mubr.f32.gmra.mrb[0].mxu0 %v1718
        %v7776 = vpop.f32.mrb[0].mxu0
        %v7777 = vadd.f32 %v4853, %v7776
        %v7778 = vpop.f32.mrb[0].mxu0
        %v7779 = vadd.f32 %v4857, %v7778
        %7780 = vdwg.mxu0
        %7781 = vmatprep.subr.mxu0 %v2129
        %7782 = vmatpush1.msra.mxu0 %v2128
        %7783 = vmatprep.subr.mxu0 %v2141
        %7784 = vmatpush1.msra.mxu0 %v2140
        %7785 = vmatprep.subr.mxu0 %v2153
        %7786 = vmatpush1.msra.mxu0 %v2152
        %7787 = vmatprep.subr.mxu0 %v2165
        %7788 = vmatpush1.msra.mxu0 %v2164
        %7789 = vmatprep.subr.mxu0 %v2177
        %7790 = vmatpush1.msra.mxu0 %v2176
        %7791 = vmatprep.subr.mxu0 %v2189
        %7792 = vmatpush1.msra.mxu0 %v2188
        %7793 = vmatprep.subr.mxu0 %v2201
        %7794 = vmatpush1.msra.mxu0 %v2200
        %7795 = vmatprep.subr.mxu0 %v2213
        %7796 = vmatpush1.msra.mxu0 %v2212
        %7797 = vmatprep.subr.mxu0 %v2225
        %7798 = vmatpush1.msra.mxu0 %v2224
        %7799 = vmatprep.subr.mxu0 %v2237
        %7800 = vmatpush1.msra.mxu0 %v2236
        %7801 = vmatprep.subr.mxu0 %v2249
        %7802 = vmatpush1.msra.mxu0 %v2248
        %7803 = vmatprep.subr.mxu0 %v2261
        %7804 = vmatpush1.msra.mxu0 %v2260
        %7805 = vmatprep.subr.mxu0 %v2273
        %7806 = vmatpush1.msra.mxu0 %v2272
        %7807 = vmatprep.subr.mxu0 %v2285
        %7808 = vmatpush1.msra.mxu0 %v2284
        %7809 = vmatprep.subr.mxu0 %v2297
        %7810 = vmatpush1.msra.mxu0 %v2296
        %7811 = vmatprep.subr.mxu0 %v2309
        %7812 = vmatpush1.msra.mxu0 %v2308
        %7813 = vmatprep.subr.mxu0 %v2321
        %7814 = vmatpush1.msra.mxu0 %v2320
        %7815 = vmatprep.subr.mxu0 %v2333
        %7816 = vmatpush1.msra.mxu0 %v2332
        %7817 = vmatprep.subr.mxu0 %v2345
        %7818 = vmatpush1.msra.mxu0 %v2344
        %7819 = vmatprep.subr.mxu0 %v2357
        %7820 = vmatpush1.msra.mxu0 %v2356
        %7821 = vmatprep.subr.mxu0 %v2369
        %7822 = vmatpush1.msra.mxu0 %v2368
        %7823 = vmatprep.subr.mxu0 %v2381
        %7824 = vmatpush1.msra.mxu0 %v2380
        %7825 = vmatprep.subr.mxu0 %v2393
        %7826 = vmatpush1.msra.mxu0 %v2392
        %7827 = vmatprep.subr.mxu0 %v2405
        %7828 = vmatpush1.msra.mxu0 %v2404
        %7829 = vmatprep.subr.mxu0 %v2417
        %7830 = vmatpush1.msra.mxu0 %v2416
        %7831 = vmatprep.subr.mxu0 %v2429
        %7832 = vmatpush1.msra.mxu0 %v2428
        %7833 = vmatprep.subr.mxu0 %v2441
        %7834 = vmatpush1.msra.mxu0 %v2440
        %7835 = vmatprep.subr.mxu0 %v2453
        %7836 = vmatpush1.msra.mxu0 %v2452
        %7837 = vmatprep.subr.mxu0 %v2465
        %7838 = vmatpush1.msra.mxu0 %v2464
        %7839 = vmatprep.subr.mxu0 %v2477
        %7840 = vmatpush1.msra.mxu0 %v2476
        %7841 = vmatprep.subr.mxu0 %v2489
        %7842 = vmatpush1.msra.mxu0 %v2488
        %7843 = vmatprep.subr.mxu0 %v2501
        %7844 = vmatpush1.msra.mxu0 %v2500
        %7845 = vmatprep.mubr.f32.mxu0 %v1721
        %7846 = vmatmul.mubr.f32.gmra.mrb[0].mxu0 %v1720
        %v7847 = vpop.f32.mrb[0].mxu0
        %v7848 = vadd.f32 %v7777, %v7847
        %v7849 = vpop.f32.mrb[0].mxu0
        %v7850 = vadd.f32 %v7779, %v7849
        %7851 = vdwg.mxu0
        %7852 = vmatprep.subr.mxu0 %v2513
        %7853 = vmatpush1.msra.mxu0 %v2512
        %7854 = vmatprep.subr.mxu0 %v2525
        %7855 = vmatpush1.msra.mxu0 %v2524
        %7856 = vmatprep.subr.mxu0 %v2537
        %7857 = vmatpush1.msra.mxu0 %v2536
        %7858 = vmatprep.subr.mxu0 %v2549
        %7859 = vmatpush1.msra.mxu0 %v2548
        %7860 = vmatprep.subr.mxu0 %v2561
        %7861 = vmatpush1.msra.mxu0 %v2560
        %7862 = vmatprep.subr.mxu0 %v2573
        %7863 = vmatpush1.msra.mxu0 %v2572
        %7864 = vmatprep.subr.mxu0 %v2585
        %7865 = vmatpush1.msra.mxu0 %v2584
        %7866 = vmatprep.subr.mxu0 %v2597
        %7867 = vmatpush1.msra.mxu0 %v2596
        %7868 = vmatprep.subr.mxu0 %v2609
        %7869 = vmatpush1.msra.mxu0 %v2608
        %7870 = vmatprep.subr.mxu0 %v2621
        %7871 = vmatpush1.msra.mxu0 %v2620
        %7872 = vmatprep.subr.mxu0 %v2633
        %7873 = vmatpush1.msra.mxu0 %v2632
        %7874 = vmatprep.subr.mxu0 %v2645
        %7875 = vmatpush1.msra.mxu0 %v2644
        %7876 = vmatprep.subr.mxu0 %v2657
        %7877 = vmatpush1.msra.mxu0 %v2656
        %7878 = vmatprep.subr.mxu0 %v2669
        %7879 = vmatpush1.msra.mxu0 %v2668
        %7880 = vmatprep.subr.mxu0 %v2681
        %7881 = vmatpush1.msra.mxu0 %v2680
        %7882 = vmatprep.subr.mxu0 %v2693
        %7883 = vmatpush1.msra.mxu0 %v2692
        %7884 = vmatprep.subr.mxu0 %v2705
        %7885 = vmatpush1.msra.mxu0 %v2704
        %7886 = vmatprep.subr.mxu0 %v2717
        %7887 = vmatpush1.msra.mxu0 %v2716
        %7888 = vmatprep.subr.mxu0 %v2729
        %7889 = vmatpush1.msra.mxu0 %v2728
        %7890 = vmatprep.subr.mxu0 %v2741
        %7891 = vmatpush1.msra.mxu0 %v2740
        %7892 = vmatprep.subr.mxu0 %v2753
        %7893 = vmatpush1.msra.mxu0 %v2752
        %7894 = vmatprep.subr.mxu0 %v2765
        %7895 = vmatpush1.msra.mxu0 %v2764
        %7896 = vmatprep.subr.mxu0 %v2777
        %7897 = vmatpush1.msra.mxu0 %v2776
        %7898 = vmatprep.subr.mxu0 %v2789
        %7899 = vmatpush1.msra.mxu0 %v2788
        %7900 = vmatprep.subr.mxu0 %v2801
        %7901 = vmatpush1.msra.mxu0 %v2800
        %7902 = vmatprep.subr.mxu0 %v2813
        %7903 = vmatpush1.msra.mxu0 %v2812
        %7904 = vmatprep.subr.mxu0 %v2825
        %7905 = vmatpush1.msra.mxu0 %v2824
        %7906 = vmatprep.subr.mxu0 %v2837
        %7907 = vmatpush1.msra.mxu0 %v2836
        %7908 = vmatprep.subr.mxu0 %v2849
        %7909 = vmatpush1.msra.mxu0 %v2848
        %7910 = vmatprep.subr.mxu0 %v2861
        %7911 = vmatpush1.msra.mxu0 %v2860
        %7912 = vmatprep.subr.mxu0 %v2873
        %7913 = vmatpush1.msra.mxu0 %v2872
        %7914 = vmatprep.subr.mxu0 %v2885
        %7915 = vmatpush1.msra.mxu0 %v2884
        %7916 = vmatprep.mubr.f32.mxu0 %v1723
        %7917 = vmatmul.mubr.f32.gmra.mrb[0].mxu0 %v1722
        %v7918 = vpop.f32.mrb[0].mxu0
        %v7919 = vadd.f32 %v7848, %v7918
        %v7920 = vpop.f32.mrb[0].mxu0
        %v7921 = vadd.f32 %v7850, %v7920
        %7922 = vdwg.mxu0
        %7923 = vmatprep.subr.mxu0 %v2897
        %7924 = vmatpush1.msra.mxu0 %v2896
        %7925 = vmatprep.subr.mxu0 %v2909
        %7926 = vmatpush1.msra.mxu0 %v2908
        %7927 = vmatprep.subr.mxu0 %v2921
        %7928 = vmatpush1.msra.mxu0 %v2920
        %7929 = vmatprep.subr.mxu0 %v2933
        %7930 = vmatpush1.msra.mxu0 %v2932
        %7931 = vmatprep.subr.mxu0 %v2945
        %7932 = vmatpush1.msra.mxu0 %v2944
        %7933 = vmatprep.subr.mxu0 %v2957
        %7934 = vmatpush1.msra.mxu0 %v2956
        %7935 = vmatprep.subr.mxu0 %v2969
        %7936 = vmatpush1.msra.mxu0 %v2968
        %7937 = vmatprep.subr.mxu0 %v2981
        %7938 = vmatpush1.msra.mxu0 %v2980
        %7939 = vmatprep.subr.mxu0 %v2993
        %7940 = vmatpush1.msra.mxu0 %v2992
        %7941 = vmatprep.subr.mxu0 %v3005
        %7942 = vmatpush1.msra.mxu0 %v3004
        %7943 = vmatprep.subr.mxu0 %v3017
        %7944 = vmatpush1.msra.mxu0 %v3016
        %7945 = vmatprep.subr.mxu0 %v3029
        %7946 = vmatpush1.msra.mxu0 %v3028
        %7947 = vmatprep.subr.mxu0 %v3041
        %7948 = vmatpush1.msra.mxu0 %v3040
        %7949 = vmatprep.subr.mxu0 %v3053
        %7950 = vmatpush1.msra.mxu0 %v3052
        %7951 = vmatprep.subr.mxu0 %v3065
        %7952 = vmatpush1.msra.mxu0 %v3064
        %7953 = vmatprep.subr.mxu0 %v3077
        %7954 = vmatpush1.msra.mxu0 %v3076
        %7955 = vmatprep.subr.mxu0 %v3089
        %7956 = vmatpush1.msra.mxu0 %v3088
        %7957 = vmatprep.subr.mxu0 %v3101
        %7958 = vmatpush1.msra.mxu0 %v3100
        %7959 = vmatprep.subr.mxu0 %v3113
        %7960 = vmatpush1.msra.mxu0 %v3112
        %7961 = vmatprep.subr.mxu0 %v3125
        %7962 = vmatpush1.msra.mxu0 %v3124
        %7963 = vmatprep.subr.mxu0 %v3137
        %7964 = vmatpush1.msra.mxu0 %v3136
        %7965 = vmatprep.subr.mxu0 %v3149
        %7966 = vmatpush1.msra.mxu0 %v3148
        %7967 = vmatprep.subr.mxu0 %v3161
        %7968 = vmatpush1.msra.mxu0 %v3160
        %7969 = vmatprep.subr.mxu0 %v3173
        %7970 = vmatpush1.msra.mxu0 %v3172
        %7971 = vmatprep.subr.mxu0 %v3185
        %7972 = vmatpush1.msra.mxu0 %v3184
        %7973 = vmatprep.subr.mxu0 %v3197
        %7974 = vmatpush1.msra.mxu0 %v3196
        %7975 = vmatprep.subr.mxu0 %v3209
        %7976 = vmatpush1.msra.mxu0 %v3208
        %7977 = vmatprep.subr.mxu0 %v3221
        %7978 = vmatpush1.msra.mxu0 %v3220
        %7979 = vmatprep.subr.mxu0 %v3233
        %7980 = vmatpush1.msra.mxu0 %v3232
        %7981 = vmatprep.subr.mxu0 %v3245
        %7982 = vmatpush1.msra.mxu0 %v3244
        %7983 = vmatprep.subr.mxu0 %v3257
        %7984 = vmatpush1.msra.mxu0 %v3256
        %7985 = vmatprep.subr.mxu0 %v3269
        %7986 = vmatpush1.msra.mxu0 %v3268
        %7987 = vmatprep.mubr.f32.mxu0 %v1725
        %7988 = vmatmul.mubr.f32.gmra.mrb[0].mxu0 %v1724
        %v7989 = vpop.f32.mrb[0].mxu0
        %v7990 = vadd.f32 %v7919, %v7989
        %v7991 = vpop.f32.mrb[0].mxu0
        %v7992 = vadd.f32 %v7921, %v7991
        %7993 = vdwg.mxu0
        %7994 = vmatprep.subr.mxu0 %v3281
        %7995 = vmatpush1.msra.mxu0 %v3280
        %7996 = vmatprep.subr.mxu0 %v3293
        %7997 = vmatpush1.msra.mxu0 %v3292
        %7998 = vmatprep.subr.mxu0 %v3305
        %7999 = vmatpush1.msra.mxu0 %v3304
        %8000 = vmatprep.subr.mxu0 %v3317
        %8001 = vmatpush1.msra.mxu0 %v3316
        %8002 = vmatprep.subr.mxu0 %v3329
        %8003 = vmatpush1.msra.mxu0 %v3328
        %8004 = vmatprep.subr.mxu0 %v3341
        %8005 = vmatpush1.msra.mxu0 %v3340
        %8006 = vmatprep.subr.mxu0 %v3353
        %8007 = vmatpush1.msra.mxu0 %v3352
        %8008 = vmatprep.subr.mxu0 %v3365
        %8009 = vmatpush1.msra.mxu0 %v3364
        %8010 = vmatprep.subr.mxu0 %v3377
        %8011 = vmatpush1.msra.mxu0 %v3376
        %8012 = vmatprep.subr.mxu0 %v3389
        %8013 = vmatpush1.msra.mxu0 %v3388
        %8014 = vmatprep.subr.mxu0 %v3401
        %8015 = vmatpush1.msra.mxu0 %v3400
        %8016 = vmatprep.subr.mxu0 %v3413
        %8017 = vmatpush1.msra.mxu0 %v3412
        %8018 = vmatprep.subr.mxu0 %v3425
        %8019 = vmatpush1.msra.mxu0 %v3424
        %8020 = vmatprep.subr.mxu0 %v3437
        %8021 = vmatpush1.msra.mxu0 %v3436
        %8022 = vmatprep.subr.mxu0 %v3449
        %8023 = vmatpush1.msra.mxu0 %v3448
        %8024 = vmatprep.subr.mxu0 %v3461
        %8025 = vmatpush1.msra.mxu0 %v3460
        %8026 = vmatprep.subr.mxu0 %v3473
        %8027 = vmatpush1.msra.mxu0 %v3472
        %8028 = vmatprep.subr.mxu0 %v3485
        %8029 = vmatpush1.msra.mxu0 %v3484
        %8030 = vmatprep.subr.mxu0 %v3497
        %8031 = vmatpush1.msra.mxu0 %v3496
        %8032 = vmatprep.subr.mxu0 %v3509
        %8033 = vmatpush1.msra.mxu0 %v3508
        %8034 = vmatprep.subr.mxu0 %v3521
        %8035 = vmatpush1.msra.mxu0 %v3520
        %8036 = vmatprep.subr.mxu0 %v3533
        %8037 = vmatpush1.msra.mxu0 %v3532
        %8038 = vmatprep.subr.mxu0 %v3545
        %8039 = vmatpush1.msra.mxu0 %v3544
        %8040 = vmatprep.subr.mxu0 %v3557
        %8041 = vmatpush1.msra.mxu0 %v3556
        %8042 = vmatprep.subr.mxu0 %v3569
        %8043 = vmatpush1.msra.mxu0 %v3568
        %8044 = vmatprep.subr.mxu0 %v3581
        %8045 = vmatpush1.msra.mxu0 %v3580
        %8046 = vmatprep.subr.mxu0 %v3593
        %8047 = vmatpush1.msra.mxu0 %v3592
        %8048 = vmatprep.subr.mxu0 %v3605
        %8049 = vmatpush1.msra.mxu0 %v3604
        %8050 = vmatprep.subr.mxu0 %v3617
        %8051 = vmatpush1.msra.mxu0 %v3616
        %8052 = vmatprep.subr.mxu0 %v3629
        %8053 = vmatpush1.msra.mxu0 %v3628
        %8054 = vmatprep.subr.mxu0 %v3641
        %8055 = vmatpush1.msra.mxu0 %v3640
        %8056 = vmatprep.subr.mxu0 %v3653
        %8057 = vmatpush1.msra.mxu0 %v3652
        %8058 = vmatprep.mubr.f32.mxu0 %v1727
        %8059 = vmatmul.mubr.f32.gmra.mrb[0].mxu0 %v1726
        %v8060 = vpop.f32.mrb[0].mxu0
        %v8061 = vadd.f32 %v7990, %v8060
        %v8062 = vpop.f32.mrb[0].mxu0
        %v8063 = vadd.f32 %v7992, %v8062
        %8064 = vdwg.mxu0
        %8065 = vmatprep.subr.mxu0 %v3665
        %8066 = vmatpush1.msra.mxu0 %v3664
        %8067 = vmatprep.subr.mxu0 %v3677
        %8068 = vmatpush1.msra.mxu0 %v3676
        %8069 = vmatprep.subr.mxu0 %v3689
        %8070 = vmatpush1.msra.mxu0 %v3688
        %8071 = vmatprep.subr.mxu0 %v3701
        %8072 = vmatpush1.msra.mxu0 %v3700
        %8073 = vmatprep.subr.mxu0 %v3713
        %8074 = vmatpush1.msra.mxu0 %v3712
        %8075 = vmatprep.subr.mxu0 %v3725
        %8076 = vmatpush1.msra.mxu0 %v3724
        %8077 = vmatprep.subr.mxu0 %v3737
        %8078 = vmatpush1.msra.mxu0 %v3736
        %8079 = vmatprep.subr.mxu0 %v3749
        %8080 = vmatpush1.msra.mxu0 %v3748
        %8081 = vmatprep.subr.mxu0 %v3761
        %8082 = vmatpush1.msra.mxu0 %v3760
        %8083 = vmatprep.subr.mxu0 %v3773
        %8084 = vmatpush1.msra.mxu0 %v3772
        %8085 = vmatprep.subr.mxu0 %v3785
        %8086 = vmatpush1.msra.mxu0 %v3784
        %8087 = vmatprep.subr.mxu0 %v3797
        %8088 = vmatpush1.msra.mxu0 %v3796
        %8089 = vmatprep.subr.mxu0 %v3809
        %8090 = vmatpush1.msra.mxu0 %v3808
        %8091 = vmatprep.subr.mxu0 %v3821
        %8092 = vmatpush1.msra.mxu0 %v3820
        %8093 = vmatprep.subr.mxu0 %v3833
        %8094 = vmatpush1.msra.mxu0 %v3832
        %8095 = vmatprep.subr.mxu0 %v3845
        %8096 = vmatpush1.msra.mxu0 %v3844
        %8097 = vmatprep.subr.mxu0 %v3857
        %8098 = vmatpush1.msra.mxu0 %v3856
        %8099 = vmatprep.subr.mxu0 %v3869
        %8100 = vmatpush1.msra.mxu0 %v3868
        %8101 = vmatprep.subr.mxu0 %v3881
        %8102 = vmatpush1.msra.mxu0 %v3880
        %8103 = vmatprep.subr.mxu0 %v3893
        %8104 = vmatpush1.msra.mxu0 %v3892
        %8105 = vmatprep.subr.mxu0 %v3905
        %8106 = vmatpush1.msra.mxu0 %v3904
        %8107 = vmatprep.subr.mxu0 %v3917
        %8108 = vmatpush1.msra.mxu0 %v3916
        %8109 = vmatprep.subr.mxu0 %v3929
        %8110 = vmatpush1.msra.mxu0 %v3928
        %8111 = vmatprep.subr.mxu0 %v3941
        %8112 = vmatpush1.msra.mxu0 %v3940
        %8113 = vmatprep.subr.mxu0 %v3953
        %8114 = vmatpush1.msra.mxu0 %v3952
        %8115 = vmatprep.subr.mxu0 %v3965
        %8116 = vmatpush1.msra.mxu0 %v3964
        %8117 = vmatprep.subr.mxu0 %v3977
        %8118 = vmatpush1.msra.mxu0 %v3976
        %8119 = vmatprep.subr.mxu0 %v3989
        %8120 = vmatpush1.msra.mxu0 %v3988
        %8121 = vmatprep.subr.mxu0 %v4001
        %8122 = vmatpush1.msra.mxu0 %v4000
        %8123 = vmatprep.subr.mxu0 %v4013
        %8124 = vmatpush1.msra.mxu0 %v4012
        %8125 = vmatprep.subr.mxu0 %v4025
        %8126 = vmatpush1.msra.mxu0 %v4024
        %8127 = vmatprep.subr.mxu0 %v4037
        %8128 = vmatpush1.msra.mxu0 %v4036
        %8129 = vmatprep.mubr.f32.mxu0 %v1729
        %8130 = vmatmul.mubr.f32.gmra.mrb[0].mxu0 %v1728
        %v8131 = vpop.f32.mrb[0].mxu0
        %v8132 = vadd.f32 %v8061, %v8131
        %v8133 = vpop.f32.mrb[0].mxu0
        %v8134 = vadd.f32 %v8063, %v8133
        %8135 = vdwg.mxu0
        %8136 = vmatprep.subr.mxu0 %v4049
        %8137 = vmatpush1.msra.mxu0 %v4048
        %8138 = vmatprep.subr.mxu0 %v4061
        %8139 = vmatpush1.msra.mxu0 %v4060
        %8140 = vmatprep.subr.mxu0 %v4073
        %8141 = vmatpush1.msra.mxu0 %v4072
        %8142 = vmatprep.subr.mxu0 %v4085
        %8143 = vmatpush1.msra.mxu0 %v4084
        %8144 = vmatprep.subr.mxu0 %v4097
        %8145 = vmatpush1.msra.mxu0 %v4096
        %8146 = vmatprep.subr.mxu0 %v4109
        %8147 = vmatpush1.msra.mxu0 %v4108
        %8148 = vmatprep.subr.mxu0 %v4121
        %8149 = vmatpush1.msra.mxu0 %v4120
        %8150 = vmatprep.subr.mxu0 %v4133
        %8151 = vmatpush1.msra.mxu0 %v4132
        %8152 = vmatprep.subr.mxu0 %v4145
        %8153 = vmatpush1.msra.mxu0 %v4144
        %8154 = vmatprep.subr.mxu0 %v4157
        %8155 = vmatpush1.msra.mxu0 %v4156
        %8156 = vmatprep.subr.mxu0 %v4169
        %8157 = vmatpush1.msra.mxu0 %v4168
        %8158 = vmatprep.subr.mxu0 %v4181
        %8159 = vmatpush1.msra.mxu0 %v4180
        %8160 = vmatprep.subr.mxu0 %v4193
        %8161 = vmatpush1.msra.mxu0 %v4192
        %8162 = vmatprep.subr.mxu0 %v4205
        %8163 = vmatpush1.msra.mxu0 %v4204
        %8164 = vmatprep.subr.mxu0 %v4217
        %8165 = vmatpush1.msra.mxu0 %v4216
        %8166 = vmatprep.subr.mxu0 %v4229
        %8167 = vmatpush1.msra.mxu0 %v4228
        %8168 = vmatprep.subr.mxu0 %v4241
        %8169 = vmatpush1.msra.mxu0 %v4240
        %8170 = vmatprep.subr.mxu0 %v4253
        %8171 = vmatpush1.msra.mxu0 %v4252
        %8172 = vmatprep.subr.mxu0 %v4265
        %8173 = vmatpush1.msra.mxu0 %v4264
        %8174 = vmatprep.subr.mxu0 %v4277
        %8175 = vmatpush1.msra.mxu0 %v4276
        %8176 = vmatprep.subr.mxu0 %v4289
        %8177 = vmatpush1.msra.mxu0 %v4288
        %8178 = vmatprep.subr.mxu0 %v4301
        %8179 = vmatpush1.msra.mxu0 %v4300
        %8180 = vmatprep.subr.mxu0 %v4313
        %8181 = vmatpush1.msra.mxu0 %v4312
        %8182 = vmatprep.subr.mxu0 %v4325
        %8183 = vmatpush1.msra.mxu0 %v4324
        %8184 = vmatprep.subr.mxu0 %v4337
        %8185 = vmatpush1.msra.mxu0 %v4336
        %8186 = vmatprep.subr.mxu0 %v4349
        %8187 = vmatpush1.msra.mxu0 %v4348
        %8188 = vmatprep.subr.mxu0 %v4361
        %8189 = vmatpush1.msra.mxu0 %v4360
        %8190 = vmatprep.subr.mxu0 %v4373
        %8191 = vmatpush1.msra.mxu0 %v4372
        %8192 = vmatprep.subr.mxu0 %v4385
        %8193 = vmatpush1.msra.mxu0 %v4384
        %8194 = vmatprep.subr.mxu0 %v4397
        %8195 = vmatpush1.msra.mxu0 %v4396
        %8196 = vmatprep.subr.mxu0 %v4409
        %8197 = vmatpush1.msra.mxu0 %v4408
        %8198 = vmatprep.subr.mxu0 %v4421
        %8199 = vmatpush1.msra.mxu0 %v4420
        %8200 = vmatprep.mubr.f32.mxu0 %v1731
        %8201 = vmatmul.mubr.f32.gmra.mrb[0].mxu0 %v1730
        %v8202 = vpop.f32.mrb[0].mxu0
        %v8203 = vadd.f32 %v8132, %v8202
        %v8204 = vpop.f32.mrb[0].mxu0
        %v8205 = vadd.f32 %v8134, %v8204
        %8206 = vdwg.mxu0
        %8207 = vmatprep.subr.mxu0 %v4433
        %8208 = vmatpush1.msra.mxu0 %v4432
        %8209 = vmatprep.subr.mxu0 %v4445
        %8210 = vmatpush1.msra.mxu0 %v4444
        %8211 = vmatprep.subr.mxu0 %v4457
        %8212 = vmatpush1.msra.mxu0 %v4456
        %8213 = vmatprep.subr.mxu0 %v4469
        %8214 = vmatpush1.msra.mxu0 %v4468
        %8215 = vmatprep.subr.mxu0 %v4481
        %8216 = vmatpush1.msra.mxu0 %v4480
        %8217 = vmatprep.subr.mxu0 %v4493
        %8218 = vmatpush1.msra.mxu0 %v4492
        %8219 = vmatprep.subr.mxu0 %v4505
        %8220 = vmatpush1.msra.mxu0 %v4504
        %8221 = vmatprep.subr.mxu0 %v4517
        %8222 = vmatpush1.msra.mxu0 %v4516
        %8223 = vmatprep.subr.mxu0 %v4529
        %8224 = vmatpush1.msra.mxu0 %v4528
        %8225 = vmatprep.subr.mxu0 %v4541
        %8226 = vmatpush1.msra.mxu0 %v4540
        %8227 = vmatprep.subr.mxu0 %v4553
        %8228 = vmatpush1.msra.mxu0 %v4552
        %8229 = vmatprep.subr.mxu0 %v4565
        %8230 = vmatpush1.msra.mxu0 %v4564
        %8231 = vmatprep.subr.mxu0 %v4577
        %8232 = vmatpush1.msra.mxu0 %v4576
        %8233 = vmatprep.subr.mxu0 %v4589
        %8234 = vmatpush1.msra.mxu0 %v4588
        %8235 = vmatprep.subr.mxu0 %v4601
        %8236 = vmatpush1.msra.mxu0 %v4600
        %8237 = vmatprep.subr.mxu0 %v4613
        %8238 = vmatpush1.msra.mxu0 %v4612
        %8239 = vmatprep.subr.mxu0 %v4625
        %8240 = vmatpush1.msra.mxu0 %v4624
        %8241 = vmatprep.subr.mxu0 %v4637
        %8242 = vmatpush1.msra.mxu0 %v4636
        %8243 = vmatprep.subr.mxu0 %v4649
        %8244 = vmatpush1.msra.mxu0 %v4648
        %8245 = vmatprep.subr.mxu0 %v4661
        %8246 = vmatpush1.msra.mxu0 %v4660
        %8247 = vmatprep.subr.mxu0 %v4673
        %8248 = vmatpush1.msra.mxu0 %v4672
        %8249 = vmatprep.subr.mxu0 %v4685
        %8250 = vmatpush1.msra.mxu0 %v4684
        %8251 = vmatprep.subr.mxu0 %v4697
        %8252 = vmatpush1.msra.mxu0 %v4696
        %8253 = vmatprep.subr.mxu0 %v4709
        %8254 = vmatpush1.msra.mxu0 %v4708
        %8255 = vmatprep.subr.mxu0 %v4721
        %8256 = vmatpush1.msra.mxu0 %v4720
        %8257 = vmatprep.subr.mxu0 %v4733
        %8258 = vmatpush1.msra.mxu0 %v4732
        %8259 = vmatprep.subr.mxu0 %v4745
        %8260 = vmatpush1.msra.mxu0 %v4744
        %8261 = vmatprep.subr.mxu0 %v4757
        %8262 = vmatpush1.msra.mxu0 %v4756
        %8263 = vmatprep.subr.mxu0 %v4769
        %8264 = vmatpush1.msra.mxu0 %v4768
        %8265 = vmatprep.subr.mxu0 %v4781
        %8266 = vmatpush1.msra.mxu0 %v4780
        %8267 = vmatprep.subr.mxu0 %v4793
        %8268 = vmatpush1.msra.mxu0 %v4792
        %8269 = vmatprep.subr.mxu0 %v4805
        %8270 = vmatpush1.msra.mxu0 %v4804
        %8271 = vmatprep.mubr.f32.mxu0 %v1733
        %8272 = vmatmul.mubr.f32.gmra.mrb[0].mxu0 %v1732
        %v8273 = vpop.f32.mrb[0].mxu0
        %v8274 = vadd.f32 %v8203, %v8273
        %v8275 = vpop.f32.mrb[0].mxu0
        %v8276 = vadd.f32 %v8205, %v8275
        %8277 = vdwg.mxu0
        %8278 = vst [vmem:[%s321] sm:$0xff] %v5434
        %8279 = vst [vmem:[%s321 + $0x8] sm:$0xff] %v5436
        %8280 = vst [vmem:[%s321 + $0x10] sm:$0xff] %v6002
        %8281 = vst [vmem:[%s321 + $0x18] sm:$0xff] %v6004
        %8282 = vst [vmem:[%s321 + $0x20] sm:$0xff] %v6570
        %8283 = vst [vmem:[%s321 + $0x28] sm:$0xff] %v6572
        %8284 = vst [vmem:[%s321 + $0x30] sm:$0xff] %v7138
        %8285 = vst [vmem:[%s321 + $0x38] sm:$0xff] %v7140
        %8286 = vst [vmem:[%s321 + $0x40] sm:$0xff] %v7706
        %8287 = vst [vmem:[%s321 + $0x48] sm:$0xff] %v7708
        %8288 = vst [vmem:[%s321 + $0x50] sm:$0xff] %v8274
        %8289 = vst [vmem:[%s321 + $0x58] sm:$0xff] %v8276
        %s8290 = smul.u32 12, %s21
        %p8291 = scmp.lt.s32.totalorder %s8290, 143
        %s8292 = scalar_select %p8291, %s8290, 143
        %s8293 = smul.addr %s8292, 8
        %s8294 = scalar_lea.vmem %s5, %s8293
        // Predicated region
        $region61: #{generator_forward.1} parent=39 // pred_check
          %p8295 = pneg %p154
        $region62: #{generator_forward.1} parent=39 // pred_check_branch
          %8297 = sbr.rel (%p8295) target = $region64
        $region63: #{generator_forward.1} parent=39 // pred_region
          %s8298 = smul.u32 12, %s21
        $region64: #{generator_forward.1} parent=39 // pred_fallthru
          _
      $region40: #{generator_forward.1} parent=5 // pred_fallthru
        _
      %p8299 = scmp.le.s32.totalorder 2, %s16
      // Predicated region
      $region65: #{generator_forward.1} parent=5 // pred_check
        %p8300 = pneg %p8299
      $region66: #{generator_forward.1} parent=5 // pred_check_branch
        %8302 = sbr.rel (%p8300) target = $region68
      $region67: #{generator_forward.1} parent=5 // pred_region
        %s8303 = ssub.s32 %s16, 2
        // Predicated region
        $region69: #{generator_forward.1} parent=67 // pred_check
          %p8304 = pneg %p160
        $region70: #{generator_forward.1} parent=67 // pred_check_branch
          %8306 = sbr.rel (%p8304) target = $region72
        $region71: #{generator_forward.1} parent=67 // pred_region
          %s8307 = smul.u32 12, %s22
          %p8308 = scmp.lt.s32.totalorder %s8307, 143
          %s8309 = scalar_select %p8308, %s8307, 143
          %s8310 = smul.addr %s8309, 8
          %s8311 = scalar_lea.vmem %s5, %s8310
        $region72: #{generator_forward.1} parent=67 // pred_fallthru
          _
      $region68: #{generator_forward.1} parent=5 // pred_fallthru
        _
    $region6: #{generator_forward.1} parent=1 // loop_footer
      %s20 = sadd.s32 1, %s16
    $region7: #{generator_forward.1} parent=1 // loop_footer_branch
      %15 = sbr.rel target = $region3
    $region8: #{generator_forward.1} parent=1 // loop_exit
      _
    %8312 = vsyncpa [#allocation3], 1
    %s8313 = scalar_lea.sflag [#allocation3], 1
    %8314 = vsyncpa %s8313, 1
    %8315 = vsyncpa [#allocation5], 1
    %8316 = vsyncpa [#allocation8], 1
    %s8317 = scalar_lea.sflag [#allocation8], 1
    %8318 = vsyncpa %s8317, 1

</llo_original>
